<compile_context>
chip_gen: v5e
topology: v5e:2x2
jax: 0.10.0
libtpu: 0.0.40
codegen_flags: <defaults>
</compile_context>

<pallas_src>
import jax
import jax.numpy as jnp
from jax import lax
from jax.experimental import pallas as pl
from jax.experimental.pallas import tpu as pltpu


# ------------------------------- small helpers -------------------------------

def _round_up(v, m):
    return (v + m - 1) // m * m


def _pick_tile(M, target):
    """Largest row tile <= target that divides M and is sublane (8) aligned."""
    if M <= target:
        return M
    start = min(target, M) // 8 * 8
    for tm in range(start, 7, -8):
        if M % tm == 0:
            return tm
    # TODO(synk): pad M up to a tile multiple in the wrapper instead of a
    # whole-array fallback block (VMEM / pipelining risk on v7x for prime-ish M).
    return M


# --------------------------- 1x1 (pointwise) conv ----------------------------

def _pw_kernel(x_ref, w_ref, b_ref, o_ref):
    # One spatial tile: (TM, Cin) @ (Cin, Cout) on the MXU.
    # bf16 operands, f32 accumulation, bias added in f32, bf16 output carry.
    x = x_ref[...].astype(jnp.bfloat16)
    o_ref[...] = (jnp.dot(x, w_ref[...], preferred_element_type=jnp.float32)
                  + b_ref[...]).astype(o_ref.dtype)


def _pw_conv(x_nhwc, w, b, *, tm_target=1024):
    """1x1 conv:  y[n,h,w,:] = x[n,h,w,:] @ w + b   (w: (Cin, Cout) bf16)."""
    N, H, W, Cin = x_nhwc.shape
    Cout = w.shape[1]
    M = N * H * W
    TM = _pick_tile(M, tm_target)
    out = pl.pallas_call(
        _pw_kernel,
        out_shape=jax.ShapeDtypeStruct((M, Cout), jnp.bfloat16),
        grid_spec=pltpu.PrefetchScalarGridSpec(
            num_scalar_prefetch=0,
            grid=(M // TM,),
            in_specs=[pl.BlockSpec((TM, Cin), lambda i: (i, 0)),
                      pl.BlockSpec((Cin, Cout), lambda i: (0, 0)),
                      pl.BlockSpec((1, Cout), lambda i: (0, 0))],
            out_specs=pl.BlockSpec((TM, Cout), lambda i: (i, 0))),
        compiler_params=pltpu.CompilerParams(
            dimension_semantics=("parallel",)),
    )(x_nhwc.reshape(M, Cin), w, b.reshape(1, Cout))
    return out.reshape(N, H, W, Cout)


# ---------------- fused (upsample + skip-add + pad + 3x3 conv) stage ----------

COL0 = 8   # interior column offset in the padded scratch (sublane aligned);
           # column COL0-1 is the left zero pad, COL0+W the right zero pad.


def _fill_padded_input(pu_ref, f_ref, zp_ref, H, W, C):
    """zp[1+y, COL0+x, :] = up2_rows(pu)[y, x, :] + f[y, x, :]   (bf16).

    Only the pad border that valid 3x3 taps can reach is zeroed (the interior
    is fully overwritten every step, so the persistent scratch never needs a
    full memset; safe under megacore "parallel" sharding)."""
    h = H // 2
    zp_ref[0] = jnp.zeros(zp_ref.shape[1:], zp_ref.dtype)           # top pad row
    zp_ref[H + 1] = jnp.zeros(zp_ref.shape[1:], zp_ref.dtype)       # bottom pad row
    zp_ref[1:H + 1, COL0 - 1:COL0, :] = jnp.zeros((H, 1, C), zp_ref.dtype)
    zp_ref[1:H + 1, COL0 + W:COL0 + W + 1, :] = jnp.zeros((H, 1, C), zp_ref.dtype)

    # Nearest-x2 ROW replication fused here (column replication was done on the
    # small low-res bf16 tensor in the wrapper): f is viewed as (h, 2, W, C)
    # row-pairs, each pair sharing one low-res pu row.  Skip-add in f32.
    pc = pu_ref[0].astype(jnp.float32)                 # (h, W, C)
    fp = f_ref[0].reshape(h, 2, W, C)                  # leading-dim split (trivial)
    z = (pc[:, None, :, :] + fp).astype(zp_ref.dtype).reshape(H, W, C)
    zp_ref[1:H + 1, COL0:COL0 + W, :] = z


def _conv3x3_taps(zp_ref, w_ref, H, W, C, Wf):
    """3x3 SAME conv over the padded scratch as 9 shifted bf16 MXU matmuls.

    One (possibly sublane-shifted) window load per kx, re-used by all three ky
    taps (aligned row slices of the layout-trivial flattened view, Wf % 8 == 0).
    Accumulation is in f32 values (compiler-managed temporaries, no scratch
    read-modify-write): the 3 ky taps of a kx are summed before joining the
    running total."""
    Hp = H + 2
    acc = None
    for kx in range(3):
        zw = zp_ref[:, COL0 - 1 + kx:COL0 - 1 + kx + Wf, :]     # (Hp, Wf, C)
        zf = zw.reshape(Hp * Wf, C)
        part = jnp.dot(zf[0:H * Wf], w_ref[0, kx],
                       preferred_element_type=jnp.float32)
        part = part + jnp.dot(zf[Wf:(H + 1) * Wf], w_ref[1, kx],
                              preferred_element_type=jnp.float32)
        part = part + jnp.dot(zf[2 * Wf:(H + 2) * Wf], w_ref[2, kx],
                              preferred_element_type=jnp.float32)
        acc = part if acc is None else acc + part
    return acc                                                   # (H*Wf, C) f32
    # TODO(synk): K-deepen (concatenate ky taps -> K=3*C) for the 64/128-channel
    # stages to better feed the 256-wide MXUs on v6e/v7x.


def _make_stage_kernel(H, W, C, Wf):
    def kernel(pu_ref, f_ref, w_ref, b_ref, o_ref, zp_ref):
        _fill_padded_input(pu_ref, f_ref, zp_ref, H, W, C)
        acc = _conv3x3_taps(zp_ref, w_ref, H, W, C, Wf)
        out = acc.reshape(H, Wf, C)[:, :W, :] + b_ref[...]
        o_ref[0] = out.astype(o_ref.dtype)
    return kernel


def _conv3x3_stage(p_cols, f, w3, b3):
    """out = conv3x3_same(up2_rows(p_cols) + f)  ->  bf16 NHWC.

    p_cols: (N, H//2, W, C) bf16 low-res pointwise output with columns already
    duplicated; f: (N, H, W, C) f32 skip feature; w3: (3,3,C,C) HWIO bf16."""
    N, H, W, C = f.shape
    assert H % 2 == 0 and W % 2 == 0
    h = H // 2
    assert p_cols.shape == (N, h, W, C)
    Wf = max(8, _round_up(W, 8))        # matmul row pitch (sublane aligned)
    Ws = Wf + 16                        # scratch row width (pad + slack)
    kernel = _make_stage_kernel(H, W, C, Wf)
    # TODO(synk): halo-aware H-strip tiling (grid=(N, H//TH)) for large
    # resolutions / v7x 64 MiB VMEM.
    return pl.pallas_call(
        kernel,
        out_shape=jax.ShapeDtypeStruct((N, H, W, C), jnp.bfloat16),
        grid_spec=pltpu.PrefetchScalarGridSpec(
            num_scalar_prefetch=0,
            grid=(N,),
            in_specs=[pl.BlockSpec((1, h, W, C), lambda n: (n, 0, 0, 0)),
                      pl.BlockSpec((1, H, W, C), lambda n: (n, 0, 0, 0)),
                      pl.BlockSpec((3, 3, C, C), lambda n: (0, 0, 0, 0)),
                      pl.BlockSpec((1, C), lambda n: (0, 0))],
            out_specs=pl.BlockSpec((1, H, W, C), lambda n: (n, 0, 0, 0)),
            scratch_shapes=[pltpu.VMEM((H + 2, Ws, C), jnp.bfloat16)]),
        compiler_params=pltpu.CompilerParams(
            dimension_semantics=("parallel",),
            vmem_limit_bytes=32 * 1024 * 1024),
    )(p_cols, f, w3, b3.reshape(1, C))


# ------ last stage with fused head: conv_33, conv4, +x, conv6, tanh ----------

def _make_head_kernel(H, W, C, Wf):
    def kernel(pu_ref, f_ref, x_ref, w3_ref, b3_ref, w4_ref, b4_ref,
               w6_ref, b6_ref, ot_ref, or_ref, zp_ref):
        _fill_padded_input(pu_ref, f_ref, zp_ref, H, W, C)
        acc = _conv3x3_taps(zp_ref, w3_ref, H, W, C, Wf)       # (H*Wf, C) f32
        feat = acc + b3_ref[...]                               # conv_33 output
        # conv4 (1x1, C->3) on the MXU, still at Wf pitch; garbage pitch
        # columns are sliced away below before reaching any valid output.
        res = jnp.dot(feat.astype(jnp.bfloat16), w4_ref[...],
                      preferred_element_type=jnp.float32) + b4_ref[...]
        out_res = res.reshape(H, Wf, 3)[:, :W, :]              # (H, W, 3) f32
        y = x_ref[0] + out_res                                 # f32 skip-add
        # conv6 (1x1, 3->3) as three VPU FMAs (K=N=3 is too small for the MXU);
        # tanh goes to the (otherwise idle) EUP.
        w6 = w6_ref[...]
        out_t = jnp.tanh(y[..., 0:1] * w6[0] + y[..., 1:2] * w6[1]
                         + y[..., 2:3] * w6[2] + b6_ref[...])
        or_ref[0] = out_res.astype(or_ref.dtype)
        ot_ref[0] = out_t.astype(ot_ref.dtype)
        # TODO(synk): emit the two 3-channel outputs lane-dense / channel-major
        # to avoid 3/128-lane masked stores and the wrapper NHWC->NCHW transpose.
    return kernel


def _conv3x3_stage_head(p_cols, f, x_nhwc, w3, b3, w4, b4, w6, b6):
    N, H, W, C = f.shape
    assert H % 2 == 0 and W % 2 == 0
    h = H // 2
    assert p_cols.shape == (N, h, W, C)
    Wf = max(8, _round_up(W, 8))
    Ws = Wf + 16
    kernel = _make_head_kernel(H, W, C, Wf)
    out_t, out_r = pl.pallas_call(
        kernel,
        out_shape=(jax.ShapeDtypeStruct((N, H, W, 3), jnp.float32),
                   jax.ShapeDtypeStruct((N, H, W, 3), jnp.float32)),
        grid_spec=pltpu.PrefetchScalarGridSpec(
            num_scalar_prefetch=0,
            grid=(N,),
            in_specs=[pl.BlockSpec((1, h, W, C), lambda n: (n, 0, 0, 0)),
                      pl.BlockSpec((1, H, W, C), lambda n: (n, 0, 0, 0)),
                      pl.BlockSpec((1, H, W, 3), lambda n: (n, 0, 0, 0)),
                      pl.BlockSpec((3, 3, C, C), lambda n: (0, 0, 0, 0)),
                      pl.BlockSpec((1, C), lambda n: (0, 0)),
                      pl.BlockSpec((C, 3), lambda n: (0, 0)),
                      pl.BlockSpec((1, 3), lambda n: (0, 0)),
                      pl.BlockSpec((3, 3), lambda n: (0, 0)),
                      pl.BlockSpec((1, 3), lambda n: (0, 0))],
            out_specs=(pl.BlockSpec((1, H, W, 3), lambda n: (n, 0, 0, 0)),
                       pl.BlockSpec((1, H, W, 3), lambda n: (n, 0, 0, 0))),
            scratch_shapes=[pltpu.VMEM((H + 2, Ws, C), jnp.bfloat16)]),
        compiler_params=pltpu.CompilerParams(
            dimension_semantics=("parallel",),
            vmem_limit_bytes=32 * 1024 * 1024),
    )(p_cols, f, x_nhwc, w3, b3.reshape(1, C), w4, b4.reshape(1, 3),
      w6, b6.reshape(1, 3))
    return out_t, out_r


# ------------------------------ parameters ----------------------------------

def init_params(key):
    """Deterministic synthetic init. 1x1 weights: (Cin, Cout); 3x3: HWIO.
    Matmul weights stored in bf16 (f32 accumulation in the kernels);
    biases and the tiny conv6 weight stay f32."""
    keys = jax.random.split(key, 16)
    it = iter(keys)

    def w_(shape, fan_in, dtype=jnp.bfloat16):
        return (jax.random.normal(next(it), shape, jnp.float32)
                / jnp.sqrt(fan_in)).astype(dtype)

    def b_(cout, fan_in):
        return jax.random.normal(next(it), (cout,), jnp.float32) / jnp.sqrt(fan_in)

    p = {}
    p['w1'],  p['b1']  = w_((512, 256), 512.),              b_(256, 512.)
    p['w2'],  p['b2']  = w_((256, 128), 256.),              b_(128, 256.)
    p['w3'],  p['b3']  = w_((128, 64), 128.),               b_(64, 128.)
    p['w4'],  p['b4']  = w_((64, 3), 64.),                  b_(3, 64.)
    p['w6'],  p['b6']  = w_((3, 3), 3., jnp.float32),       b_(3, 3.)
    p['w31'], p['b31'] = w_((3, 3, 256, 256), 256. * 9),    b_(256, 256. * 9)
    p['w32'], p['b32'] = w_((3, 3, 128, 128), 128. * 9),    b_(128, 128. * 9)
    p['w33'], p['b33'] = w_((3, 3, 64, 64), 64. * 9),       b_(64, 64. * 9)
    # conv5 / conv_34 exist in __init__ but are never used in forward -> omitted.
    return p


# ------------------------------ forward pass ---------------------------------

def feature_decoder_forward(params, x, f1, f2, f3, f4, f5):
    """Inputs / outputs are NCHW (PyTorch convention). f1 is unused."""
    t = lambda a: jnp.transpose(a, (0, 2, 3, 1))                  # NCHW->NHWC
    toN = lambda a: jnp.transpose(a, (0, 3, 1, 2))                # NHWC->NCHW
    # Nearest-x2 COLUMN duplication on the small low-res bf16 pointwise output;
    # ROW duplication is fused into the 3x3 stage kernels.
    upw = lambda a: jnp.repeat(a, 2, axis=2)

    x_, f2_, f3_, f4_, f5_ = map(t, (x, f2, f3, f4, f5))

    # 1x1 convs commute with nearest upsampling -> run them at LOW resolution.
    out = _conv3x3_stage(upw(_pw_conv(f5_, params['w1'], params['b1'])),
                         f4_, params['w31'], params['b31'])
    out = _conv3x3_stage(upw(_pw_conv(out, params['w2'], params['b2'])),
                         f3_, params['w32'], params['b32'])
    out_tanh, out_res = _conv3x3_stage_head(
        upw(_pw_conv(out, params['w3'], params['b3'])),
        f2_, x_, params['w33'], params['b33'],
        params['w4'], params['b4'], params['w6'], params['b6'])
    return toN(out_tanh), toN(out_res)


# --------------------------- pure-JAX reference -------------------------------

def reference_forward(params, x, f1, f2, f3, f4, f5):
    """Follows the original PyTorch op order (upsample THEN 1x1 conv) with the
    same rounding points as the kernels (bf16 matmul operands / bf16 HBM
    carries, f32 accumulation and f32 skip/bias/tanh)."""
    t = lambda a: jnp.transpose(a, (0, 2, 3, 1))
    toN = lambda a: jnp.transpose(a, (0, 3, 1, 2))
    up2 = lambda a: jnp.repeat(jnp.repeat(a, 2, axis=1), 2, axis=2)
    bf16, f32 = jnp.bfloat16, jnp.float32

    def c1(a, w, b):   # 1x1 conv, bf16 MXU operands, f32 accumulation
        return jnp.einsum('nhwc,cd->nhwd', a.astype(bf16), w,
                          preferred_element_type=f32) + b

    def c3(a_bf16, w, b):   # 3x3 SAME conv, bf16 operands, f32 accumulation
        return lax.conv_general_dilated(
            a_bf16, w, (1, 1), 'SAME',
            dimension_numbers=('NHWC', 'HWIO', 'NHWC'),
            preferred_element_type=f32) + b

    x_, f2_, f3_, f4_, f5_ = map(t, (x, f2, f3, f4, f5))
    p = c1(up2(f5_), params['w1'], params['b1']).astype(bf16)
    out = c3((p.astype(f32) + f4_).astype(bf16), params['w31'], params['b31'])
    p = c1(up2(out), params['w2'], params['b2']).astype(bf16)
    out = c3((p.astype(f32) + f3_).astype(bf16), params['w32'], params['b32'])
    p = c1(up2(out), params['w3'], params['b3']).astype(bf16)
    feat = c3((p.astype(f32) + f2_).astype(bf16), params['w33'], params['b33'])
    out_res = jnp.einsum('nhwc,cd->nhwd', feat.astype(bf16), params['w4'],
                         preferred_element_type=f32) + params['b4']
    y = x_ + out_res
    out_tanh = jnp.tanh(
        jnp.einsum('nhwc,cd->nhwd', y, params['w6'],
                   preferred_element_type=f32) + params['b6'])
    return toN(out_tanh), toN(out_res)


# ----------------------------------- main -------------------------------------

if __name__ == "__main__":
    key = jax.random.PRNGKey(0)
    k_p, k_x, k1, k2, k3, k4, k5 = jax.random.split(key, 7)

    params = init_params(k_p)

    N = 2
    H5 = W5 = 2  # f5 spatial; final outputs are 8x that (16x16)
    x  = jax.random.normal(k_x, (N, 3,   8 * H5,  8 * W5), jnp.float32)
    f1 = jax.random.normal(k1,  (N, 64, 16 * H5, 16 * W5), jnp.float32)  # unused
    f2 = jax.random.normal(k2,  (N, 64,  8 * H5,  8 * W5), jnp.float32)
    f3 = jax.random.normal(k3,  (N, 128, 4 * H5,  4 * W5), jnp.float32)
    f4 = jax.random.normal(k4,  (N, 256, 2 * H5,  2 * W5), jnp.float32)
    f5 = jax.random.normal(k5,  (N, 512,     H5,      W5), jnp.float32)

    fwd = jax.jit(feature_decoder_forward)
    out, out_ = fwd(params, x, f1, f2, f3, f4, f5)
    jax.block_until_ready((out, out_))

    ref_out, ref_out_ = reference_forward(params, x, f1, f2, f3, f4, f5)
    assert out.shape == (N, 3, 8 * H5, 8 * W5)
    assert out_.shape == (N, 3, 8 * H5, 8 * W5)
    e1 = float(jnp.max(jnp.abs(out - ref_out)))
    e2 = float(jnp.max(jnp.abs(out_ - ref_out_)))
    # bf16 matmul operands / bf16 carries (f32 accumulation) -> relaxed tolerance.
    assert jnp.allclose(out, ref_out, atol=5e-2, rtol=5e-2), e1
    assert jnp.allclose(out_, ref_out_, atol=5e-2, rtol=5e-2), e2

    print("KERNEL_OK")
</pallas_src>

<mosaic_0001>
module attributes {stable_mosaic.version = 11 : i64} {
  func.func @kernel(%arg0: i32, %arg1: memref<1x2x4x256xbf16, #tpu.memory_space<vmem>>, %arg2: memref<1x4x4x256xf32, #tpu.memory_space<vmem>>, %arg3: memref<3x3x256x256xbf16, #tpu.memory_space<vmem>>, %arg4: memref<1x256xf32, #tpu.memory_space<vmem>>, %arg5: memref<1x4x4x256xbf16, #tpu.memory_space<vmem>>, %arg6: memref<6x24x256xbf16, #tpu.memory_space<vmem>>) attributes {dimension_semantics = [#tpu.dimension_semantics<parallel>], iteration_bounds = array<i64: 2>, scalar_prefetch = 0 : i64, scratch_operands = 1 : i64, tpu.core_type = #tpu.core_type<tc>, window_params = [{transform_indices = @transform_0, window_bounds = array<i64: 1, 2, 4, 256>}, {transform_indices = @transform_1, window_bounds = array<i64: 1, 4, 4, 256>}, {pipeline_mode = #tpu.pipeline_mode<synchronous>, transform_indices = @transform_2, window_bounds = array<i64: 3, 3, 256, 256>}, {pipeline_mode = #tpu.pipeline_mode<synchronous>, transform_indices = @transform_3, window_bounds = array<i64: 1, 256>}, {transform_indices = @transform_4, window_bounds = array<i64: 1, 4, 4, 256>}]} {
    %cst = arith.constant 0.000000e+00 : bf16
    %0 = vector.broadcast %cst : bf16 to vector<24x256xbf16>
    %c0 = arith.constant 0 : index
    %c0_0 = arith.constant 0 : index
    %c0_1 = arith.constant 0 : index
    %1 = vector.load %arg6[%c0, %c0_0, %c0_1] : memref<6x24x256xbf16, #tpu.memory_space<vmem>>, vector<1x24x256xbf16>
    %2 = vector.shape_cast %1 : vector<1x24x256xbf16> to vector<24x256xbf16>
    %3 = vector.shape_cast %0 : vector<24x256xbf16> to vector<1x24x256xbf16>
    tpu.vector_store %arg6[%c0, %c0_0, %c0_1], %3 {strides = array<i32>} : memref<6x24x256xbf16, #tpu.memory_space<vmem>>, vector<1x24x256xbf16>,
    %cst_2 = arith.constant 0.000000e+00 : bf16
    %4 = vector.broadcast %cst_2 : bf16 to vector<24x256xbf16>
    %c5 = arith.constant 5 : index
    %c0_3 = arith.constant 0 : index
    %c0_4 = arith.constant 0 : index
    %5 = vector.load %arg6[%c5, %c0_3, %c0_4] : memref<6x24x256xbf16, #tpu.memory_space<vmem>>, vector<1x24x256xbf16>
    %6 = vector.shape_cast %5 : vector<1x24x256xbf16> to vector<24x256xbf16>
    %7 = vector.shape_cast %4 : vector<24x256xbf16> to vector<1x24x256xbf16>
    tpu.vector_store %arg6[%c5, %c0_3, %c0_4], %7 {strides = array<i32>} : memref<6x24x256xbf16, #tpu.memory_space<vmem>>, vector<1x24x256xbf16>,
    %cst_5 = arith.constant 0.000000e+00 : bf16
    %8 = vector.broadcast %cst_5 : bf16 to vector<4x1x256xbf16>
    %c1 = arith.constant 1 : index
    %c7 = arith.constant 7 : index
    %c0_6 = arith.constant 0 : index
    %9 = vector.load %arg6[%c1, %c7, %c0_6] : memref<6x24x256xbf16, #tpu.memory_space<vmem>>, vector<4x1x256xbf16>
    tpu.vector_store %arg6[%c1, %c7, %c0_6], %8 {strides = array<i32>} : memref<6x24x256xbf16, #tpu.memory_space<vmem>>, vector<4x1x256xbf16>,
    %cst_7 = arith.constant 0.000000e+00 : bf16
    %10 = vector.broadcast %cst_7 : bf16 to vector<4x1x256xbf16>
    %c1_8 = arith.constant 1 : index
    %c12 = arith.constant 12 : index
    %c0_9 = arith.constant 0 : index
    %11 = vector.load %arg6[%c1_8, %c12, %c0_9] : memref<6x24x256xbf16, #tpu.memory_space<vmem>>, vector<4x1x256xbf16>
    tpu.vector_store %arg6[%c1_8, %c12, %c0_9], %10 {strides = array<i32>} : memref<6x24x256xbf16, #tpu.memory_space<vmem>>, vector<4x1x256xbf16>,
    %c0_10 = arith.constant 0 : index
    %c0_11 = arith.constant 0 : index
    %c0_12 = arith.constant 0 : index
    %c0_13 = arith.constant 0 : index
    %12 = vector.load %arg1[%c0_10, %c0_11, %c0_12, %c0_13] : memref<1x2x4x256xbf16, #tpu.memory_space<vmem>>, vector<1x2x4x256xbf16>
    %13 = vector.shape_cast %12 : vector<1x2x4x256xbf16> to vector<2x4x256xbf16>
    %14 = arith.extf %13 : vector<2x4x256xbf16> to vector<2x4x256xf32>
    %c0_14 = arith.constant 0 : index
    %c0_15 = arith.constant 0 : index
    %c0_16 = arith.constant 0 : index
    %c0_17 = arith.constant 0 : index
    %15 = vector.load %arg2[%c0_14, %c0_15, %c0_16, %c0_17] : memref<1x4x4x256xf32, #tpu.memory_space<vmem>>, vector<1x4x4x256xf32>
    %16 = vector.shape_cast %15 : vector<1x4x4x256xf32> to vector<4x4x256xf32>
    %17 = vector.shape_cast %16 : vector<4x4x256xf32> to vector<2x2x4x256xf32>
    %18 = vector.shape_cast %14 : vector<2x4x256xf32> to vector<2x1x4x256xf32>
    %19 = vector.broadcast %18 : vector<2x1x4x256xf32> to vector<2x2x4x256xf32>
    %20 = arith.addf %19, %17 : vector<2x2x4x256xf32>
    %21 = arith.truncf %20 : vector<2x2x4x256xf32> to vector<2x2x4x256xbf16>
    %22 = vector.shape_cast %21 : vector<2x2x4x256xbf16> to vector<4x4x256xbf16>
    %c1_18 = arith.constant 1 : index
    %c8 = arith.constant 8 : index
    %c0_19 = arith.constant 0 : index
    %23 = vector.load %arg6[%c1_18, %c8, %c0_19] : memref<6x24x256xbf16, #tpu.memory_space<vmem>>, vector<4x4x256xbf16>
    tpu.vector_store %arg6[%c1_18, %c8, %c0_19], %22 {strides = array<i32>} : memref<6x24x256xbf16, #tpu.memory_space<vmem>>, vector<4x4x256xbf16>,
    %c0_20 = arith.constant 0 : index
    %c7_21 = arith.constant 7 : index
    %c0_22 = arith.constant 0 : index
    %24 = vector.load %arg6[%c0_20, %c7_21, %c0_22] : memref<6x24x256xbf16, #tpu.memory_space<vmem>>, vector<6x8x256xbf16>
    %25 = vector.shape_cast %24 : vector<6x8x256xbf16> to vector<48x256xbf16>
    %26 = vector.extract_strided_slice %25 {offsets = [0, 0], sizes = [32, 256], strides = [1, 1]} : vector<48x256xbf16> to vector<32x256xbf16>
    %c0_23 = arith.constant 0 : index
    %c0_24 = arith.constant 0 : index
    %c0_25 = arith.constant 0 : index
    %c0_26 = arith.constant 0 : index
    %27 = vector.load %arg3[%c0_23, %c0_24, %c0_25, %c0_26] : memref<3x3x256x256xbf16, #tpu.memory_space<vmem>>, vector<1x1x256x256xbf16>
    %28 = vector.shape_cast %27 : vector<1x1x256x256xbf16> to vector<256x256xbf16>
    %cst_27 = arith.constant dense<0.000000e+00> : vector<32x256xf32>
    %29 = tpu.matmul %26, %28, %cst_27 {dimension_numbers = #tpu.dot_dimension_numbers<[1], [0], [0], [1], [0, 0, 1, 1], [], []>} : vector<32x256xbf16>, vector<256x256xbf16>, vector<32x256xf32> -> vector<32x256xf32>
    %30 = vector.extract_strided_slice %25 {offsets = [8, 0], sizes = [32, 256], strides = [1, 1]} : vector<48x256xbf16> to vector<32x256xbf16>
    %c1_28 = arith.constant 1 : index
    %c0_29 = arith.constant 0 : index
    %c0_30 = arith.constant 0 : index
    %c0_31 = arith.constant 0 : index
    %31 = vector.load %arg3[%c1_28, %c0_29, %c0_30, %c0_31] : memref<3x3x256x256xbf16, #tpu.memory_space<vmem>>, vector<1x1x256x256xbf16>
    %32 = vector.shape_cast %31 : vector<1x1x256x256xbf16> to vector<256x256xbf16>
    %cst_32 = arith.constant dense<0.000000e+00> : vector<32x256xf32>
    %33 = tpu.matmul %30, %32, %cst_32 {dimension_numbers = #tpu.dot_dimension_numbers<[1], [0], [0], [1], [0, 0, 1, 1], [], []>} : vector<32x256xbf16>, vector<256x256xbf16>, vector<32x256xf32> -> vector<32x256xf32>
    %34 = arith.addf %29, %33 : vector<32x256xf32>
    %35 = vector.extract_strided_slice %25 {offsets = [16, 0], sizes = [32, 256], strides = [1, 1]} : vector<48x256xbf16> to vector<32x256xbf16>
    %c2 = arith.constant 2 : index
    %c0_33 = arith.constant 0 : index
    %c0_34 = arith.constant 0 : index
    %c0_35 = arith.constant 0 : index
    %36 = vector.load %arg3[%c2, %c0_33, %c0_34, %c0_35] : memref<3x3x256x256xbf16, #tpu.memory_space<vmem>>, vector<1x1x256x256xbf16>
    %37 = vector.shape_cast %36 : vector<1x1x256x256xbf16> to vector<256x256xbf16>
    %cst_36 = arith.constant dense<0.000000e+00> : vector<32x256xf32>
    %38 = tpu.matmul %35, %37, %cst_36 {dimension_numbers = #tpu.dot_dimension_numbers<[1], [0], [0], [1], [0, 0, 1, 1], [], []>} : vector<32x256xbf16>, vector<256x256xbf16>, vector<32x256xf32> -> vector<32x256xf32>
    %39 = arith.addf %34, %38 : vector<32x256xf32>
    %c0_37 = arith.constant 0 : index
    %c8_38 = arith.constant 8 : index
    %c0_39 = arith.constant 0 : index
    %40 = vector.load %arg6[%c0_37, %c8_38, %c0_39] : memref<6x24x256xbf16, #tpu.memory_space<vmem>>, vector<6x8x256xbf16>
    %41 = vector.shape_cast %40 : vector<6x8x256xbf16> to vector<48x256xbf16>
    %42 = vector.extract_strided_slice %41 {offsets = [0, 0], sizes = [32, 256], strides = [1, 1]} : vector<48x256xbf16> to vector<32x256xbf16>
    %c0_40 = arith.constant 0 : index
    %c1_41 = arith.constant 1 : index
    %c0_42 = arith.constant 0 : index
    %c0_43 = arith.constant 0 : index
    %43 = vector.load %arg3[%c0_40, %c1_41, %c0_42, %c0_43] : memref<3x3x256x256xbf16, #tpu.memory_space<vmem>>, vector<1x1x256x256xbf16>
    %44 = vector.shape_cast %43 : vector<1x1x256x256xbf16> to vector<256x256xbf16>
    %cst_44 = arith.constant dense<0.000000e+00> : vector<32x256xf32>
    %45 = tpu.matmul %42, %44, %cst_44 {dimension_numbers = #tpu.dot_dimension_numbers<[1], [0], [0], [1], [0, 0, 1, 1], [], []>} : vector<32x256xbf16>, vector<256x256xbf16>, vector<32x256xf32> -> vector<32x256xf32>
    %46 = vector.extract_strided_slice %41 {offsets = [8, 0], sizes = [32, 256], strides = [1, 1]} : vector<48x256xbf16> to vector<32x256xbf16>
    %c1_45 = arith.constant 1 : index
    %c1_46 = arith.constant 1 : index
    %c0_47 = arith.constant 0 : index
    %c0_48 = arith.constant 0 : index
    %47 = vector.load %arg3[%c1_45, %c1_46, %c0_47, %c0_48] : memref<3x3x256x256xbf16, #tpu.memory_space<vmem>>, vector<1x1x256x256xbf16>
    %48 = vector.shape_cast %47 : vector<1x1x256x256xbf16> to vector<256x256xbf16>
    %cst_49 = arith.constant dense<0.000000e+00> : vector<32x256xf32>
    %49 = tpu.matmul %46, %48, %cst_49 {dimension_numbers = #tpu.dot_dimension_numbers<[1], [0], [0], [1], [0, 0, 1, 1], [], []>} : vector<32x256xbf16>, vector<256x256xbf16>, vector<32x256xf32> -> vector<32x256xf32>
    %50 = arith.addf %45, %49 : vector<32x256xf32>
    %51 = vector.extract_strided_slice %41 {offsets = [16, 0], sizes = [32, 256], strides = [1, 1]} : vector<48x256xbf16> to vector<32x256xbf16>
    %c2_50 = arith.constant 2 : index
    %c1_51 = arith.constant 1 : index
    %c0_52 = arith.constant 0 : index
    %c0_53 = arith.constant 0 : index
    %52 = vector.load %arg3[%c2_50, %c1_51, %c0_52, %c0_53] : memref<3x3x256x256xbf16, #tpu.memory_space<vmem>>, vector<1x1x256x256xbf16>
    %53 = vector.shape_cast %52 : vector<1x1x256x256xbf16> to vector<256x256xbf16>
    %cst_54 = arith.constant dense<0.000000e+00> : vector<32x256xf32>
    %54 = tpu.matmul %51, %53, %cst_54 {dimension_numbers = #tpu.dot_dimension_numbers<[1], [0], [0], [1], [0, 0, 1, 1], [], []>} : vector<32x256xbf16>, vector<256x256xbf16>, vector<32x256xf32> -> vector<32x256xf32>
    %55 = arith.addf %50, %54 : vector<32x256xf32>
    %56 = arith.addf %39, %55 : vector<32x256xf32>
    %c0_55 = arith.constant 0 : index
    %c9 = arith.constant 9 : index
    %c0_56 = arith.constant 0 : index
    %57 = vector.load %arg6[%c0_55, %c9, %c0_56] : memref<6x24x256xbf16, #tpu.memory_space<vmem>>, vector<6x8x256xbf16>
    %58 = vector.shape_cast %57 : vector<6x8x256xbf16> to vector<48x256xbf16>
    %59 = vector.extract_strided_slice %58 {offsets = [0, 0], sizes = [32, 256], strides = [1, 1]} : vector<48x256xbf16> to vector<32x256xbf16>
    %c0_57 = arith.constant 0 : index
    %c2_58 = arith.constant 2 : index
    %c0_59 = arith.constant 0 : index
    %c0_60 = arith.constant 0 : index
    %60 = vector.load %arg3[%c0_57, %c2_58, %c0_59, %c0_60] : memref<3x3x256x256xbf16, #tpu.memory_space<vmem>>, vector<1x1x256x256xbf16>
    %61 = vector.shape_cast %60 : vector<1x1x256x256xbf16> to vector<256x256xbf16>
    %cst_61 = arith.constant dense<0.000000e+00> : vector<32x256xf32>
    %62 = tpu.matmul %59, %61, %cst_61 {dimension_numbers = #tpu.dot_dimension_numbers<[1], [0], [0], [1], [0, 0, 1, 1], [], []>} : vector<32x256xbf16>, vector<256x256xbf16>, vector<32x256xf32> -> vector<32x256xf32>
    %63 = vector.extract_strided_slice %58 {offsets = [8, 0], sizes = [32, 256], strides = [1, 1]} : vector<48x256xbf16> to vector<32x256xbf16>
    %c1_62 = arith.constant 1 : index
    %c2_63 = arith.constant 2 : index
    %c0_64 = arith.constant 0 : index
    %c0_65 = arith.constant 0 : index
    %64 = vector.load %arg3[%c1_62, %c2_63, %c0_64, %c0_65] : memref<3x3x256x256xbf16, #tpu.memory_space<vmem>>, vector<1x1x256x256xbf16>
    %65 = vector.shape_cast %64 : vector<1x1x256x256xbf16> to vector<256x256xbf16>
    %cst_66 = arith.constant dense<0.000000e+00> : vector<32x256xf32>
    %66 = tpu.matmul %63, %65, %cst_66 {dimension_numbers = #tpu.dot_dimension_numbers<[1], [0], [0], [1], [0, 0, 1, 1], [], []>} : vector<32x256xbf16>, vector<256x256xbf16>, vector<32x256xf32> -> vector<32x256xf32>
    %67 = arith.addf %62, %66 : vector<32x256xf32>
    %68 = vector.extract_strided_slice %58 {offsets = [16, 0], sizes = [32, 256], strides = [1, 1]} : vector<48x256xbf16> to vector<32x256xbf16>
    %c2_67 = arith.constant 2 : index
    %c2_68 = arith.constant 2 : index
    %c0_69 = arith.constant 0 : index
    %c0_70 = arith.constant 0 : index
    %69 = vector.load %arg3[%c2_67, %c2_68, %c0_69, %c0_70] : memref<3x3x256x256xbf16, #tpu.memory_space<vmem>>, vector<1x1x256x256xbf16>
    %70 = vector.shape_cast %69 : vector<1x1x256x256xbf16> to vector<256x256xbf16>
    %cst_71 = arith.constant dense<0.000000e+00> : vector<32x256xf32>
    %71 = tpu.matmul %68, %70, %cst_71 {dimension_numbers = #tpu.dot_dimension_numbers<[1], [0], [0], [1], [0, 0, 1, 1], [], []>} : vector<32x256xbf16>, vector<256x256xbf16>, vector<32x256xf32> -> vector<32x256xf32>
    %72 = arith.addf %67, %71 : vector<32x256xf32>
    %73 = arith.addf %56, %72 : vector<32x256xf32>
    %74 = vector.shape_cast %73 : vector<32x256xf32> to vector<4x8x256xf32>
    %75 = vector.extract_strided_slice %74 {offsets = [0, 0, 0], sizes = [4, 4, 256], strides = [1, 1, 1]} : vector<4x8x256xf32> to vector<4x4x256xf32>
    %c0_72 = arith.constant 0 : index
    %c0_73 = arith.constant 0 : index
    %76 = vector.load %arg4[%c0_72, %c0_73] : memref<1x256xf32, #tpu.memory_space<vmem>>, vector<1x256xf32>
    %77 = vector.shape_cast %76 : vector<1x256xf32> to vector<1x1x256xf32>
    %78 = vector.broadcast %77 : vector<1x1x256xf32> to vector<4x4x256xf32>
    %79 = arith.addf %75, %78 : vector<4x4x256xf32>
    %80 = arith.truncf %79 : vector<4x4x256xf32> to vector<4x4x256xbf16>
    %c0_74 = arith.constant 0 : index
    %c0_75 = arith.constant 0 : index
    %c0_76 = arith.constant 0 : index
    %c0_77 = arith.constant 0 : index
    %81 = vector.load %arg5[%c0_74, %c0_75, %c0_76, %c0_77] : memref<1x4x4x256xbf16, #tpu.memory_space<vmem>>, vector<1x4x4x256xbf16>
    %82 = vector.shape_cast %81 : vector<1x4x4x256xbf16> to vector<4x4x256xbf16>
    %83 = vector.shape_cast %80 : vector<4x4x256xbf16> to vector<1x4x4x256xbf16>
    tpu.vector_store %arg5[%c0_74, %c0_75, %c0_76, %c0_77], %83 {strides = array<i32>} : memref<1x4x4x256xbf16, #tpu.memory_space<vmem>>, vector<1x4x4x256xbf16>,
    return
  }
  func.func @transform_0(%arg0: i32) -> (i32, i32, i32, i32) {
    %c0_i32 = arith.constant 0 : i32
    %c0_i32_0 = arith.constant 0 : i32
    %c0_i32_1 = arith.constant 0 : i32
    %c0_i32_2 = arith.constant 0 : i32
    return %arg0, %c0_i32, %c0_i32_0, %c0_i32_1 : i32, i32, i32, i32
  }
  func.func @transform_1(%arg0: i32) -> (i32, i32, i32, i32) {
    %c0_i32 = arith.constant 0 : i32
    %c0_i32_0 = arith.constant 0 : i32
    %c0_i32_1 = arith.constant 0 : i32
    %c0_i32_2 = arith.constant 0 : i32
    return %arg0, %c0_i32, %c0_i32_0, %c0_i32_1 : i32, i32, i32, i32
  }
  func.func @transform_2(%arg0: i32) -> (i32, i32, i32, i32) {
    %c0_i32 = arith.constant 0 : i32
    %c0_i32_0 = arith.constant 0 : i32
    %c0_i32_1 = arith.constant 0 : i32
    %c0_i32_2 = arith.constant 0 : i32
    %c0_i32_3 = arith.constant 0 : i32
    return %c0_i32, %c0_i32_0, %c0_i32_1, %c0_i32_2 : i32, i32, i32, i32
  }
  func.func @transform_3(%arg0: i32) -> (i32, i32) {
    %c0_i32 = arith.constant 0 : i32
    %c0_i32_0 = arith.constant 0 : i32
    %c0_i32_1 = arith.constant 0 : i32
    return %c0_i32, %c0_i32_0 : i32, i32
  }
  func.func @transform_4(%arg0: i32) -> (i32, i32, i32, i32) {
    %c0_i32 = arith.constant 0 : i32
    %c0_i32_0 = arith.constant 0 : i32
    %c0_i32_1 = arith.constant 0 : i32
    %c0_i32_2 = arith.constant 0 : i32
    return %arg0, %c0_i32, %c0_i32_0, %c0_i32_1 : i32, i32, i32, i32
  }
}

module attributes {stable_mosaic.version = 11 : i64} {
  func.func @_pw_kernel(%arg0: i32, %arg1: memref<8x512xf32, #tpu.memory_space<vmem>>, %arg2: memref<512x256xbf16, #tpu.memory_space<vmem>>, %arg3: memref<1x256xf32, #tpu.memory_space<vmem>>, %arg4: memref<8x256xbf16, #tpu.memory_space<vmem>>) attributes {dimension_semantics = [#tpu.dimension_semantics<parallel>], iteration_bounds = array<i64: 1>, scalar_prefetch = 0 : i64, scratch_operands = 0 : i64, tpu.core_type = #tpu.core_type<tc>, window_params = [{transform_indices = @transform_0, window_bounds = array<i64: 8, 512>}, {pipeline_mode = #tpu.pipeline_mode<synchronous>, transform_indices = @transform_1, window_bounds = array<i64: 512, 256>}, {pipeline_mode = #tpu.pipeline_mode<synchronous>, transform_indices = @transform_2, window_bounds = array<i64: 1, 256>}, {transform_indices = @transform_3, window_bounds = array<i64: 8, 256>}]} {
    %c0 = arith.constant 0 : index
    %c0_0 = arith.constant 0 : index
    %0 = vector.load %arg1[%c0, %c0_0] : memref<8x512xf32, #tpu.memory_space<vmem>>, vector<8x512xf32>
    %1 = arith.truncf %0 : vector<8x512xf32> to vector<8x512xbf16>
    %c0_1 = arith.constant 0 : index
    %c0_2 = arith.constant 0 : index
    %2 = vector.load %arg2[%c0_1, %c0_2] : memref<512x256xbf16, #tpu.memory_space<vmem>>, vector<512x256xbf16>
    %cst = arith.constant dense<0.000000e+00> : vector<8x256xf32>
    %3 = tpu.matmul %1, %2, %cst {dimension_numbers = #tpu.dot_dimension_numbers<[1], [0], [0], [1], [0, 0, 1, 1], [], []>} : vector<8x512xbf16>, vector<512x256xbf16>, vector<8x256xf32> -> vector<8x256xf32>
    %c0_3 = arith.constant 0 : index
    %c0_4 = arith.constant 0 : index
    %4 = vector.load %arg3[%c0_3, %c0_4] : memref<1x256xf32, #tpu.memory_space<vmem>>, vector<1x256xf32>
    %5 = vector.broadcast %4 : vector<1x256xf32> to vector<8x256xf32>
    %6 = arith.addf %3, %5 : vector<8x256xf32>
    %7 = arith.truncf %6 : vector<8x256xf32> to vector<8x256xbf16>
    %c0_5 = arith.constant 0 : index
    %c0_6 = arith.constant 0 : index
    %8 = vector.load %arg4[%c0_5, %c0_6] : memref<8x256xbf16, #tpu.memory_space<vmem>>, vector<8x256xbf16>
    tpu.vector_store %arg4[%c0_5, %c0_6], %7 {strides = array<i32>} : memref<8x256xbf16, #tpu.memory_space<vmem>>, vector<8x256xbf16>,
    return
  }
  func.func @transform_0(%arg0: i32) -> (i32, i32) {
    %c0_i32 = arith.constant 0 : i32
    %c0_i32_0 = arith.constant 0 : i32
    return %arg0, %c0_i32 : i32, i32
  }
  func.func @transform_1(%arg0: i32) -> (i32, i32) {
    %c0_i32 = arith.constant 0 : i32
    %c0_i32_0 = arith.constant 0 : i32
    %c0_i32_1 = arith.constant 0 : i32
    return %c0_i32, %c0_i32_0 : i32, i32
  }
  func.func @transform_2(%arg0: i32) -> (i32, i32) {
    %c0_i32 = arith.constant 0 : i32
    %c0_i32_0 = arith.constant 0 : i32
    %c0_i32_1 = arith.constant 0 : i32
    return %c0_i32, %c0_i32_0 : i32, i32
  }
  func.func @transform_3(%arg0: i32) -> (i32, i32) {
    %c0_i32 = arith.constant 0 : i32
    %c0_i32_0 = arith.constant 0 : i32
    return %arg0, %c0_i32 : i32, i32
  }
}

module attributes {stable_mosaic.version = 11 : i64} {
  func.func @_pw_kernel(%arg0: i32, %arg1: memref<32x256xbf16, #tpu.memory_space<vmem>>, %arg2: memref<256x128xbf16, #tpu.memory_space<vmem>>, %arg3: memref<1x128xf32, #tpu.memory_space<vmem>>, %arg4: memref<32x128xbf16, #tpu.memory_space<vmem>>) attributes {dimension_semantics = [#tpu.dimension_semantics<parallel>], iteration_bounds = array<i64: 1>, scalar_prefetch = 0 : i64, scratch_operands = 0 : i64, tpu.core_type = #tpu.core_type<tc>, window_params = [{transform_indices = @transform_0, window_bounds = array<i64: 32, 256>}, {pipeline_mode = #tpu.pipeline_mode<synchronous>, transform_indices = @transform_1, window_bounds = array<i64: 256, 128>}, {pipeline_mode = #tpu.pipeline_mode<synchronous>, transform_indices = @transform_2, window_bounds = array<i64: 1, 128>}, {transform_indices = @transform_3, window_bounds = array<i64: 32, 128>}]} {
    %c0 = arith.constant 0 : index
    %c0_0 = arith.constant 0 : index
    %0 = vector.load %arg1[%c0, %c0_0] : memref<32x256xbf16, #tpu.memory_space<vmem>>, vector<32x256xbf16>
    %c0_1 = arith.constant 0 : index
    %c0_2 = arith.constant 0 : index
    %1 = vector.load %arg2[%c0_1, %c0_2] : memref<256x128xbf16, #tpu.memory_space<vmem>>, vector<256x128xbf16>
    %cst = arith.constant dense<0.000000e+00> : vector<32x128xf32>
    %2 = tpu.matmul %0, %1, %cst {dimension_numbers = #tpu.dot_dimension_numbers<[1], [0], [0], [1], [0, 0, 1, 1], [], []>} : vector<32x256xbf16>, vector<256x128xbf16>, vector<32x128xf32> -> vector<32x128xf32>
    %c0_3 = arith.constant 0 : index
    %c0_4 = arith.constant 0 : index
    %3 = vector.load %arg3[%c0_3, %c0_4] : memref<1x128xf32, #tpu.memory_space<vmem>>, vector<1x128xf32>
    %4 = vector.broadcast %3 : vector<1x128xf32> to vector<32x128xf32>
    %5 = arith.addf %2, %4 : vector<32x128xf32>
    %6 = arith.truncf %5 : vector<32x128xf32> to vector<32x128xbf16>
    %c0_5 = arith.constant 0 : index
    %c0_6 = arith.constant 0 : index
    %7 = vector.load %arg4[%c0_5, %c0_6] : memref<32x128xbf16, #tpu.memory_space<vmem>>, vector<32x128xbf16>
    tpu.vector_store %arg4[%c0_5, %c0_6], %6 {strides = array<i32>} : memref<32x128xbf16, #tpu.memory_space<vmem>>, vector<32x128xbf16>,
    return
  }
  func.func @transform_0(%arg0: i32) -> (i32, i32) {
    %c0_i32 = arith.constant 0 : i32
    %c0_i32_0 = arith.constant 0 : i32
    return %arg0, %c0_i32 : i32, i32
  }
  func.func @transform_1(%arg0: i32) -> (i32, i32) {
    %c0_i32 = arith.constant 0 : i32
    %c0_i32_0 = arith.constant 0 : i32
    %c0_i32_1 = arith.constant 0 : i32
    return %c0_i32, %c0_i32_0 : i32, i32
  }
  func.func @transform_2(%arg0: i32) -> (i32, i32) {
    %c0_i32 = arith.constant 0 : i32
    %c0_i32_0 = arith.constant 0 : i32
    %c0_i32_1 = arith.constant 0 : i32
    return %c0_i32, %c0_i32_0 : i32, i32
  }
  func.func @transform_3(%arg0: i32) -> (i32, i32) {
    %c0_i32 = arith.constant 0 : i32
    %c0_i32_0 = arith.constant 0 : i32
    return %arg0, %c0_i32 : i32, i32
  }
}

module attributes {stable_mosaic.version = 11 : i64} {
  func.func @kernel(%arg0: i32, %arg1: memref<1x4x8x128xbf16, #tpu.memory_space<vmem>>, %arg2: memref<1x8x8x128xf32, #tpu.memory_space<vmem>>, %arg3: memref<3x3x128x128xbf16, #tpu.memory_space<vmem>>, %arg4: memref<1x128xf32, #tpu.memory_space<vmem>>, %arg5: memref<1x8x8x128xbf16, #tpu.memory_space<vmem>>, %arg6: memref<10x24x128xbf16, #tpu.memory_space<vmem>>) attributes {dimension_semantics = [#tpu.dimension_semantics<parallel>], iteration_bounds = array<i64: 2>, scalar_prefetch = 0 : i64, scratch_operands = 1 : i64, tpu.core_type = #tpu.core_type<tc>, window_params = [{transform_indices = @transform_0, window_bounds = array<i64: 1, 4, 8, 128>}, {transform_indices = @transform_1, window_bounds = array<i64: 1, 8, 8, 128>}, {pipeline_mode = #tpu.pipeline_mode<synchronous>, transform_indices = @transform_2, window_bounds = array<i64: 3, 3, 128, 128>}, {pipeline_mode = #tpu.pipeline_mode<synchronous>, transform_indices = @transform_3, window_bounds = array<i64: 1, 128>}, {transform_indices = @transform_4, window_bounds = array<i64: 1, 8, 8, 128>}]} {
    %cst = arith.constant 0.000000e+00 : bf16
    %0 = vector.broadcast %cst : bf16 to vector<24x128xbf16>
    %c0 = arith.constant 0 : index
    %c0_0 = arith.constant 0 : index
    %c0_1 = arith.constant 0 : index
    %1 = vector.load %arg6[%c0, %c0_0, %c0_1] : memref<10x24x128xbf16, #tpu.memory_space<vmem>>, vector<1x24x128xbf16>
    %2 = vector.shape_cast %1 : vector<1x24x128xbf16> to vector<24x128xbf16>
    %3 = vector.shape_cast %0 : vector<24x128xbf16> to vector<1x24x128xbf16>
    tpu.vector_store %arg6[%c0, %c0_0, %c0_1], %3 {strides = array<i32>} : memref<10x24x128xbf16, #tpu.memory_space<vmem>>, vector<1x24x128xbf16>,
    %cst_2 = arith.constant 0.000000e+00 : bf16
    %4 = vector.broadcast %cst_2 : bf16 to vector<24x128xbf16>
    %c9 = arith.constant 9 : index
    %c0_3 = arith.constant 0 : index
    %c0_4 = arith.constant 0 : index
    %5 = vector.load %arg6[%c9, %c0_3, %c0_4] : memref<10x24x128xbf16, #tpu.memory_space<vmem>>, vector<1x24x128xbf16>
    %6 = vector.shape_cast %5 : vector<1x24x128xbf16> to vector<24x128xbf16>
    %7 = vector.shape_cast %4 : vector<24x128xbf16> to vector<1x24x128xbf16>
    tpu.vector_store %arg6[%c9, %c0_3, %c0_4], %7 {strides = array<i32>} : memref<10x24x128xbf16, #tpu.memory_space<vmem>>, vector<1x24x128xbf16>,
    %cst_5 = arith.constant 0.000000e+00 : bf16
    %8 = vector.broadcast %cst_5 : bf16 to vector<8x1x128xbf16>
    %c1 = arith.constant 1 : index
    %c7 = arith.constant 7 : index
    %c0_6 = arith.constant 0 : index
    %9 = vector.load %arg6[%c1, %c7, %c0_6] : memref<10x24x128xbf16, #tpu.memory_space<vmem>>, vector<8x1x128xbf16>
    tpu.vector_store %arg6[%c1, %c7, %c0_6], %8 {strides = array<i32>} : memref<10x24x128xbf16, #tpu.memory_space<vmem>>, vector<8x1x128xbf16>,
    %cst_7 = arith.constant 0.000000e+00 : bf16
    %10 = vector.broadcast %cst_7 : bf16 to vector<8x1x128xbf16>
    %c1_8 = arith.constant 1 : index
    %c16 = arith.constant 16 : index
    %c0_9 = arith.constant 0 : index
    %11 = vector.load %arg6[%c1_8, %c16, %c0_9] : memref<10x24x128xbf16, #tpu.memory_space<vmem>>, vector<8x1x128xbf16>
    tpu.vector_store %arg6[%c1_8, %c16, %c0_9], %10 {strides = array<i32>} : memref<10x24x128xbf16, #tpu.memory_space<vmem>>, vector<8x1x128xbf16>,
    %c0_10 = arith.constant 0 : index
    %c0_11 = arith.constant 0 : index
    %c0_12 = arith.constant 0 : index
    %c0_13 = arith.constant 0 : index
    %12 = vector.load %arg1[%c0_10, %c0_11, %c0_12, %c0_13] : memref<1x4x8x128xbf16, #tpu.memory_space<vmem>>, vector<1x4x8x128xbf16>
    %13 = vector.shape_cast %12 : vector<1x4x8x128xbf16> to vector<4x8x128xbf16>
    %14 = arith.extf %13 : vector<4x8x128xbf16> to vector<4x8x128xf32>
    %c0_14 = arith.constant 0 : index
    %c0_15 = arith.constant 0 : index
    %c0_16 = arith.constant 0 : index
    %c0_17 = arith.constant 0 : index
    %15 = vector.load %arg2[%c0_14, %c0_15, %c0_16, %c0_17] : memref<1x8x8x128xf32, #tpu.memory_space<vmem>>, vector<1x8x8x128xf32>
    %16 = vector.shape_cast %15 : vector<1x8x8x128xf32> to vector<8x8x128xf32>
    %17 = vector.shape_cast %16 : vector<8x8x128xf32> to vector<4x2x8x128xf32>
    %18 = vector.shape_cast %14 : vector<4x8x128xf32> to vector<4x1x8x128xf32>
    %19 = vector.broadcast %18 : vector<4x1x8x128xf32> to vector<4x2x8x128xf32>
    %20 = arith.addf %19, %17 : vector<4x2x8x128xf32>
    %21 = arith.truncf %20 : vector<4x2x8x128xf32> to vector<4x2x8x128xbf16>
    %22 = vector.shape_cast %21 : vector<4x2x8x128xbf16> to vector<8x8x128xbf16>
    %c1_18 = arith.constant 1 : index
    %c8 = arith.constant 8 : index
    %c0_19 = arith.constant 0 : index
    %23 = vector.load %arg6[%c1_18, %c8, %c0_19] : memref<10x24x128xbf16, #tpu.memory_space<vmem>>, vector<8x8x128xbf16>
    tpu.vector_store %arg6[%c1_18, %c8, %c0_19], %22 {strides = array<i32>} : memref<10x24x128xbf16, #tpu.memory_space<vmem>>, vector<8x8x128xbf16>,
    %c0_20 = arith.constant 0 : index
    %c7_21 = arith.constant 7 : index
    %c0_22 = arith.constant 0 : index
    %24 = vector.load %arg6[%c0_20, %c7_21, %c0_22] : memref<10x24x128xbf16, #tpu.memory_space<vmem>>, vector<10x8x128xbf16>
    %25 = vector.shape_cast %24 : vector<10x8x128xbf16> to vector<80x128xbf16>
    %26 = vector.extract_strided_slice %25 {offsets = [0, 0], sizes = [64, 128], strides = [1, 1]} : vector<80x128xbf16> to vector<64x128xbf16>
    %c0_23 = arith.constant 0 : index
    %c0_24 = arith.constant 0 : index
    %c0_25 = arith.constant 0 : index
    %c0_26 = arith.constant 0 : index
    %27 = vector.load %arg3[%c0_23, %c0_24, %c0_25, %c0_26] : memref<3x3x128x128xbf16, #tpu.memory_space<vmem>>, vector<1x1x128x128xbf16>
    %28 = vector.shape_cast %27 : vector<1x1x128x128xbf16> to vector<128x128xbf16>
    %cst_27 = arith.constant dense<0.000000e+00> : vector<64x128xf32>
    %29 = tpu.matmul %26, %28, %cst_27 {dimension_numbers = #tpu.dot_dimension_numbers<[1], [0], [0], [1], [0, 0, 1, 1], [], []>} : vector<64x128xbf16>, vector<128x128xbf16>, vector<64x128xf32> -> vector<64x128xf32>
    %30 = vector.extract_strided_slice %25 {offsets = [8, 0], sizes = [64, 128], strides = [1, 1]} : vector<80x128xbf16> to vector<64x128xbf16>
    %c1_28 = arith.constant 1 : index
    %c0_29 = arith.constant 0 : index
    %c0_30 = arith.constant 0 : index
    %c0_31 = arith.constant 0 : index
    %31 = vector.load %arg3[%c1_28, %c0_29, %c0_30, %c0_31] : memref<3x3x128x128xbf16, #tpu.memory_space<vmem>>, vector<1x1x128x128xbf16>
    %32 = vector.shape_cast %31 : vector<1x1x128x128xbf16> to vector<128x128xbf16>
    %cst_32 = arith.constant dense<0.000000e+00> : vector<64x128xf32>
    %33 = tpu.matmul %30, %32, %cst_32 {dimension_numbers = #tpu.dot_dimension_numbers<[1], [0], [0], [1], [0, 0, 1, 1], [], []>} : vector<64x128xbf16>, vector<128x128xbf16>, vector<64x128xf32> -> vector<64x128xf32>
    %34 = arith.addf %29, %33 : vector<64x128xf32>
    %35 = vector.extract_strided_slice %25 {offsets = [16, 0], sizes = [64, 128], strides = [1, 1]} : vector<80x128xbf16> to vector<64x128xbf16>
    %c2 = arith.constant 2 : index
    %c0_33 = arith.constant 0 : index
    %c0_34 = arith.constant 0 : index
    %c0_35 = arith.constant 0 : index
    %36 = vector.load %arg3[%c2, %c0_33, %c0_34, %c0_35] : memref<3x3x128x128xbf16, #tpu.memory_space<vmem>>, vector<1x1x128x128xbf16>
    %37 = vector.shape_cast %36 : vector<1x1x128x128xbf16> to vector<128x128xbf16>
    %cst_36 = arith.constant dense<0.000000e+00> : vector<64x128xf32>
    %38 = tpu.matmul %35, %37, %cst_36 {dimension_numbers = #tpu.dot_dimension_numbers<[1], [0], [0], [1], [0, 0, 1, 1], [], []>} : vector<64x128xbf16>, vector<128x128xbf16>, vector<64x128xf32> -> vector<64x128xf32>
    %39 = arith.addf %34, %38 : vector<64x128xf32>
    %c0_37 = arith.constant 0 : index
    %c8_38 = arith.constant 8 : index
    %c0_39 = arith.constant 0 : index
    %40 = vector.load %arg6[%c0_37, %c8_38, %c0_39] : memref<10x24x128xbf16, #tpu.memory_space<vmem>>, vector<10x8x128xbf16>
    %41 = vector.shape_cast %40 : vector<10x8x128xbf16> to vector<80x128xbf16>
    %42 = vector.extract_strided_slice %41 {offsets = [0, 0], sizes = [64, 128], strides = [1, 1]} : vector<80x128xbf16> to vector<64x128xbf16>
    %c0_40 = arith.constant 0 : index
    %c1_41 = arith.constant 1 : index
    %c0_42 = arith.constant 0 : index
    %c0_43 = arith.constant 0 : index
    %43 = vector.load %arg3[%c0_40, %c1_41, %c0_42, %c0_43] : memref<3x3x128x128xbf16, #tpu.memory_space<vmem>>, vector<1x1x128x128xbf16>
    %44 = vector.shape_cast %43 : vector<1x1x128x128xbf16> to vector<128x128xbf16>
    %cst_44 = arith.constant dense<0.000000e+00> : vector<64x128xf32>
    %45 = tpu.matmul %42, %44, %cst_44 {dimension_numbers = #tpu.dot_dimension_numbers<[1], [0], [0], [1], [0, 0, 1, 1], [], []>} : vector<64x128xbf16>, vector<128x128xbf16>, vector<64x128xf32> -> vector<64x128xf32>
    %46 = vector.extract_strided_slice %41 {offsets = [8, 0], sizes = [64, 128], strides = [1, 1]} : vector<80x128xbf16> to vector<64x128xbf16>
    %c1_45 = arith.constant 1 : index
    %c1_46 = arith.constant 1 : index
    %c0_47 = arith.constant 0 : index
    %c0_48 = arith.constant 0 : index
    %47 = vector.load %arg3[%c1_45, %c1_46, %c0_47, %c0_48] : memref<3x3x128x128xbf16, #tpu.memory_space<vmem>>, vector<1x1x128x128xbf16>
    %48 = vector.shape_cast %47 : vector<1x1x128x128xbf16> to vector<128x128xbf16>
    %cst_49 = arith.constant dense<0.000000e+00> : vector<64x128xf32>
    %49 = tpu.matmul %46, %48, %cst_49 {dimension_numbers = #tpu.dot_dimension_numbers<[1], [0], [0], [1], [0, 0, 1, 1], [], []>} : vector<64x128xbf16>, vector<128x128xbf16>, vector<64x128xf32> -> vector<64x128xf32>
    %50 = arith.addf %45, %49 : vector<64x128xf32>
    %51 = vector.extract_strided_slice %41 {offsets = [16, 0], sizes = [64, 128], strides = [1, 1]} : vector<80x128xbf16> to vector<64x128xbf16>
    %c2_50 = arith.constant 2 : index
    %c1_51 = arith.constant 1 : index
    %c0_52 = arith.constant 0 : index
    %c0_53 = arith.constant 0 : index
    %52 = vector.load %arg3[%c2_50, %c1_51, %c0_52, %c0_53] : memref<3x3x128x128xbf16, #tpu.memory_space<vmem>>, vector<1x1x128x128xbf16>
    %53 = vector.shape_cast %52 : vector<1x1x128x128xbf16> to vector<128x128xbf16>
    %cst_54 = arith.constant dense<0.000000e+00> : vector<64x128xf32>
    %54 = tpu.matmul %51, %53, %cst_54 {dimension_numbers = #tpu.dot_dimension_numbers<[1], [0], [0], [1], [0, 0, 1, 1], [], []>} : vector<64x128xbf16>, vector<128x128xbf16>, vector<64x128xf32> -> vector<64x128xf32>
    %55 = arith.addf %50, %54 : vector<64x128xf32>
    %56 = arith.addf %39, %55 : vector<64x128xf32>
    %c0_55 = arith.constant 0 : index
    %c9_56 = arith.constant 9 : index
    %c0_57 = arith.constant 0 : index
    %57 = vector.load %arg6[%c0_55, %c9_56, %c0_57] : memref<10x24x128xbf16, #tpu.memory_space<vmem>>, vector<10x8x128xbf16>
    %58 = vector.shape_cast %57 : vector<10x8x128xbf16> to vector<80x128xbf16>
    %59 = vector.extract_strided_slice %58 {offsets = [0, 0], sizes = [64, 128], strides = [1, 1]} : vector<80x128xbf16> to vector<64x128xbf16>
    %c0_58 = arith.constant 0 : index
    %c2_59 = arith.constant 2 : index
    %c0_60 = arith.constant 0 : index
    %c0_61 = arith.constant 0 : index
    %60 = vector.load %arg3[%c0_58, %c2_59, %c0_60, %c0_61] : memref<3x3x128x128xbf16, #tpu.memory_space<vmem>>, vector<1x1x128x128xbf16>
    %61 = vector.shape_cast %60 : vector<1x1x128x128xbf16> to vector<128x128xbf16>
    %cst_62 = arith.constant dense<0.000000e+00> : vector<64x128xf32>
    %62 = tpu.matmul %59, %61, %cst_62 {dimension_numbers = #tpu.dot_dimension_numbers<[1], [0], [0], [1], [0, 0, 1, 1], [], []>} : vector<64x128xbf16>, vector<128x128xbf16>, vector<64x128xf32> -> vector<64x128xf32>
    %63 = vector.extract_strided_slice %58 {offsets = [8, 0], sizes = [64, 128], strides = [1, 1]} : vector<80x128xbf16> to vector<64x128xbf16>
    %c1_63 = arith.constant 1 : index
    %c2_64 = arith.constant 2 : index
    %c0_65 = arith.constant 0 : index
    %c0_66 = arith.constant 0 : index
    %64 = vector.load %arg3[%c1_63, %c2_64, %c0_65, %c0_66] : memref<3x3x128x128xbf16, #tpu.memory_space<vmem>>, vector<1x1x128x128xbf16>
    %65 = vector.shape_cast %64 : vector<1x1x128x128xbf16> to vector<128x128xbf16>
    %cst_67 = arith.constant dense<0.000000e+00> : vector<64x128xf32>
    %66 = tpu.matmul %63, %65, %cst_67 {dimension_numbers = #tpu.dot_dimension_numbers<[1], [0], [0], [1], [0, 0, 1, 1], [], []>} : vector<64x128xbf16>, vector<128x128xbf16>, vector<64x128xf32> -> vector<64x128xf32>
    %67 = arith.addf %62, %66 : vector<64x128xf32>
    %68 = vector.extract_strided_slice %58 {offsets = [16, 0], sizes = [64, 128], strides = [1, 1]} : vector<80x128xbf16> to vector<64x128xbf16>
    %c2_68 = arith.constant 2 : index
    %c2_69 = arith.constant 2 : index
    %c0_70 = arith.constant 0 : index
    %c0_71 = arith.constant 0 : index
    %69 = vector.load %arg3[%c2_68, %c2_69, %c0_70, %c0_71] : memref<3x3x128x128xbf16, #tpu.memory_space<vmem>>, vector<1x1x128x128xbf16>
    %70 = vector.shape_cast %69 : vector<1x1x128x128xbf16> to vector<128x128xbf16>
    %cst_72 = arith.constant dense<0.000000e+00> : vector<64x128xf32>
    %71 = tpu.matmul %68, %70, %cst_72 {dimension_numbers = #tpu.dot_dimension_numbers<[1], [0], [0], [1], [0, 0, 1, 1], [], []>} : vector<64x128xbf16>, vector<128x128xbf16>, vector<64x128xf32> -> vector<64x128xf32>
    %72 = arith.addf %67, %71 : vector<64x128xf32>
    %73 = arith.addf %56, %72 : vector<64x128xf32>
    %74 = vector.shape_cast %73 : vector<64x128xf32> to vector<8x8x128xf32>
    %c0_73 = arith.constant 0 : index
    %c0_74 = arith.constant 0 : index
    %75 = vector.load %arg4[%c0_73, %c0_74] : memref<1x128xf32, #tpu.memory_space<vmem>>, vector<1x128xf32>
    %76 = vector.shape_cast %75 : vector<1x128xf32> to vector<1x1x128xf32>
    %77 = vector.broadcast %76 : vector<1x1x128xf32> to vector<8x8x128xf32>
    %78 = arith.addf %74, %77 : vector<8x8x128xf32>
    %79 = arith.truncf %78 : vector<8x8x128xf32> to vector<8x8x128xbf16>
    %c0_75 = arith.constant 0 : index
    %c0_76 = arith.constant 0 : index
    %c0_77 = arith.constant 0 : index
    %c0_78 = arith.constant 0 : index
    %80 = vector.load %arg5[%c0_75, %c0_76, %c0_77, %c0_78] : memref<1x8x8x128xbf16, #tpu.memory_space<vmem>>, vector<1x8x8x128xbf16>
    %81 = vector.shape_cast %80 : vector<1x8x8x128xbf16> to vector<8x8x128xbf16>
    %82 = vector.shape_cast %79 : vector<8x8x128xbf16> to vector<1x8x8x128xbf16>
    tpu.vector_store %arg5[%c0_75, %c0_76, %c0_77, %c0_78], %82 {strides = array<i32>} : memref<1x8x8x128xbf16, #tpu.memory_space<vmem>>, vector<1x8x8x128xbf16>,
    return
  }
  func.func @transform_0(%arg0: i32) -> (i32, i32, i32, i32) {
    %c0_i32 = arith.constant 0 : i32
    %c0_i32_0 = arith.constant 0 : i32
    %c0_i32_1 = arith.constant 0 : i32
    %c0_i32_2 = arith.constant 0 : i32
    return %arg0, %c0_i32, %c0_i32_0, %c0_i32_1 : i32, i32, i32, i32
  }
  func.func @transform_1(%arg0: i32) -> (i32, i32, i32, i32) {
    %c0_i32 = arith.constant 0 : i32
    %c0_i32_0 = arith.constant 0 : i32
    %c0_i32_1 = arith.constant 0 : i32
    %c0_i32_2 = arith.constant 0 : i32
    return %arg0, %c0_i32, %c0_i32_0, %c0_i32_1 : i32, i32, i32, i32
  }
  func.func @transform_2(%arg0: i32) -> (i32, i32, i32, i32) {
    %c0_i32 = arith.constant 0 : i32
    %c0_i32_0 = arith.constant 0 : i32
    %c0_i32_1 = arith.constant 0 : i32
    %c0_i32_2 = arith.constant 0 : i32
    %c0_i32_3 = arith.constant 0 : i32
    return %c0_i32, %c0_i32_0, %c0_i32_1, %c0_i32_2 : i32, i32, i32, i32
  }
  func.func @transform_3(%arg0: i32) -> (i32, i32) {
    %c0_i32 = arith.constant 0 : i32
    %c0_i32_0 = arith.constant 0 : i32
    %c0_i32_1 = arith.constant 0 : i32
    return %c0_i32, %c0_i32_0 : i32, i32
  }
  func.func @transform_4(%arg0: i32) -> (i32, i32, i32, i32) {
    %c0_i32 = arith.constant 0 : i32
    %c0_i32_0 = arith.constant 0 : i32
    %c0_i32_1 = arith.constant 0 : i32
    %c0_i32_2 = arith.constant 0 : i32
    return %arg0, %c0_i32, %c0_i32_0, %c0_i32_1 : i32, i32, i32, i32
  }
}

module attributes {stable_mosaic.version = 11 : i64} {
  func.func @_pw_kernel(%arg0: i32, %arg1: memref<128x128xbf16, #tpu.memory_space<vmem>>, %arg2: memref<128x64xbf16, #tpu.memory_space<vmem>>, %arg3: memref<1x64xf32, #tpu.memory_space<vmem>>, %arg4: memref<128x64xbf16, #tpu.memory_space<vmem>>) attributes {dimension_semantics = [#tpu.dimension_semantics<parallel>], iteration_bounds = array<i64: 1>, scalar_prefetch = 0 : i64, scratch_operands = 0 : i64, tpu.core_type = #tpu.core_type<tc>, window_params = [{transform_indices = @transform_0, window_bounds = array<i64: 128, 128>}, {pipeline_mode = #tpu.pipeline_mode<synchronous>, transform_indices = @transform_1, window_bounds = array<i64: 128, 64>}, {pipeline_mode = #tpu.pipeline_mode<synchronous>, transform_indices = @transform_2, window_bounds = array<i64: 1, 64>}, {transform_indices = @transform_3, window_bounds = array<i64: 128, 64>}]} {
    %c0 = arith.constant 0 : index
    %c0_0 = arith.constant 0 : index
    %0 = vector.load %arg1[%c0, %c0_0] : memref<128x128xbf16, #tpu.memory_space<vmem>>, vector<128x128xbf16>
    %c0_1 = arith.constant 0 : index
    %c0_2 = arith.constant 0 : index
    %1 = vector.load %arg2[%c0_1, %c0_2] : memref<128x64xbf16, #tpu.memory_space<vmem>>, vector<128x64xbf16>
    %cst = arith.constant dense<0.000000e+00> : vector<128x64xf32>
    %2 = tpu.matmul %0, %1, %cst {dimension_numbers = #tpu.dot_dimension_numbers<[1], [0], [0], [1], [0, 0, 1, 1], [], []>} : vector<128x128xbf16>, vector<128x64xbf16>, vector<128x64xf32> -> vector<128x64xf32>
    %c0_3 = arith.constant 0 : index
    %c0_4 = arith.constant 0 : index
    %3 = vector.load %arg3[%c0_3, %c0_4] : memref<1x64xf32, #tpu.memory_space<vmem>>, vector<1x64xf32>
    %4 = vector.broadcast %3 : vector<1x64xf32> to vector<128x64xf32>
    %5 = arith.addf %2, %4 : vector<128x64xf32>
    %6 = arith.truncf %5 : vector<128x64xf32> to vector<128x64xbf16>
    %c0_5 = arith.constant 0 : index
    %c0_6 = arith.constant 0 : index
    %7 = vector.load %arg4[%c0_5, %c0_6] : memref<128x64xbf16, #tpu.memory_space<vmem>>, vector<128x64xbf16>
    tpu.vector_store %arg4[%c0_5, %c0_6], %6 {strides = array<i32>} : memref<128x64xbf16, #tpu.memory_space<vmem>>, vector<128x64xbf16>,
    return
  }
  func.func @transform_0(%arg0: i32) -> (i32, i32) {
    %c0_i32 = arith.constant 0 : i32
    %c0_i32_0 = arith.constant 0 : i32
    return %arg0, %c0_i32 : i32, i32
  }
  func.func @transform_1(%arg0: i32) -> (i32, i32) {
    %c0_i32 = arith.constant 0 : i32
    %c0_i32_0 = arith.constant 0 : i32
    %c0_i32_1 = arith.constant 0 : i32
    return %c0_i32, %c0_i32_0 : i32, i32
  }
  func.func @transform_2(%arg0: i32) -> (i32, i32) {
    %c0_i32 = arith.constant 0 : i32
    %c0_i32_0 = arith.constant 0 : i32
    %c0_i32_1 = arith.constant 0 : i32
    return %c0_i32, %c0_i32_0 : i32, i32
  }
  func.func @transform_3(%arg0: i32) -> (i32, i32) {
    %c0_i32 = arith.constant 0 : i32
    %c0_i32_0 = arith.constant 0 : i32
    return %arg0, %c0_i32 : i32, i32
  }
}

module attributes {stable_mosaic.version = 11 : i64} {
  func.func @kernel(%arg0: i32, %arg1: memref<1x8x16x64xbf16, #tpu.memory_space<vmem>>, %arg2: memref<1x16x16x64xf32, #tpu.memory_space<vmem>>, %arg3: memref<1x16x16x3xf32, #tpu.memory_space<vmem>>, %arg4: memref<3x3x64x64xbf16, #tpu.memory_space<vmem>>, %arg5: memref<1x64xf32, #tpu.memory_space<vmem>>, %arg6: memref<64x3xbf16, #tpu.memory_space<vmem>>, %arg7: memref<1x3xf32, #tpu.memory_space<vmem>>, %arg8: memref<3x3xf32, #tpu.memory_space<vmem>>, %arg9: memref<1x3xf32, #tpu.memory_space<vmem>>, %arg10: memref<1x16x16x3xf32, #tpu.memory_space<vmem>>, %arg11: memref<1x16x16x3xf32, #tpu.memory_space<vmem>>, %arg12: memref<18x32x64xbf16, #tpu.memory_space<vmem>>) attributes {dimension_semantics = [#tpu.dimension_semantics<parallel>], iteration_bounds = array<i64: 2>, scalar_prefetch = 0 : i64, scratch_operands = 1 : i64, tpu.core_type = #tpu.core_type<tc>, window_params = [{transform_indices = @transform_0, window_bounds = array<i64: 1, 8, 16, 64>}, {transform_indices = @transform_1, window_bounds = array<i64: 1, 16, 16, 64>}, {transform_indices = @transform_2, window_bounds = array<i64: 1, 16, 16, 3>}, {pipeline_mode = #tpu.pipeline_mode<synchronous>, transform_indices = @transform_3, window_bounds = array<i64: 3, 3, 64, 64>}, {pipeline_mode = #tpu.pipeline_mode<synchronous>, transform_indices = @transform_4, window_bounds = array<i64: 1, 64>}, {pipeline_mode = #tpu.pipeline_mode<synchronous>, transform_indices = @transform_5, window_bounds = array<i64: 64, 3>}, {pipeline_mode = #tpu.pipeline_mode<synchronous>, transform_indices = @transform_6, window_bounds = array<i64: 1, 3>}, {pipeline_mode = #tpu.pipeline_mode<synchronous>, transform_indices = @transform_7, window_bounds = array<i64: 3, 3>}, {pipeline_mode = #tpu.pipeline_mode<synchronous>, transform_indices = @transform_8, window_bounds = array<i64: 1, 3>}, {transform_indices = @transform_9, window_bounds = array<i64: 1, 16, 16, 3>}, {transform_indices = @transform_10, window_bounds = array<i64: 1, 16, 16, 3>}]} {
    %cst = arith.constant 0.000000e+00 : bf16
    %0 = vector.broadcast %cst : bf16 to vector<32x64xbf16>
    %c0 = arith.constant 0 : index
    %c0_0 = arith.constant 0 : index
    %c0_1 = arith.constant 0 : index
    %1 = vector.load %arg12[%c0, %c0_0, %c0_1] : memref<18x32x64xbf16, #tpu.memory_space<vmem>>, vector<1x32x64xbf16>
    %2 = vector.shape_cast %1 : vector<1x32x64xbf16> to vector<32x64xbf16>
    %3 = vector.shape_cast %0 : vector<32x64xbf16> to vector<1x32x64xbf16>
    tpu.vector_store %arg12[%c0, %c0_0, %c0_1], %3 {strides = array<i32>} : memref<18x32x64xbf16, #tpu.memory_space<vmem>>, vector<1x32x64xbf16>,
    %cst_2 = arith.constant 0.000000e+00 : bf16
    %4 = vector.broadcast %cst_2 : bf16 to vector<32x64xbf16>
    %c17 = arith.constant 17 : index
    %c0_3 = arith.constant 0 : index
    %c0_4 = arith.constant 0 : index
    %5 = vector.load %arg12[%c17, %c0_3, %c0_4] : memref<18x32x64xbf16, #tpu.memory_space<vmem>>, vector<1x32x64xbf16>
    %6 = vector.shape_cast %5 : vector<1x32x64xbf16> to vector<32x64xbf16>
    %7 = vector.shape_cast %4 : vector<32x64xbf16> to vector<1x32x64xbf16>
    tpu.vector_store %arg12[%c17, %c0_3, %c0_4], %7 {strides = array<i32>} : memref<18x32x64xbf16, #tpu.memory_space<vmem>>, vector<1x32x64xbf16>,
    %cst_5 = arith.constant 0.000000e+00 : bf16
    %8 = vector.broadcast %cst_5 : bf16 to vector<16x1x64xbf16>
    %c1 = arith.constant 1 : index
    %c7 = arith.constant 7 : index
    %c0_6 = arith.constant 0 : index
    %9 = vector.load %arg12[%c1, %c7, %c0_6] : memref<18x32x64xbf16, #tpu.memory_space<vmem>>, vector<16x1x64xbf16>
    tpu.vector_store %arg12[%c1, %c7, %c0_6], %8 {strides = array<i32>} : memref<18x32x64xbf16, #tpu.memory_space<vmem>>, vector<16x1x64xbf16>,
    %cst_7 = arith.constant 0.000000e+00 : bf16
    %10 = vector.broadcast %cst_7 : bf16 to vector<16x1x64xbf16>
    %c1_8 = arith.constant 1 : index
    %c24 = arith.constant 24 : index
    %c0_9 = arith.constant 0 : index
    %11 = vector.load %arg12[%c1_8, %c24, %c0_9] : memref<18x32x64xbf16, #tpu.memory_space<vmem>>, vector<16x1x64xbf16>
    tpu.vector_store %arg12[%c1_8, %c24, %c0_9], %10 {strides = array<i32>} : memref<18x32x64xbf16, #tpu.memory_space<vmem>>, vector<16x1x64xbf16>,
    %c0_10 = arith.constant 0 : index
    %c0_11 = arith.constant 0 : index
    %c0_12 = arith.constant 0 : index
    %c0_13 = arith.constant 0 : index
    %12 = vector.load %arg1[%c0_10, %c0_11, %c0_12, %c0_13] : memref<1x8x16x64xbf16, #tpu.memory_space<vmem>>, vector<1x8x16x64xbf16>
    %13 = vector.shape_cast %12 : vector<1x8x16x64xbf16> to vector<8x16x64xbf16>
    %14 = arith.extf %13 : vector<8x16x64xbf16> to vector<8x16x64xf32>
    %c0_14 = arith.constant 0 : index
    %c0_15 = arith.constant 0 : index
    %c0_16 = arith.constant 0 : index
    %c0_17 = arith.constant 0 : index
    %15 = vector.load %arg2[%c0_14, %c0_15, %c0_16, %c0_17] : memref<1x16x16x64xf32, #tpu.memory_space<vmem>>, vector<1x16x16x64xf32>
    %16 = vector.shape_cast %15 : vector<1x16x16x64xf32> to vector<16x16x64xf32>
    %17 = vector.shape_cast %16 : vector<16x16x64xf32> to vector<8x2x16x64xf32>
    %18 = vector.shape_cast %14 : vector<8x16x64xf32> to vector<8x1x16x64xf32>
    %19 = vector.broadcast %18 : vector<8x1x16x64xf32> to vector<8x2x16x64xf32>
    %20 = arith.addf %19, %17 : vector<8x2x16x64xf32>
    %21 = arith.truncf %20 : vector<8x2x16x64xf32> to vector<8x2x16x64xbf16>
    %22 = vector.shape_cast %21 : vector<8x2x16x64xbf16> to vector<16x16x64xbf16>
    %c1_18 = arith.constant 1 : index
    %c8 = arith.constant 8 : index
    %c0_19 = arith.constant 0 : index
    %23 = vector.load %arg12[%c1_18, %c8, %c0_19] : memref<18x32x64xbf16, #tpu.memory_space<vmem>>, vector<16x16x64xbf16>
    tpu.vector_store %arg12[%c1_18, %c8, %c0_19], %22 {strides = array<i32>} : memref<18x32x64xbf16, #tpu.memory_space<vmem>>, vector<16x16x64xbf16>,
    %c0_20 = arith.constant 0 : index
    %c7_21 = arith.constant 7 : index
    %c0_22 = arith.constant 0 : index
    %24 = vector.load %arg12[%c0_20, %c7_21, %c0_22] : memref<18x32x64xbf16, #tpu.memory_space<vmem>>, vector<18x16x64xbf16>
    %25 = vector.shape_cast %24 : vector<18x16x64xbf16> to vector<288x64xbf16>
    %26 = vector.extract_strided_slice %25 {offsets = [0, 0], sizes = [256, 64], strides = [1, 1]} : vector<288x64xbf16> to vector<256x64xbf16>
    %c0_23 = arith.constant 0 : index
    %c0_24 = arith.constant 0 : index
    %c0_25 = arith.constant 0 : index
    %c0_26 = arith.constant 0 : index
    %27 = vector.load %arg4[%c0_23, %c0_24, %c0_25, %c0_26] : memref<3x3x64x64xbf16, #tpu.memory_space<vmem>>, vector<1x1x64x64xbf16>
    %28 = vector.shape_cast %27 : vector<1x1x64x64xbf16> to vector<64x64xbf16>
    %cst_27 = arith.constant dense<0.000000e+00> : vector<256x64xf32>
    %29 = tpu.matmul %26, %28, %cst_27 {dimension_numbers = #tpu.dot_dimension_numbers<[1], [0], [0], [1], [0, 0, 1, 1], [], []>} : vector<256x64xbf16>, vector<64x64xbf16>, vector<256x64xf32> -> vector<256x64xf32>
    %30 = vector.extract_strided_slice %25 {offsets = [16, 0], sizes = [256, 64], strides = [1, 1]} : vector<288x64xbf16> to vector<256x64xbf16>
    %c1_28 = arith.constant 1 : index
    %c0_29 = arith.constant 0 : index
    %c0_30 = arith.constant 0 : index
    %c0_31 = arith.constant 0 : index
    %31 = vector.load %arg4[%c1_28, %c0_29, %c0_30, %c0_31] : memref<3x3x64x64xbf16, #tpu.memory_space<vmem>>, vector<1x1x64x64xbf16>
    %32 = vector.shape_cast %31 : vector<1x1x64x64xbf16> to vector<64x64xbf16>
    %cst_32 = arith.constant dense<0.000000e+00> : vector<256x64xf32>
    %33 = tpu.matmul %30, %32, %cst_32 {dimension_numbers = #tpu.dot_dimension_numbers<[1], [0], [0], [1], [0, 0, 1, 1], [], []>} : vector<256x64xbf16>, vector<64x64xbf16>, vector<256x64xf32> -> vector<256x64xf32>
    %34 = arith.addf %29, %33 : vector<256x64xf32>
    %35 = vector.extract_strided_slice %25 {offsets = [32, 0], sizes = [256, 64], strides = [1, 1]} : vector<288x64xbf16> to vector<256x64xbf16>
    %c2 = arith.constant 2 : index
    %c0_33 = arith.constant 0 : index
    %c0_34 = arith.constant 0 : index
    %c0_35 = arith.constant 0 : index
    %36 = vector.load %arg4[%c2, %c0_33, %c0_34, %c0_35] : memref<3x3x64x64xbf16, #tpu.memory_space<vmem>>, vector<1x1x64x64xbf16>
    %37 = vector.shape_cast %36 : vector<1x1x64x64xbf16> to vector<64x64xbf16>
    %cst_36 = arith.constant dense<0.000000e+00> : vector<256x64xf32>
    %38 = tpu.matmul %35, %37, %cst_36 {dimension_numbers = #tpu.dot_dimension_numbers<[1], [0], [0], [1], [0, 0, 1, 1], [], []>} : vector<256x64xbf16>, vector<64x64xbf16>, vector<256x64xf32> -> vector<256x64xf32>
    %39 = arith.addf %34, %38 : vector<256x64xf32>
    %c0_37 = arith.constant 0 : index
    %c8_38 = arith.constant 8 : index
    %c0_39 = arith.constant 0 : index
    %40 = vector.load %arg12[%c0_37, %c8_38, %c0_39] : memref<18x32x64xbf16, #tpu.memory_space<vmem>>, vector<18x16x64xbf16>
    %41 = vector.shape_cast %40 : vector<18x16x64xbf16> to vector<288x64xbf16>
    %42 = vector.extract_strided_slice %41 {offsets = [0, 0], sizes = [256, 64], strides = [1, 1]} : vector<288x64xbf16> to vector<256x64xbf16>
    %c0_40 = arith.constant 0 : index
    %c1_41 = arith.constant 1 : index
    %c0_42 = arith.constant 0 : index
    %c0_43 = arith.constant 0 : index
    %43 = vector.load %arg4[%c0_40, %c1_41, %c0_42, %c0_43] : memref<3x3x64x64xbf16, #tpu.memory_space<vmem>>, vector<1x1x64x64xbf16>
    %44 = vector.shape_cast %43 : vector<1x1x64x64xbf16> to vector<64x64xbf16>
    %cst_44 = arith.constant dense<0.000000e+00> : vector<256x64xf32>
    %45 = tpu.matmul %42, %44, %cst_44 {dimension_numbers = #tpu.dot_dimension_numbers<[1], [0], [0], [1], [0, 0, 1, 1], [], []>} : vector<256x64xbf16>, vector<64x64xbf16>, vector<256x64xf32> -> vector<256x64xf32>
    %46 = vector.extract_strided_slice %41 {offsets = [16, 0], sizes = [256, 64], strides = [1, 1]} : vector<288x64xbf16> to vector<256x64xbf16>
    %c1_45 = arith.constant 1 : index
    %c1_46 = arith.constant 1 : index
    %c0_47 = arith.constant 0 : index
    %c0_48 = arith.constant 0 : index
    %47 = vector.load %arg4[%c1_45, %c1_46, %c0_47, %c0_48] : memref<3x3x64x64xbf16, #tpu.memory_space<vmem>>, vector<1x1x64x64xbf16>
    %48 = vector.shape_cast %47 : vector<1x1x64x64xbf16> to vector<64x64xbf16>
    %cst_49 = arith.constant dense<0.000000e+00> : vector<256x64xf32>
    %49 = tpu.matmul %46, %48, %cst_49 {dimension_numbers = #tpu.dot_dimension_numbers<[1], [0], [0], [1], [0, 0, 1, 1], [], []>} : vector<256x64xbf16>, vector<64x64xbf16>, vector<256x64xf32> -> vector<256x64xf32>
    %50 = arith.addf %45, %49 : vector<256x64xf32>
    %51 = vector.extract_strided_slice %41 {offsets = [32, 0], sizes = [256, 64], strides = [1, 1]} : vector<288x64xbf16> to vector<256x64xbf16>
    %c2_50 = arith.constant 2 : index
    %c1_51 = arith.constant 1 : index
    %c0_52 = arith.constant 0 : index
    %c0_53 = arith.constant 0 : index
    %52 = vector.load %arg4[%c2_50, %c1_51, %c0_52, %c0_53] : memref<3x3x64x64xbf16, #tpu.memory_space<vmem>>, vector<1x1x64x64xbf16>
    %53 = vector.shape_cast %52 : vector<1x1x64x64xbf16> to vector<64x64xbf16>
    %cst_54 = arith.constant dense<0.000000e+00> : vector<256x64xf32>
    %54 = tpu.matmul %51, %53, %cst_54 {dimension_numbers = #tpu.dot_dimension_numbers<[1], [0], [0], [1], [0, 0, 1, 1], [], []>} : vector<256x64xbf16>, vector<64x64xbf16>, vector<256x64xf32> -> vector<256x64xf32>
    %55 = arith.addf %50, %54 : vector<256x64xf32>
    %56 = arith.addf %39, %55 : vector<256x64xf32>
    %c0_55 = arith.constant 0 : index
    %c9 = arith.constant 9 : index
    %c0_56 = arith.constant 0 : index
    %57 = vector.load %arg12[%c0_55, %c9, %c0_56] : memref<18x32x64xbf16, #tpu.memory_space<vmem>>, vector<18x16x64xbf16>
    %58 = vector.shape_cast %57 : vector<18x16x64xbf16> to vector<288x64xbf16>
    %59 = vector.extract_strided_slice %58 {offsets = [0, 0], sizes = [256, 64], strides = [1, 1]} : vector<288x64xbf16> to vector<256x64xbf16>
    %c0_57 = arith.constant 0 : index
    %c2_58 = arith.constant 2 : index
    %c0_59 = arith.constant 0 : index
    %c0_60 = arith.constant 0 : index
    %60 = vector.load %arg4[%c0_57, %c2_58, %c0_59, %c0_60] : memref<3x3x64x64xbf16, #tpu.memory_space<vmem>>, vector<1x1x64x64xbf16>
    %61 = vector.shape_cast %60 : vector<1x1x64x64xbf16> to vector<64x64xbf16>
    %cst_61 = arith.constant dense<0.000000e+00> : vector<256x64xf32>
    %62 = tpu.matmul %59, %61, %cst_61 {dimension_numbers = #tpu.dot_dimension_numbers<[1], [0], [0], [1], [0, 0, 1, 1], [], []>} : vector<256x64xbf16>, vector<64x64xbf16>, vector<256x64xf32> -> vector<256x64xf32>
    %63 = vector.extract_strided_slice %58 {offsets = [16, 0], sizes = [256, 64], strides = [1, 1]} : vector<288x64xbf16> to vector<256x64xbf16>
    %c1_62 = arith.constant 1 : index
    %c2_63 = arith.constant 2 : index
    %c0_64 = arith.constant 0 : index
    %c0_65 = arith.constant 0 : index
    %64 = vector.load %arg4[%c1_62, %c2_63, %c0_64, %c0_65] : memref<3x3x64x64xbf16, #tpu.memory_space<vmem>>, vector<1x1x64x64xbf16>
    %65 = vector.shape_cast %64 : vector<1x1x64x64xbf16> to vector<64x64xbf16>
    %cst_66 = arith.constant dense<0.000000e+00> : vector<256x64xf32>
    %66 = tpu.matmul %63, %65, %cst_66 {dimension_numbers = #tpu.dot_dimension_numbers<[1], [0], [0], [1], [0, 0, 1, 1], [], []>} : vector<256x64xbf16>, vector<64x64xbf16>, vector<256x64xf32> -> vector<256x64xf32>
    %67 = arith.addf %62, %66 : vector<256x64xf32>
    %68 = vector.extract_strided_slice %58 {offsets = [32, 0], sizes = [256, 64], strides = [1, 1]} : vector<288x64xbf16> to vector<256x64xbf16>
    %c2_67 = arith.constant 2 : index
    %c2_68 = arith.constant 2 : index
    %c0_69 = arith.constant 0 : index
    %c0_70 = arith.constant 0 : index
    %69 = vector.load %arg4[%c2_67, %c2_68, %c0_69, %c0_70] : memref<3x3x64x64xbf16, #tpu.memory_space<vmem>>, vector<1x1x64x64xbf16>
    %70 = vector.shape_cast %69 : vector<1x1x64x64xbf16> to vector<64x64xbf16>
    %cst_71 = arith.constant dense<0.000000e+00> : vector<256x64xf32>
    %71 = tpu.matmul %68, %70, %cst_71 {dimension_numbers = #tpu.dot_dimension_numbers<[1], [0], [0], [1], [0, 0, 1, 1], [], []>} : vector<256x64xbf16>, vector<64x64xbf16>, vector<256x64xf32> -> vector<256x64xf32>
    %72 = arith.addf %67, %71 : vector<256x64xf32>
    %73 = arith.addf %56, %72 : vector<256x64xf32>
    %c0_72 = arith.constant 0 : index
    %c0_73 = arith.constant 0 : index
    %74 = vector.load %arg5[%c0_72, %c0_73] : memref<1x64xf32, #tpu.memory_space<vmem>>, vector<1x64xf32>
    %75 = vector.broadcast %74 : vector<1x64xf32> to vector<256x64xf32>
    %76 = arith.addf %73, %75 : vector<256x64xf32>
    %77 = arith.truncf %76 : vector<256x64xf32> to vector<256x64xbf16>
    %c0_74 = arith.constant 0 : index
    %c0_75 = arith.constant 0 : index
    %78 = vector.load %arg6[%c0_74, %c0_75] : memref<64x3xbf16, #tpu.memory_space<vmem>>, vector<64x3xbf16>
    %cst_76 = arith.constant dense<0.000000e+00> : vector<256x3xf32>
    %79 = tpu.matmul %77, %78, %cst_76 {dimension_numbers = #tpu.dot_dimension_numbers<[1], [0], [0], [1], [0, 0, 1, 1], [], []>} : vector<256x64xbf16>, vector<64x3xbf16>, vector<256x3xf32> -> vector<256x3xf32>
    %c0_77 = arith.constant 0 : index
    %c0_78 = arith.constant 0 : index
    %80 = vector.load %arg7[%c0_77, %c0_78] : memref<1x3xf32, #tpu.memory_space<vmem>>, vector<1x3xf32>
    %81 = vector.broadcast %80 : vector<1x3xf32> to vector<256x3xf32>
    %82 = arith.addf %79, %81 : vector<256x3xf32>
    %83 = vector.shape_cast %82 : vector<256x3xf32> to vector<16x16x3xf32>
    %c0_79 = arith.constant 0 : index
    %c0_80 = arith.constant 0 : index
    %c0_81 = arith.constant 0 : index
    %c0_82 = arith.constant 0 : index
    %84 = vector.load %arg3[%c0_79, %c0_80, %c0_81, %c0_82] : memref<1x16x16x3xf32, #tpu.memory_space<vmem>>, vector<1x16x16x3xf32>
    %85 = vector.shape_cast %84 : vector<1x16x16x3xf32> to vector<16x16x3xf32>
    %86 = arith.addf %85, %83 : vector<16x16x3xf32>
    %c0_83 = arith.constant 0 : index
    %c0_84 = arith.constant 0 : index
    %87 = vector.load %arg8[%c0_83, %c0_84] : memref<3x3xf32, #tpu.memory_space<vmem>>, vector<3x3xf32>
    %88 = vector.extract_strided_slice %86 {offsets = [0, 0, 0], sizes = [16, 16, 1], strides = [1, 1, 1]} : vector<16x16x3xf32> to vector<16x16x1xf32>
    %89 = vector.extract_strided_slice %87 {offsets = [0, 0], sizes = [1, 3], strides = [1, 1]} : vector<3x3xf32> to vector<1x3xf32>
    %90 = vector.shape_cast %89 : vector<1x3xf32> to vector<3xf32>
    %91 = vector.shape_cast %90 : vector<3xf32> to vector<1x1x3xf32>
    %92 = vector.broadcast %88 : vector<16x16x1xf32> to vector<16x16x3xf32>
    %93 = vector.broadcast %91 : vector<1x1x3xf32> to vector<16x16x3xf32>
    %94 = arith.mulf %92, %93 : vector<16x16x3xf32>
    %95 = vector.extract_strided_slice %86 {offsets = [0, 0, 1], sizes = [16, 16, 1], strides = [1, 1, 1]} : vector<16x16x3xf32> to vector<16x16x1xf32>
    %96 = vector.extract_strided_slice %87 {offsets = [1, 0], sizes = [1, 3], strides = [1, 1]} : vector<3x3xf32> to vector<1x3xf32>
    %97 = vector.shape_cast %96 : vector<1x3xf32> to vector<3xf32>
    %98 = vector.shape_cast %97 : vector<3xf32> to vector<1x1x3xf32>
    %99 = vector.broadcast %95 : vector<16x16x1xf32> to vector<16x16x3xf32>
    %100 = vector.broadcast %98 : vector<1x1x3xf32> to vector<16x16x3xf32>
    %101 = arith.mulf %99, %100 : vector<16x16x3xf32>
    %102 = arith.addf %94, %101 : vector<16x16x3xf32>
    %103 = vector.extract_strided_slice %86 {offsets = [0, 0, 2], sizes = [16, 16, 1], strides = [1, 1, 1]} : vector<16x16x3xf32> to vector<16x16x1xf32>
    %104 = vector.extract_strided_slice %87 {offsets = [2, 0], sizes = [1, 3], strides = [1, 1]} : vector<3x3xf32> to vector<1x3xf32>
    %105 = vector.shape_cast %104 : vector<1x3xf32> to vector<3xf32>
    %106 = vector.shape_cast %105 : vector<3xf32> to vector<1x1x3xf32>
    %107 = vector.broadcast %103 : vector<16x16x1xf32> to vector<16x16x3xf32>
    %108 = vector.broadcast %106 : vector<1x1x3xf32> to vector<16x16x3xf32>
    %109 = arith.mulf %107, %108 : vector<16x16x3xf32>
    %110 = arith.addf %102, %109 : vector<16x16x3xf32>
    %c0_85 = arith.constant 0 : index
    %c0_86 = arith.constant 0 : index
    %111 = vector.load %arg9[%c0_85, %c0_86] : memref<1x3xf32, #tpu.memory_space<vmem>>, vector<1x3xf32>
    %112 = vector.shape_cast %111 : vector<1x3xf32> to vector<1x1x3xf32>
    %113 = vector.broadcast %112 : vector<1x1x3xf32> to vector<16x16x3xf32>
    %114 = arith.addf %110, %113 : vector<16x16x3xf32>
    %115 = math.tanh %114 : vector<16x16x3xf32>
    %c0_87 = arith.constant 0 : index
    %c0_88 = arith.constant 0 : index
    %c0_89 = arith.constant 0 : index
    %c0_90 = arith.constant 0 : index
    %116 = vector.load %arg11[%c0_87, %c0_88, %c0_89, %c0_90] : memref<1x16x16x3xf32, #tpu.memory_space<vmem>>, vector<1x16x16x3xf32>
    %117 = vector.shape_cast %116 : vector<1x16x16x3xf32> to vector<16x16x3xf32>
    %118 = vector.shape_cast %83 : vector<16x16x3xf32> to vector<1x16x16x3xf32>
    tpu.vector_store %arg11[%c0_87, %c0_88, %c0_89, %c0_90], %118 {strides = array<i32>} : memref<1x16x16x3xf32, #tpu.memory_space<vmem>>, vector<1x16x16x3xf32>,
    %c0_91 = arith.constant 0 : index
    %c0_92 = arith.constant 0 : index
    %c0_93 = arith.constant 0 : index
    %c0_94 = arith.constant 0 : index
    %119 = vector.load %arg10[%c0_91, %c0_92, %c0_93, %c0_94] : memref<1x16x16x3xf32, #tpu.memory_space<vmem>>, vector<1x16x16x3xf32>
    %120 = vector.shape_cast %119 : vector<1x16x16x3xf32> to vector<16x16x3xf32>
    %121 = vector.shape_cast %115 : vector<16x16x3xf32> to vector<1x16x16x3xf32>
    tpu.vector_store %arg10[%c0_91, %c0_92, %c0_93, %c0_94], %121 {strides = array<i32>} : memref<1x16x16x3xf32, #tpu.memory_space<vmem>>, vector<1x16x16x3xf32>,
    return
  }
  func.func @transform_0(%arg0: i32) -> (i32, i32, i32, i32) {
    %c0_i32 = arith.constant 0 : i32
    %c0_i32_0 = arith.constant 0 : i32
    %c0_i32_1 = arith.constant 0 : i32
    %c0_i32_2 = arith.constant 0 : i32
    return %arg0, %c0_i32, %c0_i32_0, %c0_i32_1 : i32, i32, i32, i32
  }
  func.func @transform_1(%arg0: i32) -> (i32, i32, i32, i32) {
    %c0_i32 = arith.constant 0 : i32
    %c0_i32_0 = arith.constant 0 : i32
    %c0_i32_1 = arith.constant 0 : i32
    %c0_i32_2 = arith.constant 0 : i32
    return %arg0, %c0_i32, %c0_i32_0, %c0_i32_1 : i32, i32, i32, i32
  }
  func.func @transform_2(%arg0: i32) -> (i32, i32, i32, i32) {
    %c0_i32 = arith.constant 0 : i32
    %c0_i32_0 = arith.constant 0 : i32
    %c0_i32_1 = arith.constant 0 : i32
    %c0_i32_2 = arith.constant 0 : i32
    return %arg0, %c0_i32, %c0_i32_0, %c0_i32_1 : i32, i32, i32, i32
  }
  func.func @transform_3(%arg0: i32) -> (i32, i32, i32, i32) {
    %c0_i32 = arith.constant 0 : i32
    %c0_i32_0 = arith.constant 0 : i32
    %c0_i32_1 = arith.constant 0 : i32
    %c0_i32_2 = arith.constant 0 : i32
    %c0_i32_3 = arith.constant 0 : i32
    return %c0_i32, %c0_i32_0, %c0_i32_1, %c0_i32_2 : i32, i32, i32, i32
  }
  func.func @transform_4(%arg0: i32) -> (i32, i32) {
    %c0_i32 = arith.constant 0 : i32
    %c0_i32_0 = arith.constant 0 : i32
    %c0_i32_1 = arith.constant 0 : i32
    return %c0_i32, %c0_i32_0 : i32, i32
  }
  func.func @transform_5(%arg0: i32) -> (i32, i32) {
    %c0_i32 = arith.constant 0 : i32
    %c0_i32_0 = arith.constant 0 : i32
    %c0_i32_1 = arith.constant 0 : i32
    return %c0_i32, %c0_i32_0 : i32, i32
  }
  func.func @transform_6(%arg0: i32) -> (i32, i32) {
    %c0_i32 = arith.constant 0 : i32
    %c0_i32_0 = arith.constant 0 : i32
    %c0_i32_1 = arith.constant 0 : i32
    return %c0_i32, %c0_i32_0 : i32, i32
  }
  func.func @transform_7(%arg0: i32) -> (i32, i32) {
    %c0_i32 = arith.constant 0 : i32
    %c0_i32_0 = arith.constant 0 : i32
    %c0_i32_1 = arith.constant 0 : i32
    return %c0_i32, %c0_i32_0 : i32, i32
  }
  func.func @transform_8(%arg0: i32) -> (i32, i32) {
    %c0_i32 = arith.constant 0 : i32
    %c0_i32_0 = arith.constant 0 : i32
    %c0_i32_1 = arith.constant 0 : i32
    return %c0_i32, %c0_i32_0 : i32, i32
  }
  func.func @transform_9(%arg0: i32) -> (i32, i32, i32, i32) {
    %c0_i32 = arith.constant 0 : i32
    %c0_i32_0 = arith.constant 0 : i32
    %c0_i32_1 = arith.constant 0 : i32
    %c0_i32_2 = arith.constant 0 : i32
    return %arg0, %c0_i32, %c0_i32_0, %c0_i32_1 : i32, i32, i32, i32
  }
  func.func @transform_10(%arg0: i32) -> (i32, i32, i32, i32) {
    %c0_i32 = arith.constant 0 : i32
    %c0_i32_0 = arith.constant 0 : i32
    %c0_i32_1 = arith.constant 0 : i32
    %c0_i32_2 = arith.constant 0 : i32
    return %arg0, %c0_i32, %c0_i32_0, %c0_i32_1 : i32, i32, i32, i32
  }
}

</mosaic_0001>

<llo_original>
// kernel: feature_decoder_forward.6
$region0: #{feature_decoder_forward.6}
  #allocation0 [shape = 'u32[]', space=smem, size = 0x4, offset = 0x4, fixed_abs, tag = 'smem constant byte address 0x4 - core index']
  #allocation1 [shape = 'u32[72,128]{1,0:T(1,128)}', space=vmem, size = 0x9000, scoped, tag = 'internal scratch']
  %s0 = inlined_call_operand.vmem [shape: f32[8,512], index: 0, kind: input, shape index: {}]
  %s1 = inlined_call_operand.hbm [shape: bf16[512,256], index: 1, kind: input, shape index: {}]
  %s2 = inlined_call_operand.hbm [shape: f32[1,256], index: 2, kind: input, shape index: {}]
  %s3 = inlined_call_operand.vmem [shape: bf16[8,256], index: 3, kind: output, shape index: {}]
  %s4 = sld [smem:[#allocation0]]
  $region30: #{feature_decoder_forward.6} parent=0
    _
  %s6 = ssub.s32 1, %s4
  %s7 = scalar_select 0, %s6, %s4
  $region1: #{feature_decoder_forward.6} parent=0
    #allocation2 [shape = 'u8[262144]{0}', space=vmem, size = 0x40000, scoped, tag = 'input window, operand 1, single buffered']
    #allocation3 [shape = 's32[1]{0}', space=sflag, size = 0x4, scoped, tag = 'scoped memory for feature_decoder_forward.6']
    #allocation4 [shape = 'u8[1024]{0}', space=vmem, size = 0x400, scoped, tag = 'input window, operand 2, single buffered']
    #allocation5 [shape = 's32[1]{0}', space=sflag, size = 0x4, scoped, tag = 'scoped memory for feature_decoder_forward.6']
    %8 = vsyncpa [#allocation3], 0
    %9 = vsyncpa [#allocation5], 0
    // Predicated region
    $region2: #{feature_decoder_forward.6} parent=1 // pred_check
      _
    $region3: #{feature_decoder_forward.6} parent=1 // pred_check_branch
      %11 = sbr.rel (0) target = $region5
    $region4: #{feature_decoder_forward.6} parent=1 // pred_region
      _
    $region5: #{feature_decoder_forward.6} parent=1 // pred_fallthru
      _
    // Predicated region
    $region6: #{feature_decoder_forward.6} parent=1 // pred_check
      _
    $region7: #{feature_decoder_forward.6} parent=1 // pred_check_branch
      %13 = sbr.rel (0) target = $region9
    $region8: #{feature_decoder_forward.6} parent=1 // pred_region
      %15 = vsyncadd [#allocation3], 0
      %s16 = sshll.u32 %s1, 4
      %s17 = int_to_ptr.hbm [resolvable:$true] %s16
      %s18 = sshll.u32 [#allocation2], 4
      %s19 = int_to_ptr.vmem [resolvable:$true] %s18
      %24 = dma.hbm_to_vmem [thread:$0]  %s17, 8192, %s19, [#allocation3], 128, 128, 8
    $region9: #{feature_decoder_forward.6} parent=1 // pred_fallthru
      _
    // Predicated region
    $region10: #{feature_decoder_forward.6} parent=1 // pred_check
      _
    $region11: #{feature_decoder_forward.6} parent=1 // pred_check_branch
      %26 = sbr.rel (0) target = $region13
    $region12: #{feature_decoder_forward.6} parent=1 // pred_region
      %28 = vsyncadd [#allocation5], 0
      %s30 = sshll.u32 %s2, 4
      %s31 = int_to_ptr.hbm [resolvable:$true] %s30
      %s32 = sshll.u32 [#allocation4], 4
      %s33 = int_to_ptr.vmem [resolvable:$true] %s32
      %35 = dma.hbm_to_vmem [thread:$0]  %s31, 32, %s33, [#allocation5]
    $region13: #{feature_decoder_forward.6} parent=1 // pred_fallthru
      _
    // Predicated region
    $region14: #{feature_decoder_forward.6} parent=1 // pred_check
      _
    $region15: #{feature_decoder_forward.6} parent=1 // pred_check_branch
      %37 = sbr.rel (0) target = $region17
    $region16: #{feature_decoder_forward.6} parent=1 // pred_region
      %39 = dma.done [#allocation3], 8192
    $region17: #{feature_decoder_forward.6} parent=1 // pred_fallthru
      _
    // Predicated region
    $region18: #{feature_decoder_forward.6} parent=1 // pred_check
      _
    $region19: #{feature_decoder_forward.6} parent=1 // pred_check_branch
      %41 = sbr.rel (0) target = $region21
    $region20: #{feature_decoder_forward.6} parent=1 // pred_region
      %43 = dma.done [#allocation5], 32
    $region21: #{feature_decoder_forward.6} parent=1 // pred_fallthru
      _
    %v44 = vld [vmem:[%s0] sm:$0xff]
    %v45 = vld [vmem:[%s0 + $0x8] sm:$0xff]
    %v46 = vld [vmem:[%s0 + $0x10] sm:$0xff]
    %v47 = vld [vmem:[%s0 + $0x18] sm:$0xff]
    %v48 = vpack.c.bf16 %v44, %v44
    %v49 = vpack.c.bf16 %v45, %v45
    %v50 = vpack.c.bf16 %v46, %v46
    %v51 = vpack.c.bf16 %v47, %v47
    %v52 = vld [vmem:[#allocation2] sm:$0xff]
    %v53 = vld [vmem:[#allocation2 + $0x8] sm:$0xff]
    %v54 = vld [vmem:[#allocation2 + $0x10] sm:$0xff]
    %v55 = vld [vmem:[#allocation2 + $0x18] sm:$0xff]
    %v56 = vld [vmem:[#allocation2 + $0x20] sm:$0xff]
    %v57 = vld [vmem:[#allocation2 + $0x28] sm:$0xff]
    %v58 = vld [vmem:[#allocation2 + $0x30] sm:$0xff]
    %v59 = vld [vmem:[#allocation2 + $0x38] sm:$0xff]
    %v60 = vld [vmem:[#allocation2 + $0x40] sm:$0xff]
    %v61 = vld [vmem:[#allocation2 + $0x48] sm:$0xff]
    %v62 = vld [vmem:[#allocation2 + $0x50] sm:$0xff]
    %v63 = vld [vmem:[#allocation2 + $0x58] sm:$0xff]
    %v64 = vld [vmem:[#allocation2 + $0x60] sm:$0xff]
    %v65 = vld [vmem:[#allocation2 + $0x68] sm:$0xff]
    %v66 = vld [vmem:[#allocation2 + $0x70] sm:$0xff]
    %v67 = vld [vmem:[#allocation2 + $0x78] sm:$0xff]
    %v68 = vld [vmem:[#allocation2 + $0x80] sm:$0xff]
    %v69 = vld [vmem:[#allocation2 + $0x88] sm:$0xff]
    %v70 = vld [vmem:[#allocation2 + $0x90] sm:$0xff]
    %v71 = vld [vmem:[#allocation2 + $0x98] sm:$0xff]
    %v72 = vld [vmem:[#allocation2 + $0xa0] sm:$0xff]
    %v73 = vld [vmem:[#allocation2 + $0xa8] sm:$0xff]
    %v74 = vld [vmem:[#allocation2 + $0xb0] sm:$0xff]
    %v75 = vld [vmem:[#allocation2 + $0xb8] sm:$0xff]
    %v76 = vld [vmem:[#allocation2 + $0xc0] sm:$0xff]
    %v77 = vld [vmem:[#allocation2 + $0xc8] sm:$0xff]
    %v78 = vld [vmem:[#allocation2 + $0xd0] sm:$0xff]
    %v79 = vld [vmem:[#allocation2 + $0xd8] sm:$0xff]
    %v80 = vld [vmem:[#allocation2 + $0xe0] sm:$0xff]
    %v81 = vld [vmem:[#allocation2 + $0xe8] sm:$0xff]
    %v82 = vld [vmem:[#allocation2 + $0xf0] sm:$0xff]
    %v83 = vld [vmem:[#allocation2 + $0xf8] sm:$0xff]
    %v84 = vld [vmem:[#allocation2 + $0x100] sm:$0xff]
    %v85 = vld [vmem:[#allocation2 + $0x108] sm:$0xff]
    %v86 = vld [vmem:[#allocation2 + $0x110] sm:$0xff]
    %v87 = vld [vmem:[#allocation2 + $0x118] sm:$0xff]
    %v88 = vld [vmem:[#allocation2 + $0x120] sm:$0xff]
    %v89 = vld [vmem:[#allocation2 + $0x128] sm:$0xff]
    %v90 = vld [vmem:[#allocation2 + $0x130] sm:$0xff]
    %v91 = vld [vmem:[#allocation2 + $0x138] sm:$0xff]
    %v92 = vld [vmem:[#allocation2 + $0x140] sm:$0xff]
    %v93 = vld [vmem:[#allocation2 + $0x148] sm:$0xff]
    %v94 = vld [vmem:[#allocation2 + $0x150] sm:$0xff]
    %v95 = vld [vmem:[#allocation2 + $0x158] sm:$0xff]
    %v96 = vld [vmem:[#allocation2 + $0x160] sm:$0xff]
    %v97 = vld [vmem:[#allocation2 + $0x168] sm:$0xff]
    %v98 = vld [vmem:[#allocation2 + $0x170] sm:$0xff]
    %v99 = vld [vmem:[#allocation2 + $0x178] sm:$0xff]
    %v100 = vld [vmem:[#allocation2 + $0x180] sm:$0xff]
    %v101 = vld [vmem:[#allocation2 + $0x188] sm:$0xff]
    %v102 = vld [vmem:[#allocation2 + $0x190] sm:$0xff]
    %v103 = vld [vmem:[#allocation2 + $0x198] sm:$0xff]
    %v104 = vld [vmem:[#allocation2 + $0x1a0] sm:$0xff]
    %v105 = vld [vmem:[#allocation2 + $0x1a8] sm:$0xff]
    %v106 = vld [vmem:[#allocation2 + $0x1b0] sm:$0xff]
    %v107 = vld [vmem:[#allocation2 + $0x1b8] sm:$0xff]
    %v108 = vld [vmem:[#allocation2 + $0x1c0] sm:$0xff]
    %v109 = vld [vmem:[#allocation2 + $0x1c8] sm:$0xff]
    %v110 = vld [vmem:[#allocation2 + $0x1d0] sm:$0xff]
    %v111 = vld [vmem:[#allocation2 + $0x1d8] sm:$0xff]
    %v112 = vld [vmem:[#allocation2 + $0x1e0] sm:$0xff]
    %v113 = vld [vmem:[#allocation2 + $0x1e8] sm:$0xff]
    %v114 = vld [vmem:[#allocation2 + $0x1f0] sm:$0xff]
    %v115 = vld [vmem:[#allocation2 + $0x1f8] sm:$0xff]
    %v116 = vld [vmem:[#allocation4] sm:$0x3]
    %v118 = vperm.slane %v116, 0
    %v119 = vperm.slane %v116, 1
    %v186 = vunpack.c.l.b16 %v52
    %v187 = vunpack.c.h.b16 %v52
    %v188 = vunpack.c.l.b16 %v53
    %v189 = vunpack.c.h.b16 %v53
    %v190 = vunpack.c.l.b16 %v54
    %v191 = vunpack.c.h.b16 %v54
    %v192 = vunpack.c.l.b16 %v55
    %v193 = vunpack.c.h.b16 %v55
    %v194 = vunpack.c.l.b16 %v56
    %v195 = vunpack.c.h.b16 %v56
    %v196 = vunpack.c.l.b16 %v57
    %v197 = vunpack.c.h.b16 %v57
    %v198 = vunpack.c.l.b16 %v58
    %v199 = vunpack.c.h.b16 %v58
    %v200 = vunpack.c.l.b16 %v59
    %v201 = vunpack.c.h.b16 %v59
    %v202 = vunpack.c.l.b16 %v60
    %v203 = vunpack.c.h.b16 %v60
    %v204 = vunpack.c.l.b16 %v61
    %v205 = vunpack.c.h.b16 %v61
    %v206 = vunpack.c.l.b16 %v62
    %v207 = vunpack.c.h.b16 %v62
    %v208 = vunpack.c.l.b16 %v63
    %v209 = vunpack.c.h.b16 %v63
    %v210 = vunpack.c.l.b16 %v64
    %v211 = vunpack.c.h.b16 %v64
    %v212 = vunpack.c.l.b16 %v65
    %v213 = vunpack.c.h.b16 %v65
    %v214 = vunpack.c.l.b16 %v66
    %v215 = vunpack.c.h.b16 %v66
    %v216 = vunpack.c.l.b16 %v67
    %v217 = vunpack.c.h.b16 %v67
    %v218 = vunpack.c.l.b16 %v68
    %v219 = vunpack.c.h.b16 %v68
    %v220 = vunpack.c.l.b16 %v69
    %v221 = vunpack.c.h.b16 %v69
    %v222 = vunpack.c.l.b16 %v70
    %v223 = vunpack.c.h.b16 %v70
    %v224 = vunpack.c.l.b16 %v71
    %v225 = vunpack.c.h.b16 %v71
    %v226 = vunpack.c.l.b16 %v72
    %v227 = vunpack.c.h.b16 %v72
    %v228 = vunpack.c.l.b16 %v73
    %v229 = vunpack.c.h.b16 %v73
    %v230 = vunpack.c.l.b16 %v74
    %v231 = vunpack.c.h.b16 %v74
    %v232 = vunpack.c.l.b16 %v75
    %v233 = vunpack.c.h.b16 %v75
    %v234 = vunpack.c.l.b16 %v76
    %v235 = vunpack.c.h.b16 %v76
    %v236 = vunpack.c.l.b16 %v77
    %v237 = vunpack.c.h.b16 %v77
    %v238 = vunpack.c.l.b16 %v78
    %v239 = vunpack.c.h.b16 %v78
    %v240 = vunpack.c.l.b16 %v79
    %v241 = vunpack.c.h.b16 %v79
    %v242 = vunpack.c.l.b16 %v80
    %v243 = vunpack.c.h.b16 %v80
    %v244 = vunpack.c.l.b16 %v81
    %v245 = vunpack.c.h.b16 %v81
    %v246 = vunpack.c.l.b16 %v82
    %v247 = vunpack.c.h.b16 %v82
    %v248 = vunpack.c.l.b16 %v83
    %v249 = vunpack.c.h.b16 %v83
    %v250 = vunpack.c.l.b16 %v84
    %v251 = vunpack.c.h.b16 %v84
    %v252 = vunpack.c.l.b16 %v85
    %v253 = vunpack.c.h.b16 %v85
    %v254 = vunpack.c.l.b16 %v86
    %v255 = vunpack.c.h.b16 %v86
    %v256 = vunpack.c.l.b16 %v87
    %v257 = vunpack.c.h.b16 %v87
    %v258 = vunpack.c.l.b16 %v88
    %v259 = vunpack.c.h.b16 %v88
    %v260 = vunpack.c.l.b16 %v89
    %v261 = vunpack.c.h.b16 %v89
    %v262 = vunpack.c.l.b16 %v90
    %v263 = vunpack.c.h.b16 %v90
    %v264 = vunpack.c.l.b16 %v91
    %v265 = vunpack.c.h.b16 %v91
    %v266 = vunpack.c.l.b16 %v92
    %v267 = vunpack.c.h.b16 %v92
    %v268 = vunpack.c.l.b16 %v93
    %v269 = vunpack.c.h.b16 %v93
    %v270 = vunpack.c.l.b16 %v94
    %v271 = vunpack.c.h.b16 %v94
    %v272 = vunpack.c.l.b16 %v95
    %v273 = vunpack.c.h.b16 %v95
    %v274 = vunpack.c.l.b16 %v96
    %v275 = vunpack.c.h.b16 %v96
    %v276 = vunpack.c.l.b16 %v97
    %v277 = vunpack.c.h.b16 %v97
    %v278 = vunpack.c.l.b16 %v98
    %v279 = vunpack.c.h.b16 %v98
    %v280 = vunpack.c.l.b16 %v99
    %v281 = vunpack.c.h.b16 %v99
    %v282 = vunpack.c.l.b16 %v100
    %v283 = vunpack.c.h.b16 %v100
    %v284 = vunpack.c.l.b16 %v101
    %v285 = vunpack.c.h.b16 %v101
    %v286 = vunpack.c.l.b16 %v102
    %v287 = vunpack.c.h.b16 %v102
    %v288 = vunpack.c.l.b16 %v103
    %v289 = vunpack.c.h.b16 %v103
    %v290 = vunpack.c.l.b16 %v104
    %v291 = vunpack.c.h.b16 %v104
    %v292 = vunpack.c.l.b16 %v105
    %v293 = vunpack.c.h.b16 %v105
    %v294 = vunpack.c.l.b16 %v106
    %v295 = vunpack.c.h.b16 %v106
    %v296 = vunpack.c.l.b16 %v107
    %v297 = vunpack.c.h.b16 %v107
    %v298 = vunpack.c.l.b16 %v108
    %v299 = vunpack.c.h.b16 %v108
    %v300 = vunpack.c.l.b16 %v109
    %v301 = vunpack.c.h.b16 %v109
    %v302 = vunpack.c.l.b16 %v110
    %v303 = vunpack.c.h.b16 %v110
    %v304 = vunpack.c.l.b16 %v111
    %v305 = vunpack.c.h.b16 %v111
    %v306 = vunpack.c.l.b16 %v112
    %v307 = vunpack.c.h.b16 %v112
    %v308 = vunpack.c.l.b16 %v113
    %v309 = vunpack.c.h.b16 %v113
    %v310 = vunpack.c.l.b16 %v114
    %v311 = vunpack.c.h.b16 %v114
    %v312 = vunpack.c.l.b16 %v115
    %v313 = vunpack.c.h.b16 %v115
    %v314 = vpack.c.b16 %v188, %v186
    %v315 = vpack.c.b16 %v189, %v187
    %v316 = vpack.c.b16 %v192, %v190
    %v317 = vpack.c.b16 %v193, %v191
    %v318 = vpack.c.b16 %v196, %v194
    %v319 = vpack.c.b16 %v197, %v195
    %v320 = vpack.c.b16 %v200, %v198
    %v321 = vpack.c.b16 %v201, %v199
    %v322 = vpack.c.b16 %v204, %v202
    %v323 = vpack.c.b16 %v205, %v203
    %v324 = vpack.c.b16 %v208, %v206
    %v325 = vpack.c.b16 %v209, %v207
    %v326 = vpack.c.b16 %v212, %v210
    %v327 = vpack.c.b16 %v213, %v211
    %v328 = vpack.c.b16 %v216, %v214
    %v329 = vpack.c.b16 %v217, %v215
    %v330 = vpack.c.b16 %v220, %v218
    %v331 = vpack.c.b16 %v221, %v219
    %v332 = vpack.c.b16 %v224, %v222
    %v333 = vpack.c.b16 %v225, %v223
    %v334 = vpack.c.b16 %v228, %v226
    %v335 = vpack.c.b16 %v229, %v227
    %v336 = vpack.c.b16 %v232, %v230
    %v337 = vpack.c.b16 %v233, %v231
    %v338 = vpack.c.b16 %v236, %v234
    %v339 = vpack.c.b16 %v237, %v235
    %v340 = vpack.c.b16 %v240, %v238
    %v341 = vpack.c.b16 %v241, %v239
    %v342 = vpack.c.b16 %v244, %v242
    %v343 = vpack.c.b16 %v245, %v243
    %v344 = vpack.c.b16 %v248, %v246
    %v345 = vpack.c.b16 %v249, %v247
    %v346 = vpack.c.b16 %v252, %v250
    %v347 = vpack.c.b16 %v253, %v251
    %v348 = vpack.c.b16 %v256, %v254
    %v349 = vpack.c.b16 %v257, %v255
    %v350 = vpack.c.b16 %v260, %v258
    %v351 = vpack.c.b16 %v261, %v259
    %v352 = vpack.c.b16 %v264, %v262
    %v353 = vpack.c.b16 %v265, %v263
    %v354 = vpack.c.b16 %v268, %v266
    %v355 = vpack.c.b16 %v269, %v267
    %v356 = vpack.c.b16 %v272, %v270
    %v357 = vpack.c.b16 %v273, %v271
    %v358 = vpack.c.b16 %v276, %v274
    %v359 = vpack.c.b16 %v277, %v275
    %v360 = vpack.c.b16 %v280, %v278
    %v361 = vpack.c.b16 %v281, %v279
    %v362 = vpack.c.b16 %v284, %v282
    %v363 = vpack.c.b16 %v285, %v283
    %v364 = vpack.c.b16 %v288, %v286
    %v365 = vpack.c.b16 %v289, %v287
    %v366 = vpack.c.b16 %v292, %v290
    %v367 = vpack.c.b16 %v293, %v291
    %v368 = vpack.c.b16 %v296, %v294
    %v369 = vpack.c.b16 %v297, %v295
    %v370 = vpack.c.b16 %v300, %v298
    %v371 = vpack.c.b16 %v301, %v299
    %v372 = vpack.c.b16 %v304, %v302
    %v373 = vpack.c.b16 %v305, %v303
    %v374 = vpack.c.b16 %v308, %v306
    %v375 = vpack.c.b16 %v309, %v307
    %v376 = vpack.c.b16 %v312, %v310
    %v377 = vpack.c.b16 %v313, %v311
    %442 = vmatpush.bf16.msra.mxu0 %v328
    %443 = vmatpush.bf16.msra.mxu0 %v326
    %444 = vmatpush.bf16.msra.mxu0 %v324
    %445 = vmatpush.bf16.msra.mxu0 %v322
    %446 = vmatpush.bf16.msra.mxu0 %v320
    %447 = vmatpush.bf16.msra.mxu0 %v318
    %448 = vmatpush.bf16.msra.mxu0 %v316
    %449 = vmatpush.bf16.msra.mxu0 %v314
    %450 = vmatmul.bf16.gmra.mxu0 %v48
    %v451 = vpop.f32.mrf.mxu0
    %v452 = vadd.f32 %v118, %v451
    %v453 = vpop.f32.mrf.mxu0
    %454 = vdwg.mxu0
    %455 = vmatpush.bf16.msra.mxu0 %v344
    %456 = vmatpush.bf16.msra.mxu0 %v342
    %457 = vmatpush.bf16.msra.mxu0 %v340
    %458 = vmatpush.bf16.msra.mxu0 %v338
    %459 = vmatpush.bf16.msra.mxu0 %v336
    %460 = vmatpush.bf16.msra.mxu0 %v334
    %461 = vmatpush.bf16.msra.mxu0 %v332
    %462 = vmatpush.bf16.msra.mxu0 %v330
    %463 = vmatmul.bf16.gmra.mxu0 %v49
    %v464 = vpop.f32.mrf.mxu0
    %v465 = vadd.f32 %v452, %v464
    %v466 = vpop.f32.mrf.mxu0
    %467 = vdwg.mxu0
    %468 = vmatpush.bf16.msra.mxu0 %v360
    %469 = vmatpush.bf16.msra.mxu0 %v358
    %470 = vmatpush.bf16.msra.mxu0 %v356
    %471 = vmatpush.bf16.msra.mxu0 %v354
    %472 = vmatpush.bf16.msra.mxu0 %v352
    %473 = vmatpush.bf16.msra.mxu0 %v350
    %474 = vmatpush.bf16.msra.mxu0 %v348
    %475 = vmatpush.bf16.msra.mxu0 %v346
    %476 = vmatmul.bf16.gmra.mxu0 %v50
    %v477 = vpop.f32.mrf.mxu0
    %v478 = vadd.f32 %v465, %v477
    %v479 = vpop.f32.mrf.mxu0
    %480 = vdwg.mxu0
    %481 = vmatpush.bf16.msra.mxu0 %v376
    %482 = vmatpush.bf16.msra.mxu0 %v374
    %483 = vmatpush.bf16.msra.mxu0 %v372
    %484 = vmatpush.bf16.msra.mxu0 %v370
    %485 = vmatpush.bf16.msra.mxu0 %v368
    %486 = vmatpush.bf16.msra.mxu0 %v366
    %487 = vmatpush.bf16.msra.mxu0 %v364
    %488 = vmatpush.bf16.msra.mxu0 %v362
    %489 = vmatmul.bf16.gmra.mxu0 %v51
    %v490 = vpop.f32.mrf.mxu0
    %v491 = vadd.f32 %v478, %v490
    %v492 = vpop.f32.mrf.mxu0
    %493 = vdwg.mxu0
    %494 = vmatpush.bf16.msra.mxu0 %v329
    %495 = vmatpush.bf16.msra.mxu0 %v327
    %496 = vmatpush.bf16.msra.mxu0 %v325
    %497 = vmatpush.bf16.msra.mxu0 %v323
    %498 = vmatpush.bf16.msra.mxu0 %v321
    %499 = vmatpush.bf16.msra.mxu0 %v319
    %500 = vmatpush.bf16.msra.mxu0 %v317
    %501 = vmatpush.bf16.msra.mxu0 %v315
    %502 = vmatmul.bf16.gmra.mxu0 %v48
    %v503 = vpop.f32.mrf.mxu0
    %v504 = vadd.f32 %v119, %v503
    %v505 = vpop.f32.mrf.mxu0
    %506 = vdwg.mxu0
    %507 = vmatpush.bf16.msra.mxu0 %v345
    %508 = vmatpush.bf16.msra.mxu0 %v343
    %509 = vmatpush.bf16.msra.mxu0 %v341
    %510 = vmatpush.bf16.msra.mxu0 %v339
    %511 = vmatpush.bf16.msra.mxu0 %v337
    %512 = vmatpush.bf16.msra.mxu0 %v335
    %513 = vmatpush.bf16.msra.mxu0 %v333
    %514 = vmatpush.bf16.msra.mxu0 %v331
    %515 = vmatmul.bf16.gmra.mxu0 %v49
    %v516 = vpop.f32.mrf.mxu0
    %v517 = vadd.f32 %v504, %v516
    %v518 = vpop.f32.mrf.mxu0
    %519 = vdwg.mxu0
    %520 = vmatpush.bf16.msra.mxu0 %v361
    %521 = vmatpush.bf16.msra.mxu0 %v359
    %522 = vmatpush.bf16.msra.mxu0 %v357
    %523 = vmatpush.bf16.msra.mxu0 %v355
    %524 = vmatpush.bf16.msra.mxu0 %v353
    %525 = vmatpush.bf16.msra.mxu0 %v351
    %526 = vmatpush.bf16.msra.mxu0 %v349
    %527 = vmatpush.bf16.msra.mxu0 %v347
    %528 = vmatmul.bf16.gmra.mxu0 %v50
    %v529 = vpop.f32.mrf.mxu0
    %v530 = vadd.f32 %v517, %v529
    %v531 = vpop.f32.mrf.mxu0
    %532 = vdwg.mxu0
    %533 = vmatpush.bf16.msra.mxu0 %v377
    %534 = vmatpush.bf16.msra.mxu0 %v375
    %535 = vmatpush.bf16.msra.mxu0 %v373
    %536 = vmatpush.bf16.msra.mxu0 %v371
    %537 = vmatpush.bf16.msra.mxu0 %v369
    %538 = vmatpush.bf16.msra.mxu0 %v367
    %539 = vmatpush.bf16.msra.mxu0 %v365
    %540 = vmatpush.bf16.msra.mxu0 %v363
    %541 = vmatmul.bf16.gmra.mxu0 %v51
    %v542 = vpop.f32.mrf.mxu0
    %v543 = vadd.f32 %v530, %v542
    %v544 = vpop.f32.mrf.mxu0
    %545 = vdwg.mxu0
    %v546 = vpack.c.bf16 %v543, %v491
    %547 = vst [vmem:[%s3] sm:$0xff] %v546
    // Predicated region
    $region22: #{feature_decoder_forward.6} parent=1 // pred_check
      _
    $region23: #{feature_decoder_forward.6} parent=1 // pred_check_branch
      %549 = sbr.rel (0) target = $region25
    $region24: #{feature_decoder_forward.6} parent=1 // pred_region
      _
    $region25: #{feature_decoder_forward.6} parent=1 // pred_fallthru
      _
    // Predicated region
    $region26: #{feature_decoder_forward.6} parent=1 // pred_check
      _
    $region27: #{feature_decoder_forward.6} parent=1 // pred_check_branch
      %551 = sbr.rel (0) target = $region29
    $region28: #{feature_decoder_forward.6} parent=1 // pred_region
      _
    $region29: #{feature_decoder_forward.6} parent=1 // pred_fallthru
      _
    %552 = vsyncpa [#allocation3], 1
    %553 = vsyncpa [#allocation5], 1

// kernel: feature_decoder_forward.8
$region0: #{feature_decoder_forward.8}
  #allocation0 [shape = 'u32[]', space=smem, size = 0x4, offset = 0x4, fixed_abs, tag = 'smem constant byte address 0x4 - core index']
  #allocation1 [shape = 'u32[72,128]{1,0:T(1,128)}', space=vmem, size = 0x9000, scoped, tag = 'internal scratch']
  %s0 = inlined_call_operand.vmem [shape: bf16[32,256], index: 0, kind: input, shape index: {}]
  %s1 = inlined_call_operand.hbm [shape: bf16[256,128], index: 1, kind: input, shape index: {}]
  %s2 = inlined_call_operand.hbm [shape: f32[1,128], index: 2, kind: input, shape index: {}]
  %s3 = inlined_call_operand.vmem [shape: bf16[32,128], index: 3, kind: output, shape index: {}]
  %s4 = sld [smem:[#allocation0]]
  $region30: #{feature_decoder_forward.8} parent=0
    _
  %s6 = ssub.s32 1, %s4
  %s7 = scalar_select 0, %s6, %s4
  $region1: #{feature_decoder_forward.8} parent=0
    #allocation2 [shape = 'u8[65536]{0}', space=vmem, size = 0x10000, scoped, tag = 'input window, operand 1, single buffered']
    #allocation3 [shape = 's32[1]{0}', space=sflag, size = 0x4, scoped, tag = 'scoped memory for feature_decoder_forward.8']
    #allocation4 [shape = 'u8[512]{0}', space=vmem, size = 0x400, scoped, tag = 'input window, operand 2, single buffered']
    #allocation5 [shape = 's32[1]{0}', space=sflag, size = 0x4, scoped, tag = 'scoped memory for feature_decoder_forward.8']
    %8 = vsyncpa [#allocation3], 0
    %9 = vsyncpa [#allocation5], 0
    // Predicated region
    $region2: #{feature_decoder_forward.8} parent=1 // pred_check
      _
    $region3: #{feature_decoder_forward.8} parent=1 // pred_check_branch
      %11 = sbr.rel (0) target = $region5
    $region4: #{feature_decoder_forward.8} parent=1 // pred_region
      _
    $region5: #{feature_decoder_forward.8} parent=1 // pred_fallthru
      _
    // Predicated region
    $region6: #{feature_decoder_forward.8} parent=1 // pred_check
      _
    $region7: #{feature_decoder_forward.8} parent=1 // pred_check_branch
      %13 = sbr.rel (0) target = $region9
    $region8: #{feature_decoder_forward.8} parent=1 // pred_region
      %15 = vsyncadd [#allocation3], 0
      %s16 = sshll.u32 %s1, 4
      %s17 = int_to_ptr.hbm [resolvable:$true] %s16
      %s18 = sshll.u32 [#allocation2], 4
      %s19 = int_to_ptr.vmem [resolvable:$true] %s18
      %24 = dma.hbm_to_vmem [thread:$0]  %s17, 2048, %s19, [#allocation3], 64, 64, 4
    $region9: #{feature_decoder_forward.8} parent=1 // pred_fallthru
      _
    // Predicated region
    $region10: #{feature_decoder_forward.8} parent=1 // pred_check
      _
    $region11: #{feature_decoder_forward.8} parent=1 // pred_check_branch
      %26 = sbr.rel (0) target = $region13
    $region12: #{feature_decoder_forward.8} parent=1 // pred_region
      %28 = vsyncadd [#allocation5], 0
      %s30 = sshll.u32 %s2, 4
      %s31 = int_to_ptr.hbm [resolvable:$true] %s30
      %s32 = sshll.u32 [#allocation4], 4
      %s33 = int_to_ptr.vmem [resolvable:$true] %s32
      %35 = dma.hbm_to_vmem [thread:$0]  %s31, 16, %s33, [#allocation5]
    $region13: #{feature_decoder_forward.8} parent=1 // pred_fallthru
      _
    // Predicated region
    $region14: #{feature_decoder_forward.8} parent=1 // pred_check
      _
    $region15: #{feature_decoder_forward.8} parent=1 // pred_check_branch
      %37 = sbr.rel (0) target = $region17
    $region16: #{feature_decoder_forward.8} parent=1 // pred_region
      %39 = dma.done [#allocation3], 2048
    $region17: #{feature_decoder_forward.8} parent=1 // pred_fallthru
      _
    // Predicated region
    $region18: #{feature_decoder_forward.8} parent=1 // pred_check
      _
    $region19: #{feature_decoder_forward.8} parent=1 // pred_check_branch
      %41 = sbr.rel (0) target = $region21
    $region20: #{feature_decoder_forward.8} parent=1 // pred_region
      %43 = dma.done [#allocation5], 16
    $region21: #{feature_decoder_forward.8} parent=1 // pred_fallthru
      _
    %v44 = vld [vmem:[%s0] sm:$0xff]
    %v45 = vld [vmem:[%s0 + $0x8] sm:$0xff]
    %v46 = vld [vmem:[%s0 + $0x10] sm:$0xff]
    %v47 = vld [vmem:[%s0 + $0x18] sm:$0xff]
    %v48 = vld [vmem:[#allocation2] sm:$0xf]
    %v49 = vld [vmem:[#allocation2 + $0x4] sm:$0xf]
    %v50 = vld [vmem:[#allocation2 + $0x8] sm:$0xf]
    %v51 = vld [vmem:[#allocation2 + $0xc] sm:$0xf]
    %v52 = vld [vmem:[#allocation2 + $0x10] sm:$0xf]
    %v53 = vld [vmem:[#allocation2 + $0x14] sm:$0xf]
    %v54 = vld [vmem:[#allocation2 + $0x18] sm:$0xf]
    %v55 = vld [vmem:[#allocation2 + $0x1c] sm:$0xf]
    %v56 = vld [vmem:[#allocation2 + $0x20] sm:$0xf]
    %v57 = vld [vmem:[#allocation2 + $0x24] sm:$0xf]
    %v58 = vld [vmem:[#allocation2 + $0x28] sm:$0xf]
    %v59 = vld [vmem:[#allocation2 + $0x2c] sm:$0xf]
    %v60 = vld [vmem:[#allocation2 + $0x30] sm:$0xf]
    %v61 = vld [vmem:[#allocation2 + $0x34] sm:$0xf]
    %v62 = vld [vmem:[#allocation2 + $0x38] sm:$0xf]
    %v63 = vld [vmem:[#allocation2 + $0x3c] sm:$0xf]
    %v64 = vld [vmem:[#allocation2 + $0x40] sm:$0xf]
    %v65 = vld [vmem:[#allocation2 + $0x44] sm:$0xf]
    %v66 = vld [vmem:[#allocation2 + $0x48] sm:$0xf]
    %v67 = vld [vmem:[#allocation2 + $0x4c] sm:$0xf]
    %v68 = vld [vmem:[#allocation2 + $0x50] sm:$0xf]
    %v69 = vld [vmem:[#allocation2 + $0x54] sm:$0xf]
    %v70 = vld [vmem:[#allocation2 + $0x58] sm:$0xf]
    %v71 = vld [vmem:[#allocation2 + $0x5c] sm:$0xf]
    %v72 = vld [vmem:[#allocation2 + $0x60] sm:$0xf]
    %v73 = vld [vmem:[#allocation2 + $0x64] sm:$0xf]
    %v74 = vld [vmem:[#allocation2 + $0x68] sm:$0xf]
    %v75 = vld [vmem:[#allocation2 + $0x6c] sm:$0xf]
    %v76 = vld [vmem:[#allocation2 + $0x70] sm:$0xf]
    %v77 = vld [vmem:[#allocation2 + $0x74] sm:$0xf]
    %v78 = vld [vmem:[#allocation2 + $0x78] sm:$0xf]
    %v79 = vld [vmem:[#allocation2 + $0x7c] sm:$0xf]
    %v80 = vld [vmem:[#allocation4] sm:$0x1]
    %v82 = vperm.slane %v80, 0
    %v88 = vunpack.c.l.b16 %v44
    %v89 = vunpack.c.h.b16 %v44
    %v90 = vunpack.c.l.b16 %v45
    %v91 = vunpack.c.h.b16 %v45
    %v92 = vunpack.c.l.b16 %v46
    %v93 = vunpack.c.h.b16 %v46
    %v94 = vunpack.c.l.b16 %v47
    %v95 = vunpack.c.h.b16 %v47
    %v96 = vpack.c.b16 %v90, %v88
    %v97 = vpack.c.b16 %v91, %v89
    %v98 = vpack.c.b16 %v94, %v92
    %v99 = vpack.c.b16 %v95, %v93
    %v136 = vunpack.c.l.b16 %v48
    %v137 = vunpack.c.l.b16 %v49
    %v138 = vunpack.c.l.b16 %v50
    %v139 = vunpack.c.l.b16 %v51
    %v140 = vunpack.c.l.b16 %v52
    %v141 = vunpack.c.l.b16 %v53
    %v142 = vunpack.c.l.b16 %v54
    %v143 = vunpack.c.l.b16 %v55
    %v144 = vunpack.c.l.b16 %v56
    %v145 = vunpack.c.l.b16 %v57
    %v146 = vunpack.c.l.b16 %v58
    %v147 = vunpack.c.l.b16 %v59
    %v148 = vunpack.c.l.b16 %v60
    %v149 = vunpack.c.l.b16 %v61
    %v150 = vunpack.c.l.b16 %v62
    %v151 = vunpack.c.l.b16 %v63
    %v152 = vunpack.c.l.b16 %v64
    %v153 = vunpack.c.l.b16 %v65
    %v154 = vunpack.c.l.b16 %v66
    %v155 = vunpack.c.l.b16 %v67
    %v156 = vunpack.c.l.b16 %v68
    %v157 = vunpack.c.l.b16 %v69
    %v158 = vunpack.c.l.b16 %v70
    %v159 = vunpack.c.l.b16 %v71
    %v160 = vunpack.c.l.b16 %v72
    %v161 = vunpack.c.l.b16 %v73
    %v162 = vunpack.c.l.b16 %v74
    %v163 = vunpack.c.l.b16 %v75
    %v164 = vunpack.c.l.b16 %v76
    %v165 = vunpack.c.l.b16 %v77
    %v166 = vunpack.c.l.b16 %v78
    %v167 = vunpack.c.l.b16 %v79
    %v168 = vpack.c.b16 %v137, %v136
    %v169 = vpack.c.b16 %v139, %v138
    %v170 = vpack.c.b16 %v141, %v140
    %v171 = vpack.c.b16 %v143, %v142
    %v172 = vpack.c.b16 %v145, %v144
    %v173 = vpack.c.b16 %v147, %v146
    %v174 = vpack.c.b16 %v149, %v148
    %v175 = vpack.c.b16 %v151, %v150
    %v176 = vpack.c.b16 %v153, %v152
    %v177 = vpack.c.b16 %v155, %v154
    %v178 = vpack.c.b16 %v157, %v156
    %v179 = vpack.c.b16 %v159, %v158
    %v180 = vpack.c.b16 %v161, %v160
    %v181 = vpack.c.b16 %v163, %v162
    %v182 = vpack.c.b16 %v165, %v164
    %v183 = vpack.c.b16 %v167, %v166
    %200 = vmatpush.bf16.msra.mxu0 %v175
    %201 = vmatpush.bf16.msra.mxu0 %v174
    %202 = vmatpush.bf16.msra.mxu0 %v173
    %203 = vmatpush.bf16.msra.mxu0 %v172
    %204 = vmatpush.bf16.msra.mxu0 %v171
    %205 = vmatpush.bf16.msra.mxu0 %v170
    %206 = vmatpush.bf16.msra.mxu0 %v169
    %207 = vmatpush.bf16.msra.mxu0 %v168
    %208 = vmatmul.bf16.gmra.mxu0 %v96
    %v209 = vpop.f32.mrf.mxu0
    %v210 = vadd.f32 %v82, %v209
    %v211 = vpop.f32.mrf.mxu0
    %v212 = vadd.f32 %v82, %v211
    %213 = vmatmul.bf16.gmra.mxu0 %v98
    %v214 = vpop.f32.mrf.mxu0
    %v215 = vadd.f32 %v82, %v214
    %v216 = vpop.f32.mrf.mxu0
    %v217 = vadd.f32 %v82, %v216
    %218 = vdwg.mxu0
    %219 = vmatpush.bf16.msra.mxu0 %v183
    %220 = vmatpush.bf16.msra.mxu0 %v182
    %221 = vmatpush.bf16.msra.mxu0 %v181
    %222 = vmatpush.bf16.msra.mxu0 %v180
    %223 = vmatpush.bf16.msra.mxu0 %v179
    %224 = vmatpush.bf16.msra.mxu0 %v178
    %225 = vmatpush.bf16.msra.mxu0 %v177
    %226 = vmatpush.bf16.msra.mxu0 %v176
    %227 = vmatmul.bf16.gmra.mxu0 %v97
    %v228 = vpop.f32.mrf.mxu0
    %v229 = vadd.f32 %v210, %v228
    %v230 = vpop.f32.mrf.mxu0
    %v231 = vadd.f32 %v212, %v230
    %232 = vmatmul.bf16.gmra.mxu0 %v99
    %v233 = vpop.f32.mrf.mxu0
    %v234 = vadd.f32 %v215, %v233
    %v235 = vpop.f32.mrf.mxu0
    %v236 = vadd.f32 %v217, %v235
    %237 = vdwg.mxu0
    %v238 = vpack.c.bf16 %v229, %v229
    %v239 = vpack.c.bf16 %v231, %v231
    %v240 = vpack.c.bf16 %v234, %v234
    %v241 = vpack.c.bf16 %v236, %v236
    %242 = vst [vmem:[%s3] sm:$0xf] %v238
    %243 = vst [vmem:[%s3 + $0x4] sm:$0xf] %v239
    %244 = vst [vmem:[%s3 + $0x8] sm:$0xf] %v240
    %245 = vst [vmem:[%s3 + $0xc] sm:$0xf] %v241
    // Predicated region
    $region22: #{feature_decoder_forward.8} parent=1 // pred_check
      _
    $region23: #{feature_decoder_forward.8} parent=1 // pred_check_branch
      %247 = sbr.rel (0) target = $region25
    $region24: #{feature_decoder_forward.8} parent=1 // pred_region
      _
    $region25: #{feature_decoder_forward.8} parent=1 // pred_fallthru
      _
    // Predicated region
    $region26: #{feature_decoder_forward.8} parent=1 // pred_check
      _
    $region27: #{feature_decoder_forward.8} parent=1 // pred_check_branch
      %249 = sbr.rel (0) target = $region29
    $region28: #{feature_decoder_forward.8} parent=1 // pred_region
      _
    $region29: #{feature_decoder_forward.8} parent=1 // pred_fallthru
      _
    %250 = vsyncpa [#allocation3], 1
    %251 = vsyncpa [#allocation5], 1

// kernel: feature_decoder_forward.10
$region0: #{feature_decoder_forward.10}
  #allocation0 [shape = 'u32[]', space=smem, size = 0x4, offset = 0x4, fixed_abs, tag = 'smem constant byte address 0x4 - core index']
  #allocation1 [shape = 'u32[72,128]{1,0:T(1,128)}', space=vmem, size = 0x9000, scoped, tag = 'internal scratch']
  %s0 = inlined_call_operand.vmem [shape: bf16[128,128], index: 0, kind: input, shape index: {}]
  %s1 = inlined_call_operand.vmem [shape: bf16[128,64], index: 1, kind: input, shape index: {}]
  %s2 = inlined_call_operand.hbm [shape: f32[1,64], index: 2, kind: input, shape index: {}]
  %s3 = inlined_call_operand.vmem [shape: bf16[128,64], index: 3, kind: output, shape index: {}]
  %s4 = sld [smem:[#allocation0]]
  $region26: #{feature_decoder_forward.10} parent=0
    _
  %s6 = ssub.s32 1, %s4
  %s7 = scalar_select 0, %s6, %s4
  $region1: #{feature_decoder_forward.10} parent=0
    #allocation2 [shape = 'u8[512]{0}', space=vmem, size = 0x400, scoped, tag = 'input window, operand 2, single buffered']
    #allocation3 [shape = 's32[1]{0}', space=sflag, size = 0x4, scoped, tag = 'scoped memory for feature_decoder_forward.10']
    %8 = vsyncpa [#allocation3], 0
    // Predicated region
    $region2: #{feature_decoder_forward.10} parent=1 // pred_check
      _
    $region3: #{feature_decoder_forward.10} parent=1 // pred_check_branch
      %10 = sbr.rel (0) target = $region5
    $region4: #{feature_decoder_forward.10} parent=1 // pred_region
      _
    $region5: #{feature_decoder_forward.10} parent=1 // pred_fallthru
      _
    // Predicated region
    $region6: #{feature_decoder_forward.10} parent=1 // pred_check
      _
    $region7: #{feature_decoder_forward.10} parent=1 // pred_check_branch
      %12 = sbr.rel (0) target = $region9
    $region8: #{feature_decoder_forward.10} parent=1 // pred_region
      _
    $region9: #{feature_decoder_forward.10} parent=1 // pred_fallthru
      _
    // Predicated region
    $region10: #{feature_decoder_forward.10} parent=1 // pred_check
      _
    $region11: #{feature_decoder_forward.10} parent=1 // pred_check_branch
      %14 = sbr.rel (0) target = $region13
    $region12: #{feature_decoder_forward.10} parent=1 // pred_region
      %16 = vsyncadd [#allocation3], 0
      %s18 = sshll.u32 %s2, 4
      %s19 = int_to_ptr.hbm [resolvable:$true] %s18
      %s20 = sshll.u32 [#allocation2], 4
      %s21 = int_to_ptr.vmem [resolvable:$true] %s20
      %23 = dma.hbm_to_vmem [thread:$0]  %s19, 16, %s21, [#allocation3]
    $region13: #{feature_decoder_forward.10} parent=1 // pred_fallthru
      _
    // Predicated region
    $region14: #{feature_decoder_forward.10} parent=1 // pred_check
      _
    $region15: #{feature_decoder_forward.10} parent=1 // pred_check_branch
      %25 = sbr.rel (0) target = $region17
    $region16: #{feature_decoder_forward.10} parent=1 // pred_region
      %27 = dma.done [#allocation3], 16
    $region17: #{feature_decoder_forward.10} parent=1 // pred_fallthru
      _
    %v28 = vld [vmem:[%s0] sm:$0xf]
    %v29 = vld [vmem:[%s0 + $0x4] sm:$0xf]
    %v30 = vld [vmem:[%s0 + $0x8] sm:$0xf]
    %v31 = vld [vmem:[%s0 + $0xc] sm:$0xf]
    %v32 = vld [vmem:[%s0 + $0x10] sm:$0xf]
    %v33 = vld [vmem:[%s0 + $0x14] sm:$0xf]
    %v34 = vld [vmem:[%s0 + $0x18] sm:$0xf]
    %v35 = vld [vmem:[%s0 + $0x1c] sm:$0xf]
    %v36 = vld [vmem:[%s0 + $0x20] sm:$0xf]
    %v37 = vld [vmem:[%s0 + $0x24] sm:$0xf]
    %v38 = vld [vmem:[%s0 + $0x28] sm:$0xf]
    %v39 = vld [vmem:[%s0 + $0x2c] sm:$0xf]
    %v40 = vld [vmem:[%s0 + $0x30] sm:$0xf]
    %v41 = vld [vmem:[%s0 + $0x34] sm:$0xf]
    %v42 = vld [vmem:[%s0 + $0x38] sm:$0xf]
    %v43 = vld [vmem:[%s0 + $0x3c] sm:$0xf]
    %v44 = vld [vmem:[%s1] sm:$0xf]
    %v45 = vld [vmem:[%s1 + $0x4] sm:$0xf]
    %v46 = vld [vmem:[%s1 + $0x8] sm:$0xf]
    %v47 = vld [vmem:[%s1 + $0xc] sm:$0xf]
    %v48 = vld [vmem:[%s1 + $0x10] sm:$0xf]
    %v49 = vld [vmem:[%s1 + $0x14] sm:$0xf]
    %v50 = vld [vmem:[%s1 + $0x18] sm:$0xf]
    %v51 = vld [vmem:[%s1 + $0x1c] sm:$0xf]
    %v52 = vld [vmem:[%s1 + $0x20] sm:$0xf]
    %v53 = vld [vmem:[%s1 + $0x24] sm:$0xf]
    %v54 = vld [vmem:[%s1 + $0x28] sm:$0xf]
    %v55 = vld [vmem:[%s1 + $0x2c] sm:$0xf]
    %v56 = vld [vmem:[%s1 + $0x30] sm:$0xf]
    %v57 = vld [vmem:[%s1 + $0x34] sm:$0xf]
    %v58 = vld [vmem:[%s1 + $0x38] sm:$0xf]
    %v59 = vld [vmem:[%s1 + $0x3c] sm:$0xf]
    %v60 = vld [vmem:[#allocation2] sm:$0x1]
    %v62 = vperm.slane %v60, 0
    %v80 = vunpack.c.l.b16 %v28
    %v81 = vunpack.c.l.b16 %v29
    %v82 = vunpack.c.l.b16 %v30
    %v83 = vunpack.c.l.b16 %v31
    %v84 = vunpack.c.l.b16 %v32
    %v85 = vunpack.c.l.b16 %v33
    %v86 = vunpack.c.l.b16 %v34
    %v87 = vunpack.c.l.b16 %v35
    %v88 = vunpack.c.l.b16 %v36
    %v89 = vunpack.c.l.b16 %v37
    %v90 = vunpack.c.l.b16 %v38
    %v91 = vunpack.c.l.b16 %v39
    %v92 = vunpack.c.l.b16 %v40
    %v93 = vunpack.c.l.b16 %v41
    %v94 = vunpack.c.l.b16 %v42
    %v95 = vunpack.c.l.b16 %v43
    %v96 = vpack.c.b16 %v81, %v80
    %v97 = vpack.c.b16 %v83, %v82
    %v98 = vpack.c.b16 %v85, %v84
    %v99 = vpack.c.b16 %v87, %v86
    %v100 = vpack.c.b16 %v89, %v88
    %v101 = vpack.c.b16 %v91, %v90
    %v102 = vpack.c.b16 %v93, %v92
    %v103 = vpack.c.b16 %v95, %v94
    %v128 = vunpack.c.l.b16 %v44
    %v129 = vunpack.c.l.b16 %v45
    %v130 = vunpack.c.l.b16 %v46
    %v131 = vunpack.c.l.b16 %v47
    %v132 = vunpack.c.l.b16 %v48
    %v133 = vunpack.c.l.b16 %v49
    %v134 = vunpack.c.l.b16 %v50
    %v135 = vunpack.c.l.b16 %v51
    %v136 = vunpack.c.l.b16 %v52
    %v137 = vunpack.c.l.b16 %v53
    %v138 = vunpack.c.l.b16 %v54
    %v139 = vunpack.c.l.b16 %v55
    %v140 = vunpack.c.l.b16 %v56
    %v141 = vunpack.c.l.b16 %v57
    %v142 = vunpack.c.l.b16 %v58
    %v143 = vunpack.c.l.b16 %v59
    %v144 = vpack.c.b16 %v129, %v128
    %v145 = vpack.c.b16 %v131, %v130
    %v146 = vpack.c.b16 %v133, %v132
    %v147 = vpack.c.b16 %v135, %v134
    %v148 = vpack.c.b16 %v137, %v136
    %v149 = vpack.c.b16 %v139, %v138
    %v150 = vpack.c.b16 %v141, %v140
    %v151 = vpack.c.b16 %v143, %v142
    %160 = vmatpush.bf16.msra.mxu0 %v151
    %161 = vmatpush.bf16.msra.mxu0 %v150
    %162 = vmatpush.bf16.msra.mxu0 %v149
    %163 = vmatpush.bf16.msra.mxu0 %v148
    %164 = vmatpush.bf16.msra.mxu0 %v147
    %165 = vmatpush.bf16.msra.mxu0 %v146
    %166 = vmatpush.bf16.msra.mxu0 %v145
    %167 = vmatpush.bf16.msra.mxu0 %v144
    %168 = vmatmul.bf16.gmra.mxu0 %v96
    %v169 = vpop.f32.mrf.mxu0
    %v170 = vadd.f32 %v62, %v169
    %v171 = vpop.f32.mrf.mxu0
    %v172 = vadd.f32 %v62, %v171
    %173 = vmatmul.bf16.gmra.mxu0 %v97
    %v174 = vpop.f32.mrf.mxu0
    %v175 = vadd.f32 %v62, %v174
    %v176 = vpop.f32.mrf.mxu0
    %v177 = vadd.f32 %v62, %v176
    %178 = vmatmul.bf16.gmra.mxu0 %v98
    %v179 = vpop.f32.mrf.mxu0
    %v180 = vadd.f32 %v62, %v179
    %v181 = vpop.f32.mrf.mxu0
    %v182 = vadd.f32 %v62, %v181
    %183 = vmatmul.bf16.gmra.mxu0 %v99
    %v184 = vpop.f32.mrf.mxu0
    %v185 = vadd.f32 %v62, %v184
    %v186 = vpop.f32.mrf.mxu0
    %v187 = vadd.f32 %v62, %v186
    %188 = vmatmul.bf16.gmra.mxu0 %v100
    %v189 = vpop.f32.mrf.mxu0
    %v190 = vadd.f32 %v62, %v189
    %v191 = vpop.f32.mrf.mxu0
    %v192 = vadd.f32 %v62, %v191
    %193 = vmatmul.bf16.gmra.mxu0 %v101
    %v194 = vpop.f32.mrf.mxu0
    %v195 = vadd.f32 %v62, %v194
    %v196 = vpop.f32.mrf.mxu0
    %v197 = vadd.f32 %v62, %v196
    %198 = vmatmul.bf16.gmra.mxu0 %v102
    %v199 = vpop.f32.mrf.mxu0
    %v200 = vadd.f32 %v62, %v199
    %v201 = vpop.f32.mrf.mxu0
    %v202 = vadd.f32 %v62, %v201
    %203 = vmatmul.bf16.gmra.mxu0 %v103
    %v204 = vpop.f32.mrf.mxu0
    %v205 = vadd.f32 %v62, %v204
    %v206 = vpop.f32.mrf.mxu0
    %v207 = vadd.f32 %v62, %v206
    %208 = vdwg.mxu0
    %v209 = vpack.c.bf16 %v170, %v170
    %v210 = vpack.c.bf16 %v172, %v172
    %v211 = vpack.c.bf16 %v175, %v175
    %v212 = vpack.c.bf16 %v177, %v177
    %v213 = vpack.c.bf16 %v180, %v180
    %v214 = vpack.c.bf16 %v182, %v182
    %v215 = vpack.c.bf16 %v185, %v185
    %v216 = vpack.c.bf16 %v187, %v187
    %v217 = vpack.c.bf16 %v190, %v190
    %v218 = vpack.c.bf16 %v192, %v192
    %v219 = vpack.c.bf16 %v195, %v195
    %v220 = vpack.c.bf16 %v197, %v197
    %v221 = vpack.c.bf16 %v200, %v200
    %v222 = vpack.c.bf16 %v202, %v202
    %v223 = vpack.c.bf16 %v205, %v205
    %v224 = vpack.c.bf16 %v207, %v207
    %vm225 = vcmask 519168
    %226 = vst.msk [vmem:[%s3] sm:$0xf] %vm225, %v209
    %227 = vst.msk [vmem:[%s3 + $0x4] sm:$0xf] %vm225, %v210
    %228 = vst.msk [vmem:[%s3 + $0x8] sm:$0xf] %vm225, %v211
    %229 = vst.msk [vmem:[%s3 + $0xc] sm:$0xf] %vm225, %v212
    %230 = vst.msk [vmem:[%s3 + $0x10] sm:$0xf] %vm225, %v213
    %231 = vst.msk [vmem:[%s3 + $0x14] sm:$0xf] %vm225, %v214
    %232 = vst.msk [vmem:[%s3 + $0x18] sm:$0xf] %vm225, %v215
    %233 = vst.msk [vmem:[%s3 + $0x1c] sm:$0xf] %vm225, %v216
    %234 = vst.msk [vmem:[%s3 + $0x20] sm:$0xf] %vm225, %v217
    %235 = vst.msk [vmem:[%s3 + $0x24] sm:$0xf] %vm225, %v218
    %236 = vst.msk [vmem:[%s3 + $0x28] sm:$0xf] %vm225, %v219
    %237 = vst.msk [vmem:[%s3 + $0x2c] sm:$0xf] %vm225, %v220
    %238 = vst.msk [vmem:[%s3 + $0x30] sm:$0xf] %vm225, %v221
    %239 = vst.msk [vmem:[%s3 + $0x34] sm:$0xf] %vm225, %v222
    %240 = vst.msk [vmem:[%s3 + $0x38] sm:$0xf] %vm225, %v223
    %241 = vst.msk [vmem:[%s3 + $0x3c] sm:$0xf] %vm225, %v224
    // Predicated region
    $region18: #{feature_decoder_forward.10} parent=1 // pred_check
      _
    $region19: #{feature_decoder_forward.10} parent=1 // pred_check_branch
      %243 = sbr.rel (0) target = $region21
    $region20: #{feature_decoder_forward.10} parent=1 // pred_region
      _
    $region21: #{feature_decoder_forward.10} parent=1 // pred_fallthru
      _
    // Predicated region
    $region22: #{feature_decoder_forward.10} parent=1 // pred_check
      _
    $region23: #{feature_decoder_forward.10} parent=1 // pred_check_branch
      %245 = sbr.rel (0) target = $region25
    $region24: #{feature_decoder_forward.10} parent=1 // pred_region
      _
    $region25: #{feature_decoder_forward.10} parent=1 // pred_fallthru
      _
    %246 = vsyncpa [#allocation3], 1

// kernel: feature_decoder_forward.9
$region0: #{feature_decoder_forward.9}
  #allocation0 [shape = 'u32[]', space=smem, size = 0x4, offset = 0x4, fixed_abs, tag = 'smem constant byte address 0x4 - core index']
  #allocation1 [shape = 'u32[72,128]{1,0:T(1,128)}', space=vmem, size = 0x9000, scoped, tag = 'internal scratch']
  #allocation2 [shape = 'bf16[10,24,128]{2,1,0:T(8,128)(2,1)}', space=vmem, size = 0xf000, scoped, tag = 'scratch operand']
  %s0 = inlined_call_operand.vmem [shape: bf16[2,4,8,128], index: 0, kind: input, shape index: {}]
  %s1 = inlined_call_operand.hbm [shape: f32[2,8,8,128], index: 1, kind: input, shape index: {}]
  %s2 = inlined_call_operand.hbm [shape: bf16[3,3,128,128], index: 2, kind: input, shape index: {}]
  %s3 = inlined_call_operand.hbm [shape: f32[1,128], index: 3, kind: input, shape index: {}]
  %s4 = inlined_call_operand.vmem [shape: bf16[2,8,8,128], index: 4, kind: output, shape index: {}]
  %s5 = sld [smem:[#allocation0]]
  $region61: #{feature_decoder_forward.9} parent=0
    _
  %s7 = ssub.s32 1, %s5
  %s8 = scalar_select 0, %s7, %s5
  $region1: #{feature_decoder_forward.9} parent=0
    #allocation3 [shape = 'u8[65536]{0}', space=vmem, size = 0x10000, scoped, tag = 'input window, operand 1']
    #allocation4 [shape = 's32[2]{0}', space=sflag, size = 0x8, scoped, tag = 'scoped memory for feature_decoder_forward.9']
    #allocation5 [shape = 'u8[294912]{0}', space=vmem, size = 0x48000, scoped, tag = 'input window, operand 2, single buffered']
    #allocation6 [shape = 's32[1]{0}', space=sflag, size = 0x4, scoped, tag = 'scoped memory for feature_decoder_forward.9']
    #allocation7 [shape = 'u8[512]{0}', space=vmem, size = 0x400, scoped, tag = 'input window, operand 3, single buffered']
    %9 = vsyncpa [#allocation4], 0
    %s10 = scalar_lea.sflag [#allocation4], 1
    %11 = vsyncpa %s10, 0
    %12 = vsyncpa [#allocation6], 0
    loop: start=0, step=1, limit=4
    $region2: #{feature_decoder_forward.9} parent=1 // loop_pre_header
      _
    $region3: #{feature_decoder_forward.9} parent=1 // loop_header
      %s14 = sphi 0, %s18
      %p15 = scmp.ge.s32.totalorder %s14, 4
      %s24 = sphi 0, %s26
      %s27 = sphi 0, %s24
      %s28 = sphi 0, %s27
      %s44 = sphi 0, %s28
      %s50 = sphi 0, %s52
      %s53 = sphi 0, %s50
      %s54 = sphi 0, %s53
      %s70 = sphi 0, %s54
      %s74 = sphi 0, %s74
      %s76 = sphi 0, %s74
      %s77 = sphi 0, %s76
      %s91 = sphi 0, %s77
      %s95 = sphi 0, %s95
      %s97 = sphi 0, %s95
      %s98 = sphi 0, %s97
      %s112 = sphi 0, %s98
      %s118 = sphi 0, %s120
      %s121 = sphi 0, %s118
      %s122 = sphi 0, %s121
      %s138 = sphi 0, %s122
    $region4: #{feature_decoder_forward.9} parent=1 // loop_header_branch
      %17 = sbr.rel (%p15) target = $region8
    $region5: #{feature_decoder_forward.9} parent=1 // loop_body
      %s19 = ssub.s32 %s14, 1
      %s20 = ssub.s32 %s14, 2
      %s21 = sadd.s32 %s14, 1
      %s22 = ssub.s32 %s14, %s21
      %p23 = scmp.eq.s32.totalorder %s22, 0
      %s25 = sadd.s32 %s24, 1
      %s26 = scalar_select %p23, %s24, %s25
      %p29 = pneg %p23
      %p30 = scmp.eq.s32.totalorder %s14, 1
      %p31 = por %p29, %p30
      %p32 = scmp.ne.s32.totalorder %s24, %s27
      %p33 = scmp.eq.s32.totalorder %s14, 0
      %p34 = por %p32, %p33
      %p35 = scmp.ne.s32.totalorder %s24, %s27
      %p36 = scmp.eq.s32.totalorder %s19, 1
      %p37 = por %p35, %p36
      %p38 = scmp.ne.s32.totalorder %s27, %s28
      %p39 = scmp.eq.s32.totalorder %s19, 0
      %p40 = por %p38, %p39
      %p41 = scmp.ne.s32.totalorder %s27, %s28
      %p42 = scmp.eq.s32.totalorder %s20, 1
      %p43 = por %p41, %p42
      %p45 = scmp.ne.s32.totalorder %s28, %s44
      %p46 = scmp.eq.s32.totalorder %s20, 0
      %p47 = por %p45, %p46
      %s48 = ssub.s32 %s14, %s21
      %p49 = scmp.eq.s32.totalorder %s48, 0
      %s51 = sadd.s32 %s50, 1
      %s52 = scalar_select %p49, %s50, %s51
      %p55 = pneg %p49
      %p56 = scmp.eq.s32.totalorder %s14, 1
      %p57 = por %p55, %p56
      %p58 = scmp.ne.s32.totalorder %s50, %s53
      %p59 = scmp.eq.s32.totalorder %s14, 0
      %p60 = por %p58, %p59
      %p61 = scmp.ne.s32.totalorder %s50, %s53
      %p62 = scmp.eq.s32.totalorder %s19, 1
      %p63 = por %p61, %p62
      %p64 = scmp.ne.s32.totalorder %s53, %s54
      %p65 = scmp.eq.s32.totalorder %s19, 0
      %p66 = por %p64, %p65
      %p67 = scmp.ne.s32.totalorder %s53, %s54
      %p68 = scmp.eq.s32.totalorder %s20, 1
      %p69 = por %p67, %p68
      %p71 = scmp.ne.s32.totalorder %s54, %s70
      %p72 = scmp.eq.s32.totalorder %s20, 0
      %p73 = por %p71, %p72
      %s75 = sadd.s32 %s74, 1
      %p78 = scmp.eq.s32.totalorder %s14, 1
      %p79 = scmp.ne.s32.totalorder %s74, %s76
      %p80 = scmp.eq.s32.totalorder %s14, 0
      %p81 = por %p79, %p80
      %p82 = scmp.ne.s32.totalorder %s74, %s76
      %p83 = scmp.eq.s32.totalorder %s19, 1
      %p84 = por %p82, %p83
      %p85 = scmp.ne.s32.totalorder %s76, %s77
      %p86 = scmp.eq.s32.totalorder %s19, 0
      %p87 = por %p85, %p86
      %p88 = scmp.ne.s32.totalorder %s76, %s77
      %p89 = scmp.eq.s32.totalorder %s20, 1
      %p90 = por %p88, %p89
      %p92 = scmp.ne.s32.totalorder %s77, %s91
      %p93 = scmp.eq.s32.totalorder %s20, 0
      %p94 = por %p92, %p93
      %s96 = sadd.s32 %s95, 1
      %p99 = scmp.eq.s32.totalorder %s14, 1
      %p100 = scmp.ne.s32.totalorder %s95, %s97
      %p101 = scmp.eq.s32.totalorder %s14, 0
      %p102 = por %p100, %p101
      %p103 = scmp.ne.s32.totalorder %s95, %s97
      %p104 = scmp.eq.s32.totalorder %s19, 1
      %p105 = por %p103, %p104
      %p106 = scmp.ne.s32.totalorder %s97, %s98
      %p107 = scmp.eq.s32.totalorder %s19, 0
      %p108 = por %p106, %p107
      %p109 = scmp.ne.s32.totalorder %s97, %s98
      %p110 = scmp.eq.s32.totalorder %s20, 1
      %p111 = por %p109, %p110
      %p113 = scmp.ne.s32.totalorder %s98, %s112
      %p114 = scmp.eq.s32.totalorder %s20, 0
      %p115 = por %p113, %p114
      %s116 = ssub.s32 %s14, %s21
      %p117 = scmp.eq.s32.totalorder %s116, 0
      %s119 = sadd.s32 %s118, 1
      %s120 = scalar_select %p117, %s118, %s119
      %p123 = pneg %p117
      %p124 = scmp.eq.s32.totalorder %s14, 1
      %p125 = por %p123, %p124
      %p126 = scmp.ne.s32.totalorder %s118, %s121
      %p127 = scmp.eq.s32.totalorder %s14, 0
      %p128 = por %p126, %p127
      %p129 = scmp.ne.s32.totalorder %s118, %s121
      %p130 = scmp.eq.s32.totalorder %s19, 1
      %p131 = por %p129, %p130
      %p132 = scmp.ne.s32.totalorder %s121, %s122
      %p133 = scmp.eq.s32.totalorder %s19, 0
      %p134 = por %p132, %p133
      %p135 = scmp.ne.s32.totalorder %s121, %s122
      %p136 = scmp.eq.s32.totalorder %s20, 1
      %p137 = por %p135, %p136
      %p139 = scmp.ne.s32.totalorder %s122, %s138
      %p140 = scmp.eq.s32.totalorder %s20, 0
      %p141 = por %p139, %p140
      %p142 = scmp.le.s32.totalorder 1, %s14
      %p143 = scmp.lt.s32.totalorder %s14, 3
      %p144 = pnand %p142, %p143
      %p145 = pneg %p144
      // Predicated region
      $region9: #{feature_decoder_forward.9} parent=5 // pred_check
        _
      $region10: #{feature_decoder_forward.9} parent=5 // pred_check_branch
        %147 = sbr.rel (%p144) target = $region12
      $region11: #{feature_decoder_forward.9} parent=5 // pred_region
        %s148 = ssub.s32 %s14, 1
        // Predicated region
        $region13: #{feature_decoder_forward.9} parent=11 // pred_check
          %p149 = pneg %p87
        $region14: #{feature_decoder_forward.9} parent=11 // pred_check_branch
          %151 = sbr.rel (%p149) target = $region16
        $region15: #{feature_decoder_forward.9} parent=11 // pred_region
          %153 = vsyncadd [#allocation6], 0
          %s154 = sshll.u32 %s2, 4
          %s155 = int_to_ptr.hbm [resolvable:$true] %s154
          %s156 = sshll.u32 [#allocation5], 4
          %s157 = int_to_ptr.vmem [resolvable:$true] %s156
          %162 = dma.hbm_to_vmem [thread:$0]  %s155, 9216, %s157, [#allocation6], 64, 64, 4
        $region16: #{feature_decoder_forward.9} parent=11 // pred_fallthru
          _
        // Predicated region
        $region17: #{feature_decoder_forward.9} parent=11 // pred_check
          %p163 = pneg %p108
        $region18: #{feature_decoder_forward.9} parent=11 // pred_check_branch
          %165 = sbr.rel (%p163) target = $region20
        $region19: #{feature_decoder_forward.9} parent=11 // pred_region
          %167 = vsyncadd [#allocation6], 0
          %s169 = sshll.u32 %s3, 4
          %s170 = int_to_ptr.hbm [resolvable:$true] %s169
          %s171 = sshll.u32 [#allocation7], 4
          %s172 = int_to_ptr.vmem [resolvable:$true] %s171
          %174 = dma.hbm_to_vmem [thread:$0]  %s170, 16, %s172, [#allocation6]
        $region20: #{feature_decoder_forward.9} parent=11 // pred_fallthru
          _
      $region12: #{feature_decoder_forward.9} parent=5 // pred_fallthru
        _
      %p175 = scmp.lt.s32.totalorder %s14, 2
      // Predicated region
      $region21: #{feature_decoder_forward.9} parent=5 // pred_check
        %p176 = pneg %p175
      $region22: #{feature_decoder_forward.9} parent=5 // pred_check_branch
        %178 = sbr.rel (%p176) target = $region24
      $region23: #{feature_decoder_forward.9} parent=5 // pred_region
        // Predicated region
        $region25: #{feature_decoder_forward.9} parent=23 // pred_check
          %p179 = pneg %p34
        $region26: #{feature_decoder_forward.9} parent=23 // pred_check_branch
          %181 = sbr.rel (%p179) target = $region28
        $region27: #{feature_decoder_forward.9} parent=23 // pred_region
          %p182 = scmp.lt.s32.totalorder %s14, 1
          %s183 = scalar_select %p182, %s14, 1
          %s184 = smul.addr %s183, 4
          %s185 = smul.addr %s184, 4
          %s186 = scalar_lea.vmem %s0, %s185
        $region28: #{feature_decoder_forward.9} parent=23 // pred_fallthru
          _
        // Predicated region
        $region29: #{feature_decoder_forward.9} parent=23 // pred_check
          %p187 = pneg %p60
        $region30: #{feature_decoder_forward.9} parent=23 // pred_check_branch
          %189 = sbr.rel (%p187) target = $region32
        $region31: #{feature_decoder_forward.9} parent=23 // pred_region
          %s190 = sand.u32 %s50, 1
          %s191 = scalar_lea.sflag [#allocation4], %s190
          %s192 = sand.u32 %s50, 1
          %s193 = smul.addr %s192, 64
          %s194 = scalar_lea.vmem [#allocation3], %s193
          %196 = vsyncadd %s191, 0
          %s197 = smul.addr %s14, 8
          %s198 = smul.addr %s197, 8
          %s199 = scalar_lea.hbm %s1, %s198
          %s200 = sshll.u32 %s199, 4
          %s201 = int_to_ptr.hbm [resolvable:$true] %s200
          %s202 = sshll.u32 %s194, 4
          %s203 = int_to_ptr.vmem [resolvable:$true] %s202
          %208 = dma.hbm_to_vmem [thread:$0]  %s201, 1024, %s203, %s191, 128, 128, 8
        $region32: #{feature_decoder_forward.9} parent=23 // pred_fallthru
          _
      $region24: #{feature_decoder_forward.9} parent=5 // pred_fallthru
        _
      %p209 = scmp.le.s32.totalorder 1, %s14
      %p210 = scmp.lt.s32.totalorder %s14, 3
      %p211 = pnand %p209, %p210
      %p212 = pneg %p211
      // Predicated region
      $region33: #{feature_decoder_forward.9} parent=5 // pred_check
        _
      $region34: #{feature_decoder_forward.9} parent=5 // pred_check_branch
        %214 = sbr.rel (%p211) target = $region36
      $region35: #{feature_decoder_forward.9} parent=5 // pred_region
        %s215 = ssub.s32 %s14, 1
        %s216 = sand.u32 %s53, 1
        %s217 = scalar_lea.sflag [#allocation4], %s216
        %s218 = sand.u32 %s53, 1
        %s219 = smul.addr %s218, 64
        %s220 = scalar_lea.vmem [#allocation3], %s219
        // Predicated region
        $region37: #{feature_decoder_forward.9} parent=35 // pred_check
          %p221 = pneg %p66
        $region38: #{feature_decoder_forward.9} parent=35 // pred_check_branch
          %223 = sbr.rel (%p221) target = $region40
        $region39: #{feature_decoder_forward.9} parent=35 // pred_region
          %225 = dma.done %s217, 1024
        $region40: #{feature_decoder_forward.9} parent=35 // pred_fallthru
          _
        // Predicated region
        $region41: #{feature_decoder_forward.9} parent=35 // pred_check
          %p226 = pneg %p87
        $region42: #{feature_decoder_forward.9} parent=35 // pred_check_branch
          %228 = sbr.rel (%p226) target = $region44
        $region43: #{feature_decoder_forward.9} parent=35 // pred_region
          %230 = dma.done [#allocation6], 9216
        $region44: #{feature_decoder_forward.9} parent=35 // pred_fallthru
          _
        // Predicated region
        $region45: #{feature_decoder_forward.9} parent=35 // pred_check
          %p231 = pneg %p108
        $region46: #{feature_decoder_forward.9} parent=35 // pred_check_branch
          %233 = sbr.rel (%p231) target = $region48
        $region47: #{feature_decoder_forward.9} parent=35 // pred_region
          %235 = dma.done [#allocation6], 16
        $region48: #{feature_decoder_forward.9} parent=35 // pred_fallthru
          _
        %p236 = scmp.lt.s32.totalorder %s19, 1
        %s237 = scalar_select %p236, %s19, 1
        %s238 = smul.addr %s237, 4
        %s239 = smul.addr %s238, 4
        %s240 = scalar_lea.vmem %s0, %s239
        %p241 = pneg %p40
        %p242 = pneg %p37
        %s243 = sand.u32 %s53, 1
        %s244 = scalar_lea.sflag [#allocation4], %s243
        %s245 = sand.u32 %s53, 1
        %s246 = smul.addr %s245, 64
        %s247 = scalar_lea.vmem [#allocation3], %s246
        %p248 = pneg %p66
        %p249 = pneg %p63
        %p250 = pneg %p87
        %p251 = pneg %p84
        %p252 = pneg %p108
        %p253 = pneg %p105
        %p254 = pneg %p134
        %p255 = pneg %p131
        %p256 = scmp.lt.s32.totalorder %s19, 1
        %s257 = scalar_select %p256, %s19, 1
        %s258 = smul.addr %s257, 8
        %s259 = smul.addr %s258, 4
        %s260 = scalar_lea.vmem %s4, %s259
        %p261 = scmp.lt.s32.totalorder %s19, 1
        %s262 = scalar_select %p261, %s19, 1
        %s263 = smul.addr %s262, 4
        %s264 = smul.addr %s263, 4
        %s265 = scalar_lea.vmem %s0, %s264
        %p266 = scmp.lt.s32.totalorder %s19, 1
        %s267 = scalar_select %p266, %s19, 1
        %s268 = smul.addr %s267, 8
        %s269 = smul.addr %s268, 4
        %s270 = scalar_lea.vmem %s4, %s269
        %272 = vst [vmem:[#allocation2] sm:$0xf] 0
        %273 = vst [vmem:[#allocation2 + $0x4] sm:$0xf] 0
        %274 = vst [vmem:[#allocation2 + $0x8] sm:$0xf] 0
        %s275 = scalar_lea.vmem [#allocation2], 108
        %276 = vst [vmem:[%s275] sm:$0xf] 0
        %277 = vst [vmem:[%s275 + $0x4] sm:$0xf] 0
        %278 = vst [vmem:[%s275 + $0x8] sm:$0xf] 0
        %s279 = scalar_lea.vmem [#allocation2], 12
        %vm280 = vcmask 1043459
        %vm281 = vsmask.f32 7950
        %vm282 = vmand %vm280, %vm281
        %v283 = vld [vmem:[%s279] sm:$0x8]
        %v284 = vsel %vm282, 0, %v283
        %285 = vst [vmem:[%s279] sm:$0x8] %v284
        %v286 = vld [vmem:[%s279 + $0xc] sm:$0x8]
        %v287 = vsel %vm282, 0, %v286
        %288 = vst [vmem:[%s279 + $0xc] sm:$0x8] %v287
        %v289 = vld [vmem:[%s279 + $0x18] sm:$0x8]
        %v290 = vsel %vm282, 0, %v289
        %291 = vst [vmem:[%s279 + $0x18] sm:$0x8] %v290
        %v292 = vld [vmem:[%s279 + $0x24] sm:$0x8]
        %v293 = vsel %vm282, 0, %v292
        %294 = vst [vmem:[%s279 + $0x24] sm:$0x8] %v293
        %v295 = vld [vmem:[%s279 + $0x30] sm:$0x8]
        %v296 = vsel %vm282, 0, %v295
        %297 = vst [vmem:[%s279 + $0x30] sm:$0x8] %v296
        %v298 = vld [vmem:[%s279 + $0x3c] sm:$0x8]
        %v299 = vsel %vm282, 0, %v298
        %300 = vst [vmem:[%s279 + $0x3c] sm:$0x8] %v299
        %v301 = vld [vmem:[%s279 + $0x48] sm:$0x8]
        %v302 = vsel %vm282, 0, %v301
        %303 = vst [vmem:[%s279 + $0x48] sm:$0x8] %v302
        %v304 = vld [vmem:[%s279 + $0x54] sm:$0x8]
        %v305 = vsel %vm282, 0, %v304
        %306 = vst [vmem:[%s279 + $0x54] sm:$0x8] %v305
        %vm307 = vcmask 1040384
        %vm308 = vsmask.f32 256
        %vm309 = vmand %vm307, %vm308
        %v310 = vld [vmem:[%s279 + $0x8] sm:$0x1]
        %v311 = vsel %vm309, 0, %v310
        %312 = vst [vmem:[%s279 + $0x8] sm:$0x1] %v311
        %v313 = vld [vmem:[%s279 + $0x14] sm:$0x1]
        %v314 = vsel %vm309, 0, %v313
        %315 = vst [vmem:[%s279 + $0x14] sm:$0x1] %v314
        %v316 = vld [vmem:[%s279 + $0x20] sm:$0x1]
        %v317 = vsel %vm309, 0, %v316
        %318 = vst [vmem:[%s279 + $0x20] sm:$0x1] %v317
        %v319 = vld [vmem:[%s279 + $0x2c] sm:$0x1]
        %v320 = vsel %vm309, 0, %v319
        %321 = vst [vmem:[%s279 + $0x2c] sm:$0x1] %v320
        %v322 = vld [vmem:[%s279 + $0x38] sm:$0x1]
        %v323 = vsel %vm309, 0, %v322
        %324 = vst [vmem:[%s279 + $0x38] sm:$0x1] %v323
        %v325 = vld [vmem:[%s279 + $0x44] sm:$0x1]
        %v326 = vsel %vm309, 0, %v325
        %327 = vst [vmem:[%s279 + $0x44] sm:$0x1] %v326
        %v328 = vld [vmem:[%s279 + $0x50] sm:$0x1]
        %v329 = vsel %vm309, 0, %v328
        %330 = vst [vmem:[%s279 + $0x50] sm:$0x1] %v329
        %v331 = vld [vmem:[%s279 + $0x5c] sm:$0x1]
        %v332 = vsel %vm309, 0, %v331
        %333 = vst [vmem:[%s279 + $0x5c] sm:$0x1] %v332
        %v334 = vld [vmem:[%s265] sm:$0xf]
        %v335 = vld [vmem:[%s265 + $0x4] sm:$0xf]
        %v336 = vld [vmem:[%s265 + $0x8] sm:$0xf]
        %v337 = vld [vmem:[%s265 + $0xc] sm:$0xf]
        %v338 = vunpack.c.l.bf16 %v334
        %v339 = vunpack.c.l.bf16 %v335
        %v340 = vunpack.c.l.bf16 %v336
        %v341 = vunpack.c.l.bf16 %v337
        %v342 = vld [vmem:[%s220] sm:$0xff]
        %v343 = vld [vmem:[%s220 + $0x8] sm:$0xff]
        %v344 = vld [vmem:[%s220 + $0x10] sm:$0xff]
        %v345 = vld [vmem:[%s220 + $0x18] sm:$0xff]
        %v346 = vld [vmem:[%s220 + $0x20] sm:$0xff]
        %v347 = vld [vmem:[%s220 + $0x28] sm:$0xff]
        %v348 = vld [vmem:[%s220 + $0x30] sm:$0xff]
        %v349 = vld [vmem:[%s220 + $0x38] sm:$0xff]
        %v350 = vadd.f32 %v338, %v342
        %v351 = vadd.f32 %v338, %v343
        %v352 = vadd.f32 %v339, %v344
        %v353 = vadd.f32 %v339, %v345
        %v354 = vadd.f32 %v340, %v346
        %v355 = vadd.f32 %v340, %v347
        %v356 = vadd.f32 %v341, %v348
        %v357 = vadd.f32 %v341, %v349
        %v358 = vpack.c.bf16 %v350, %v350
        %v359 = vpack.c.bf16 %v351, %v351
        %v360 = vpack.c.bf16 %v352, %v352
        %v361 = vpack.c.bf16 %v353, %v353
        %v362 = vpack.c.bf16 %v354, %v354
        %v363 = vpack.c.bf16 %v355, %v355
        %v364 = vpack.c.bf16 %v356, %v356
        %v365 = vpack.c.bf16 %v357, %v357
        %366 = vst [vmem:[%s279 + $0x4] sm:$0xf] %v358
        %367 = vst [vmem:[%s279 + $0x10] sm:$0xf] %v359
        %368 = vst [vmem:[%s279 + $0x1c] sm:$0xf] %v360
        %369 = vst [vmem:[%s279 + $0x28] sm:$0xf] %v361
        %370 = vst [vmem:[%s279 + $0x34] sm:$0xf] %v362
        %371 = vst [vmem:[%s279 + $0x40] sm:$0xf] %v363
        %372 = vst [vmem:[%s279 + $0x4c] sm:$0xf] %v364
        %373 = vst [vmem:[%s279 + $0x58] sm:$0xf] %v365
        %v374 = vld [vmem:[#allocation2] sm:$0x8]
        %v375 = vld [vmem:[#allocation2 + $0x4] sm:$0xf]
        %v376 = vld [vmem:[#allocation2 + $0xc] sm:$0x8]
        %v377 = vld [vmem:[#allocation2 + $0x10] sm:$0xf]
        %v378 = vld [vmem:[#allocation2 + $0x18] sm:$0x8]
        %v379 = vld [vmem:[#allocation2 + $0x1c] sm:$0xf]
        %v380 = vld [vmem:[#allocation2 + $0x24] sm:$0x8]
        %v381 = vld [vmem:[#allocation2 + $0x28] sm:$0xf]
        %v382 = vld [vmem:[#allocation2 + $0x30] sm:$0x8]
        %v383 = vld [vmem:[#allocation2 + $0x34] sm:$0xf]
        %v384 = vld [vmem:[#allocation2 + $0x3c] sm:$0x8]
        %v385 = vld [vmem:[#allocation2 + $0x40] sm:$0xf]
        %v386 = vld [vmem:[#allocation2 + $0x48] sm:$0x8]
        %v387 = vld [vmem:[#allocation2 + $0x4c] sm:$0xf]
        %v388 = vld [vmem:[#allocation2 + $0x54] sm:$0x8]
        %v389 = vld [vmem:[#allocation2 + $0x58] sm:$0xf]
        %v390 = vld [vmem:[#allocation2 + $0x60] sm:$0x8]
        %v391 = vld [vmem:[#allocation2 + $0x64] sm:$0xf]
        %v392 = vld [vmem:[#allocation2 + $0x6c] sm:$0x8]
        %v393 = vld [vmem:[#allocation2 + $0x70] sm:$0xf]
        %vm394 = vsmask.f32 4368
        %vm395 = vmor %vm308, %vm394
        %v397 = vshrl.u32 %v374, 16
        %v399 = vrot.slane %v397, 7
        %v400 = vrot.slane %v399, 4
        %v402 = vshrl.u32 %v375, 16
        %v404 = vrot.slane %v402, 7
        %v405 = vshll.u32 %v375, 16
        %v407 = vor.u32 %v404, %v405
        %v408 = vsel %vm395, %v400, %v407
        %v410 = vshrl.u32 %v376, 16
        %v412 = vrot.slane %v410, 7
        %v413 = vrot.slane %v412, 4
        %v415 = vshrl.u32 %v377, 16
        %v417 = vrot.slane %v415, 7
        %v418 = vshll.u32 %v377, 16
        %v420 = vor.u32 %v417, %v418
        %v421 = vsel %vm395, %v413, %v420
        %v423 = vshrl.u32 %v378, 16
        %v425 = vrot.slane %v423, 7
        %v426 = vrot.slane %v425, 4
        %v428 = vshrl.u32 %v379, 16
        %v430 = vrot.slane %v428, 7
        %v431 = vshll.u32 %v379, 16
        %v433 = vor.u32 %v430, %v431
        %v434 = vsel %vm395, %v426, %v433
        %v436 = vshrl.u32 %v380, 16
        %v438 = vrot.slane %v436, 7
        %v439 = vrot.slane %v438, 4
        %v441 = vshrl.u32 %v381, 16
        %v443 = vrot.slane %v441, 7
        %v444 = vshll.u32 %v381, 16
        %v446 = vor.u32 %v443, %v444
        %v447 = vsel %vm395, %v439, %v446
        %v449 = vshrl.u32 %v382, 16
        %v451 = vrot.slane %v449, 7
        %v452 = vrot.slane %v451, 4
        %v454 = vshrl.u32 %v383, 16
        %v456 = vrot.slane %v454, 7
        %v457 = vshll.u32 %v383, 16
        %v459 = vor.u32 %v456, %v457
        %v460 = vsel %vm395, %v452, %v459
        %v462 = vshrl.u32 %v384, 16
        %v464 = vrot.slane %v462, 7
        %v465 = vrot.slane %v464, 4
        %v467 = vshrl.u32 %v385, 16
        %v469 = vrot.slane %v467, 7
        %v470 = vshll.u32 %v385, 16
        %v472 = vor.u32 %v469, %v470
        %v473 = vsel %vm395, %v465, %v472
        %v475 = vshrl.u32 %v386, 16
        %v477 = vrot.slane %v475, 7
        %v478 = vrot.slane %v477, 4
        %v480 = vshrl.u32 %v387, 16
        %v482 = vrot.slane %v480, 7
        %v483 = vshll.u32 %v387, 16
        %v485 = vor.u32 %v482, %v483
        %v486 = vsel %vm395, %v478, %v485
        %v488 = vshrl.u32 %v388, 16
        %v490 = vrot.slane %v488, 7
        %v491 = vrot.slane %v490, 4
        %v493 = vshrl.u32 %v389, 16
        %v495 = vrot.slane %v493, 7
        %v496 = vshll.u32 %v389, 16
        %v498 = vor.u32 %v495, %v496
        %v499 = vsel %vm395, %v491, %v498
        %v501 = vshrl.u32 %v390, 16
        %v503 = vrot.slane %v501, 7
        %v504 = vrot.slane %v503, 4
        %v506 = vshrl.u32 %v391, 16
        %v508 = vrot.slane %v506, 7
        %v509 = vshll.u32 %v391, 16
        %v511 = vor.u32 %v508, %v509
        %v512 = vsel %vm395, %v504, %v511
        %v514 = vshrl.u32 %v392, 16
        %v516 = vrot.slane %v514, 7
        %v517 = vrot.slane %v516, 4
        %v519 = vshrl.u32 %v393, 16
        %v521 = vrot.slane %v519, 7
        %v522 = vshll.u32 %v393, 16
        %v524 = vor.u32 %v521, %v522
        %v525 = vsel %vm395, %v517, %v524
        %v526 = vld [vmem:[#allocation5] sm:$0xf]
        %v527 = vld [vmem:[#allocation5 + $0x4] sm:$0xf]
        %v528 = vld [vmem:[#allocation5 + $0x8] sm:$0xf]
        %v529 = vld [vmem:[#allocation5 + $0xc] sm:$0xf]
        %v530 = vld [vmem:[#allocation5 + $0x10] sm:$0xf]
        %v531 = vld [vmem:[#allocation5 + $0x14] sm:$0xf]
        %v532 = vld [vmem:[#allocation5 + $0x18] sm:$0xf]
        %v533 = vld [vmem:[#allocation5 + $0x1c] sm:$0xf]
        %v534 = vld [vmem:[#allocation5 + $0x20] sm:$0xf]
        %v535 = vld [vmem:[#allocation5 + $0x24] sm:$0xf]
        %v536 = vld [vmem:[#allocation5 + $0x28] sm:$0xf]
        %v537 = vld [vmem:[#allocation5 + $0x2c] sm:$0xf]
        %v538 = vld [vmem:[#allocation5 + $0x30] sm:$0xf]
        %v539 = vld [vmem:[#allocation5 + $0x34] sm:$0xf]
        %v540 = vld [vmem:[#allocation5 + $0x38] sm:$0xf]
        %v541 = vld [vmem:[#allocation5 + $0x3c] sm:$0xf]
        %s542 = scalar_lea.vmem [#allocation5], 192
        %v543 = vld [vmem:[%s542] sm:$0xf]
        %v544 = vld [vmem:[%s542 + $0x4] sm:$0xf]
        %v545 = vld [vmem:[%s542 + $0x8] sm:$0xf]
        %v546 = vld [vmem:[%s542 + $0xc] sm:$0xf]
        %v547 = vld [vmem:[%s542 + $0x10] sm:$0xf]
        %v548 = vld [vmem:[%s542 + $0x14] sm:$0xf]
        %v549 = vld [vmem:[%s542 + $0x18] sm:$0xf]
        %v550 = vld [vmem:[%s542 + $0x1c] sm:$0xf]
        %v551 = vld [vmem:[%s542 + $0x20] sm:$0xf]
        %v552 = vld [vmem:[%s542 + $0x24] sm:$0xf]
        %v553 = vld [vmem:[%s542 + $0x28] sm:$0xf]
        %v554 = vld [vmem:[%s542 + $0x2c] sm:$0xf]
        %v555 = vld [vmem:[%s542 + $0x30] sm:$0xf]
        %v556 = vld [vmem:[%s542 + $0x34] sm:$0xf]
        %v557 = vld [vmem:[%s542 + $0x38] sm:$0xf]
        %v558 = vld [vmem:[%s542 + $0x3c] sm:$0xf]
        %v559 = vunpack.c.l.b16 %v421
        %v560 = vunpack.c.l.b16 %v434
        %v561 = vunpack.c.l.b16 %v447
        %v562 = vunpack.c.l.b16 %v460
        %v563 = vunpack.c.l.b16 %v473
        %v564 = vunpack.c.l.b16 %v486
        %v565 = vunpack.c.l.b16 %v499
        %v566 = vunpack.c.l.b16 %v512
        %v567 = vpack.c.b16 %v560, %v559
        %v568 = vpack.c.b16 %v562, %v561
        %v569 = vpack.c.b16 %v564, %v563
        %v570 = vpack.c.b16 %v566, %v565
        %v591 = vunpack.c.l.b16 %v543
        %v592 = vunpack.c.l.b16 %v544
        %v593 = vunpack.c.l.b16 %v545
        %v594 = vunpack.c.l.b16 %v546
        %v595 = vunpack.c.l.b16 %v547
        %v596 = vunpack.c.l.b16 %v548
        %v597 = vunpack.c.l.b16 %v549
        %v598 = vunpack.c.l.b16 %v550
        %v599 = vunpack.c.l.b16 %v551
        %v600 = vunpack.c.l.b16 %v552
        %v601 = vunpack.c.l.b16 %v553
        %v602 = vunpack.c.l.b16 %v554
        %v603 = vunpack.c.l.b16 %v555
        %v604 = vunpack.c.l.b16 %v556
        %v605 = vunpack.c.l.b16 %v557
        %v606 = vunpack.c.l.b16 %v558
        %v607 = vpack.c.b16 %v592, %v591
        %v608 = vpack.c.b16 %v594, %v593
        %v609 = vpack.c.b16 %v596, %v595
        %v610 = vpack.c.b16 %v598, %v597
        %v611 = vpack.c.b16 %v600, %v599
        %v612 = vpack.c.b16 %v602, %v601
        %v613 = vpack.c.b16 %v604, %v603
        %v614 = vpack.c.b16 %v606, %v605
        %623 = vmatpush.bf16.msra.mxu0 %v614
        %624 = vmatpush.bf16.msra.mxu0 %v613
        %625 = vmatpush.bf16.msra.mxu0 %v612
        %626 = vmatpush.bf16.msra.mxu0 %v611
        %627 = vmatpush.bf16.msra.mxu0 %v610
        %628 = vmatpush.bf16.msra.mxu0 %v609
        %629 = vmatpush.bf16.msra.mxu0 %v608
        %630 = vmatpush.bf16.msra.mxu0 %v607
        %631 = vmatmul.bf16.gmra.mxu0 %v567
        %v632 = vpop.f32.mrf.mxu0
        %v633 = vadd.f32 0.0, %v632
        %v634 = vpop.f32.mrf.mxu0
        %v635 = vadd.f32 0.0, %v634
        %636 = vmatmul.bf16.gmra.mxu0 %v568
        %v637 = vpop.f32.mrf.mxu0
        %v638 = vadd.f32 0.0, %v637
        %v639 = vpop.f32.mrf.mxu0
        %v640 = vadd.f32 0.0, %v639
        %641 = vmatmul.bf16.gmra.mxu0 %v569
        %v642 = vpop.f32.mrf.mxu0
        %v643 = vadd.f32 0.0, %v642
        %v644 = vpop.f32.mrf.mxu0
        %v645 = vadd.f32 0.0, %v644
        %646 = vmatmul.bf16.gmra.mxu0 %v570
        %v647 = vpop.f32.mrf.mxu0
        %v648 = vadd.f32 0.0, %v647
        %v649 = vpop.f32.mrf.mxu0
        %v650 = vadd.f32 0.0, %v649
        %651 = vdwg.mxu0
        %v652 = vunpack.c.l.b16 %v408
        %v653 = vpack.c.b16 %v559, %v652
        %v654 = vpack.c.b16 %v561, %v560
        %v655 = vpack.c.b16 %v563, %v562
        %v656 = vpack.c.b16 %v565, %v564
        %v677 = vunpack.c.l.b16 %v526
        %v678 = vunpack.c.l.b16 %v527
        %v679 = vunpack.c.l.b16 %v528
        %v680 = vunpack.c.l.b16 %v529
        %v681 = vunpack.c.l.b16 %v530
        %v682 = vunpack.c.l.b16 %v531
        %v683 = vunpack.c.l.b16 %v532
        %v684 = vunpack.c.l.b16 %v533
        %v685 = vunpack.c.l.b16 %v534
        %v686 = vunpack.c.l.b16 %v535
        %v687 = vunpack.c.l.b16 %v536
        %v688 = vunpack.c.l.b16 %v537
        %v689 = vunpack.c.l.b16 %v538
        %v690 = vunpack.c.l.b16 %v539
        %v691 = vunpack.c.l.b16 %v540
        %v692 = vunpack.c.l.b16 %v541
        %v693 = vpack.c.b16 %v678, %v677
        %v694 = vpack.c.b16 %v680, %v679
        %v695 = vpack.c.b16 %v682, %v681
        %v696 = vpack.c.b16 %v684, %v683
        %v697 = vpack.c.b16 %v686, %v685
        %v698 = vpack.c.b16 %v688, %v687
        %v699 = vpack.c.b16 %v690, %v689
        %v700 = vpack.c.b16 %v692, %v691
        %709 = vmatpush.bf16.msra.mxu0 %v700
        %710 = vmatpush.bf16.msra.mxu0 %v699
        %711 = vmatpush.bf16.msra.mxu0 %v698
        %712 = vmatpush.bf16.msra.mxu0 %v697
        %713 = vmatpush.bf16.msra.mxu0 %v696
        %714 = vmatpush.bf16.msra.mxu0 %v695
        %715 = vmatpush.bf16.msra.mxu0 %v694
        %716 = vmatpush.bf16.msra.mxu0 %v693
        %717 = vmatmul.bf16.gmra.mxu0 %v653
        %v718 = vpop.f32.mrf.mxu0
        %v719 = vadd.f32 %v633, %v718
        %v720 = vpop.f32.mrf.mxu0
        %v721 = vadd.f32 %v635, %v720
        %722 = vmatmul.bf16.gmra.mxu0 %v654
        %v723 = vpop.f32.mrf.mxu0
        %v724 = vadd.f32 %v638, %v723
        %v725 = vpop.f32.mrf.mxu0
        %v726 = vadd.f32 %v640, %v725
        %727 = vmatmul.bf16.gmra.mxu0 %v655
        %v728 = vpop.f32.mrf.mxu0
        %v729 = vadd.f32 %v643, %v728
        %v730 = vpop.f32.mrf.mxu0
        %v731 = vadd.f32 %v645, %v730
        %732 = vmatmul.bf16.gmra.mxu0 %v656
        %v733 = vpop.f32.mrf.mxu0
        %v734 = vadd.f32 %v648, %v733
        %v735 = vpop.f32.mrf.mxu0
        %v736 = vadd.f32 %v650, %v735
        %737 = vdwg.mxu0
        %s738 = scalar_lea.vmem [#allocation5], 384
        %v739 = vld [vmem:[%s738] sm:$0xf]
        %v740 = vld [vmem:[%s738 + $0x4] sm:$0xf]
        %v741 = vld [vmem:[%s738 + $0x8] sm:$0xf]
        %v742 = vld [vmem:[%s738 + $0xc] sm:$0xf]
        %v743 = vld [vmem:[%s738 + $0x10] sm:$0xf]
        %v744 = vld [vmem:[%s738 + $0x14] sm:$0xf]
        %v745 = vld [vmem:[%s738 + $0x18] sm:$0xf]
        %v746 = vld [vmem:[%s738 + $0x1c] sm:$0xf]
        %v747 = vld [vmem:[%s738 + $0x20] sm:$0xf]
        %v748 = vld [vmem:[%s738 + $0x24] sm:$0xf]
        %v749 = vld [vmem:[%s738 + $0x28] sm:$0xf]
        %v750 = vld [vmem:[%s738 + $0x2c] sm:$0xf]
        %v751 = vld [vmem:[%s738 + $0x30] sm:$0xf]
        %v752 = vld [vmem:[%s738 + $0x34] sm:$0xf]
        %v753 = vld [vmem:[%s738 + $0x38] sm:$0xf]
        %v754 = vld [vmem:[%s738 + $0x3c] sm:$0xf]
        %v755 = vunpack.c.l.b16 %v525
        %v756 = vpack.c.b16 %v755, %v566
        %v774 = vunpack.c.l.b16 %v739
        %v775 = vunpack.c.l.b16 %v740
        %v776 = vunpack.c.l.b16 %v741
        %v777 = vunpack.c.l.b16 %v742
        %v778 = vunpack.c.l.b16 %v743
        %v779 = vunpack.c.l.b16 %v744
        %v780 = vunpack.c.l.b16 %v745
        %v781 = vunpack.c.l.b16 %v746
        %v782 = vunpack.c.l.b16 %v747
        %v783 = vunpack.c.l.b16 %v748
        %v784 = vunpack.c.l.b16 %v749
        %v785 = vunpack.c.l.b16 %v750
        %v786 = vunpack.c.l.b16 %v751
        %v787 = vunpack.c.l.b16 %v752
        %v788 = vunpack.c.l.b16 %v753
        %v789 = vunpack.c.l.b16 %v754
        %v790 = vpack.c.b16 %v775, %v774
        %v791 = vpack.c.b16 %v777, %v776
        %v792 = vpack.c.b16 %v779, %v778
        %v793 = vpack.c.b16 %v781, %v780
        %v794 = vpack.c.b16 %v783, %v782
        %v795 = vpack.c.b16 %v785, %v784
        %v796 = vpack.c.b16 %v787, %v786
        %v797 = vpack.c.b16 %v789, %v788
        %806 = vmatpush.bf16.msra.mxu0 %v797
        %807 = vmatpush.bf16.msra.mxu0 %v796
        %808 = vmatpush.bf16.msra.mxu0 %v795
        %809 = vmatpush.bf16.msra.mxu0 %v794
        %810 = vmatpush.bf16.msra.mxu0 %v793
        %811 = vmatpush.bf16.msra.mxu0 %v792
        %812 = vmatpush.bf16.msra.mxu0 %v791
        %813 = vmatpush.bf16.msra.mxu0 %v790
        %814 = vmatmul.bf16.gmra.mxu0 %v654
        %v815 = vpop.f32.mrf.mxu0
        %v816 = vadd.f32 0.0, %v815
        %v817 = vpop.f32.mrf.mxu0
        %v818 = vadd.f32 0.0, %v817
        %819 = vmatmul.bf16.gmra.mxu0 %v655
        %v820 = vpop.f32.mrf.mxu0
        %v821 = vadd.f32 0.0, %v820
        %v822 = vpop.f32.mrf.mxu0
        %v823 = vadd.f32 0.0, %v822
        %824 = vmatmul.bf16.gmra.mxu0 %v656
        %v825 = vpop.f32.mrf.mxu0
        %v826 = vadd.f32 0.0, %v825
        %v827 = vpop.f32.mrf.mxu0
        %v828 = vadd.f32 0.0, %v827
        %829 = vmatmul.bf16.gmra.mxu0 %v756
        %v830 = vpop.f32.mrf.mxu0
        %v831 = vadd.f32 0.0, %v830
        %v832 = vpop.f32.mrf.mxu0
        %v833 = vadd.f32 0.0, %v832
        %834 = vdwg.mxu0
        %v835 = vadd.f32 %v719, %v816
        %v836 = vadd.f32 %v721, %v818
        %v837 = vadd.f32 %v724, %v821
        %v838 = vadd.f32 %v726, %v823
        %v839 = vadd.f32 %v729, %v826
        %v840 = vadd.f32 %v731, %v828
        %v841 = vadd.f32 %v734, %v831
        %v842 = vadd.f32 %v736, %v833
        %s843 = scalar_lea.vmem [#allocation5], 64
        %v844 = vld [vmem:[%s843] sm:$0xf]
        %v845 = vld [vmem:[%s843 + $0x4] sm:$0xf]
        %v846 = vld [vmem:[%s843 + $0x8] sm:$0xf]
        %v847 = vld [vmem:[%s843 + $0xc] sm:$0xf]
        %v848 = vld [vmem:[%s843 + $0x10] sm:$0xf]
        %v849 = vld [vmem:[%s843 + $0x14] sm:$0xf]
        %v850 = vld [vmem:[%s843 + $0x18] sm:$0xf]
        %v851 = vld [vmem:[%s843 + $0x1c] sm:$0xf]
        %v852 = vld [vmem:[%s843 + $0x20] sm:$0xf]
        %v853 = vld [vmem:[%s843 + $0x24] sm:$0xf]
        %v854 = vld [vmem:[%s843 + $0x28] sm:$0xf]
        %v855 = vld [vmem:[%s843 + $0x2c] sm:$0xf]
        %v856 = vld [vmem:[%s843 + $0x30] sm:$0xf]
        %v857 = vld [vmem:[%s843 + $0x34] sm:$0xf]
        %v858 = vld [vmem:[%s843 + $0x38] sm:$0xf]
        %v859 = vld [vmem:[%s843 + $0x3c] sm:$0xf]
        %s860 = scalar_lea.vmem [#allocation5], 256
        %v861 = vld [vmem:[%s860] sm:$0xf]
        %v862 = vld [vmem:[%s860 + $0x4] sm:$0xf]
        %v863 = vld [vmem:[%s860 + $0x8] sm:$0xf]
        %v864 = vld [vmem:[%s860 + $0xc] sm:$0xf]
        %v865 = vld [vmem:[%s860 + $0x10] sm:$0xf]
        %v866 = vld [vmem:[%s860 + $0x14] sm:$0xf]
        %v867 = vld [vmem:[%s860 + $0x18] sm:$0xf]
        %v868 = vld [vmem:[%s860 + $0x1c] sm:$0xf]
        %v869 = vld [vmem:[%s860 + $0x20] sm:$0xf]
        %v870 = vld [vmem:[%s860 + $0x24] sm:$0xf]
        %v871 = vld [vmem:[%s860 + $0x28] sm:$0xf]
        %v872 = vld [vmem:[%s860 + $0x2c] sm:$0xf]
        %v873 = vld [vmem:[%s860 + $0x30] sm:$0xf]
        %v874 = vld [vmem:[%s860 + $0x34] sm:$0xf]
        %v875 = vld [vmem:[%s860 + $0x38] sm:$0xf]
        %v876 = vld [vmem:[%s860 + $0x3c] sm:$0xf]
        %v885 = vunpack.c.l.b16 %v377
        %v886 = vunpack.c.l.b16 %v379
        %v887 = vunpack.c.l.b16 %v381
        %v888 = vunpack.c.l.b16 %v383
        %v889 = vunpack.c.l.b16 %v385
        %v890 = vunpack.c.l.b16 %v387
        %v891 = vunpack.c.l.b16 %v389
        %v892 = vunpack.c.l.b16 %v391
        %v893 = vpack.c.b16 %v886, %v885
        %v894 = vpack.c.b16 %v888, %v887
        %v895 = vpack.c.b16 %v890, %v889
        %v896 = vpack.c.b16 %v892, %v891
        %v917 = vunpack.c.l.b16 %v861
        %v918 = vunpack.c.l.b16 %v862
        %v919 = vunpack.c.l.b16 %v863
        %v920 = vunpack.c.l.b16 %v864
        %v921 = vunpack.c.l.b16 %v865
        %v922 = vunpack.c.l.b16 %v866
        %v923 = vunpack.c.l.b16 %v867
        %v924 = vunpack.c.l.b16 %v868
        %v925 = vunpack.c.l.b16 %v869
        %v926 = vunpack.c.l.b16 %v870
        %v927 = vunpack.c.l.b16 %v871
        %v928 = vunpack.c.l.b16 %v872
        %v929 = vunpack.c.l.b16 %v873
        %v930 = vunpack.c.l.b16 %v874
        %v931 = vunpack.c.l.b16 %v875
        %v932 = vunpack.c.l.b16 %v876
        %v933 = vpack.c.b16 %v918, %v917
        %v934 = vpack.c.b16 %v920, %v919
        %v935 = vpack.c.b16 %v922, %v921
        %v936 = vpack.c.b16 %v924, %v923
        %v937 = vpack.c.b16 %v926, %v925
        %v938 = vpack.c.b16 %v928, %v927
        %v939 = vpack.c.b16 %v930, %v929
        %v940 = vpack.c.b16 %v932, %v931
        %949 = vmatpush.bf16.msra.mxu0 %v940
        %950 = vmatpush.bf16.msra.mxu0 %v939
        %951 = vmatpush.bf16.msra.mxu0 %v938
        %952 = vmatpush.bf16.msra.mxu0 %v937
        %953 = vmatpush.bf16.msra.mxu0 %v936
        %954 = vmatpush.bf16.msra.mxu0 %v935
        %955 = vmatpush.bf16.msra.mxu0 %v934
        %956 = vmatpush.bf16.msra.mxu0 %v933
        %957 = vmatmul.bf16.gmra.mxu0 %v893
        %v958 = vpop.f32.mrf.mxu0
        %v959 = vadd.f32 0.0, %v958
        %v960 = vpop.f32.mrf.mxu0
        %v961 = vadd.f32 0.0, %v960
        %962 = vmatmul.bf16.gmra.mxu0 %v894
        %v963 = vpop.f32.mrf.mxu0
        %v964 = vadd.f32 0.0, %v963
        %v965 = vpop.f32.mrf.mxu0
        %v966 = vadd.f32 0.0, %v965
        %967 = vmatmul.bf16.gmra.mxu0 %v895
        %v968 = vpop.f32.mrf.mxu0
        %v969 = vadd.f32 0.0, %v968
        %v970 = vpop.f32.mrf.mxu0
        %v971 = vadd.f32 0.0, %v970
        %972 = vmatmul.bf16.gmra.mxu0 %v896
        %v973 = vpop.f32.mrf.mxu0
        %v974 = vadd.f32 0.0, %v973
        %v975 = vpop.f32.mrf.mxu0
        %v976 = vadd.f32 0.0, %v975
        %977 = vdwg.mxu0
        %v979 = vunpack.c.l.b16 %v375
        %v980 = vpack.c.b16 %v885, %v979
        %v981 = vpack.c.b16 %v887, %v886
        %v982 = vpack.c.b16 %v889, %v888
        %v983 = vpack.c.b16 %v891, %v890
        %v1004 = vunpack.c.l.b16 %v844
        %v1005 = vunpack.c.l.b16 %v845
        %v1006 = vunpack.c.l.b16 %v846
        %v1007 = vunpack.c.l.b16 %v847
        %v1008 = vunpack.c.l.b16 %v848
        %v1009 = vunpack.c.l.b16 %v849
        %v1010 = vunpack.c.l.b16 %v850
        %v1011 = vunpack.c.l.b16 %v851
        %v1012 = vunpack.c.l.b16 %v852
        %v1013 = vunpack.c.l.b16 %v853
        %v1014 = vunpack.c.l.b16 %v854
        %v1015 = vunpack.c.l.b16 %v855
        %v1016 = vunpack.c.l.b16 %v856
        %v1017 = vunpack.c.l.b16 %v857
        %v1018 = vunpack.c.l.b16 %v858
        %v1019 = vunpack.c.l.b16 %v859
        %v1020 = vpack.c.b16 %v1005, %v1004
        %v1021 = vpack.c.b16 %v1007, %v1006
        %v1022 = vpack.c.b16 %v1009, %v1008
        %v1023 = vpack.c.b16 %v1011, %v1010
        %v1024 = vpack.c.b16 %v1013, %v1012
        %v1025 = vpack.c.b16 %v1015, %v1014
        %v1026 = vpack.c.b16 %v1017, %v1016
        %v1027 = vpack.c.b16 %v1019, %v1018
        %1036 = vmatpush.bf16.msra.mxu0 %v1027
        %1037 = vmatpush.bf16.msra.mxu0 %v1026
        %1038 = vmatpush.bf16.msra.mxu0 %v1025
        %1039 = vmatpush.bf16.msra.mxu0 %v1024
        %1040 = vmatpush.bf16.msra.mxu0 %v1023
        %1041 = vmatpush.bf16.msra.mxu0 %v1022
        %1042 = vmatpush.bf16.msra.mxu0 %v1021
        %1043 = vmatpush.bf16.msra.mxu0 %v1020
        %1044 = vmatmul.bf16.gmra.mxu0 %v980
        %v1045 = vpop.f32.mrf.mxu0
        %v1046 = vadd.f32 %v959, %v1045
        %v1047 = vpop.f32.mrf.mxu0
        %v1048 = vadd.f32 %v961, %v1047
        %1049 = vmatmul.bf16.gmra.mxu0 %v981
        %v1050 = vpop.f32.mrf.mxu0
        %v1051 = vadd.f32 %v964, %v1050
        %v1052 = vpop.f32.mrf.mxu0
        %v1053 = vadd.f32 %v966, %v1052
        %1054 = vmatmul.bf16.gmra.mxu0 %v982
        %v1055 = vpop.f32.mrf.mxu0
        %v1056 = vadd.f32 %v969, %v1055
        %v1057 = vpop.f32.mrf.mxu0
        %v1058 = vadd.f32 %v971, %v1057
        %1059 = vmatmul.bf16.gmra.mxu0 %v983
        %v1060 = vpop.f32.mrf.mxu0
        %v1061 = vadd.f32 %v974, %v1060
        %v1062 = vpop.f32.mrf.mxu0
        %v1063 = vadd.f32 %v976, %v1062
        %1064 = vdwg.mxu0
        %s1065 = scalar_lea.vmem [#allocation5], 448
        %v1066 = vld [vmem:[%s1065] sm:$0xf]
        %v1067 = vld [vmem:[%s1065 + $0x4] sm:$0xf]
        %v1068 = vld [vmem:[%s1065 + $0x8] sm:$0xf]
        %v1069 = vld [vmem:[%s1065 + $0xc] sm:$0xf]
        %v1070 = vld [vmem:[%s1065 + $0x10] sm:$0xf]
        %v1071 = vld [vmem:[%s1065 + $0x14] sm:$0xf]
        %v1072 = vld [vmem:[%s1065 + $0x18] sm:$0xf]
        %v1073 = vld [vmem:[%s1065 + $0x1c] sm:$0xf]
        %v1074 = vld [vmem:[%s1065 + $0x20] sm:$0xf]
        %v1075 = vld [vmem:[%s1065 + $0x24] sm:$0xf]
        %v1076 = vld [vmem:[%s1065 + $0x28] sm:$0xf]
        %v1077 = vld [vmem:[%s1065 + $0x2c] sm:$0xf]
        %v1078 = vld [vmem:[%s1065 + $0x30] sm:$0xf]
        %v1079 = vld [vmem:[%s1065 + $0x34] sm:$0xf]
        %v1080 = vld [vmem:[%s1065 + $0x38] sm:$0xf]
        %v1081 = vld [vmem:[%s1065 + $0x3c] sm:$0xf]
        %v1083 = vunpack.c.l.b16 %v393
        %v1084 = vpack.c.b16 %v1083, %v892
        %v1102 = vunpack.c.l.b16 %v1066
        %v1103 = vunpack.c.l.b16 %v1067
        %v1104 = vunpack.c.l.b16 %v1068
        %v1105 = vunpack.c.l.b16 %v1069
        %v1106 = vunpack.c.l.b16 %v1070
        %v1107 = vunpack.c.l.b16 %v1071
        %v1108 = vunpack.c.l.b16 %v1072
        %v1109 = vunpack.c.l.b16 %v1073
        %v1110 = vunpack.c.l.b16 %v1074
        %v1111 = vunpack.c.l.b16 %v1075
        %v1112 = vunpack.c.l.b16 %v1076
        %v1113 = vunpack.c.l.b16 %v1077
        %v1114 = vunpack.c.l.b16 %v1078
        %v1115 = vunpack.c.l.b16 %v1079
        %v1116 = vunpack.c.l.b16 %v1080
        %v1117 = vunpack.c.l.b16 %v1081
        %v1118 = vpack.c.b16 %v1103, %v1102
        %v1119 = vpack.c.b16 %v1105, %v1104
        %v1120 = vpack.c.b16 %v1107, %v1106
        %v1121 = vpack.c.b16 %v1109, %v1108
        %v1122 = vpack.c.b16 %v1111, %v1110
        %v1123 = vpack.c.b16 %v1113, %v1112
        %v1124 = vpack.c.b16 %v1115, %v1114
        %v1125 = vpack.c.b16 %v1117, %v1116
        %1134 = vmatpush.bf16.msra.mxu0 %v1125
        %1135 = vmatpush.bf16.msra.mxu0 %v1124
        %1136 = vmatpush.bf16.msra.mxu0 %v1123
        %1137 = vmatpush.bf16.msra.mxu0 %v1122
        %1138 = vmatpush.bf16.msra.mxu0 %v1121
        %1139 = vmatpush.bf16.msra.mxu0 %v1120
        %1140 = vmatpush.bf16.msra.mxu0 %v1119
        %1141 = vmatpush.bf16.msra.mxu0 %v1118
        %1142 = vmatmul.bf16.gmra.mxu0 %v981
        %v1143 = vpop.f32.mrf.mxu0
        %v1144 = vadd.f32 0.0, %v1143
        %v1145 = vpop.f32.mrf.mxu0
        %v1146 = vadd.f32 0.0, %v1145
        %1147 = vmatmul.bf16.gmra.mxu0 %v982
        %v1148 = vpop.f32.mrf.mxu0
        %v1149 = vadd.f32 0.0, %v1148
        %v1150 = vpop.f32.mrf.mxu0
        %v1151 = vadd.f32 0.0, %v1150
        %1152 = vmatmul.bf16.gmra.mxu0 %v983
        %v1153 = vpop.f32.mrf.mxu0
        %v1154 = vadd.f32 0.0, %v1153
        %v1155 = vpop.f32.mrf.mxu0
        %v1156 = vadd.f32 0.0, %v1155
        %1157 = vmatmul.bf16.gmra.mxu0 %v1084
        %v1158 = vpop.f32.mrf.mxu0
        %v1159 = vadd.f32 0.0, %v1158
        %v1160 = vpop.f32.mrf.mxu0
        %v1161 = vadd.f32 0.0, %v1160
        %1162 = vdwg.mxu0
        %v1163 = vadd.f32 %v1046, %v1144
        %v1164 = vadd.f32 %v1048, %v1146
        %v1165 = vadd.f32 %v1051, %v1149
        %v1166 = vadd.f32 %v1053, %v1151
        %v1167 = vadd.f32 %v1056, %v1154
        %v1168 = vadd.f32 %v1058, %v1156
        %v1169 = vadd.f32 %v1061, %v1159
        %v1170 = vadd.f32 %v1063, %v1161
        %v1171 = vadd.f32 %v835, %v1163
        %v1172 = vadd.f32 %v836, %v1164
        %v1173 = vadd.f32 %v837, %v1165
        %v1174 = vadd.f32 %v838, %v1166
        %v1175 = vadd.f32 %v839, %v1167
        %v1176 = vadd.f32 %v840, %v1168
        %v1177 = vadd.f32 %v841, %v1169
        %v1178 = vadd.f32 %v842, %v1170
        %v1179 = vld [vmem:[#allocation2 + $0x4] sm:$0xf]
        %v1180 = vld [vmem:[#allocation2 + $0x8] sm:$0x1]
        %v1181 = vld [vmem:[#allocation2 + $0x10] sm:$0xf]
        %v1182 = vld [vmem:[#allocation2 + $0x14] sm:$0x1]
        %v1183 = vld [vmem:[#allocation2 + $0x1c] sm:$0xf]
        %v1184 = vld [vmem:[#allocation2 + $0x20] sm:$0x1]
        %v1185 = vld [vmem:[#allocation2 + $0x28] sm:$0xf]
        %v1186 = vld [vmem:[#allocation2 + $0x2c] sm:$0x1]
        %v1187 = vld [vmem:[#allocation2 + $0x34] sm:$0xf]
        %v1188 = vld [vmem:[#allocation2 + $0x38] sm:$0x1]
        %v1189 = vld [vmem:[#allocation2 + $0x40] sm:$0xf]
        %v1190 = vld [vmem:[#allocation2 + $0x44] sm:$0x1]
        %v1191 = vld [vmem:[#allocation2 + $0x4c] sm:$0xf]
        %v1192 = vld [vmem:[#allocation2 + $0x50] sm:$0x1]
        %v1193 = vld [vmem:[#allocation2 + $0x58] sm:$0xf]
        %v1194 = vld [vmem:[#allocation2 + $0x5c] sm:$0x1]
        %v1195 = vld [vmem:[#allocation2 + $0x64] sm:$0xf]
        %v1196 = vld [vmem:[#allocation2 + $0x68] sm:$0x1]
        %v1197 = vld [vmem:[#allocation2 + $0x70] sm:$0xf]
        %v1198 = vld [vmem:[#allocation2 + $0x74] sm:$0x1]
        %vm1199 = vsmask.f32 3328
        %vm1200 = vsmask.f32 7440
        %vm1201 = vmor %vm1199, %vm1200
        %v1203 = vshrl.u32 %v1179, 16
        %v1205 = vrot.slane %v1203, 4
        %v1206 = vshll.u32 %v1179, 16
        %v1208 = vrot.slane %v1206, 5
        %v1209 = vor.u32 %v1205, %v1208
        %v1210 = vrot.slane %v1209, 4
        %v1212 = vshll.u32 %v1180, 16
        %v1214 = vrot.slane %v1212, 5
        %v1215 = vsel %vm1201, %v1210, %v1214
        %v1217 = vshrl.u32 %v1181, 16
        %v1219 = vrot.slane %v1217, 4
        %v1220 = vshll.u32 %v1181, 16
        %v1222 = vrot.slane %v1220, 5
        %v1223 = vor.u32 %v1219, %v1222
        %v1224 = vrot.slane %v1223, 4
        %v1226 = vshll.u32 %v1182, 16
        %v1228 = vrot.slane %v1226, 5
        %v1229 = vsel %vm1201, %v1224, %v1228
        %v1231 = vshrl.u32 %v1183, 16
        %v1233 = vrot.slane %v1231, 4
        %v1234 = vshll.u32 %v1183, 16
        %v1236 = vrot.slane %v1234, 5
        %v1237 = vor.u32 %v1233, %v1236
        %v1238 = vrot.slane %v1237, 4
        %v1240 = vshll.u32 %v1184, 16
        %v1242 = vrot.slane %v1240, 5
        %v1243 = vsel %vm1201, %v1238, %v1242
        %v1245 = vshrl.u32 %v1185, 16
        %v1247 = vrot.slane %v1245, 4
        %v1248 = vshll.u32 %v1185, 16
        %v1250 = vrot.slane %v1248, 5
        %v1251 = vor.u32 %v1247, %v1250
        %v1252 = vrot.slane %v1251, 4
        %v1254 = vshll.u32 %v1186, 16
        %v1256 = vrot.slane %v1254, 5
        %v1257 = vsel %vm1201, %v1252, %v1256
        %v1259 = vshrl.u32 %v1187, 16
        %v1261 = vrot.slane %v1259, 4
        %v1262 = vshll.u32 %v1187, 16
        %v1264 = vrot.slane %v1262, 5
        %v1265 = vor.u32 %v1261, %v1264
        %v1266 = vrot.slane %v1265, 4
        %v1268 = vshll.u32 %v1188, 16
        %v1270 = vrot.slane %v1268, 5
        %v1271 = vsel %vm1201, %v1266, %v1270
        %v1273 = vshrl.u32 %v1189, 16
        %v1275 = vrot.slane %v1273, 4
        %v1276 = vshll.u32 %v1189, 16
        %v1278 = vrot.slane %v1276, 5
        %v1279 = vor.u32 %v1275, %v1278
        %v1280 = vrot.slane %v1279, 4
        %v1282 = vshll.u32 %v1190, 16
        %v1284 = vrot.slane %v1282, 5
        %v1285 = vsel %vm1201, %v1280, %v1284
        %v1287 = vshrl.u32 %v1191, 16
        %v1289 = vrot.slane %v1287, 4
        %v1290 = vshll.u32 %v1191, 16
        %v1292 = vrot.slane %v1290, 5
        %v1293 = vor.u32 %v1289, %v1292
        %v1294 = vrot.slane %v1293, 4
        %v1296 = vshll.u32 %v1192, 16
        %v1298 = vrot.slane %v1296, 5
        %v1299 = vsel %vm1201, %v1294, %v1298
        %v1301 = vshrl.u32 %v1193, 16
        %v1303 = vrot.slane %v1301, 4
        %v1304 = vshll.u32 %v1193, 16
        %v1306 = vrot.slane %v1304, 5
        %v1307 = vor.u32 %v1303, %v1306
        %v1308 = vrot.slane %v1307, 4
        %v1310 = vshll.u32 %v1194, 16
        %v1312 = vrot.slane %v1310, 5
        %v1313 = vsel %vm1201, %v1308, %v1312
        %v1315 = vshrl.u32 %v1195, 16
        %v1317 = vrot.slane %v1315, 4
        %v1318 = vshll.u32 %v1195, 16
        %v1320 = vrot.slane %v1318, 5
        %v1321 = vor.u32 %v1317, %v1320
        %v1322 = vrot.slane %v1321, 4
        %v1324 = vshll.u32 %v1196, 16
        %v1326 = vrot.slane %v1324, 5
        %v1327 = vsel %vm1201, %v1322, %v1326
        %v1329 = vshrl.u32 %v1197, 16
        %v1331 = vrot.slane %v1329, 4
        %v1332 = vshll.u32 %v1197, 16
        %v1334 = vrot.slane %v1332, 5
        %v1335 = vor.u32 %v1331, %v1334
        %v1336 = vrot.slane %v1335, 4
        %v1338 = vshll.u32 %v1198, 16
        %v1340 = vrot.slane %v1338, 5
        %v1341 = vsel %vm1201, %v1336, %v1340
        %s1342 = scalar_lea.vmem [#allocation5], 128
        %v1343 = vld [vmem:[%s1342] sm:$0xf]
        %v1344 = vld [vmem:[%s1342 + $0x4] sm:$0xf]
        %v1345 = vld [vmem:[%s1342 + $0x8] sm:$0xf]
        %v1346 = vld [vmem:[%s1342 + $0xc] sm:$0xf]
        %v1347 = vld [vmem:[%s1342 + $0x10] sm:$0xf]
        %v1348 = vld [vmem:[%s1342 + $0x14] sm:$0xf]
        %v1349 = vld [vmem:[%s1342 + $0x18] sm:$0xf]
        %v1350 = vld [vmem:[%s1342 + $0x1c] sm:$0xf]
        %v1351 = vld [vmem:[%s1342 + $0x20] sm:$0xf]
        %v1352 = vld [vmem:[%s1342 + $0x24] sm:$0xf]
        %v1353 = vld [vmem:[%s1342 + $0x28] sm:$0xf]
        %v1354 = vld [vmem:[%s1342 + $0x2c] sm:$0xf]
        %v1355 = vld [vmem:[%s1342 + $0x30] sm:$0xf]
        %v1356 = vld [vmem:[%s1342 + $0x34] sm:$0xf]
        %v1357 = vld [vmem:[%s1342 + $0x38] sm:$0xf]
        %v1358 = vld [vmem:[%s1342 + $0x3c] sm:$0xf]
        %s1359 = scalar_lea.vmem [#allocation5], 320
        %v1360 = vld [vmem:[%s1359] sm:$0xf]
        %v1361 = vld [vmem:[%s1359 + $0x4] sm:$0xf]
        %v1362 = vld [vmem:[%s1359 + $0x8] sm:$0xf]
        %v1363 = vld [vmem:[%s1359 + $0xc] sm:$0xf]
        %v1364 = vld [vmem:[%s1359 + $0x10] sm:$0xf]
        %v1365 = vld [vmem:[%s1359 + $0x14] sm:$0xf]
        %v1366 = vld [vmem:[%s1359 + $0x18] sm:$0xf]
        %v1367 = vld [vmem:[%s1359 + $0x1c] sm:$0xf]
        %v1368 = vld [vmem:[%s1359 + $0x20] sm:$0xf]
        %v1369 = vld [vmem:[%s1359 + $0x24] sm:$0xf]
        %v1370 = vld [vmem:[%s1359 + $0x28] sm:$0xf]
        %v1371 = vld [vmem:[%s1359 + $0x2c] sm:$0xf]
        %v1372 = vld [vmem:[%s1359 + $0x30] sm:$0xf]
        %v1373 = vld [vmem:[%s1359 + $0x34] sm:$0xf]
        %v1374 = vld [vmem:[%s1359 + $0x38] sm:$0xf]
        %v1375 = vld [vmem:[%s1359 + $0x3c] sm:$0xf]
        %v1376 = vunpack.c.l.b16 %v1229
        %v1377 = vunpack.c.l.b16 %v1243
        %v1378 = vunpack.c.l.b16 %v1257
        %v1379 = vunpack.c.l.b16 %v1271
        %v1380 = vunpack.c.l.b16 %v1285
        %v1381 = vunpack.c.l.b16 %v1299
        %v1382 = vunpack.c.l.b16 %v1313
        %v1383 = vunpack.c.l.b16 %v1327
        %v1384 = vpack.c.b16 %v1377, %v1376
        %v1385 = vpack.c.b16 %v1379, %v1378
        %v1386 = vpack.c.b16 %v1381, %v1380
        %v1387 = vpack.c.b16 %v1383, %v1382
        %v1408 = vunpack.c.l.b16 %v1360
        %v1409 = vunpack.c.l.b16 %v1361
        %v1410 = vunpack.c.l.b16 %v1362
        %v1411 = vunpack.c.l.b16 %v1363
        %v1412 = vunpack.c.l.b16 %v1364
        %v1413 = vunpack.c.l.b16 %v1365
        %v1414 = vunpack.c.l.b16 %v1366
        %v1415 = vunpack.c.l.b16 %v1367
        %v1416 = vunpack.c.l.b16 %v1368
        %v1417 = vunpack.c.l.b16 %v1369
        %v1418 = vunpack.c.l.b16 %v1370
        %v1419 = vunpack.c.l.b16 %v1371
        %v1420 = vunpack.c.l.b16 %v1372
        %v1421 = vunpack.c.l.b16 %v1373
        %v1422 = vunpack.c.l.b16 %v1374
        %v1423 = vunpack.c.l.b16 %v1375
        %v1424 = vpack.c.b16 %v1409, %v1408
        %v1425 = vpack.c.b16 %v1411, %v1410
        %v1426 = vpack.c.b16 %v1413, %v1412
        %v1427 = vpack.c.b16 %v1415, %v1414
        %v1428 = vpack.c.b16 %v1417, %v1416
        %v1429 = vpack.c.b16 %v1419, %v1418
        %v1430 = vpack.c.b16 %v1421, %v1420
        %v1431 = vpack.c.b16 %v1423, %v1422
        %1440 = vmatpush.bf16.msra.mxu0 %v1431
        %1441 = vmatpush.bf16.msra.mxu0 %v1430
        %1442 = vmatpush.bf16.msra.mxu0 %v1429
        %1443 = vmatpush.bf16.msra.mxu0 %v1428
        %1444 = vmatpush.bf16.msra.mxu0 %v1427
        %1445 = vmatpush.bf16.msra.mxu0 %v1426
        %1446 = vmatpush.bf16.msra.mxu0 %v1425
        %1447 = vmatpush.bf16.msra.mxu0 %v1424
        %1448 = vmatmul.bf16.gmra.mxu0 %v1384
        %v1449 = vpop.f32.mrf.mxu0
        %v1450 = vadd.f32 0.0, %v1449
        %v1451 = vpop.f32.mrf.mxu0
        %v1452 = vadd.f32 0.0, %v1451
        %1453 = vmatmul.bf16.gmra.mxu0 %v1385
        %v1454 = vpop.f32.mrf.mxu0
        %v1455 = vadd.f32 0.0, %v1454
        %v1456 = vpop.f32.mrf.mxu0
        %v1457 = vadd.f32 0.0, %v1456
        %1458 = vmatmul.bf16.gmra.mxu0 %v1386
        %v1459 = vpop.f32.mrf.mxu0
        %v1460 = vadd.f32 0.0, %v1459
        %v1461 = vpop.f32.mrf.mxu0
        %v1462 = vadd.f32 0.0, %v1461
        %1463 = vmatmul.bf16.gmra.mxu0 %v1387
        %v1464 = vpop.f32.mrf.mxu0
        %v1465 = vadd.f32 0.0, %v1464
        %v1466 = vpop.f32.mrf.mxu0
        %v1467 = vadd.f32 0.0, %v1466
        %1468 = vdwg.mxu0
        %v1469 = vunpack.c.l.b16 %v1215
        %v1470 = vpack.c.b16 %v1376, %v1469
        %v1471 = vpack.c.b16 %v1378, %v1377
        %v1472 = vpack.c.b16 %v1380, %v1379
        %v1473 = vpack.c.b16 %v1382, %v1381
        %v1494 = vunpack.c.l.b16 %v1343
        %v1495 = vunpack.c.l.b16 %v1344
        %v1496 = vunpack.c.l.b16 %v1345
        %v1497 = vunpack.c.l.b16 %v1346
        %v1498 = vunpack.c.l.b16 %v1347
        %v1499 = vunpack.c.l.b16 %v1348
        %v1500 = vunpack.c.l.b16 %v1349
        %v1501 = vunpack.c.l.b16 %v1350
        %v1502 = vunpack.c.l.b16 %v1351
        %v1503 = vunpack.c.l.b16 %v1352
        %v1504 = vunpack.c.l.b16 %v1353
        %v1505 = vunpack.c.l.b16 %v1354
        %v1506 = vunpack.c.l.b16 %v1355
        %v1507 = vunpack.c.l.b16 %v1356
        %v1508 = vunpack.c.l.b16 %v1357
        %v1509 = vunpack.c.l.b16 %v1358
        %v1510 = vpack.c.b16 %v1495, %v1494
        %v1511 = vpack.c.b16 %v1497, %v1496
        %v1512 = vpack.c.b16 %v1499, %v1498
        %v1513 = vpack.c.b16 %v1501, %v1500
        %v1514 = vpack.c.b16 %v1503, %v1502
        %v1515 = vpack.c.b16 %v1505, %v1504
        %v1516 = vpack.c.b16 %v1507, %v1506
        %v1517 = vpack.c.b16 %v1509, %v1508
        %1526 = vmatpush.bf16.msra.mxu0 %v1517
        %1527 = vmatpush.bf16.msra.mxu0 %v1516
        %1528 = vmatpush.bf16.msra.mxu0 %v1515
        %1529 = vmatpush.bf16.msra.mxu0 %v1514
        %1530 = vmatpush.bf16.msra.mxu0 %v1513
        %1531 = vmatpush.bf16.msra.mxu0 %v1512
        %1532 = vmatpush.bf16.msra.mxu0 %v1511
        %1533 = vmatpush.bf16.msra.mxu0 %v1510
        %1534 = vmatmul.bf16.gmra.mxu0 %v1470
        %v1535 = vpop.f32.mrf.mxu0
        %v1536 = vadd.f32 %v1450, %v1535
        %v1537 = vpop.f32.mrf.mxu0
        %v1538 = vadd.f32 %v1452, %v1537
        %1539 = vmatmul.bf16.gmra.mxu0 %v1471
        %v1540 = vpop.f32.mrf.mxu0
        %v1541 = vadd.f32 %v1455, %v1540
        %v1542 = vpop.f32.mrf.mxu0
        %v1543 = vadd.f32 %v1457, %v1542
        %1544 = vmatmul.bf16.gmra.mxu0 %v1472
        %v1545 = vpop.f32.mrf.mxu0
        %v1546 = vadd.f32 %v1460, %v1545
        %v1547 = vpop.f32.mrf.mxu0
        %v1548 = vadd.f32 %v1462, %v1547
        %1549 = vmatmul.bf16.gmra.mxu0 %v1473
        %v1550 = vpop.f32.mrf.mxu0
        %v1551 = vadd.f32 %v1465, %v1550
        %v1552 = vpop.f32.mrf.mxu0
        %v1553 = vadd.f32 %v1467, %v1552
        %1554 = vdwg.mxu0
        %s1555 = scalar_lea.vmem [#allocation5], 512
        %v1556 = vld [vmem:[%s1555] sm:$0xf]
        %v1557 = vld [vmem:[%s1555 + $0x4] sm:$0xf]
        %v1558 = vld [vmem:[%s1555 + $0x8] sm:$0xf]
        %v1559 = vld [vmem:[%s1555 + $0xc] sm:$0xf]
        %v1560 = vld [vmem:[%s1555 + $0x10] sm:$0xf]
        %v1561 = vld [vmem:[%s1555 + $0x14] sm:$0xf]
        %v1562 = vld [vmem:[%s1555 + $0x18] sm:$0xf]
        %v1563 = vld [vmem:[%s1555 + $0x1c] sm:$0xf]
        %v1564 = vld [vmem:[%s1555 + $0x20] sm:$0xf]
        %v1565 = vld [vmem:[%s1555 + $0x24] sm:$0xf]
        %v1566 = vld [vmem:[%s1555 + $0x28] sm:$0xf]
        %v1567 = vld [vmem:[%s1555 + $0x2c] sm:$0xf]
        %v1568 = vld [vmem:[%s1555 + $0x30] sm:$0xf]
        %v1569 = vld [vmem:[%s1555 + $0x34] sm:$0xf]
        %v1570 = vld [vmem:[%s1555 + $0x38] sm:$0xf]
        %v1571 = vld [vmem:[%s1555 + $0x3c] sm:$0xf]
        %v1572 = vunpack.c.l.b16 %v1341
        %v1573 = vpack.c.b16 %v1572, %v1383
        %v1591 = vunpack.c.l.b16 %v1556
        %v1592 = vunpack.c.l.b16 %v1557
        %v1593 = vunpack.c.l.b16 %v1558
        %v1594 = vunpack.c.l.b16 %v1559
        %v1595 = vunpack.c.l.b16 %v1560
        %v1596 = vunpack.c.l.b16 %v1561
        %v1597 = vunpack.c.l.b16 %v1562
        %v1598 = vunpack.c.l.b16 %v1563
        %v1599 = vunpack.c.l.b16 %v1564
        %v1600 = vunpack.c.l.b16 %v1565
        %v1601 = vunpack.c.l.b16 %v1566
        %v1602 = vunpack.c.l.b16 %v1567
        %v1603 = vunpack.c.l.b16 %v1568
        %v1604 = vunpack.c.l.b16 %v1569
        %v1605 = vunpack.c.l.b16 %v1570
        %v1606 = vunpack.c.l.b16 %v1571
        %v1607 = vpack.c.b16 %v1592, %v1591
        %v1608 = vpack.c.b16 %v1594, %v1593
        %v1609 = vpack.c.b16 %v1596, %v1595
        %v1610 = vpack.c.b16 %v1598, %v1597
        %v1611 = vpack.c.b16 %v1600, %v1599
        %v1612 = vpack.c.b16 %v1602, %v1601
        %v1613 = vpack.c.b16 %v1604, %v1603
        %v1614 = vpack.c.b16 %v1606, %v1605
        %1623 = vmatpush.bf16.msra.mxu0 %v1614
        %1624 = vmatpush.bf16.msra.mxu0 %v1613
        %1625 = vmatpush.bf16.msra.mxu0 %v1612
        %1626 = vmatpush.bf16.msra.mxu0 %v1611
        %1627 = vmatpush.bf16.msra.mxu0 %v1610
        %1628 = vmatpush.bf16.msra.mxu0 %v1609
        %1629 = vmatpush.bf16.msra.mxu0 %v1608
        %1630 = vmatpush.bf16.msra.mxu0 %v1607
        %1631 = vmatmul.bf16.gmra.mxu0 %v1471
        %v1632 = vpop.f32.mrf.mxu0
        %v1633 = vadd.f32 0.0, %v1632
        %v1634 = vpop.f32.mrf.mxu0
        %v1635 = vadd.f32 0.0, %v1634
        %1636 = vmatmul.bf16.gmra.mxu0 %v1472
        %v1637 = vpop.f32.mrf.mxu0
        %v1638 = vadd.f32 0.0, %v1637
        %v1639 = vpop.f32.mrf.mxu0
        %v1640 = vadd.f32 0.0, %v1639
        %1641 = vmatmul.bf16.gmra.mxu0 %v1473
        %v1642 = vpop.f32.mrf.mxu0
        %v1643 = vadd.f32 0.0, %v1642
        %v1644 = vpop.f32.mrf.mxu0
        %v1645 = vadd.f32 0.0, %v1644
        %1646 = vmatmul.bf16.gmra.mxu0 %v1573
        %v1647 = vpop.f32.mrf.mxu0
        %v1648 = vadd.f32 0.0, %v1647
        %v1649 = vpop.f32.mrf.mxu0
        %v1650 = vadd.f32 0.0, %v1649
        %1651 = vdwg.mxu0
        %v1652 = vadd.f32 %v1536, %v1633
        %v1653 = vadd.f32 %v1538, %v1635
        %v1654 = vadd.f32 %v1541, %v1638
        %v1655 = vadd.f32 %v1543, %v1640
        %v1656 = vadd.f32 %v1546, %v1643
        %v1657 = vadd.f32 %v1548, %v1645
        %v1658 = vadd.f32 %v1551, %v1648
        %v1659 = vadd.f32 %v1553, %v1650
        %v1660 = vadd.f32 %v1171, %v1652
        %v1661 = vadd.f32 %v1172, %v1653
        %v1662 = vadd.f32 %v1173, %v1654
        %v1663 = vadd.f32 %v1174, %v1655
        %v1664 = vadd.f32 %v1175, %v1656
        %v1665 = vadd.f32 %v1176, %v1657
        %v1666 = vadd.f32 %v1177, %v1658
        %v1667 = vadd.f32 %v1178, %v1659
        %v1668 = vld [vmem:[#allocation7] sm:$0x1]
        %v1670 = vperm.slane %v1668, 0
        %v1672 = vadd.f32 %v1660, %v1670
        %v1673 = vadd.f32 %v1661, %v1670
        %v1674 = vadd.f32 %v1662, %v1670
        %v1675 = vadd.f32 %v1663, %v1670
        %v1676 = vadd.f32 %v1664, %v1670
        %v1677 = vadd.f32 %v1665, %v1670
        %v1678 = vadd.f32 %v1666, %v1670
        %v1679 = vadd.f32 %v1667, %v1670
        %v1680 = vpack.c.bf16 %v1672, %v1672
        %v1681 = vpack.c.bf16 %v1673, %v1673
        %v1682 = vpack.c.bf16 %v1674, %v1674
        %v1683 = vpack.c.bf16 %v1675, %v1675
        %v1684 = vpack.c.bf16 %v1676, %v1676
        %v1685 = vpack.c.bf16 %v1677, %v1677
        %v1686 = vpack.c.bf16 %v1678, %v1678
        %v1687 = vpack.c.bf16 %v1679, %v1679
        %1688 = vst [vmem:[%s270] sm:$0xf] %v1680
        %1689 = vst [vmem:[%s270 + $0x4] sm:$0xf] %v1681
        %1690 = vst [vmem:[%s270 + $0x8] sm:$0xf] %v1682
        %1691 = vst [vmem:[%s270 + $0xc] sm:$0xf] %v1683
        %1692 = vst [vmem:[%s270 + $0x10] sm:$0xf] %v1684
        %1693 = vst [vmem:[%s270 + $0x14] sm:$0xf] %v1685
        %1694 = vst [vmem:[%s270 + $0x18] sm:$0xf] %v1686
        %1695 = vst [vmem:[%s270 + $0x1c] sm:$0xf] %v1687
        %p1696 = scmp.lt.s32.totalorder %s19, 1
        %s1697 = scalar_select %p1696, %s19, 1
        %s1698 = smul.addr %s1697, 8
        %s1699 = smul.addr %s1698, 4
        %s1700 = scalar_lea.vmem %s4, %s1699
        // Predicated region
        $region49: #{feature_decoder_forward.9} parent=35 // pred_check
          %p1701 = pneg %p131
        $region50: #{feature_decoder_forward.9} parent=35 // pred_check_branch
          %1703 = sbr.rel (%p1701) target = $region52
        $region51: #{feature_decoder_forward.9} parent=35 // pred_region
          _
        $region52: #{feature_decoder_forward.9} parent=35 // pred_fallthru
          _
      $region36: #{feature_decoder_forward.9} parent=5 // pred_fallthru
        _
      %p1704 = scmp.le.s32.totalorder 2, %s14
      // Predicated region
      $region53: #{feature_decoder_forward.9} parent=5 // pred_check
        %p1705 = pneg %p1704
      $region54: #{feature_decoder_forward.9} parent=5 // pred_check_branch
        %1707 = sbr.rel (%p1705) target = $region56
      $region55: #{feature_decoder_forward.9} parent=5 // pred_region
        %s1708 = ssub.s32 %s14, 2
        // Predicated region
        $region57: #{feature_decoder_forward.9} parent=55 // pred_check
          %p1709 = pneg %p137
        $region58: #{feature_decoder_forward.9} parent=55 // pred_check_branch
          %1711 = sbr.rel (%p1709) target = $region60
        $region59: #{feature_decoder_forward.9} parent=55 // pred_region
          %p1712 = scmp.lt.s32.totalorder %s20, 1
          %s1713 = scalar_select %p1712, %s20, 1
          %s1714 = smul.addr %s1713, 8
          %s1715 = smul.addr %s1714, 4
          %s1716 = scalar_lea.vmem %s4, %s1715
        $region60: #{feature_decoder_forward.9} parent=55 // pred_fallthru
          _
      $region56: #{feature_decoder_forward.9} parent=5 // pred_fallthru
        _
    $region6: #{feature_decoder_forward.9} parent=1 // loop_footer
      %s18 = sadd.s32 1, %s14
    $region7: #{feature_decoder_forward.9} parent=1 // loop_footer_branch
      %13 = sbr.rel target = $region3
    $region8: #{feature_decoder_forward.9} parent=1 // loop_exit
      _
    %1717 = vsyncpa [#allocation4], 1
    %s1718 = scalar_lea.sflag [#allocation4], 1
    %1719 = vsyncpa %s1718, 1
    %1720 = vsyncpa [#allocation6], 1

// kernel: feature_decoder_forward.7
$region0: #{feature_decoder_forward.7}
  #allocation0 [shape = 'u32[]', space=smem, size = 0x4, offset = 0x4, fixed_abs, tag = 'smem constant byte address 0x4 - core index']
  #allocation1 [shape = 'u32[72,128]{1,0:T(1,128)}', space=vmem, size = 0x9000, scoped, tag = 'internal scratch']
  #allocation2 [shape = 'bf16[6,24,256]{2,1,0:T(8,128)(2,1)}', space=vmem, size = 0x12000, scoped, tag = 'scratch operand']
  %s0 = inlined_call_operand.vmem [shape: bf16[2,2,4,256], index: 0, kind: input, shape index: {}]
  %s1 = inlined_call_operand.hbm [shape: f32[2,4,4,256], index: 1, kind: input, shape index: {}]
  %s2 = inlined_call_operand.hbm [shape: bf16[3,3,256,256], index: 2, kind: input, shape index: {}]
  %s3 = inlined_call_operand.hbm [shape: f32[1,256], index: 3, kind: input, shape index: {}]
  %s4 = inlined_call_operand.vmem [shape: bf16[2,4,4,256], index: 4, kind: output, shape index: {}]
  %s5 = sld [smem:[#allocation0]]
  $region61: #{feature_decoder_forward.7} parent=0
    _
  %s7 = ssub.s32 1, %s5
  %s8 = scalar_select 0, %s7, %s5
  $region1: #{feature_decoder_forward.7} parent=0
    #allocation3 [shape = 'u8[32768]{0}', space=vmem, size = 0x8000, scoped, tag = 'input window, operand 1']
    #allocation4 [shape = 's32[2]{0}', space=sflag, size = 0x8, scoped, tag = 'scoped memory for feature_decoder_forward.7']
    #allocation5 [shape = 'u8[1179648]{0}', space=vmem, size = 0x120000, scoped, tag = 'input window, operand 2, single buffered']
    #allocation6 [shape = 's32[1]{0}', space=sflag, size = 0x4, scoped, tag = 'scoped memory for feature_decoder_forward.7']
    #allocation7 [shape = 'u8[1024]{0}', space=vmem, size = 0x400, scoped, tag = 'input window, operand 3, single buffered']
    %9 = vsyncpa [#allocation4], 0
    %s10 = scalar_lea.sflag [#allocation4], 1
    %11 = vsyncpa %s10, 0
    %12 = vsyncpa [#allocation6], 0
    loop: start=0, step=1, limit=4
    $region2: #{feature_decoder_forward.7} parent=1 // loop_pre_header
      _
    $region3: #{feature_decoder_forward.7} parent=1 // loop_header
      %s14 = sphi 0, %s18
      %p15 = scmp.ge.s32.totalorder %s14, 4
      %s24 = sphi 0, %s26
      %s27 = sphi 0, %s24
      %s28 = sphi 0, %s27
      %s44 = sphi 0, %s28
      %s50 = sphi 0, %s52
      %s53 = sphi 0, %s50
      %s54 = sphi 0, %s53
      %s70 = sphi 0, %s54
      %s74 = sphi 0, %s74
      %s76 = sphi 0, %s74
      %s77 = sphi 0, %s76
      %s91 = sphi 0, %s77
      %s95 = sphi 0, %s95
      %s97 = sphi 0, %s95
      %s98 = sphi 0, %s97
      %s112 = sphi 0, %s98
      %s118 = sphi 0, %s120
      %s121 = sphi 0, %s118
      %s122 = sphi 0, %s121
      %s138 = sphi 0, %s122
    $region4: #{feature_decoder_forward.7} parent=1 // loop_header_branch
      %17 = sbr.rel (%p15) target = $region8
    $region5: #{feature_decoder_forward.7} parent=1 // loop_body
      %s19 = ssub.s32 %s14, 1
      %s20 = ssub.s32 %s14, 2
      %s21 = sadd.s32 %s14, 1
      %s22 = ssub.s32 %s14, %s21
      %p23 = scmp.eq.s32.totalorder %s22, 0
      %s25 = sadd.s32 %s24, 1
      %s26 = scalar_select %p23, %s24, %s25
      %p29 = pneg %p23
      %p30 = scmp.eq.s32.totalorder %s14, 1
      %p31 = por %p29, %p30
      %p32 = scmp.ne.s32.totalorder %s24, %s27
      %p33 = scmp.eq.s32.totalorder %s14, 0
      %p34 = por %p32, %p33
      %p35 = scmp.ne.s32.totalorder %s24, %s27
      %p36 = scmp.eq.s32.totalorder %s19, 1
      %p37 = por %p35, %p36
      %p38 = scmp.ne.s32.totalorder %s27, %s28
      %p39 = scmp.eq.s32.totalorder %s19, 0
      %p40 = por %p38, %p39
      %p41 = scmp.ne.s32.totalorder %s27, %s28
      %p42 = scmp.eq.s32.totalorder %s20, 1
      %p43 = por %p41, %p42
      %p45 = scmp.ne.s32.totalorder %s28, %s44
      %p46 = scmp.eq.s32.totalorder %s20, 0
      %p47 = por %p45, %p46
      %s48 = ssub.s32 %s14, %s21
      %p49 = scmp.eq.s32.totalorder %s48, 0
      %s51 = sadd.s32 %s50, 1
      %s52 = scalar_select %p49, %s50, %s51
      %p55 = pneg %p49
      %p56 = scmp.eq.s32.totalorder %s14, 1
      %p57 = por %p55, %p56
      %p58 = scmp.ne.s32.totalorder %s50, %s53
      %p59 = scmp.eq.s32.totalorder %s14, 0
      %p60 = por %p58, %p59
      %p61 = scmp.ne.s32.totalorder %s50, %s53
      %p62 = scmp.eq.s32.totalorder %s19, 1
      %p63 = por %p61, %p62
      %p64 = scmp.ne.s32.totalorder %s53, %s54
      %p65 = scmp.eq.s32.totalorder %s19, 0
      %p66 = por %p64, %p65
      %p67 = scmp.ne.s32.totalorder %s53, %s54
      %p68 = scmp.eq.s32.totalorder %s20, 1
      %p69 = por %p67, %p68
      %p71 = scmp.ne.s32.totalorder %s54, %s70
      %p72 = scmp.eq.s32.totalorder %s20, 0
      %p73 = por %p71, %p72
      %s75 = sadd.s32 %s74, 1
      %p78 = scmp.eq.s32.totalorder %s14, 1
      %p79 = scmp.ne.s32.totalorder %s74, %s76
      %p80 = scmp.eq.s32.totalorder %s14, 0
      %p81 = por %p79, %p80
      %p82 = scmp.ne.s32.totalorder %s74, %s76
      %p83 = scmp.eq.s32.totalorder %s19, 1
      %p84 = por %p82, %p83
      %p85 = scmp.ne.s32.totalorder %s76, %s77
      %p86 = scmp.eq.s32.totalorder %s19, 0
      %p87 = por %p85, %p86
      %p88 = scmp.ne.s32.totalorder %s76, %s77
      %p89 = scmp.eq.s32.totalorder %s20, 1
      %p90 = por %p88, %p89
      %p92 = scmp.ne.s32.totalorder %s77, %s91
      %p93 = scmp.eq.s32.totalorder %s20, 0
      %p94 = por %p92, %p93
      %s96 = sadd.s32 %s95, 1
      %p99 = scmp.eq.s32.totalorder %s14, 1
      %p100 = scmp.ne.s32.totalorder %s95, %s97
      %p101 = scmp.eq.s32.totalorder %s14, 0
      %p102 = por %p100, %p101
      %p103 = scmp.ne.s32.totalorder %s95, %s97
      %p104 = scmp.eq.s32.totalorder %s19, 1
      %p105 = por %p103, %p104
      %p106 = scmp.ne.s32.totalorder %s97, %s98
      %p107 = scmp.eq.s32.totalorder %s19, 0
      %p108 = por %p106, %p107
      %p109 = scmp.ne.s32.totalorder %s97, %s98
      %p110 = scmp.eq.s32.totalorder %s20, 1
      %p111 = por %p109, %p110
      %p113 = scmp.ne.s32.totalorder %s98, %s112
      %p114 = scmp.eq.s32.totalorder %s20, 0
      %p115 = por %p113, %p114
      %s116 = ssub.s32 %s14, %s21
      %p117 = scmp.eq.s32.totalorder %s116, 0
      %s119 = sadd.s32 %s118, 1
      %s120 = scalar_select %p117, %s118, %s119
      %p123 = pneg %p117
      %p124 = scmp.eq.s32.totalorder %s14, 1
      %p125 = por %p123, %p124
      %p126 = scmp.ne.s32.totalorder %s118, %s121
      %p127 = scmp.eq.s32.totalorder %s14, 0
      %p128 = por %p126, %p127
      %p129 = scmp.ne.s32.totalorder %s118, %s121
      %p130 = scmp.eq.s32.totalorder %s19, 1
      %p131 = por %p129, %p130
      %p132 = scmp.ne.s32.totalorder %s121, %s122
      %p133 = scmp.eq.s32.totalorder %s19, 0
      %p134 = por %p132, %p133
      %p135 = scmp.ne.s32.totalorder %s121, %s122
      %p136 = scmp.eq.s32.totalorder %s20, 1
      %p137 = por %p135, %p136
      %p139 = scmp.ne.s32.totalorder %s122, %s138
      %p140 = scmp.eq.s32.totalorder %s20, 0
      %p141 = por %p139, %p140
      %p142 = scmp.le.s32.totalorder 1, %s14
      %p143 = scmp.lt.s32.totalorder %s14, 3
      %p144 = pnand %p142, %p143
      %p145 = pneg %p144
      // Predicated region
      $region9: #{feature_decoder_forward.7} parent=5 // pred_check
        _
      $region10: #{feature_decoder_forward.7} parent=5 // pred_check_branch
        %147 = sbr.rel (%p144) target = $region12
      $region11: #{feature_decoder_forward.7} parent=5 // pred_region
        %s148 = ssub.s32 %s14, 1
        // Predicated region
        $region13: #{feature_decoder_forward.7} parent=11 // pred_check
          %p149 = pneg %p87
        $region14: #{feature_decoder_forward.7} parent=11 // pred_check_branch
          %151 = sbr.rel (%p149) target = $region16
        $region15: #{feature_decoder_forward.7} parent=11 // pred_region
          %153 = vsyncadd [#allocation6], 0
          %s154 = sshll.u32 %s2, 4
          %s155 = int_to_ptr.hbm [resolvable:$true] %s154
          %s156 = sshll.u32 [#allocation5], 4
          %s157 = int_to_ptr.vmem [resolvable:$true] %s156
          %162 = dma.hbm_to_vmem [thread:$0]  %s155, 36864, %s157, [#allocation6], 128, 128, 8
        $region16: #{feature_decoder_forward.7} parent=11 // pred_fallthru
          _
        // Predicated region
        $region17: #{feature_decoder_forward.7} parent=11 // pred_check
          %p163 = pneg %p108
        $region18: #{feature_decoder_forward.7} parent=11 // pred_check_branch
          %165 = sbr.rel (%p163) target = $region20
        $region19: #{feature_decoder_forward.7} parent=11 // pred_region
          %167 = vsyncadd [#allocation6], 0
          %s169 = sshll.u32 %s3, 4
          %s170 = int_to_ptr.hbm [resolvable:$true] %s169
          %s171 = sshll.u32 [#allocation7], 4
          %s172 = int_to_ptr.vmem [resolvable:$true] %s171
          %174 = dma.hbm_to_vmem [thread:$0]  %s170, 32, %s172, [#allocation6]
        $region20: #{feature_decoder_forward.7} parent=11 // pred_fallthru
          _
      $region12: #{feature_decoder_forward.7} parent=5 // pred_fallthru
        _
      %p175 = scmp.lt.s32.totalorder %s14, 2
      // Predicated region
      $region21: #{feature_decoder_forward.7} parent=5 // pred_check
        %p176 = pneg %p175
      $region22: #{feature_decoder_forward.7} parent=5 // pred_check_branch
        %178 = sbr.rel (%p176) target = $region24
      $region23: #{feature_decoder_forward.7} parent=5 // pred_region
        // Predicated region
        $region25: #{feature_decoder_forward.7} parent=23 // pred_check
          %p179 = pneg %p34
        $region26: #{feature_decoder_forward.7} parent=23 // pred_check_branch
          %181 = sbr.rel (%p179) target = $region28
        $region27: #{feature_decoder_forward.7} parent=23 // pred_region
          %p182 = scmp.lt.s32.totalorder %s14, 1
          %s183 = scalar_select %p182, %s14, 1
          %s184 = smul.addr %s183, 4
          %s185 = smul.addr %s184, 2
          %s186 = scalar_lea.vmem %s0, %s185
        $region28: #{feature_decoder_forward.7} parent=23 // pred_fallthru
          _
        // Predicated region
        $region29: #{feature_decoder_forward.7} parent=23 // pred_check
          %p187 = pneg %p60
        $region30: #{feature_decoder_forward.7} parent=23 // pred_check_branch
          %189 = sbr.rel (%p187) target = $region32
        $region31: #{feature_decoder_forward.7} parent=23 // pred_region
          %s190 = sand.u32 %s50, 1
          %s191 = scalar_lea.sflag [#allocation4], %s190
          %s192 = sand.u32 %s50, 1
          %s193 = smul.addr %s192, 32
          %s194 = scalar_lea.vmem [#allocation3], %s193
          %196 = vsyncadd %s191, 0
          %s197 = smul.addr %s14, 8
          %s198 = smul.addr %s197, 4
          %s199 = scalar_lea.hbm %s1, %s198
          %s200 = sshll.u32 %s199, 4
          %s201 = int_to_ptr.hbm [resolvable:$true] %s200
          %s202 = sshll.u32 %s194, 4
          %s203 = int_to_ptr.vmem [resolvable:$true] %s202
          %208 = dma.hbm_to_vmem [thread:$0]  %s201, 512, %s203, %s191, 128, 128, 8
        $region32: #{feature_decoder_forward.7} parent=23 // pred_fallthru
          _
      $region24: #{feature_decoder_forward.7} parent=5 // pred_fallthru
        _
      %p209 = scmp.le.s32.totalorder 1, %s14
      %p210 = scmp.lt.s32.totalorder %s14, 3
      %p211 = pnand %p209, %p210
      %p212 = pneg %p211
      // Predicated region
      $region33: #{feature_decoder_forward.7} parent=5 // pred_check
        _
      $region34: #{feature_decoder_forward.7} parent=5 // pred_check_branch
        %214 = sbr.rel (%p211) target = $region36
      $region35: #{feature_decoder_forward.7} parent=5 // pred_region
        %s215 = ssub.s32 %s14, 1
        %s216 = sand.u32 %s53, 1
        %s217 = scalar_lea.sflag [#allocation4], %s216
        %s218 = sand.u32 %s53, 1
        %s219 = smul.addr %s218, 32
        %s220 = scalar_lea.vmem [#allocation3], %s219
        // Predicated region
        $region37: #{feature_decoder_forward.7} parent=35 // pred_check
          %p221 = pneg %p66
        $region38: #{feature_decoder_forward.7} parent=35 // pred_check_branch
          %223 = sbr.rel (%p221) target = $region40
        $region39: #{feature_decoder_forward.7} parent=35 // pred_region
          %225 = dma.done %s217, 512
        $region40: #{feature_decoder_forward.7} parent=35 // pred_fallthru
          _
        // Predicated region
        $region41: #{feature_decoder_forward.7} parent=35 // pred_check
          %p226 = pneg %p87
        $region42: #{feature_decoder_forward.7} parent=35 // pred_check_branch
          %228 = sbr.rel (%p226) target = $region44
        $region43: #{feature_decoder_forward.7} parent=35 // pred_region
          %230 = dma.done [#allocation6], 36864
        $region44: #{feature_decoder_forward.7} parent=35 // pred_fallthru
          _
        // Predicated region
        $region45: #{feature_decoder_forward.7} parent=35 // pred_check
          %p231 = pneg %p108
        $region46: #{feature_decoder_forward.7} parent=35 // pred_check_branch
          %233 = sbr.rel (%p231) target = $region48
        $region47: #{feature_decoder_forward.7} parent=35 // pred_region
          %235 = dma.done [#allocation6], 32
        $region48: #{feature_decoder_forward.7} parent=35 // pred_fallthru
          _
        %p236 = scmp.lt.s32.totalorder %s19, 1
        %s237 = scalar_select %p236, %s19, 1
        %s238 = smul.addr %s237, 4
        %s239 = smul.addr %s238, 2
        %s240 = scalar_lea.vmem %s0, %s239
        %p241 = pneg %p40
        %p242 = pneg %p37
        %s243 = sand.u32 %s53, 1
        %s244 = scalar_lea.sflag [#allocation4], %s243
        %s245 = sand.u32 %s53, 1
        %s246 = smul.addr %s245, 32
        %s247 = scalar_lea.vmem [#allocation3], %s246
        %p248 = pneg %p66
        %p249 = pneg %p63
        %p250 = pneg %p87
        %p251 = pneg %p84
        %p252 = pneg %p108
        %p253 = pneg %p105
        %p254 = pneg %p134
        %p255 = pneg %p131
        %p256 = scmp.lt.s32.totalorder %s19, 1
        %s257 = scalar_select %p256, %s19, 1
        %s258 = smul.addr %s257, 8
        %s259 = smul.addr %s258, 2
        %s260 = scalar_lea.vmem %s4, %s259
        %p261 = scmp.lt.s32.totalorder %s19, 1
        %s262 = scalar_select %p261, %s19, 1
        %s263 = smul.addr %s262, 4
        %s264 = smul.addr %s263, 2
        %s265 = scalar_lea.vmem %s0, %s264
        %p266 = scmp.lt.s32.totalorder %s19, 1
        %s267 = scalar_select %p266, %s19, 1
        %s268 = smul.addr %s267, 8
        %s269 = smul.addr %s268, 2
        %s270 = scalar_lea.vmem %s4, %s269
        %272 = vst [vmem:[#allocation2] sm:$0xff] 0
        %273 = vst [vmem:[#allocation2 + $0x8] sm:$0xff] 0
        %274 = vst [vmem:[#allocation2 + $0x10] sm:$0xff] 0
        %s275 = scalar_lea.vmem [#allocation2], 120
        %276 = vst [vmem:[%s275] sm:$0xff] 0
        %277 = vst [vmem:[%s275 + $0x8] sm:$0xff] 0
        %278 = vst [vmem:[%s275 + $0x10] sm:$0xff] 0
        %s279 = scalar_lea.vmem [#allocation2], 24
        %vm280 = vcmask 1043459
        %vm281 = vsmask.f32 7950
        %vm282 = vmand %vm280, %vm281
        %vm283 = vcmask 1047559
        %vm284 = vsmask.f32 7966
        %vm285 = vmand %vm283, %vm284
        %vm286 = vmor %vm285, %vm282
        %v287 = vld [vmem:[%s279] sm:$0x88]
        %v288 = vsel %vm286, 0, %v287
        %289 = vst [vmem:[%s279] sm:$0x88] %v288
        %v290 = vld [vmem:[%s279 + $0x18] sm:$0x88]
        %v291 = vsel %vm286, 0, %v290
        %292 = vst [vmem:[%s279 + $0x18] sm:$0x88] %v291
        %v293 = vld [vmem:[%s279 + $0x30] sm:$0x88]
        %v294 = vsel %vm286, 0, %v293
        %295 = vst [vmem:[%s279 + $0x30] sm:$0x88] %v294
        %v296 = vld [vmem:[%s279 + $0x48] sm:$0x88]
        %v297 = vsel %vm286, 0, %v296
        %298 = vst [vmem:[%s279 + $0x48] sm:$0x88] %v297
        %vm299 = vcmask 1042434
        %vm300 = vsmask.f32 2304
        %vm301 = vmand %vm299, %vm300
        %vm302 = vcmask 1046534
        %vm303 = vsmask.f32 6400
        %vm304 = vmand %vm302, %vm303
        %vm305 = vmor %vm304, %vm301
        %v306 = vld [vmem:[%s279 + $0x8] sm:$0x44]
        %v307 = vsel %vm305, 0, %v306
        %308 = vst [vmem:[%s279 + $0x8] sm:$0x44] %v307
        %v309 = vld [vmem:[%s279 + $0x20] sm:$0x44]
        %v310 = vsel %vm305, 0, %v309
        %311 = vst [vmem:[%s279 + $0x20] sm:$0x44] %v310
        %v312 = vld [vmem:[%s279 + $0x38] sm:$0x44]
        %v313 = vsel %vm305, 0, %v312
        %314 = vst [vmem:[%s279 + $0x38] sm:$0x44] %v313
        %v315 = vld [vmem:[%s279 + $0x50] sm:$0x44]
        %v316 = vsel %vm305, 0, %v315
        %317 = vst [vmem:[%s279 + $0x50] sm:$0x44] %v316
        %v318 = vld [vmem:[%s265] sm:$0xf]
        %v319 = vld [vmem:[%s265 + $0x4] sm:$0xf]
        %v320 = vunpack.c.l.bf16 %v318
        %v321 = vunpack.c.l.bf16 %v319
        %v322 = vld [vmem:[%s220] sm:$0xff]
        %v323 = vld [vmem:[%s220 + $0x8] sm:$0xff]
        %v324 = vld [vmem:[%s220 + $0x10] sm:$0xff]
        %v325 = vld [vmem:[%s220 + $0x18] sm:$0xff]
        %v326 = vadd.f32 %v320, %v322
        %v327 = vadd.f32 %v320, %v323
        %v328 = vadd.f32 %v321, %v324
        %v329 = vadd.f32 %v321, %v325
        %334 = vst [vmem:[#allocation1] ss:$2 sm:$0xff] %v326
        %v335 = vld.sshfl [vmem:[#allocation1] sm:$0xff pattern:$0x75316420]
        %v336 = vld.sshfl [vmem:[#allocation1 + $0x8] sm:$0xff pattern:$0x75316420]
        %s337 = scalar_lea.vmem [#allocation1], 16
        %338 = vst [vmem:[%s337] ss:$2 sm:$0xff] %v327
        %v339 = vld.sshfl [vmem:[#allocation1 + $0x10] sm:$0xff pattern:$0x75316420]
        %v340 = vld.sshfl [vmem:[#allocation1 + $0x18] sm:$0xff pattern:$0x75316420]
        %s341 = scalar_lea.vmem [#allocation1], 32
        %342 = vst [vmem:[%s341] ss:$2 sm:$0xff] %v328
        %v343 = vld.sshfl [vmem:[#allocation1 + $0x20] sm:$0xff pattern:$0x75316420]
        %v344 = vld.sshfl [vmem:[#allocation1 + $0x28] sm:$0xff pattern:$0x75316420]
        %s345 = scalar_lea.vmem [#allocation1], 48
        %346 = vst [vmem:[%s345] ss:$2 sm:$0xff] %v329
        %v347 = vld.sshfl [vmem:[#allocation1 + $0x30] sm:$0xff pattern:$0x75316420]
        %v348 = vld.sshfl [vmem:[#allocation1 + $0x38] sm:$0xff pattern:$0x75316420]
        %v357 = vpack.c.bf16 %v336, %v335
        %v358 = vpack.c.bf16 %v340, %v339
        %v359 = vpack.c.bf16 %v344, %v343
        %v360 = vpack.c.bf16 %v348, %v347
        %361 = vst [vmem:[%s279 + $0x8] sm:$0x33] %v357
        %362 = vst [vmem:[%s279 + $0x20] sm:$0x33] %v358
        %363 = vst [vmem:[%s279 + $0x38] sm:$0x33] %v359
        %364 = vst [vmem:[%s279 + $0x50] sm:$0x33] %v360
        %v365 = vld [vmem:[#allocation2] sm:$0x88]
        %v366 = vld [vmem:[#allocation2 + $0x8] sm:$0xff]
        %v367 = vld [vmem:[#allocation2 + $0x18] sm:$0x88]
        %v368 = vld [vmem:[#allocation2 + $0x20] sm:$0xff]
        %v369 = vld [vmem:[#allocation2 + $0x30] sm:$0x88]
        %v370 = vld [vmem:[#allocation2 + $0x38] sm:$0xff]
        %v371 = vld [vmem:[#allocation2 + $0x48] sm:$0x88]
        %v372 = vld [vmem:[#allocation2 + $0x50] sm:$0xff]
        %v373 = vld [vmem:[#allocation2 + $0x60] sm:$0x88]
        %v374 = vld [vmem:[#allocation2 + $0x68] sm:$0xff]
        %v375 = vld [vmem:[#allocation2 + $0x78] sm:$0x88]
        %v376 = vld [vmem:[#allocation2 + $0x80] sm:$0xff]
        %vm377 = vsmask.f32 256
        %vm378 = vsmask.f32 4368
        %vm379 = vmor %vm377, %vm378
        %v381 = vshrl.u32 %v365, 16
        %v383 = vrot.slane %v381, 7
        %v384 = vrot.slane %v383, 4
        %v386 = vshrl.u32 %v366, 16
        %v388 = vrot.slane %v386, 7
        %v389 = vshll.u32 %v366, 16
        %v391 = vor.u32 %v388, %v389
        %v392 = vsel %vm379, %v384, %v391
        %v394 = vshrl.u32 %v367, 16
        %v396 = vrot.slane %v394, 7
        %v397 = vrot.slane %v396, 4
        %v399 = vshrl.u32 %v368, 16
        %v401 = vrot.slane %v399, 7
        %v402 = vshll.u32 %v368, 16
        %v404 = vor.u32 %v401, %v402
        %v405 = vsel %vm379, %v397, %v404
        %v407 = vshrl.u32 %v369, 16
        %v409 = vrot.slane %v407, 7
        %v410 = vrot.slane %v409, 4
        %v412 = vshrl.u32 %v370, 16
        %v414 = vrot.slane %v412, 7
        %v415 = vshll.u32 %v370, 16
        %v417 = vor.u32 %v414, %v415
        %v418 = vsel %vm379, %v410, %v417
        %v420 = vshrl.u32 %v371, 16
        %v422 = vrot.slane %v420, 7
        %v423 = vrot.slane %v422, 4
        %v425 = vshrl.u32 %v372, 16
        %v427 = vrot.slane %v425, 7
        %v428 = vshll.u32 %v372, 16
        %v430 = vor.u32 %v427, %v428
        %v431 = vsel %vm379, %v423, %v430
        %v433 = vshrl.u32 %v373, 16
        %v435 = vrot.slane %v433, 7
        %v436 = vrot.slane %v435, 4
        %v438 = vshrl.u32 %v374, 16
        %v440 = vrot.slane %v438, 7
        %v441 = vshll.u32 %v374, 16
        %v443 = vor.u32 %v440, %v441
        %v444 = vsel %vm379, %v436, %v443
        %v446 = vshrl.u32 %v375, 16
        %v448 = vrot.slane %v446, 7
        %v449 = vrot.slane %v448, 4
        %v451 = vshrl.u32 %v376, 16
        %v453 = vrot.slane %v451, 7
        %v454 = vshll.u32 %v376, 16
        %v456 = vor.u32 %v453, %v454
        %v457 = vsel %vm379, %v449, %v456
        %v458 = vld [vmem:[#allocation5] sm:$0xff]
        %v459 = vld [vmem:[#allocation5 + $0x8] sm:$0xff]
        %v460 = vld [vmem:[#allocation5 + $0x10] sm:$0xff]
        %v461 = vld [vmem:[#allocation5 + $0x18] sm:$0xff]
        %v462 = vld [vmem:[#allocation5 + $0x20] sm:$0xff]
        %v463 = vld [vmem:[#allocation5 + $0x28] sm:$0xff]
        %v464 = vld [vmem:[#allocation5 + $0x30] sm:$0xff]
        %v465 = vld [vmem:[#allocation5 + $0x38] sm:$0xff]
        %v466 = vld [vmem:[#allocation5 + $0x40] sm:$0xff]
        %v467 = vld [vmem:[#allocation5 + $0x48] sm:$0xff]
        %v468 = vld [vmem:[#allocation5 + $0x50] sm:$0xff]
        %v469 = vld [vmem:[#allocation5 + $0x58] sm:$0xff]
        %v470 = vld [vmem:[#allocation5 + $0x60] sm:$0xff]
        %v471 = vld [vmem:[#allocation5 + $0x68] sm:$0xff]
        %v472 = vld [vmem:[#allocation5 + $0x70] sm:$0xff]
        %v473 = vld [vmem:[#allocation5 + $0x78] sm:$0xff]
        %v474 = vld [vmem:[#allocation5 + $0x80] sm:$0xff]
        %v475 = vld [vmem:[#allocation5 + $0x88] sm:$0xff]
        %v476 = vld [vmem:[#allocation5 + $0x90] sm:$0xff]
        %v477 = vld [vmem:[#allocation5 + $0x98] sm:$0xff]
        %v478 = vld [vmem:[#allocation5 + $0xa0] sm:$0xff]
        %v479 = vld [vmem:[#allocation5 + $0xa8] sm:$0xff]
        %v480 = vld [vmem:[#allocation5 + $0xb0] sm:$0xff]
        %v481 = vld [vmem:[#allocation5 + $0xb8] sm:$0xff]
        %v482 = vld [vmem:[#allocation5 + $0xc0] sm:$0xff]
        %v483 = vld [vmem:[#allocation5 + $0xc8] sm:$0xff]
        %v484 = vld [vmem:[#allocation5 + $0xd0] sm:$0xff]
        %v485 = vld [vmem:[#allocation5 + $0xd8] sm:$0xff]
        %v486 = vld [vmem:[#allocation5 + $0xe0] sm:$0xff]
        %v487 = vld [vmem:[#allocation5 + $0xe8] sm:$0xff]
        %v488 = vld [vmem:[#allocation5 + $0xf0] sm:$0xff]
        %v489 = vld [vmem:[#allocation5 + $0xf8] sm:$0xff]
        %s490 = scalar_lea.vmem [#allocation5], 768
        %v491 = vld [vmem:[%s490] sm:$0xff]
        %v492 = vld [vmem:[%s490 + $0x8] sm:$0xff]
        %v493 = vld [vmem:[%s490 + $0x10] sm:$0xff]
        %v494 = vld [vmem:[%s490 + $0x18] sm:$0xff]
        %v495 = vld [vmem:[%s490 + $0x20] sm:$0xff]
        %v496 = vld [vmem:[%s490 + $0x28] sm:$0xff]
        %v497 = vld [vmem:[%s490 + $0x30] sm:$0xff]
        %v498 = vld [vmem:[%s490 + $0x38] sm:$0xff]
        %v499 = vld [vmem:[%s490 + $0x40] sm:$0xff]
        %v500 = vld [vmem:[%s490 + $0x48] sm:$0xff]
        %v501 = vld [vmem:[%s490 + $0x50] sm:$0xff]
        %v502 = vld [vmem:[%s490 + $0x58] sm:$0xff]
        %v503 = vld [vmem:[%s490 + $0x60] sm:$0xff]
        %v504 = vld [vmem:[%s490 + $0x68] sm:$0xff]
        %v505 = vld [vmem:[%s490 + $0x70] sm:$0xff]
        %v506 = vld [vmem:[%s490 + $0x78] sm:$0xff]
        %v507 = vld [vmem:[%s490 + $0x80] sm:$0xff]
        %v508 = vld [vmem:[%s490 + $0x88] sm:$0xff]
        %v509 = vld [vmem:[%s490 + $0x90] sm:$0xff]
        %v510 = vld [vmem:[%s490 + $0x98] sm:$0xff]
        %v511 = vld [vmem:[%s490 + $0xa0] sm:$0xff]
        %v512 = vld [vmem:[%s490 + $0xa8] sm:$0xff]
        %v513 = vld [vmem:[%s490 + $0xb0] sm:$0xff]
        %v514 = vld [vmem:[%s490 + $0xb8] sm:$0xff]
        %v515 = vld [vmem:[%s490 + $0xc0] sm:$0xff]
        %v516 = vld [vmem:[%s490 + $0xc8] sm:$0xff]
        %v517 = vld [vmem:[%s490 + $0xd0] sm:$0xff]
        %v518 = vld [vmem:[%s490 + $0xd8] sm:$0xff]
        %v519 = vld [vmem:[%s490 + $0xe0] sm:$0xff]
        %v520 = vld [vmem:[%s490 + $0xe8] sm:$0xff]
        %v521 = vld [vmem:[%s490 + $0xf0] sm:$0xff]
        %v522 = vld [vmem:[%s490 + $0xf8] sm:$0xff]
        %v523 = vunpack.c.l.b16 %v405
        %v524 = vunpack.c.h.b16 %v405
        %v525 = vunpack.c.l.b16 %v418
        %v526 = vunpack.c.h.b16 %v418
        %v527 = vunpack.c.l.b16 %v431
        %v528 = vunpack.c.h.b16 %v431
        %v529 = vunpack.c.l.b16 %v444
        %v530 = vunpack.c.h.b16 %v444
        %v531 = vpack.c.b16 %v525, %v523
        %v532 = vpack.c.b16 %v526, %v524
        %v533 = vpack.c.b16 %v529, %v527
        %v534 = vpack.c.b16 %v530, %v528
        %v571 = vunpack.c.l.b16 %v491
        %v572 = vunpack.c.h.b16 %v491
        %v573 = vunpack.c.l.b16 %v492
        %v574 = vunpack.c.h.b16 %v492
        %v575 = vunpack.c.l.b16 %v493
        %v576 = vunpack.c.h.b16 %v493
        %v577 = vunpack.c.l.b16 %v494
        %v578 = vunpack.c.h.b16 %v494
        %v579 = vunpack.c.l.b16 %v495
        %v580 = vunpack.c.h.b16 %v495
        %v581 = vunpack.c.l.b16 %v496
        %v582 = vunpack.c.h.b16 %v496
        %v583 = vunpack.c.l.b16 %v497
        %v584 = vunpack.c.h.b16 %v497
        %v585 = vunpack.c.l.b16 %v498
        %v586 = vunpack.c.h.b16 %v498
        %v587 = vunpack.c.l.b16 %v499
        %v588 = vunpack.c.h.b16 %v499
        %v589 = vunpack.c.l.b16 %v500
        %v590 = vunpack.c.h.b16 %v500
        %v591 = vunpack.c.l.b16 %v501
        %v592 = vunpack.c.h.b16 %v501
        %v593 = vunpack.c.l.b16 %v502
        %v594 = vunpack.c.h.b16 %v502
        %v595 = vunpack.c.l.b16 %v503
        %v596 = vunpack.c.h.b16 %v503
        %v597 = vunpack.c.l.b16 %v504
        %v598 = vunpack.c.h.b16 %v504
        %v599 = vunpack.c.l.b16 %v505
        %v600 = vunpack.c.h.b16 %v505
        %v601 = vunpack.c.l.b16 %v506
        %v602 = vunpack.c.h.b16 %v506
        %v603 = vunpack.c.l.b16 %v507
        %v604 = vunpack.c.h.b16 %v507
        %v605 = vunpack.c.l.b16 %v508
        %v606 = vunpack.c.h.b16 %v508
        %v607 = vunpack.c.l.b16 %v509
        %v608 = vunpack.c.h.b16 %v509
        %v609 = vunpack.c.l.b16 %v510
        %v610 = vunpack.c.h.b16 %v510
        %v611 = vunpack.c.l.b16 %v511
        %v612 = vunpack.c.h.b16 %v511
        %v613 = vunpack.c.l.b16 %v512
        %v614 = vunpack.c.h.b16 %v512
        %v615 = vunpack.c.l.b16 %v513
        %v616 = vunpack.c.h.b16 %v513
        %v617 = vunpack.c.l.b16 %v514
        %v618 = vunpack.c.h.b16 %v514
        %v619 = vunpack.c.l.b16 %v515
        %v620 = vunpack.c.h.b16 %v515
        %v621 = vunpack.c.l.b16 %v516
        %v622 = vunpack.c.h.b16 %v516
        %v623 = vunpack.c.l.b16 %v517
        %v624 = vunpack.c.h.b16 %v517
        %v625 = vunpack.c.l.b16 %v518
        %v626 = vunpack.c.h.b16 %v518
        %v627 = vunpack.c.l.b16 %v519
        %v628 = vunpack.c.h.b16 %v519
        %v629 = vunpack.c.l.b16 %v520
        %v630 = vunpack.c.h.b16 %v520
        %v631 = vunpack.c.l.b16 %v521
        %v632 = vunpack.c.h.b16 %v521
        %v633 = vunpack.c.l.b16 %v522
        %v634 = vunpack.c.h.b16 %v522
        %v635 = vpack.c.b16 %v573, %v571
        %v636 = vpack.c.b16 %v574, %v572
        %v637 = vpack.c.b16 %v577, %v575
        %v638 = vpack.c.b16 %v578, %v576
        %v639 = vpack.c.b16 %v581, %v579
        %v640 = vpack.c.b16 %v582, %v580
        %v641 = vpack.c.b16 %v585, %v583
        %v642 = vpack.c.b16 %v586, %v584
        %v643 = vpack.c.b16 %v589, %v587
        %v644 = vpack.c.b16 %v590, %v588
        %v645 = vpack.c.b16 %v593, %v591
        %v646 = vpack.c.b16 %v594, %v592
        %v647 = vpack.c.b16 %v597, %v595
        %v648 = vpack.c.b16 %v598, %v596
        %v649 = vpack.c.b16 %v601, %v599
        %v650 = vpack.c.b16 %v602, %v600
        %v651 = vpack.c.b16 %v605, %v603
        %v652 = vpack.c.b16 %v606, %v604
        %v653 = vpack.c.b16 %v609, %v607
        %v654 = vpack.c.b16 %v610, %v608
        %v655 = vpack.c.b16 %v613, %v611
        %v656 = vpack.c.b16 %v614, %v612
        %v657 = vpack.c.b16 %v617, %v615
        %v658 = vpack.c.b16 %v618, %v616
        %v659 = vpack.c.b16 %v621, %v619
        %v660 = vpack.c.b16 %v622, %v620
        %v661 = vpack.c.b16 %v625, %v623
        %v662 = vpack.c.b16 %v626, %v624
        %v663 = vpack.c.b16 %v629, %v627
        %v664 = vpack.c.b16 %v630, %v628
        %v665 = vpack.c.b16 %v633, %v631
        %v666 = vpack.c.b16 %v634, %v632
        %699 = vmatpush.bf16.msra.mxu0 %v649
        %700 = vmatpush.bf16.msra.mxu0 %v647
        %701 = vmatpush.bf16.msra.mxu0 %v645
        %702 = vmatpush.bf16.msra.mxu0 %v643
        %703 = vmatpush.bf16.msra.mxu0 %v641
        %704 = vmatpush.bf16.msra.mxu0 %v639
        %705 = vmatpush.bf16.msra.mxu0 %v637
        %706 = vmatpush.bf16.msra.mxu0 %v635
        %707 = vmatmul.bf16.gmra.mxu0 %v531
        %v708 = vpop.f32.mrf.mxu0
        %v709 = vadd.f32 0.0, %v708
        %v710 = vpop.f32.mrf.mxu0
        %v711 = vadd.f32 0.0, %v710
        %712 = vmatmul.bf16.gmra.mxu0 %v533
        %v713 = vpop.f32.mrf.mxu0
        %v714 = vadd.f32 0.0, %v713
        %v715 = vpop.f32.mrf.mxu0
        %v716 = vadd.f32 0.0, %v715
        %717 = vdwg.mxu0
        %718 = vmatpush.bf16.msra.mxu0 %v665
        %719 = vmatpush.bf16.msra.mxu0 %v663
        %720 = vmatpush.bf16.msra.mxu0 %v661
        %721 = vmatpush.bf16.msra.mxu0 %v659
        %722 = vmatpush.bf16.msra.mxu0 %v657
        %723 = vmatpush.bf16.msra.mxu0 %v655
        %724 = vmatpush.bf16.msra.mxu0 %v653
        %725 = vmatpush.bf16.msra.mxu0 %v651
        %726 = vmatmul.bf16.gmra.mxu0 %v532
        %v727 = vpop.f32.mrf.mxu0
        %v728 = vadd.f32 %v709, %v727
        %v729 = vpop.f32.mrf.mxu0
        %v730 = vadd.f32 %v711, %v729
        %731 = vmatmul.bf16.gmra.mxu0 %v534
        %v732 = vpop.f32.mrf.mxu0
        %v733 = vadd.f32 %v714, %v732
        %v734 = vpop.f32.mrf.mxu0
        %v735 = vadd.f32 %v716, %v734
        %736 = vdwg.mxu0
        %737 = vmatpush.bf16.msra.mxu0 %v650
        %738 = vmatpush.bf16.msra.mxu0 %v648
        %739 = vmatpush.bf16.msra.mxu0 %v646
        %740 = vmatpush.bf16.msra.mxu0 %v644
        %741 = vmatpush.bf16.msra.mxu0 %v642
        %742 = vmatpush.bf16.msra.mxu0 %v640
        %743 = vmatpush.bf16.msra.mxu0 %v638
        %744 = vmatpush.bf16.msra.mxu0 %v636
        %745 = vmatmul.bf16.gmra.mxu0 %v531
        %v746 = vpop.f32.mrf.mxu0
        %v747 = vadd.f32 0.0, %v746
        %v748 = vpop.f32.mrf.mxu0
        %v749 = vadd.f32 0.0, %v748
        %750 = vmatmul.bf16.gmra.mxu0 %v533
        %v751 = vpop.f32.mrf.mxu0
        %v752 = vadd.f32 0.0, %v751
        %v753 = vpop.f32.mrf.mxu0
        %v754 = vadd.f32 0.0, %v753
        %755 = vdwg.mxu0
        %756 = vmatpush.bf16.msra.mxu0 %v666
        %757 = vmatpush.bf16.msra.mxu0 %v664
        %758 = vmatpush.bf16.msra.mxu0 %v662
        %759 = vmatpush.bf16.msra.mxu0 %v660
        %760 = vmatpush.bf16.msra.mxu0 %v658
        %761 = vmatpush.bf16.msra.mxu0 %v656
        %762 = vmatpush.bf16.msra.mxu0 %v654
        %763 = vmatpush.bf16.msra.mxu0 %v652
        %764 = vmatmul.bf16.gmra.mxu0 %v532
        %v765 = vpop.f32.mrf.mxu0
        %v766 = vadd.f32 %v747, %v765
        %v767 = vpop.f32.mrf.mxu0
        %v768 = vadd.f32 %v749, %v767
        %769 = vmatmul.bf16.gmra.mxu0 %v534
        %v770 = vpop.f32.mrf.mxu0
        %v771 = vadd.f32 %v752, %v770
        %v772 = vpop.f32.mrf.mxu0
        %v773 = vadd.f32 %v754, %v772
        %774 = vdwg.mxu0
        %v775 = vunpack.c.l.b16 %v392
        %v776 = vunpack.c.h.b16 %v392
        %v777 = vpack.c.b16 %v523, %v775
        %v778 = vpack.c.b16 %v524, %v776
        %v779 = vpack.c.b16 %v527, %v525
        %v780 = vpack.c.b16 %v528, %v526
        %v817 = vunpack.c.l.b16 %v458
        %v818 = vunpack.c.h.b16 %v458
        %v819 = vunpack.c.l.b16 %v459
        %v820 = vunpack.c.h.b16 %v459
        %v821 = vunpack.c.l.b16 %v460
        %v822 = vunpack.c.h.b16 %v460
        %v823 = vunpack.c.l.b16 %v461
        %v824 = vunpack.c.h.b16 %v461
        %v825 = vunpack.c.l.b16 %v462
        %v826 = vunpack.c.h.b16 %v462
        %v827 = vunpack.c.l.b16 %v463
        %v828 = vunpack.c.h.b16 %v463
        %v829 = vunpack.c.l.b16 %v464
        %v830 = vunpack.c.h.b16 %v464
        %v831 = vunpack.c.l.b16 %v465
        %v832 = vunpack.c.h.b16 %v465
        %v833 = vunpack.c.l.b16 %v466
        %v834 = vunpack.c.h.b16 %v466
        %v835 = vunpack.c.l.b16 %v467
        %v836 = vunpack.c.h.b16 %v467
        %v837 = vunpack.c.l.b16 %v468
        %v838 = vunpack.c.h.b16 %v468
        %v839 = vunpack.c.l.b16 %v469
        %v840 = vunpack.c.h.b16 %v469
        %v841 = vunpack.c.l.b16 %v470
        %v842 = vunpack.c.h.b16 %v470
        %v843 = vunpack.c.l.b16 %v471
        %v844 = vunpack.c.h.b16 %v471
        %v845 = vunpack.c.l.b16 %v472
        %v846 = vunpack.c.h.b16 %v472
        %v847 = vunpack.c.l.b16 %v473
        %v848 = vunpack.c.h.b16 %v473
        %v849 = vunpack.c.l.b16 %v474
        %v850 = vunpack.c.h.b16 %v474
        %v851 = vunpack.c.l.b16 %v475
        %v852 = vunpack.c.h.b16 %v475
        %v853 = vunpack.c.l.b16 %v476
        %v854 = vunpack.c.h.b16 %v476
        %v855 = vunpack.c.l.b16 %v477
        %v856 = vunpack.c.h.b16 %v477
        %v857 = vunpack.c.l.b16 %v478
        %v858 = vunpack.c.h.b16 %v478
        %v859 = vunpack.c.l.b16 %v479
        %v860 = vunpack.c.h.b16 %v479
        %v861 = vunpack.c.l.b16 %v480
        %v862 = vunpack.c.h.b16 %v480
        %v863 = vunpack.c.l.b16 %v481
        %v864 = vunpack.c.h.b16 %v481
        %v865 = vunpack.c.l.b16 %v482
        %v866 = vunpack.c.h.b16 %v482
        %v867 = vunpack.c.l.b16 %v483
        %v868 = vunpack.c.h.b16 %v483
        %v869 = vunpack.c.l.b16 %v484
        %v870 = vunpack.c.h.b16 %v484
        %v871 = vunpack.c.l.b16 %v485
        %v872 = vunpack.c.h.b16 %v485
        %v873 = vunpack.c.l.b16 %v486
        %v874 = vunpack.c.h.b16 %v486
        %v875 = vunpack.c.l.b16 %v487
        %v876 = vunpack.c.h.b16 %v487
        %v877 = vunpack.c.l.b16 %v488
        %v878 = vunpack.c.h.b16 %v488
        %v879 = vunpack.c.l.b16 %v489
        %v880 = vunpack.c.h.b16 %v489
        %v881 = vpack.c.b16 %v819, %v817
        %v882 = vpack.c.b16 %v820, %v818
        %v883 = vpack.c.b16 %v823, %v821
        %v884 = vpack.c.b16 %v824, %v822
        %v885 = vpack.c.b16 %v827, %v825
        %v886 = vpack.c.b16 %v828, %v826
        %v887 = vpack.c.b16 %v831, %v829
        %v888 = vpack.c.b16 %v832, %v830
        %v889 = vpack.c.b16 %v835, %v833
        %v890 = vpack.c.b16 %v836, %v834
        %v891 = vpack.c.b16 %v839, %v837
        %v892 = vpack.c.b16 %v840, %v838
        %v893 = vpack.c.b16 %v843, %v841
        %v894 = vpack.c.b16 %v844, %v842
        %v895 = vpack.c.b16 %v847, %v845
        %v896 = vpack.c.b16 %v848, %v846
        %v897 = vpack.c.b16 %v851, %v849
        %v898 = vpack.c.b16 %v852, %v850
        %v899 = vpack.c.b16 %v855, %v853
        %v900 = vpack.c.b16 %v856, %v854
        %v901 = vpack.c.b16 %v859, %v857
        %v902 = vpack.c.b16 %v860, %v858
        %v903 = vpack.c.b16 %v863, %v861
        %v904 = vpack.c.b16 %v864, %v862
        %v905 = vpack.c.b16 %v867, %v865
        %v906 = vpack.c.b16 %v868, %v866
        %v907 = vpack.c.b16 %v871, %v869
        %v908 = vpack.c.b16 %v872, %v870
        %v909 = vpack.c.b16 %v875, %v873
        %v910 = vpack.c.b16 %v876, %v874
        %v911 = vpack.c.b16 %v879, %v877
        %v912 = vpack.c.b16 %v880, %v878
        %945 = vmatpush.bf16.msra.mxu0 %v895
        %946 = vmatpush.bf16.msra.mxu0 %v893
        %947 = vmatpush.bf16.msra.mxu0 %v891
        %948 = vmatpush.bf16.msra.mxu0 %v889
        %949 = vmatpush.bf16.msra.mxu0 %v887
        %950 = vmatpush.bf16.msra.mxu0 %v885
        %951 = vmatpush.bf16.msra.mxu0 %v883
        %952 = vmatpush.bf16.msra.mxu0 %v881
        %953 = vmatmul.bf16.gmra.mxu0 %v777
        %v954 = vpop.f32.mrf.mxu0
        %v955 = vadd.f32 %v728, %v954
        %v956 = vpop.f32.mrf.mxu0
        %v957 = vadd.f32 %v730, %v956
        %958 = vmatmul.bf16.gmra.mxu0 %v779
        %v959 = vpop.f32.mrf.mxu0
        %v960 = vadd.f32 %v733, %v959
        %v961 = vpop.f32.mrf.mxu0
        %v962 = vadd.f32 %v735, %v961
        %963 = vdwg.mxu0
        %964 = vmatpush.bf16.msra.mxu0 %v911
        %965 = vmatpush.bf16.msra.mxu0 %v909
        %966 = vmatpush.bf16.msra.mxu0 %v907
        %967 = vmatpush.bf16.msra.mxu0 %v905
        %968 = vmatpush.bf16.msra.mxu0 %v903
        %969 = vmatpush.bf16.msra.mxu0 %v901
        %970 = vmatpush.bf16.msra.mxu0 %v899
        %971 = vmatpush.bf16.msra.mxu0 %v897
        %972 = vmatmul.bf16.gmra.mxu0 %v778
        %v973 = vpop.f32.mrf.mxu0
        %v974 = vadd.f32 %v955, %v973
        %v975 = vpop.f32.mrf.mxu0
        %v976 = vadd.f32 %v957, %v975
        %977 = vmatmul.bf16.gmra.mxu0 %v780
        %v978 = vpop.f32.mrf.mxu0
        %v979 = vadd.f32 %v960, %v978
        %v980 = vpop.f32.mrf.mxu0
        %v981 = vadd.f32 %v962, %v980
        %982 = vdwg.mxu0
        %983 = vmatpush.bf16.msra.mxu0 %v896
        %984 = vmatpush.bf16.msra.mxu0 %v894
        %985 = vmatpush.bf16.msra.mxu0 %v892
        %986 = vmatpush.bf16.msra.mxu0 %v890
        %987 = vmatpush.bf16.msra.mxu0 %v888
        %988 = vmatpush.bf16.msra.mxu0 %v886
        %989 = vmatpush.bf16.msra.mxu0 %v884
        %990 = vmatpush.bf16.msra.mxu0 %v882
        %991 = vmatmul.bf16.gmra.mxu0 %v777
        %v992 = vpop.f32.mrf.mxu0
        %v993 = vadd.f32 %v766, %v992
        %v994 = vpop.f32.mrf.mxu0
        %v995 = vadd.f32 %v768, %v994
        %996 = vmatmul.bf16.gmra.mxu0 %v779
        %v997 = vpop.f32.mrf.mxu0
        %v998 = vadd.f32 %v771, %v997
        %v999 = vpop.f32.mrf.mxu0
        %v1000 = vadd.f32 %v773, %v999
        %1001 = vdwg.mxu0
        %1002 = vmatpush.bf16.msra.mxu0 %v912
        %1003 = vmatpush.bf16.msra.mxu0 %v910
        %1004 = vmatpush.bf16.msra.mxu0 %v908
        %1005 = vmatpush.bf16.msra.mxu0 %v906
        %1006 = vmatpush.bf16.msra.mxu0 %v904
        %1007 = vmatpush.bf16.msra.mxu0 %v902
        %1008 = vmatpush.bf16.msra.mxu0 %v900
        %1009 = vmatpush.bf16.msra.mxu0 %v898
        %1010 = vmatmul.bf16.gmra.mxu0 %v778
        %v1011 = vpop.f32.mrf.mxu0
        %v1012 = vadd.f32 %v993, %v1011
        %v1013 = vpop.f32.mrf.mxu0
        %v1014 = vadd.f32 %v995, %v1013
        %1015 = vmatmul.bf16.gmra.mxu0 %v780
        %v1016 = vpop.f32.mrf.mxu0
        %v1017 = vadd.f32 %v998, %v1016
        %v1018 = vpop.f32.mrf.mxu0
        %v1019 = vadd.f32 %v1000, %v1018
        %1020 = vdwg.mxu0
        %s1021 = scalar_lea.vmem [#allocation5], 1536
        %v1022 = vld [vmem:[%s1021] sm:$0xff]
        %v1023 = vld [vmem:[%s1021 + $0x8] sm:$0xff]
        %v1024 = vld [vmem:[%s1021 + $0x10] sm:$0xff]
        %v1025 = vld [vmem:[%s1021 + $0x18] sm:$0xff]
        %v1026 = vld [vmem:[%s1021 + $0x20] sm:$0xff]
        %v1027 = vld [vmem:[%s1021 + $0x28] sm:$0xff]
        %v1028 = vld [vmem:[%s1021 + $0x30] sm:$0xff]
        %v1029 = vld [vmem:[%s1021 + $0x38] sm:$0xff]
        %v1030 = vld [vmem:[%s1021 + $0x40] sm:$0xff]
        %v1031 = vld [vmem:[%s1021 + $0x48] sm:$0xff]
        %v1032 = vld [vmem:[%s1021 + $0x50] sm:$0xff]
        %v1033 = vld [vmem:[%s1021 + $0x58] sm:$0xff]
        %v1034 = vld [vmem:[%s1021 + $0x60] sm:$0xff]
        %v1035 = vld [vmem:[%s1021 + $0x68] sm:$0xff]
        %v1036 = vld [vmem:[%s1021 + $0x70] sm:$0xff]
        %v1037 = vld [vmem:[%s1021 + $0x78] sm:$0xff]
        %v1038 = vld [vmem:[%s1021 + $0x80] sm:$0xff]
        %v1039 = vld [vmem:[%s1021 + $0x88] sm:$0xff]
        %v1040 = vld [vmem:[%s1021 + $0x90] sm:$0xff]
        %v1041 = vld [vmem:[%s1021 + $0x98] sm:$0xff]
        %v1042 = vld [vmem:[%s1021 + $0xa0] sm:$0xff]
        %v1043 = vld [vmem:[%s1021 + $0xa8] sm:$0xff]
        %v1044 = vld [vmem:[%s1021 + $0xb0] sm:$0xff]
        %v1045 = vld [vmem:[%s1021 + $0xb8] sm:$0xff]
        %v1046 = vld [vmem:[%s1021 + $0xc0] sm:$0xff]
        %v1047 = vld [vmem:[%s1021 + $0xc8] sm:$0xff]
        %v1048 = vld [vmem:[%s1021 + $0xd0] sm:$0xff]
        %v1049 = vld [vmem:[%s1021 + $0xd8] sm:$0xff]
        %v1050 = vld [vmem:[%s1021 + $0xe0] sm:$0xff]
        %v1051 = vld [vmem:[%s1021 + $0xe8] sm:$0xff]
        %v1052 = vld [vmem:[%s1021 + $0xf0] sm:$0xff]
        %v1053 = vld [vmem:[%s1021 + $0xf8] sm:$0xff]
        %v1054 = vunpack.c.l.b16 %v457
        %v1055 = vunpack.c.h.b16 %v457
        %v1056 = vpack.c.b16 %v1054, %v529
        %v1057 = vpack.c.b16 %v1055, %v530
        %v1092 = vunpack.c.l.b16 %v1022
        %v1093 = vunpack.c.h.b16 %v1022
        %v1094 = vunpack.c.l.b16 %v1023
        %v1095 = vunpack.c.h.b16 %v1023
        %v1096 = vunpack.c.l.b16 %v1024
        %v1097 = vunpack.c.h.b16 %v1024
        %v1098 = vunpack.c.l.b16 %v1025
        %v1099 = vunpack.c.h.b16 %v1025
        %v1100 = vunpack.c.l.b16 %v1026
        %v1101 = vunpack.c.h.b16 %v1026
        %v1102 = vunpack.c.l.b16 %v1027
        %v1103 = vunpack.c.h.b16 %v1027
        %v1104 = vunpack.c.l.b16 %v1028
        %v1105 = vunpack.c.h.b16 %v1028
        %v1106 = vunpack.c.l.b16 %v1029
        %v1107 = vunpack.c.h.b16 %v1029
        %v1108 = vunpack.c.l.b16 %v1030
        %v1109 = vunpack.c.h.b16 %v1030
        %v1110 = vunpack.c.l.b16 %v1031
        %v1111 = vunpack.c.h.b16 %v1031
        %v1112 = vunpack.c.l.b16 %v1032
        %v1113 = vunpack.c.h.b16 %v1032
        %v1114 = vunpack.c.l.b16 %v1033
        %v1115 = vunpack.c.h.b16 %v1033
        %v1116 = vunpack.c.l.b16 %v1034
        %v1117 = vunpack.c.h.b16 %v1034
        %v1118 = vunpack.c.l.b16 %v1035
        %v1119 = vunpack.c.h.b16 %v1035
        %v1120 = vunpack.c.l.b16 %v1036
        %v1121 = vunpack.c.h.b16 %v1036
        %v1122 = vunpack.c.l.b16 %v1037
        %v1123 = vunpack.c.h.b16 %v1037
        %v1124 = vunpack.c.l.b16 %v1038
        %v1125 = vunpack.c.h.b16 %v1038
        %v1126 = vunpack.c.l.b16 %v1039
        %v1127 = vunpack.c.h.b16 %v1039
        %v1128 = vunpack.c.l.b16 %v1040
        %v1129 = vunpack.c.h.b16 %v1040
        %v1130 = vunpack.c.l.b16 %v1041
        %v1131 = vunpack.c.h.b16 %v1041
        %v1132 = vunpack.c.l.b16 %v1042
        %v1133 = vunpack.c.h.b16 %v1042
        %v1134 = vunpack.c.l.b16 %v1043
        %v1135 = vunpack.c.h.b16 %v1043
        %v1136 = vunpack.c.l.b16 %v1044
        %v1137 = vunpack.c.h.b16 %v1044
        %v1138 = vunpack.c.l.b16 %v1045
        %v1139 = vunpack.c.h.b16 %v1045
        %v1140 = vunpack.c.l.b16 %v1046
        %v1141 = vunpack.c.h.b16 %v1046
        %v1142 = vunpack.c.l.b16 %v1047
        %v1143 = vunpack.c.h.b16 %v1047
        %v1144 = vunpack.c.l.b16 %v1048
        %v1145 = vunpack.c.h.b16 %v1048
        %v1146 = vunpack.c.l.b16 %v1049
        %v1147 = vunpack.c.h.b16 %v1049
        %v1148 = vunpack.c.l.b16 %v1050
        %v1149 = vunpack.c.h.b16 %v1050
        %v1150 = vunpack.c.l.b16 %v1051
        %v1151 = vunpack.c.h.b16 %v1051
        %v1152 = vunpack.c.l.b16 %v1052
        %v1153 = vunpack.c.h.b16 %v1052
        %v1154 = vunpack.c.l.b16 %v1053
        %v1155 = vunpack.c.h.b16 %v1053
        %v1156 = vpack.c.b16 %v1094, %v1092
        %v1157 = vpack.c.b16 %v1095, %v1093
        %v1158 = vpack.c.b16 %v1098, %v1096
        %v1159 = vpack.c.b16 %v1099, %v1097
        %v1160 = vpack.c.b16 %v1102, %v1100
        %v1161 = vpack.c.b16 %v1103, %v1101
        %v1162 = vpack.c.b16 %v1106, %v1104
        %v1163 = vpack.c.b16 %v1107, %v1105
        %v1164 = vpack.c.b16 %v1110, %v1108
        %v1165 = vpack.c.b16 %v1111, %v1109
        %v1166 = vpack.c.b16 %v1114, %v1112
        %v1167 = vpack.c.b16 %v1115, %v1113
        %v1168 = vpack.c.b16 %v1118, %v1116
        %v1169 = vpack.c.b16 %v1119, %v1117
        %v1170 = vpack.c.b16 %v1122, %v1120
        %v1171 = vpack.c.b16 %v1123, %v1121
        %v1172 = vpack.c.b16 %v1126, %v1124
        %v1173 = vpack.c.b16 %v1127, %v1125
        %v1174 = vpack.c.b16 %v1130, %v1128
        %v1175 = vpack.c.b16 %v1131, %v1129
        %v1176 = vpack.c.b16 %v1134, %v1132
        %v1177 = vpack.c.b16 %v1135, %v1133
        %v1178 = vpack.c.b16 %v1138, %v1136
        %v1179 = vpack.c.b16 %v1139, %v1137
        %v1180 = vpack.c.b16 %v1142, %v1140
        %v1181 = vpack.c.b16 %v1143, %v1141
        %v1182 = vpack.c.b16 %v1146, %v1144
        %v1183 = vpack.c.b16 %v1147, %v1145
        %v1184 = vpack.c.b16 %v1150, %v1148
        %v1185 = vpack.c.b16 %v1151, %v1149
        %v1186 = vpack.c.b16 %v1154, %v1152
        %v1187 = vpack.c.b16 %v1155, %v1153
        %1220 = vmatpush.bf16.msra.mxu0 %v1170
        %1221 = vmatpush.bf16.msra.mxu0 %v1168
        %1222 = vmatpush.bf16.msra.mxu0 %v1166
        %1223 = vmatpush.bf16.msra.mxu0 %v1164
        %1224 = vmatpush.bf16.msra.mxu0 %v1162
        %1225 = vmatpush.bf16.msra.mxu0 %v1160
        %1226 = vmatpush.bf16.msra.mxu0 %v1158
        %1227 = vmatpush.bf16.msra.mxu0 %v1156
        %1228 = vmatmul.bf16.gmra.mxu0 %v779
        %v1229 = vpop.f32.mrf.mxu0
        %v1230 = vadd.f32 0.0, %v1229
        %v1231 = vpop.f32.mrf.mxu0
        %v1232 = vadd.f32 0.0, %v1231
        %1233 = vmatmul.bf16.gmra.mxu0 %v1056
        %v1234 = vpop.f32.mrf.mxu0
        %v1235 = vadd.f32 0.0, %v1234
        %v1236 = vpop.f32.mrf.mxu0
        %v1237 = vadd.f32 0.0, %v1236
        %1238 = vdwg.mxu0
        %1239 = vmatpush.bf16.msra.mxu0 %v1186
        %1240 = vmatpush.bf16.msra.mxu0 %v1184
        %1241 = vmatpush.bf16.msra.mxu0 %v1182
        %1242 = vmatpush.bf16.msra.mxu0 %v1180
        %1243 = vmatpush.bf16.msra.mxu0 %v1178
        %1244 = vmatpush.bf16.msra.mxu0 %v1176
        %1245 = vmatpush.bf16.msra.mxu0 %v1174
        %1246 = vmatpush.bf16.msra.mxu0 %v1172
        %1247 = vmatmul.bf16.gmra.mxu0 %v780
        %v1248 = vpop.f32.mrf.mxu0
        %v1249 = vadd.f32 %v1230, %v1248
        %v1250 = vpop.f32.mrf.mxu0
        %v1251 = vadd.f32 %v1232, %v1250
        %1252 = vmatmul.bf16.gmra.mxu0 %v1057
        %v1253 = vpop.f32.mrf.mxu0
        %v1254 = vadd.f32 %v1235, %v1253
        %v1255 = vpop.f32.mrf.mxu0
        %v1256 = vadd.f32 %v1237, %v1255
        %1257 = vdwg.mxu0
        %1258 = vmatpush.bf16.msra.mxu0 %v1171
        %1259 = vmatpush.bf16.msra.mxu0 %v1169
        %1260 = vmatpush.bf16.msra.mxu0 %v1167
        %1261 = vmatpush.bf16.msra.mxu0 %v1165
        %1262 = vmatpush.bf16.msra.mxu0 %v1163
        %1263 = vmatpush.bf16.msra.mxu0 %v1161
        %1264 = vmatpush.bf16.msra.mxu0 %v1159
        %1265 = vmatpush.bf16.msra.mxu0 %v1157
        %1266 = vmatmul.bf16.gmra.mxu0 %v779
        %v1267 = vpop.f32.mrf.mxu0
        %v1268 = vadd.f32 0.0, %v1267
        %v1269 = vpop.f32.mrf.mxu0
        %v1270 = vadd.f32 0.0, %v1269
        %1271 = vmatmul.bf16.gmra.mxu0 %v1056
        %v1272 = vpop.f32.mrf.mxu0
        %v1273 = vadd.f32 0.0, %v1272
        %v1274 = vpop.f32.mrf.mxu0
        %v1275 = vadd.f32 0.0, %v1274
        %1276 = vdwg.mxu0
        %1277 = vmatpush.bf16.msra.mxu0 %v1187
        %1278 = vmatpush.bf16.msra.mxu0 %v1185
        %1279 = vmatpush.bf16.msra.mxu0 %v1183
        %1280 = vmatpush.bf16.msra.mxu0 %v1181
        %1281 = vmatpush.bf16.msra.mxu0 %v1179
        %1282 = vmatpush.bf16.msra.mxu0 %v1177
        %1283 = vmatpush.bf16.msra.mxu0 %v1175
        %1284 = vmatpush.bf16.msra.mxu0 %v1173
        %1285 = vmatmul.bf16.gmra.mxu0 %v780
        %v1286 = vpop.f32.mrf.mxu0
        %v1287 = vadd.f32 %v1268, %v1286
        %v1288 = vpop.f32.mrf.mxu0
        %v1289 = vadd.f32 %v1270, %v1288
        %1290 = vmatmul.bf16.gmra.mxu0 %v1057
        %v1291 = vpop.f32.mrf.mxu0
        %v1292 = vadd.f32 %v1273, %v1291
        %v1293 = vpop.f32.mrf.mxu0
        %v1294 = vadd.f32 %v1275, %v1293
        %1295 = vdwg.mxu0
        %v1296 = vadd.f32 %v974, %v1249
        %v1297 = vadd.f32 %v1012, %v1287
        %v1298 = vadd.f32 %v976, %v1251
        %v1299 = vadd.f32 %v1014, %v1289
        %v1300 = vadd.f32 %v979, %v1254
        %v1301 = vadd.f32 %v1017, %v1292
        %v1302 = vadd.f32 %v981, %v1256
        %v1303 = vadd.f32 %v1019, %v1294
        %s1304 = scalar_lea.vmem [#allocation5], 256
        %v1305 = vld [vmem:[%s1304] sm:$0xff]
        %v1306 = vld [vmem:[%s1304 + $0x8] sm:$0xff]
        %v1307 = vld [vmem:[%s1304 + $0x10] sm:$0xff]
        %v1308 = vld [vmem:[%s1304 + $0x18] sm:$0xff]
        %v1309 = vld [vmem:[%s1304 + $0x20] sm:$0xff]
        %v1310 = vld [vmem:[%s1304 + $0x28] sm:$0xff]
        %v1311 = vld [vmem:[%s1304 + $0x30] sm:$0xff]
        %v1312 = vld [vmem:[%s1304 + $0x38] sm:$0xff]
        %v1313 = vld [vmem:[%s1304 + $0x40] sm:$0xff]
        %v1314 = vld [vmem:[%s1304 + $0x48] sm:$0xff]
        %v1315 = vld [vmem:[%s1304 + $0x50] sm:$0xff]
        %v1316 = vld [vmem:[%s1304 + $0x58] sm:$0xff]
        %v1317 = vld [vmem:[%s1304 + $0x60] sm:$0xff]
        %v1318 = vld [vmem:[%s1304 + $0x68] sm:$0xff]
        %v1319 = vld [vmem:[%s1304 + $0x70] sm:$0xff]
        %v1320 = vld [vmem:[%s1304 + $0x78] sm:$0xff]
        %v1321 = vld [vmem:[%s1304 + $0x80] sm:$0xff]
        %v1322 = vld [vmem:[%s1304 + $0x88] sm:$0xff]
        %v1323 = vld [vmem:[%s1304 + $0x90] sm:$0xff]
        %v1324 = vld [vmem:[%s1304 + $0x98] sm:$0xff]
        %v1325 = vld [vmem:[%s1304 + $0xa0] sm:$0xff]
        %v1326 = vld [vmem:[%s1304 + $0xa8] sm:$0xff]
        %v1327 = vld [vmem:[%s1304 + $0xb0] sm:$0xff]
        %v1328 = vld [vmem:[%s1304 + $0xb8] sm:$0xff]
        %v1329 = vld [vmem:[%s1304 + $0xc0] sm:$0xff]
        %v1330 = vld [vmem:[%s1304 + $0xc8] sm:$0xff]
        %v1331 = vld [vmem:[%s1304 + $0xd0] sm:$0xff]
        %v1332 = vld [vmem:[%s1304 + $0xd8] sm:$0xff]
        %v1333 = vld [vmem:[%s1304 + $0xe0] sm:$0xff]
        %v1334 = vld [vmem:[%s1304 + $0xe8] sm:$0xff]
        %v1335 = vld [vmem:[%s1304 + $0xf0] sm:$0xff]
        %v1336 = vld [vmem:[%s1304 + $0xf8] sm:$0xff]
        %s1337 = scalar_lea.vmem [#allocation5], 1024
        %v1338 = vld [vmem:[%s1337] sm:$0xff]
        %v1339 = vld [vmem:[%s1337 + $0x8] sm:$0xff]
        %v1340 = vld [vmem:[%s1337 + $0x10] sm:$0xff]
        %v1341 = vld [vmem:[%s1337 + $0x18] sm:$0xff]
        %v1342 = vld [vmem:[%s1337 + $0x20] sm:$0xff]
        %v1343 = vld [vmem:[%s1337 + $0x28] sm:$0xff]
        %v1344 = vld [vmem:[%s1337 + $0x30] sm:$0xff]
        %v1345 = vld [vmem:[%s1337 + $0x38] sm:$0xff]
        %v1346 = vld [vmem:[%s1337 + $0x40] sm:$0xff]
        %v1347 = vld [vmem:[%s1337 + $0x48] sm:$0xff]
        %v1348 = vld [vmem:[%s1337 + $0x50] sm:$0xff]
        %v1349 = vld [vmem:[%s1337 + $0x58] sm:$0xff]
        %v1350 = vld [vmem:[%s1337 + $0x60] sm:$0xff]
        %v1351 = vld [vmem:[%s1337 + $0x68] sm:$0xff]
        %v1352 = vld [vmem:[%s1337 + $0x70] sm:$0xff]
        %v1353 = vld [vmem:[%s1337 + $0x78] sm:$0xff]
        %v1354 = vld [vmem:[%s1337 + $0x80] sm:$0xff]
        %v1355 = vld [vmem:[%s1337 + $0x88] sm:$0xff]
        %v1356 = vld [vmem:[%s1337 + $0x90] sm:$0xff]
        %v1357 = vld [vmem:[%s1337 + $0x98] sm:$0xff]
        %v1358 = vld [vmem:[%s1337 + $0xa0] sm:$0xff]
        %v1359 = vld [vmem:[%s1337 + $0xa8] sm:$0xff]
        %v1360 = vld [vmem:[%s1337 + $0xb0] sm:$0xff]
        %v1361 = vld [vmem:[%s1337 + $0xb8] sm:$0xff]
        %v1362 = vld [vmem:[%s1337 + $0xc0] sm:$0xff]
        %v1363 = vld [vmem:[%s1337 + $0xc8] sm:$0xff]
        %v1364 = vld [vmem:[%s1337 + $0xd0] sm:$0xff]
        %v1365 = vld [vmem:[%s1337 + $0xd8] sm:$0xff]
        %v1366 = vld [vmem:[%s1337 + $0xe0] sm:$0xff]
        %v1367 = vld [vmem:[%s1337 + $0xe8] sm:$0xff]
        %v1368 = vld [vmem:[%s1337 + $0xf0] sm:$0xff]
        %v1369 = vld [vmem:[%s1337 + $0xf8] sm:$0xff]
        %v1374 = vunpack.c.l.b16 %v368
        %v1375 = vunpack.c.h.b16 %v368
        %v1376 = vunpack.c.l.b16 %v370
        %v1377 = vunpack.c.h.b16 %v370
        %v1378 = vunpack.c.l.b16 %v372
        %v1379 = vunpack.c.h.b16 %v372
        %v1380 = vunpack.c.l.b16 %v374
        %v1381 = vunpack.c.h.b16 %v374
        %v1382 = vpack.c.b16 %v1376, %v1374
        %v1383 = vpack.c.b16 %v1377, %v1375
        %v1384 = vpack.c.b16 %v1380, %v1378
        %v1385 = vpack.c.b16 %v1381, %v1379
        %v1422 = vunpack.c.l.b16 %v1338
        %v1423 = vunpack.c.h.b16 %v1338
        %v1424 = vunpack.c.l.b16 %v1339
        %v1425 = vunpack.c.h.b16 %v1339
        %v1426 = vunpack.c.l.b16 %v1340
        %v1427 = vunpack.c.h.b16 %v1340
        %v1428 = vunpack.c.l.b16 %v1341
        %v1429 = vunpack.c.h.b16 %v1341
        %v1430 = vunpack.c.l.b16 %v1342
        %v1431 = vunpack.c.h.b16 %v1342
        %v1432 = vunpack.c.l.b16 %v1343
        %v1433 = vunpack.c.h.b16 %v1343
        %v1434 = vunpack.c.l.b16 %v1344
        %v1435 = vunpack.c.h.b16 %v1344
        %v1436 = vunpack.c.l.b16 %v1345
        %v1437 = vunpack.c.h.b16 %v1345
        %v1438 = vunpack.c.l.b16 %v1346
        %v1439 = vunpack.c.h.b16 %v1346
        %v1440 = vunpack.c.l.b16 %v1347
        %v1441 = vunpack.c.h.b16 %v1347
        %v1442 = vunpack.c.l.b16 %v1348
        %v1443 = vunpack.c.h.b16 %v1348
        %v1444 = vunpack.c.l.b16 %v1349
        %v1445 = vunpack.c.h.b16 %v1349
        %v1446 = vunpack.c.l.b16 %v1350
        %v1447 = vunpack.c.h.b16 %v1350
        %v1448 = vunpack.c.l.b16 %v1351
        %v1449 = vunpack.c.h.b16 %v1351
        %v1450 = vunpack.c.l.b16 %v1352
        %v1451 = vunpack.c.h.b16 %v1352
        %v1452 = vunpack.c.l.b16 %v1353
        %v1453 = vunpack.c.h.b16 %v1353
        %v1454 = vunpack.c.l.b16 %v1354
        %v1455 = vunpack.c.h.b16 %v1354
        %v1456 = vunpack.c.l.b16 %v1355
        %v1457 = vunpack.c.h.b16 %v1355
        %v1458 = vunpack.c.l.b16 %v1356
        %v1459 = vunpack.c.h.b16 %v1356
        %v1460 = vunpack.c.l.b16 %v1357
        %v1461 = vunpack.c.h.b16 %v1357
        %v1462 = vunpack.c.l.b16 %v1358
        %v1463 = vunpack.c.h.b16 %v1358
        %v1464 = vunpack.c.l.b16 %v1359
        %v1465 = vunpack.c.h.b16 %v1359
        %v1466 = vunpack.c.l.b16 %v1360
        %v1467 = vunpack.c.h.b16 %v1360
        %v1468 = vunpack.c.l.b16 %v1361
        %v1469 = vunpack.c.h.b16 %v1361
        %v1470 = vunpack.c.l.b16 %v1362
        %v1471 = vunpack.c.h.b16 %v1362
        %v1472 = vunpack.c.l.b16 %v1363
        %v1473 = vunpack.c.h.b16 %v1363
        %v1474 = vunpack.c.l.b16 %v1364
        %v1475 = vunpack.c.h.b16 %v1364
        %v1476 = vunpack.c.l.b16 %v1365
        %v1477 = vunpack.c.h.b16 %v1365
        %v1478 = vunpack.c.l.b16 %v1366
        %v1479 = vunpack.c.h.b16 %v1366
        %v1480 = vunpack.c.l.b16 %v1367
        %v1481 = vunpack.c.h.b16 %v1367
        %v1482 = vunpack.c.l.b16 %v1368
        %v1483 = vunpack.c.h.b16 %v1368
        %v1484 = vunpack.c.l.b16 %v1369
        %v1485 = vunpack.c.h.b16 %v1369
        %v1486 = vpack.c.b16 %v1424, %v1422
        %v1487 = vpack.c.b16 %v1425, %v1423
        %v1488 = vpack.c.b16 %v1428, %v1426
        %v1489 = vpack.c.b16 %v1429, %v1427
        %v1490 = vpack.c.b16 %v1432, %v1430
        %v1491 = vpack.c.b16 %v1433, %v1431
        %v1492 = vpack.c.b16 %v1436, %v1434
        %v1493 = vpack.c.b16 %v1437, %v1435
        %v1494 = vpack.c.b16 %v1440, %v1438
        %v1495 = vpack.c.b16 %v1441, %v1439
        %v1496 = vpack.c.b16 %v1444, %v1442
        %v1497 = vpack.c.b16 %v1445, %v1443
        %v1498 = vpack.c.b16 %v1448, %v1446
        %v1499 = vpack.c.b16 %v1449, %v1447
        %v1500 = vpack.c.b16 %v1452, %v1450
        %v1501 = vpack.c.b16 %v1453, %v1451
        %v1502 = vpack.c.b16 %v1456, %v1454
        %v1503 = vpack.c.b16 %v1457, %v1455
        %v1504 = vpack.c.b16 %v1460, %v1458
        %v1505 = vpack.c.b16 %v1461, %v1459
        %v1506 = vpack.c.b16 %v1464, %v1462
        %v1507 = vpack.c.b16 %v1465, %v1463
        %v1508 = vpack.c.b16 %v1468, %v1466
        %v1509 = vpack.c.b16 %v1469, %v1467
        %v1510 = vpack.c.b16 %v1472, %v1470
        %v1511 = vpack.c.b16 %v1473, %v1471
        %v1512 = vpack.c.b16 %v1476, %v1474
        %v1513 = vpack.c.b16 %v1477, %v1475
        %v1514 = vpack.c.b16 %v1480, %v1478
        %v1515 = vpack.c.b16 %v1481, %v1479
        %v1516 = vpack.c.b16 %v1484, %v1482
        %v1517 = vpack.c.b16 %v1485, %v1483
        %1550 = vmatpush.bf16.msra.mxu0 %v1500
        %1551 = vmatpush.bf16.msra.mxu0 %v1498
        %1552 = vmatpush.bf16.msra.mxu0 %v1496
        %1553 = vmatpush.bf16.msra.mxu0 %v1494
        %1554 = vmatpush.bf16.msra.mxu0 %v1492
        %1555 = vmatpush.bf16.msra.mxu0 %v1490
        %1556 = vmatpush.bf16.msra.mxu0 %v1488
        %1557 = vmatpush.bf16.msra.mxu0 %v1486
        %1558 = vmatmul.bf16.gmra.mxu0 %v1382
        %v1559 = vpop.f32.mrf.mxu0
        %v1560 = vadd.f32 0.0, %v1559
        %v1561 = vpop.f32.mrf.mxu0
        %v1562 = vadd.f32 0.0, %v1561
        %1563 = vmatmul.bf16.gmra.mxu0 %v1384
        %v1564 = vpop.f32.mrf.mxu0
        %v1565 = vadd.f32 0.0, %v1564
        %v1566 = vpop.f32.mrf.mxu0
        %v1567 = vadd.f32 0.0, %v1566
        %1568 = vdwg.mxu0
        %1569 = vmatpush.bf16.msra.mxu0 %v1516
        %1570 = vmatpush.bf16.msra.mxu0 %v1514
        %1571 = vmatpush.bf16.msra.mxu0 %v1512
        %1572 = vmatpush.bf16.msra.mxu0 %v1510
        %1573 = vmatpush.bf16.msra.mxu0 %v1508
        %1574 = vmatpush.bf16.msra.mxu0 %v1506
        %1575 = vmatpush.bf16.msra.mxu0 %v1504
        %1576 = vmatpush.bf16.msra.mxu0 %v1502
        %1577 = vmatmul.bf16.gmra.mxu0 %v1383
        %v1578 = vpop.f32.mrf.mxu0
        %v1579 = vadd.f32 %v1560, %v1578
        %v1580 = vpop.f32.mrf.mxu0
        %v1581 = vadd.f32 %v1562, %v1580
        %1582 = vmatmul.bf16.gmra.mxu0 %v1385
        %v1583 = vpop.f32.mrf.mxu0
        %v1584 = vadd.f32 %v1565, %v1583
        %v1585 = vpop.f32.mrf.mxu0
        %v1586 = vadd.f32 %v1567, %v1585
        %1587 = vdwg.mxu0
        %1588 = vmatpush.bf16.msra.mxu0 %v1501
        %1589 = vmatpush.bf16.msra.mxu0 %v1499
        %1590 = vmatpush.bf16.msra.mxu0 %v1497
        %1591 = vmatpush.bf16.msra.mxu0 %v1495
        %1592 = vmatpush.bf16.msra.mxu0 %v1493
        %1593 = vmatpush.bf16.msra.mxu0 %v1491
        %1594 = vmatpush.bf16.msra.mxu0 %v1489
        %1595 = vmatpush.bf16.msra.mxu0 %v1487
        %1596 = vmatmul.bf16.gmra.mxu0 %v1382
        %v1597 = vpop.f32.mrf.mxu0
        %v1598 = vadd.f32 0.0, %v1597
        %v1599 = vpop.f32.mrf.mxu0
        %v1600 = vadd.f32 0.0, %v1599
        %1601 = vmatmul.bf16.gmra.mxu0 %v1384
        %v1602 = vpop.f32.mrf.mxu0
        %v1603 = vadd.f32 0.0, %v1602
        %v1604 = vpop.f32.mrf.mxu0
        %v1605 = vadd.f32 0.0, %v1604
        %1606 = vdwg.mxu0
        %1607 = vmatpush.bf16.msra.mxu0 %v1517
        %1608 = vmatpush.bf16.msra.mxu0 %v1515
        %1609 = vmatpush.bf16.msra.mxu0 %v1513
        %1610 = vmatpush.bf16.msra.mxu0 %v1511
        %1611 = vmatpush.bf16.msra.mxu0 %v1509
        %1612 = vmatpush.bf16.msra.mxu0 %v1507
        %1613 = vmatpush.bf16.msra.mxu0 %v1505
        %1614 = vmatpush.bf16.msra.mxu0 %v1503
        %1615 = vmatmul.bf16.gmra.mxu0 %v1383
        %v1616 = vpop.f32.mrf.mxu0
        %v1617 = vadd.f32 %v1598, %v1616
        %v1618 = vpop.f32.mrf.mxu0
        %v1619 = vadd.f32 %v1600, %v1618
        %1620 = vmatmul.bf16.gmra.mxu0 %v1385
        %v1621 = vpop.f32.mrf.mxu0
        %v1622 = vadd.f32 %v1603, %v1621
        %v1623 = vpop.f32.mrf.mxu0
        %v1624 = vadd.f32 %v1605, %v1623
        %1625 = vdwg.mxu0
        %v1627 = vunpack.c.l.b16 %v366
        %v1628 = vunpack.c.h.b16 %v366
        %v1629 = vpack.c.b16 %v1374, %v1627
        %v1630 = vpack.c.b16 %v1375, %v1628
        %v1631 = vpack.c.b16 %v1378, %v1376
        %v1632 = vpack.c.b16 %v1379, %v1377
        %v1669 = vunpack.c.l.b16 %v1305
        %v1670 = vunpack.c.h.b16 %v1305
        %v1671 = vunpack.c.l.b16 %v1306
        %v1672 = vunpack.c.h.b16 %v1306
        %v1673 = vunpack.c.l.b16 %v1307
        %v1674 = vunpack.c.h.b16 %v1307
        %v1675 = vunpack.c.l.b16 %v1308
        %v1676 = vunpack.c.h.b16 %v1308
        %v1677 = vunpack.c.l.b16 %v1309
        %v1678 = vunpack.c.h.b16 %v1309
        %v1679 = vunpack.c.l.b16 %v1310
        %v1680 = vunpack.c.h.b16 %v1310
        %v1681 = vunpack.c.l.b16 %v1311
        %v1682 = vunpack.c.h.b16 %v1311
        %v1683 = vunpack.c.l.b16 %v1312
        %v1684 = vunpack.c.h.b16 %v1312
        %v1685 = vunpack.c.l.b16 %v1313
        %v1686 = vunpack.c.h.b16 %v1313
        %v1687 = vunpack.c.l.b16 %v1314
        %v1688 = vunpack.c.h.b16 %v1314
        %v1689 = vunpack.c.l.b16 %v1315
        %v1690 = vunpack.c.h.b16 %v1315
        %v1691 = vunpack.c.l.b16 %v1316
        %v1692 = vunpack.c.h.b16 %v1316
        %v1693 = vunpack.c.l.b16 %v1317
        %v1694 = vunpack.c.h.b16 %v1317
        %v1695 = vunpack.c.l.b16 %v1318
        %v1696 = vunpack.c.h.b16 %v1318
        %v1697 = vunpack.c.l.b16 %v1319
        %v1698 = vunpack.c.h.b16 %v1319
        %v1699 = vunpack.c.l.b16 %v1320
        %v1700 = vunpack.c.h.b16 %v1320
        %v1701 = vunpack.c.l.b16 %v1321
        %v1702 = vunpack.c.h.b16 %v1321
        %v1703 = vunpack.c.l.b16 %v1322
        %v1704 = vunpack.c.h.b16 %v1322
        %v1705 = vunpack.c.l.b16 %v1323
        %v1706 = vunpack.c.h.b16 %v1323
        %v1707 = vunpack.c.l.b16 %v1324
        %v1708 = vunpack.c.h.b16 %v1324
        %v1709 = vunpack.c.l.b16 %v1325
        %v1710 = vunpack.c.h.b16 %v1325
        %v1711 = vunpack.c.l.b16 %v1326
        %v1712 = vunpack.c.h.b16 %v1326
        %v1713 = vunpack.c.l.b16 %v1327
        %v1714 = vunpack.c.h.b16 %v1327
        %v1715 = vunpack.c.l.b16 %v1328
        %v1716 = vunpack.c.h.b16 %v1328
        %v1717 = vunpack.c.l.b16 %v1329
        %v1718 = vunpack.c.h.b16 %v1329
        %v1719 = vunpack.c.l.b16 %v1330
        %v1720 = vunpack.c.h.b16 %v1330
        %v1721 = vunpack.c.l.b16 %v1331
        %v1722 = vunpack.c.h.b16 %v1331
        %v1723 = vunpack.c.l.b16 %v1332
        %v1724 = vunpack.c.h.b16 %v1332
        %v1725 = vunpack.c.l.b16 %v1333
        %v1726 = vunpack.c.h.b16 %v1333
        %v1727 = vunpack.c.l.b16 %v1334
        %v1728 = vunpack.c.h.b16 %v1334
        %v1729 = vunpack.c.l.b16 %v1335
        %v1730 = vunpack.c.h.b16 %v1335
        %v1731 = vunpack.c.l.b16 %v1336
        %v1732 = vunpack.c.h.b16 %v1336
        %v1733 = vpack.c.b16 %v1671, %v1669
        %v1734 = vpack.c.b16 %v1672, %v1670
        %v1735 = vpack.c.b16 %v1675, %v1673
        %v1736 = vpack.c.b16 %v1676, %v1674
        %v1737 = vpack.c.b16 %v1679, %v1677
        %v1738 = vpack.c.b16 %v1680, %v1678
        %v1739 = vpack.c.b16 %v1683, %v1681
        %v1740 = vpack.c.b16 %v1684, %v1682
        %v1741 = vpack.c.b16 %v1687, %v1685
        %v1742 = vpack.c.b16 %v1688, %v1686
        %v1743 = vpack.c.b16 %v1691, %v1689
        %v1744 = vpack.c.b16 %v1692, %v1690
        %v1745 = vpack.c.b16 %v1695, %v1693
        %v1746 = vpack.c.b16 %v1696, %v1694
        %v1747 = vpack.c.b16 %v1699, %v1697
        %v1748 = vpack.c.b16 %v1700, %v1698
        %v1749 = vpack.c.b16 %v1703, %v1701
        %v1750 = vpack.c.b16 %v1704, %v1702
        %v1751 = vpack.c.b16 %v1707, %v1705
        %v1752 = vpack.c.b16 %v1708, %v1706
        %v1753 = vpack.c.b16 %v1711, %v1709
        %v1754 = vpack.c.b16 %v1712, %v1710
        %v1755 = vpack.c.b16 %v1715, %v1713
        %v1756 = vpack.c.b16 %v1716, %v1714
        %v1757 = vpack.c.b16 %v1719, %v1717
        %v1758 = vpack.c.b16 %v1720, %v1718
        %v1759 = vpack.c.b16 %v1723, %v1721
        %v1760 = vpack.c.b16 %v1724, %v1722
        %v1761 = vpack.c.b16 %v1727, %v1725
        %v1762 = vpack.c.b16 %v1728, %v1726
        %v1763 = vpack.c.b16 %v1731, %v1729
        %v1764 = vpack.c.b16 %v1732, %v1730
        %1797 = vmatpush.bf16.msra.mxu0 %v1747
        %1798 = vmatpush.bf16.msra.mxu0 %v1745
        %1799 = vmatpush.bf16.msra.mxu0 %v1743
        %1800 = vmatpush.bf16.msra.mxu0 %v1741
        %1801 = vmatpush.bf16.msra.mxu0 %v1739
        %1802 = vmatpush.bf16.msra.mxu0 %v1737
        %1803 = vmatpush.bf16.msra.mxu0 %v1735
        %1804 = vmatpush.bf16.msra.mxu0 %v1733
        %1805 = vmatmul.bf16.gmra.mxu0 %v1629
        %v1806 = vpop.f32.mrf.mxu0
        %v1807 = vadd.f32 %v1579, %v1806
        %v1808 = vpop.f32.mrf.mxu0
        %v1809 = vadd.f32 %v1581, %v1808
        %1810 = vmatmul.bf16.gmra.mxu0 %v1631
        %v1811 = vpop.f32.mrf.mxu0
        %v1812 = vadd.f32 %v1584, %v1811
        %v1813 = vpop.f32.mrf.mxu0
        %v1814 = vadd.f32 %v1586, %v1813
        %1815 = vdwg.mxu0
        %1816 = vmatpush.bf16.msra.mxu0 %v1763
        %1817 = vmatpush.bf16.msra.mxu0 %v1761
        %1818 = vmatpush.bf16.msra.mxu0 %v1759
        %1819 = vmatpush.bf16.msra.mxu0 %v1757
        %1820 = vmatpush.bf16.msra.mxu0 %v1755
        %1821 = vmatpush.bf16.msra.mxu0 %v1753
        %1822 = vmatpush.bf16.msra.mxu0 %v1751
        %1823 = vmatpush.bf16.msra.mxu0 %v1749
        %1824 = vmatmul.bf16.gmra.mxu0 %v1630
        %v1825 = vpop.f32.mrf.mxu0
        %v1826 = vadd.f32 %v1807, %v1825
        %v1827 = vpop.f32.mrf.mxu0
        %v1828 = vadd.f32 %v1809, %v1827
        %1829 = vmatmul.bf16.gmra.mxu0 %v1632
        %v1830 = vpop.f32.mrf.mxu0
        %v1831 = vadd.f32 %v1812, %v1830
        %v1832 = vpop.f32.mrf.mxu0
        %v1833 = vadd.f32 %v1814, %v1832
        %1834 = vdwg.mxu0
        %1835 = vmatpush.bf16.msra.mxu0 %v1748
        %1836 = vmatpush.bf16.msra.mxu0 %v1746
        %1837 = vmatpush.bf16.msra.mxu0 %v1744
        %1838 = vmatpush.bf16.msra.mxu0 %v1742
        %1839 = vmatpush.bf16.msra.mxu0 %v1740
        %1840 = vmatpush.bf16.msra.mxu0 %v1738
        %1841 = vmatpush.bf16.msra.mxu0 %v1736
        %1842 = vmatpush.bf16.msra.mxu0 %v1734
        %1843 = vmatmul.bf16.gmra.mxu0 %v1629
        %v1844 = vpop.f32.mrf.mxu0
        %v1845 = vadd.f32 %v1617, %v1844
        %v1846 = vpop.f32.mrf.mxu0
        %v1847 = vadd.f32 %v1619, %v1846
        %1848 = vmatmul.bf16.gmra.mxu0 %v1631
        %v1849 = vpop.f32.mrf.mxu0
        %v1850 = vadd.f32 %v1622, %v1849
        %v1851 = vpop.f32.mrf.mxu0
        %v1852 = vadd.f32 %v1624, %v1851
        %1853 = vdwg.mxu0
        %1854 = vmatpush.bf16.msra.mxu0 %v1764
        %1855 = vmatpush.bf16.msra.mxu0 %v1762
        %1856 = vmatpush.bf16.msra.mxu0 %v1760
        %1857 = vmatpush.bf16.msra.mxu0 %v1758
        %1858 = vmatpush.bf16.msra.mxu0 %v1756
        %1859 = vmatpush.bf16.msra.mxu0 %v1754
        %1860 = vmatpush.bf16.msra.mxu0 %v1752
        %1861 = vmatpush.bf16.msra.mxu0 %v1750
        %1862 = vmatmul.bf16.gmra.mxu0 %v1630
        %v1863 = vpop.f32.mrf.mxu0
        %v1864 = vadd.f32 %v1845, %v1863
        %v1865 = vpop.f32.mrf.mxu0
        %v1866 = vadd.f32 %v1847, %v1865
        %1867 = vmatmul.bf16.gmra.mxu0 %v1632
        %v1868 = vpop.f32.mrf.mxu0
        %v1869 = vadd.f32 %v1850, %v1868
        %v1870 = vpop.f32.mrf.mxu0
        %v1871 = vadd.f32 %v1852, %v1870
        %1872 = vdwg.mxu0
        %s1873 = scalar_lea.vmem [#allocation5], 1792
        %v1874 = vld [vmem:[%s1873] sm:$0xff]
        %v1875 = vld [vmem:[%s1873 + $0x8] sm:$0xff]
        %v1876 = vld [vmem:[%s1873 + $0x10] sm:$0xff]
        %v1877 = vld [vmem:[%s1873 + $0x18] sm:$0xff]
        %v1878 = vld [vmem:[%s1873 + $0x20] sm:$0xff]
        %v1879 = vld [vmem:[%s1873 + $0x28] sm:$0xff]
        %v1880 = vld [vmem:[%s1873 + $0x30] sm:$0xff]
        %v1881 = vld [vmem:[%s1873 + $0x38] sm:$0xff]
        %v1882 = vld [vmem:[%s1873 + $0x40] sm:$0xff]
        %v1883 = vld [vmem:[%s1873 + $0x48] sm:$0xff]
        %v1884 = vld [vmem:[%s1873 + $0x50] sm:$0xff]
        %v1885 = vld [vmem:[%s1873 + $0x58] sm:$0xff]
        %v1886 = vld [vmem:[%s1873 + $0x60] sm:$0xff]
        %v1887 = vld [vmem:[%s1873 + $0x68] sm:$0xff]
        %v1888 = vld [vmem:[%s1873 + $0x70] sm:$0xff]
        %v1889 = vld [vmem:[%s1873 + $0x78] sm:$0xff]
        %v1890 = vld [vmem:[%s1873 + $0x80] sm:$0xff]
        %v1891 = vld [vmem:[%s1873 + $0x88] sm:$0xff]
        %v1892 = vld [vmem:[%s1873 + $0x90] sm:$0xff]
        %v1893 = vld [vmem:[%s1873 + $0x98] sm:$0xff]
        %v1894 = vld [vmem:[%s1873 + $0xa0] sm:$0xff]
        %v1895 = vld [vmem:[%s1873 + $0xa8] sm:$0xff]
        %v1896 = vld [vmem:[%s1873 + $0xb0] sm:$0xff]
        %v1897 = vld [vmem:[%s1873 + $0xb8] sm:$0xff]
        %v1898 = vld [vmem:[%s1873 + $0xc0] sm:$0xff]
        %v1899 = vld [vmem:[%s1873 + $0xc8] sm:$0xff]
        %v1900 = vld [vmem:[%s1873 + $0xd0] sm:$0xff]
        %v1901 = vld [vmem:[%s1873 + $0xd8] sm:$0xff]
        %v1902 = vld [vmem:[%s1873 + $0xe0] sm:$0xff]
        %v1903 = vld [vmem:[%s1873 + $0xe8] sm:$0xff]
        %v1904 = vld [vmem:[%s1873 + $0xf0] sm:$0xff]
        %v1905 = vld [vmem:[%s1873 + $0xf8] sm:$0xff]
        %v1907 = vunpack.c.l.b16 %v376
        %v1908 = vunpack.c.h.b16 %v376
        %v1909 = vpack.c.b16 %v1907, %v1380
        %v1910 = vpack.c.b16 %v1908, %v1381
        %v1945 = vunpack.c.l.b16 %v1874
        %v1946 = vunpack.c.h.b16 %v1874
        %v1947 = vunpack.c.l.b16 %v1875
        %v1948 = vunpack.c.h.b16 %v1875
        %v1949 = vunpack.c.l.b16 %v1876
        %v1950 = vunpack.c.h.b16 %v1876
        %v1951 = vunpack.c.l.b16 %v1877
        %v1952 = vunpack.c.h.b16 %v1877
        %v1953 = vunpack.c.l.b16 %v1878
        %v1954 = vunpack.c.h.b16 %v1878
        %v1955 = vunpack.c.l.b16 %v1879
        %v1956 = vunpack.c.h.b16 %v1879
        %v1957 = vunpack.c.l.b16 %v1880
        %v1958 = vunpack.c.h.b16 %v1880
        %v1959 = vunpack.c.l.b16 %v1881
        %v1960 = vunpack.c.h.b16 %v1881
        %v1961 = vunpack.c.l.b16 %v1882
        %v1962 = vunpack.c.h.b16 %v1882
        %v1963 = vunpack.c.l.b16 %v1883
        %v1964 = vunpack.c.h.b16 %v1883
        %v1965 = vunpack.c.l.b16 %v1884
        %v1966 = vunpack.c.h.b16 %v1884
        %v1967 = vunpack.c.l.b16 %v1885
        %v1968 = vunpack.c.h.b16 %v1885
        %v1969 = vunpack.c.l.b16 %v1886
        %v1970 = vunpack.c.h.b16 %v1886
        %v1971 = vunpack.c.l.b16 %v1887
        %v1972 = vunpack.c.h.b16 %v1887
        %v1973 = vunpack.c.l.b16 %v1888
        %v1974 = vunpack.c.h.b16 %v1888
        %v1975 = vunpack.c.l.b16 %v1889
        %v1976 = vunpack.c.h.b16 %v1889
        %v1977 = vunpack.c.l.b16 %v1890
        %v1978 = vunpack.c.h.b16 %v1890
        %v1979 = vunpack.c.l.b16 %v1891
        %v1980 = vunpack.c.h.b16 %v1891
        %v1981 = vunpack.c.l.b16 %v1892
        %v1982 = vunpack.c.h.b16 %v1892
        %v1983 = vunpack.c.l.b16 %v1893
        %v1984 = vunpack.c.h.b16 %v1893
        %v1985 = vunpack.c.l.b16 %v1894
        %v1986 = vunpack.c.h.b16 %v1894
        %v1987 = vunpack.c.l.b16 %v1895
        %v1988 = vunpack.c.h.b16 %v1895
        %v1989 = vunpack.c.l.b16 %v1896
        %v1990 = vunpack.c.h.b16 %v1896
        %v1991 = vunpack.c.l.b16 %v1897
        %v1992 = vunpack.c.h.b16 %v1897
        %v1993 = vunpack.c.l.b16 %v1898
        %v1994 = vunpack.c.h.b16 %v1898
        %v1995 = vunpack.c.l.b16 %v1899
        %v1996 = vunpack.c.h.b16 %v1899
        %v1997 = vunpack.c.l.b16 %v1900
        %v1998 = vunpack.c.h.b16 %v1900
        %v1999 = vunpack.c.l.b16 %v1901
        %v2000 = vunpack.c.h.b16 %v1901
        %v2001 = vunpack.c.l.b16 %v1902
        %v2002 = vunpack.c.h.b16 %v1902
        %v2003 = vunpack.c.l.b16 %v1903
        %v2004 = vunpack.c.h.b16 %v1903
        %v2005 = vunpack.c.l.b16 %v1904
        %v2006 = vunpack.c.h.b16 %v1904
        %v2007 = vunpack.c.l.b16 %v1905
        %v2008 = vunpack.c.h.b16 %v1905
        %v2009 = vpack.c.b16 %v1947, %v1945
        %v2010 = vpack.c.b16 %v1948, %v1946
        %v2011 = vpack.c.b16 %v1951, %v1949
        %v2012 = vpack.c.b16 %v1952, %v1950
        %v2013 = vpack.c.b16 %v1955, %v1953
        %v2014 = vpack.c.b16 %v1956, %v1954
        %v2015 = vpack.c.b16 %v1959, %v1957
        %v2016 = vpack.c.b16 %v1960, %v1958
        %v2017 = vpack.c.b16 %v1963, %v1961
        %v2018 = vpack.c.b16 %v1964, %v1962
        %v2019 = vpack.c.b16 %v1967, %v1965
        %v2020 = vpack.c.b16 %v1968, %v1966
        %v2021 = vpack.c.b16 %v1971, %v1969
        %v2022 = vpack.c.b16 %v1972, %v1970
        %v2023 = vpack.c.b16 %v1975, %v1973
        %v2024 = vpack.c.b16 %v1976, %v1974
        %v2025 = vpack.c.b16 %v1979, %v1977
        %v2026 = vpack.c.b16 %v1980, %v1978
        %v2027 = vpack.c.b16 %v1983, %v1981
        %v2028 = vpack.c.b16 %v1984, %v1982
        %v2029 = vpack.c.b16 %v1987, %v1985
        %v2030 = vpack.c.b16 %v1988, %v1986
        %v2031 = vpack.c.b16 %v1991, %v1989
        %v2032 = vpack.c.b16 %v1992, %v1990
        %v2033 = vpack.c.b16 %v1995, %v1993
        %v2034 = vpack.c.b16 %v1996, %v1994
        %v2035 = vpack.c.b16 %v1999, %v1997
        %v2036 = vpack.c.b16 %v2000, %v1998
        %v2037 = vpack.c.b16 %v2003, %v2001
        %v2038 = vpack.c.b16 %v2004, %v2002
        %v2039 = vpack.c.b16 %v2007, %v2005
        %v2040 = vpack.c.b16 %v2008, %v2006
        %2073 = vmatpush.bf16.msra.mxu0 %v2023
        %2074 = vmatpush.bf16.msra.mxu0 %v2021
        %2075 = vmatpush.bf16.msra.mxu0 %v2019
        %2076 = vmatpush.bf16.msra.mxu0 %v2017
        %2077 = vmatpush.bf16.msra.mxu0 %v2015
        %2078 = vmatpush.bf16.msra.mxu0 %v2013
        %2079 = vmatpush.bf16.msra.mxu0 %v2011
        %2080 = vmatpush.bf16.msra.mxu0 %v2009
        %2081 = vmatmul.bf16.gmra.mxu0 %v1631
        %v2082 = vpop.f32.mrf.mxu0
        %v2083 = vadd.f32 0.0, %v2082
        %v2084 = vpop.f32.mrf.mxu0
        %v2085 = vadd.f32 0.0, %v2084
        %2086 = vmatmul.bf16.gmra.mxu0 %v1909
        %v2087 = vpop.f32.mrf.mxu0
        %v2088 = vadd.f32 0.0, %v2087
        %v2089 = vpop.f32.mrf.mxu0
        %v2090 = vadd.f32 0.0, %v2089
        %2091 = vdwg.mxu0
        %2092 = vmatpush.bf16.msra.mxu0 %v2039
        %2093 = vmatpush.bf16.msra.mxu0 %v2037
        %2094 = vmatpush.bf16.msra.mxu0 %v2035
        %2095 = vmatpush.bf16.msra.mxu0 %v2033
        %2096 = vmatpush.bf16.msra.mxu0 %v2031
        %2097 = vmatpush.bf16.msra.mxu0 %v2029
        %2098 = vmatpush.bf16.msra.mxu0 %v2027
        %2099 = vmatpush.bf16.msra.mxu0 %v2025
        %2100 = vmatmul.bf16.gmra.mxu0 %v1632
        %v2101 = vpop.f32.mrf.mxu0
        %v2102 = vadd.f32 %v2083, %v2101
        %v2103 = vpop.f32.mrf.mxu0
        %v2104 = vadd.f32 %v2085, %v2103
        %2105 = vmatmul.bf16.gmra.mxu0 %v1910
        %v2106 = vpop.f32.mrf.mxu0
        %v2107 = vadd.f32 %v2088, %v2106
        %v2108 = vpop.f32.mrf.mxu0
        %v2109 = vadd.f32 %v2090, %v2108
        %2110 = vdwg.mxu0
        %2111 = vmatpush.bf16.msra.mxu0 %v2024
        %2112 = vmatpush.bf16.msra.mxu0 %v2022
        %2113 = vmatpush.bf16.msra.mxu0 %v2020
        %2114 = vmatpush.bf16.msra.mxu0 %v2018
        %2115 = vmatpush.bf16.msra.mxu0 %v2016
        %2116 = vmatpush.bf16.msra.mxu0 %v2014
        %2117 = vmatpush.bf16.msra.mxu0 %v2012
        %2118 = vmatpush.bf16.msra.mxu0 %v2010
        %2119 = vmatmul.bf16.gmra.mxu0 %v1631
        %v2120 = vpop.f32.mrf.mxu0
        %v2121 = vadd.f32 0.0, %v2120
        %v2122 = vpop.f32.mrf.mxu0
        %v2123 = vadd.f32 0.0, %v2122
        %2124 = vmatmul.bf16.gmra.mxu0 %v1909
        %v2125 = vpop.f32.mrf.mxu0
        %v2126 = vadd.f32 0.0, %v2125
        %v2127 = vpop.f32.mrf.mxu0
        %v2128 = vadd.f32 0.0, %v2127
        %2129 = vdwg.mxu0
        %2130 = vmatpush.bf16.msra.mxu0 %v2040
        %2131 = vmatpush.bf16.msra.mxu0 %v2038
        %2132 = vmatpush.bf16.msra.mxu0 %v2036
        %2133 = vmatpush.bf16.msra.mxu0 %v2034
        %2134 = vmatpush.bf16.msra.mxu0 %v2032
        %2135 = vmatpush.bf16.msra.mxu0 %v2030
        %2136 = vmatpush.bf16.msra.mxu0 %v2028
        %2137 = vmatpush.bf16.msra.mxu0 %v2026
        %2138 = vmatmul.bf16.gmra.mxu0 %v1632
        %v2139 = vpop.f32.mrf.mxu0
        %v2140 = vadd.f32 %v2121, %v2139
        %v2141 = vpop.f32.mrf.mxu0
        %v2142 = vadd.f32 %v2123, %v2141
        %2143 = vmatmul.bf16.gmra.mxu0 %v1910
        %v2144 = vpop.f32.mrf.mxu0
        %v2145 = vadd.f32 %v2126, %v2144
        %v2146 = vpop.f32.mrf.mxu0
        %v2147 = vadd.f32 %v2128, %v2146
        %2148 = vdwg.mxu0
        %v2149 = vadd.f32 %v1826, %v2102
        %v2150 = vadd.f32 %v1864, %v2140
        %v2151 = vadd.f32 %v1828, %v2104
        %v2152 = vadd.f32 %v1866, %v2142
        %v2153 = vadd.f32 %v1831, %v2107
        %v2154 = vadd.f32 %v1869, %v2145
        %v2155 = vadd.f32 %v1833, %v2109
        %v2156 = vadd.f32 %v1871, %v2147
        %v2157 = vadd.f32 %v1296, %v2149
        %v2158 = vadd.f32 %v1297, %v2150
        %v2159 = vadd.f32 %v1298, %v2151
        %v2160 = vadd.f32 %v1299, %v2152
        %v2161 = vadd.f32 %v1300, %v2153
        %v2162 = vadd.f32 %v1301, %v2154
        %v2163 = vadd.f32 %v1302, %v2155
        %v2164 = vadd.f32 %v1303, %v2156
        %v2165 = vld [vmem:[#allocation2 + $0x8] sm:$0xff]
        %v2166 = vld [vmem:[#allocation2 + $0x10] sm:$0x11]
        %v2167 = vld [vmem:[#allocation2 + $0x20] sm:$0xff]
        %v2168 = vld [vmem:[#allocation2 + $0x28] sm:$0x11]
        %v2169 = vld [vmem:[#allocation2 + $0x38] sm:$0xff]
        %v2170 = vld [vmem:[#allocation2 + $0x40] sm:$0x11]
        %v2171 = vld [vmem:[#allocation2 + $0x50] sm:$0xff]
        %v2172 = vld [vmem:[#allocation2 + $0x58] sm:$0x11]
        %v2173 = vld [vmem:[#allocation2 + $0x68] sm:$0xff]
        %v2174 = vld [vmem:[#allocation2 + $0x70] sm:$0x11]
        %v2175 = vld [vmem:[#allocation2 + $0x80] sm:$0xff]
        %v2176 = vld [vmem:[#allocation2 + $0x88] sm:$0x11]
        %vm2177 = vsmask.f32 3328
        %vm2178 = vsmask.f32 7440
        %vm2179 = vmor %vm2177, %vm2178
        %v2181 = vshrl.u32 %v2165, 16
        %v2183 = vrot.slane %v2181, 4
        %v2184 = vshll.u32 %v2165, 16
        %v2186 = vrot.slane %v2184, 5
        %v2187 = vor.u32 %v2183, %v2186
        %v2188 = vrot.slane %v2187, 4
        %v2190 = vshll.u32 %v2166, 16
        %v2192 = vrot.slane %v2190, 5
        %v2193 = vsel %vm2179, %v2188, %v2192
        %v2195 = vshrl.u32 %v2167, 16
        %v2197 = vrot.slane %v2195, 4
        %v2198 = vshll.u32 %v2167, 16
        %v2200 = vrot.slane %v2198, 5
        %v2201 = vor.u32 %v2197, %v2200
        %v2202 = vrot.slane %v2201, 4
        %v2204 = vshll.u32 %v2168, 16
        %v2206 = vrot.slane %v2204, 5
        %v2207 = vsel %vm2179, %v2202, %v2206
        %v2209 = vshrl.u32 %v2169, 16
        %v2211 = vrot.slane %v2209, 4
        %v2212 = vshll.u32 %v2169, 16
        %v2214 = vrot.slane %v2212, 5
        %v2215 = vor.u32 %v2211, %v2214
        %v2216 = vrot.slane %v2215, 4
        %v2218 = vshll.u32 %v2170, 16
        %v2220 = vrot.slane %v2218, 5
        %v2221 = vsel %vm2179, %v2216, %v2220
        %v2223 = vshrl.u32 %v2171, 16
        %v2225 = vrot.slane %v2223, 4
        %v2226 = vshll.u32 %v2171, 16
        %v2228 = vrot.slane %v2226, 5
        %v2229 = vor.u32 %v2225, %v2228
        %v2230 = vrot.slane %v2229, 4
        %v2232 = vshll.u32 %v2172, 16
        %v2234 = vrot.slane %v2232, 5
        %v2235 = vsel %vm2179, %v2230, %v2234
        %v2237 = vshrl.u32 %v2173, 16
        %v2239 = vrot.slane %v2237, 4
        %v2240 = vshll.u32 %v2173, 16
        %v2242 = vrot.slane %v2240, 5
        %v2243 = vor.u32 %v2239, %v2242
        %v2244 = vrot.slane %v2243, 4
        %v2246 = vshll.u32 %v2174, 16
        %v2248 = vrot.slane %v2246, 5
        %v2249 = vsel %vm2179, %v2244, %v2248
        %v2251 = vshrl.u32 %v2175, 16
        %v2253 = vrot.slane %v2251, 4
        %v2254 = vshll.u32 %v2175, 16
        %v2256 = vrot.slane %v2254, 5
        %v2257 = vor.u32 %v2253, %v2256
        %v2258 = vrot.slane %v2257, 4
        %v2260 = vshll.u32 %v2176, 16
        %v2262 = vrot.slane %v2260, 5
        %v2263 = vsel %vm2179, %v2258, %v2262
        %s2264 = scalar_lea.vmem [#allocation5], 512
        %v2265 = vld [vmem:[%s2264] sm:$0xff]
        %v2266 = vld [vmem:[%s2264 + $0x8] sm:$0xff]
        %v2267 = vld [vmem:[%s2264 + $0x10] sm:$0xff]
        %v2268 = vld [vmem:[%s2264 + $0x18] sm:$0xff]
        %v2269 = vld [vmem:[%s2264 + $0x20] sm:$0xff]
        %v2270 = vld [vmem:[%s2264 + $0x28] sm:$0xff]
        %v2271 = vld [vmem:[%s2264 + $0x30] sm:$0xff]
        %v2272 = vld [vmem:[%s2264 + $0x38] sm:$0xff]
        %v2273 = vld [vmem:[%s2264 + $0x40] sm:$0xff]
        %v2274 = vld [vmem:[%s2264 + $0x48] sm:$0xff]
        %v2275 = vld [vmem:[%s2264 + $0x50] sm:$0xff]
        %v2276 = vld [vmem:[%s2264 + $0x58] sm:$0xff]
        %v2277 = vld [vmem:[%s2264 + $0x60] sm:$0xff]
        %v2278 = vld [vmem:[%s2264 + $0x68] sm:$0xff]
        %v2279 = vld [vmem:[%s2264 + $0x70] sm:$0xff]
        %v2280 = vld [vmem:[%s2264 + $0x78] sm:$0xff]
        %v2281 = vld [vmem:[%s2264 + $0x80] sm:$0xff]
        %v2282 = vld [vmem:[%s2264 + $0x88] sm:$0xff]
        %v2283 = vld [vmem:[%s2264 + $0x90] sm:$0xff]
        %v2284 = vld [vmem:[%s2264 + $0x98] sm:$0xff]
        %v2285 = vld [vmem:[%s2264 + $0xa0] sm:$0xff]
        %v2286 = vld [vmem:[%s2264 + $0xa8] sm:$0xff]
        %v2287 = vld [vmem:[%s2264 + $0xb0] sm:$0xff]
        %v2288 = vld [vmem:[%s2264 + $0xb8] sm:$0xff]
        %v2289 = vld [vmem:[%s2264 + $0xc0] sm:$0xff]
        %v2290 = vld [vmem:[%s2264 + $0xc8] sm:$0xff]
        %v2291 = vld [vmem:[%s2264 + $0xd0] sm:$0xff]
        %v2292 = vld [vmem:[%s2264 + $0xd8] sm:$0xff]
        %v2293 = vld [vmem:[%s2264 + $0xe0] sm:$0xff]
        %v2294 = vld [vmem:[%s2264 + $0xe8] sm:$0xff]
        %v2295 = vld [vmem:[%s2264 + $0xf0] sm:$0xff]
        %v2296 = vld [vmem:[%s2264 + $0xf8] sm:$0xff]
        %s2297 = scalar_lea.vmem [#allocation5], 1280
        %v2298 = vld [vmem:[%s2297] sm:$0xff]
        %v2299 = vld [vmem:[%s2297 + $0x8] sm:$0xff]
        %v2300 = vld [vmem:[%s2297 + $0x10] sm:$0xff]
        %v2301 = vld [vmem:[%s2297 + $0x18] sm:$0xff]
        %v2302 = vld [vmem:[%s2297 + $0x20] sm:$0xff]
        %v2303 = vld [vmem:[%s2297 + $0x28] sm:$0xff]
        %v2304 = vld [vmem:[%s2297 + $0x30] sm:$0xff]
        %v2305 = vld [vmem:[%s2297 + $0x38] sm:$0xff]
        %v2306 = vld [vmem:[%s2297 + $0x40] sm:$0xff]
        %v2307 = vld [vmem:[%s2297 + $0x48] sm:$0xff]
        %v2308 = vld [vmem:[%s2297 + $0x50] sm:$0xff]
        %v2309 = vld [vmem:[%s2297 + $0x58] sm:$0xff]
        %v2310 = vld [vmem:[%s2297 + $0x60] sm:$0xff]
        %v2311 = vld [vmem:[%s2297 + $0x68] sm:$0xff]
        %v2312 = vld [vmem:[%s2297 + $0x70] sm:$0xff]
        %v2313 = vld [vmem:[%s2297 + $0x78] sm:$0xff]
        %v2314 = vld [vmem:[%s2297 + $0x80] sm:$0xff]
        %v2315 = vld [vmem:[%s2297 + $0x88] sm:$0xff]
        %v2316 = vld [vmem:[%s2297 + $0x90] sm:$0xff]
        %v2317 = vld [vmem:[%s2297 + $0x98] sm:$0xff]
        %v2318 = vld [vmem:[%s2297 + $0xa0] sm:$0xff]
        %v2319 = vld [vmem:[%s2297 + $0xa8] sm:$0xff]
        %v2320 = vld [vmem:[%s2297 + $0xb0] sm:$0xff]
        %v2321 = vld [vmem:[%s2297 + $0xb8] sm:$0xff]
        %v2322 = vld [vmem:[%s2297 + $0xc0] sm:$0xff]
        %v2323 = vld [vmem:[%s2297 + $0xc8] sm:$0xff]
        %v2324 = vld [vmem:[%s2297 + $0xd0] sm:$0xff]
        %v2325 = vld [vmem:[%s2297 + $0xd8] sm:$0xff]
        %v2326 = vld [vmem:[%s2297 + $0xe0] sm:$0xff]
        %v2327 = vld [vmem:[%s2297 + $0xe8] sm:$0xff]
        %v2328 = vld [vmem:[%s2297 + $0xf0] sm:$0xff]
        %v2329 = vld [vmem:[%s2297 + $0xf8] sm:$0xff]
        %v2330 = vunpack.c.l.b16 %v2207
        %v2331 = vunpack.c.h.b16 %v2207
        %v2332 = vunpack.c.l.b16 %v2221
        %v2333 = vunpack.c.h.b16 %v2221
        %v2334 = vunpack.c.l.b16 %v2235
        %v2335 = vunpack.c.h.b16 %v2235
        %v2336 = vunpack.c.l.b16 %v2249
        %v2337 = vunpack.c.h.b16 %v2249
        %v2338 = vpack.c.b16 %v2332, %v2330
        %v2339 = vpack.c.b16 %v2333, %v2331
        %v2340 = vpack.c.b16 %v2336, %v2334
        %v2341 = vpack.c.b16 %v2337, %v2335
        %v2378 = vunpack.c.l.b16 %v2298
        %v2379 = vunpack.c.h.b16 %v2298
        %v2380 = vunpack.c.l.b16 %v2299
        %v2381 = vunpack.c.h.b16 %v2299
        %v2382 = vunpack.c.l.b16 %v2300
        %v2383 = vunpack.c.h.b16 %v2300
        %v2384 = vunpack.c.l.b16 %v2301
        %v2385 = vunpack.c.h.b16 %v2301
        %v2386 = vunpack.c.l.b16 %v2302
        %v2387 = vunpack.c.h.b16 %v2302
        %v2388 = vunpack.c.l.b16 %v2303
        %v2389 = vunpack.c.h.b16 %v2303
        %v2390 = vunpack.c.l.b16 %v2304
        %v2391 = vunpack.c.h.b16 %v2304
        %v2392 = vunpack.c.l.b16 %v2305
        %v2393 = vunpack.c.h.b16 %v2305
        %v2394 = vunpack.c.l.b16 %v2306
        %v2395 = vunpack.c.h.b16 %v2306
        %v2396 = vunpack.c.l.b16 %v2307
        %v2397 = vunpack.c.h.b16 %v2307
        %v2398 = vunpack.c.l.b16 %v2308
        %v2399 = vunpack.c.h.b16 %v2308
        %v2400 = vunpack.c.l.b16 %v2309
        %v2401 = vunpack.c.h.b16 %v2309
        %v2402 = vunpack.c.l.b16 %v2310
        %v2403 = vunpack.c.h.b16 %v2310
        %v2404 = vunpack.c.l.b16 %v2311
        %v2405 = vunpack.c.h.b16 %v2311
        %v2406 = vunpack.c.l.b16 %v2312
        %v2407 = vunpack.c.h.b16 %v2312
        %v2408 = vunpack.c.l.b16 %v2313
        %v2409 = vunpack.c.h.b16 %v2313
        %v2410 = vunpack.c.l.b16 %v2314
        %v2411 = vunpack.c.h.b16 %v2314
        %v2412 = vunpack.c.l.b16 %v2315
        %v2413 = vunpack.c.h.b16 %v2315
        %v2414 = vunpack.c.l.b16 %v2316
        %v2415 = vunpack.c.h.b16 %v2316
        %v2416 = vunpack.c.l.b16 %v2317
        %v2417 = vunpack.c.h.b16 %v2317
        %v2418 = vunpack.c.l.b16 %v2318
        %v2419 = vunpack.c.h.b16 %v2318
        %v2420 = vunpack.c.l.b16 %v2319
        %v2421 = vunpack.c.h.b16 %v2319
        %v2422 = vunpack.c.l.b16 %v2320
        %v2423 = vunpack.c.h.b16 %v2320
        %v2424 = vunpack.c.l.b16 %v2321
        %v2425 = vunpack.c.h.b16 %v2321
        %v2426 = vunpack.c.l.b16 %v2322
        %v2427 = vunpack.c.h.b16 %v2322
        %v2428 = vunpack.c.l.b16 %v2323
        %v2429 = vunpack.c.h.b16 %v2323
        %v2430 = vunpack.c.l.b16 %v2324
        %v2431 = vunpack.c.h.b16 %v2324
        %v2432 = vunpack.c.l.b16 %v2325
        %v2433 = vunpack.c.h.b16 %v2325
        %v2434 = vunpack.c.l.b16 %v2326
        %v2435 = vunpack.c.h.b16 %v2326
        %v2436 = vunpack.c.l.b16 %v2327
        %v2437 = vunpack.c.h.b16 %v2327
        %v2438 = vunpack.c.l.b16 %v2328
        %v2439 = vunpack.c.h.b16 %v2328
        %v2440 = vunpack.c.l.b16 %v2329
        %v2441 = vunpack.c.h.b16 %v2329
        %v2442 = vpack.c.b16 %v2380, %v2378
        %v2443 = vpack.c.b16 %v2381, %v2379
        %v2444 = vpack.c.b16 %v2384, %v2382
        %v2445 = vpack.c.b16 %v2385, %v2383
        %v2446 = vpack.c.b16 %v2388, %v2386
        %v2447 = vpack.c.b16 %v2389, %v2387
        %v2448 = vpack.c.b16 %v2392, %v2390
        %v2449 = vpack.c.b16 %v2393, %v2391
        %v2450 = vpack.c.b16 %v2396, %v2394
        %v2451 = vpack.c.b16 %v2397, %v2395
        %v2452 = vpack.c.b16 %v2400, %v2398
        %v2453 = vpack.c.b16 %v2401, %v2399
        %v2454 = vpack.c.b16 %v2404, %v2402
        %v2455 = vpack.c.b16 %v2405, %v2403
        %v2456 = vpack.c.b16 %v2408, %v2406
        %v2457 = vpack.c.b16 %v2409, %v2407
        %v2458 = vpack.c.b16 %v2412, %v2410
        %v2459 = vpack.c.b16 %v2413, %v2411
        %v2460 = vpack.c.b16 %v2416, %v2414
        %v2461 = vpack.c.b16 %v2417, %v2415
        %v2462 = vpack.c.b16 %v2420, %v2418
        %v2463 = vpack.c.b16 %v2421, %v2419
        %v2464 = vpack.c.b16 %v2424, %v2422
        %v2465 = vpack.c.b16 %v2425, %v2423
        %v2466 = vpack.c.b16 %v2428, %v2426
        %v2467 = vpack.c.b16 %v2429, %v2427
        %v2468 = vpack.c.b16 %v2432, %v2430
        %v2469 = vpack.c.b16 %v2433, %v2431
        %v2470 = vpack.c.b16 %v2436, %v2434
        %v2471 = vpack.c.b16 %v2437, %v2435
        %v2472 = vpack.c.b16 %v2440, %v2438
        %v2473 = vpack.c.b16 %v2441, %v2439
        %2506 = vmatpush.bf16.msra.mxu0 %v2456
        %2507 = vmatpush.bf16.msra.mxu0 %v2454
        %2508 = vmatpush.bf16.msra.mxu0 %v2452
        %2509 = vmatpush.bf16.msra.mxu0 %v2450
        %2510 = vmatpush.bf16.msra.mxu0 %v2448
        %2511 = vmatpush.bf16.msra.mxu0 %v2446
        %2512 = vmatpush.bf16.msra.mxu0 %v2444
        %2513 = vmatpush.bf16.msra.mxu0 %v2442
        %2514 = vmatmul.bf16.gmra.mxu0 %v2338
        %v2515 = vpop.f32.mrf.mxu0
        %v2516 = vadd.f32 0.0, %v2515
        %v2517 = vpop.f32.mrf.mxu0
        %v2518 = vadd.f32 0.0, %v2517
        %2519 = vmatmul.bf16.gmra.mxu0 %v2340
        %v2520 = vpop.f32.mrf.mxu0
        %v2521 = vadd.f32 0.0, %v2520
        %v2522 = vpop.f32.mrf.mxu0
        %v2523 = vadd.f32 0.0, %v2522
        %2524 = vdwg.mxu0
        %2525 = vmatpush.bf16.msra.mxu0 %v2472
        %2526 = vmatpush.bf16.msra.mxu0 %v2470
        %2527 = vmatpush.bf16.msra.mxu0 %v2468
        %2528 = vmatpush.bf16.msra.mxu0 %v2466
        %2529 = vmatpush.bf16.msra.mxu0 %v2464
        %2530 = vmatpush.bf16.msra.mxu0 %v2462
        %2531 = vmatpush.bf16.msra.mxu0 %v2460
        %2532 = vmatpush.bf16.msra.mxu0 %v2458
        %2533 = vmatmul.bf16.gmra.mxu0 %v2339
        %v2534 = vpop.f32.mrf.mxu0
        %v2535 = vadd.f32 %v2516, %v2534
        %v2536 = vpop.f32.mrf.mxu0
        %v2537 = vadd.f32 %v2518, %v2536
        %2538 = vmatmul.bf16.gmra.mxu0 %v2341
        %v2539 = vpop.f32.mrf.mxu0
        %v2540 = vadd.f32 %v2521, %v2539
        %v2541 = vpop.f32.mrf.mxu0
        %v2542 = vadd.f32 %v2523, %v2541
        %2543 = vdwg.mxu0
        %2544 = vmatpush.bf16.msra.mxu0 %v2457
        %2545 = vmatpush.bf16.msra.mxu0 %v2455
        %2546 = vmatpush.bf16.msra.mxu0 %v2453
        %2547 = vmatpush.bf16.msra.mxu0 %v2451
        %2548 = vmatpush.bf16.msra.mxu0 %v2449
        %2549 = vmatpush.bf16.msra.mxu0 %v2447
        %2550 = vmatpush.bf16.msra.mxu0 %v2445
        %2551 = vmatpush.bf16.msra.mxu0 %v2443
        %2552 = vmatmul.bf16.gmra.mxu0 %v2338
        %v2553 = vpop.f32.mrf.mxu0
        %v2554 = vadd.f32 0.0, %v2553
        %v2555 = vpop.f32.mrf.mxu0
        %v2556 = vadd.f32 0.0, %v2555
        %2557 = vmatmul.bf16.gmra.mxu0 %v2340
        %v2558 = vpop.f32.mrf.mxu0
        %v2559 = vadd.f32 0.0, %v2558
        %v2560 = vpop.f32.mrf.mxu0
        %v2561 = vadd.f32 0.0, %v2560
        %2562 = vdwg.mxu0
        %2563 = vmatpush.bf16.msra.mxu0 %v2473
        %2564 = vmatpush.bf16.msra.mxu0 %v2471
        %2565 = vmatpush.bf16.msra.mxu0 %v2469
        %2566 = vmatpush.bf16.msra.mxu0 %v2467
        %2567 = vmatpush.bf16.msra.mxu0 %v2465
        %2568 = vmatpush.bf16.msra.mxu0 %v2463
        %2569 = vmatpush.bf16.msra.mxu0 %v2461
        %2570 = vmatpush.bf16.msra.mxu0 %v2459
        %2571 = vmatmul.bf16.gmra.mxu0 %v2339
        %v2572 = vpop.f32.mrf.mxu0
        %v2573 = vadd.f32 %v2554, %v2572
        %v2574 = vpop.f32.mrf.mxu0
        %v2575 = vadd.f32 %v2556, %v2574
        %2576 = vmatmul.bf16.gmra.mxu0 %v2341
        %v2577 = vpop.f32.mrf.mxu0
        %v2578 = vadd.f32 %v2559, %v2577
        %v2579 = vpop.f32.mrf.mxu0
        %v2580 = vadd.f32 %v2561, %v2579
        %2581 = vdwg.mxu0
        %v2582 = vunpack.c.l.b16 %v2193
        %v2583 = vunpack.c.h.b16 %v2193
        %v2584 = vpack.c.b16 %v2330, %v2582
        %v2585 = vpack.c.b16 %v2331, %v2583
        %v2586 = vpack.c.b16 %v2334, %v2332
        %v2587 = vpack.c.b16 %v2335, %v2333
        %v2624 = vunpack.c.l.b16 %v2265
        %v2625 = vunpack.c.h.b16 %v2265
        %v2626 = vunpack.c.l.b16 %v2266
        %v2627 = vunpack.c.h.b16 %v2266
        %v2628 = vunpack.c.l.b16 %v2267
        %v2629 = vunpack.c.h.b16 %v2267
        %v2630 = vunpack.c.l.b16 %v2268
        %v2631 = vunpack.c.h.b16 %v2268
        %v2632 = vunpack.c.l.b16 %v2269
        %v2633 = vunpack.c.h.b16 %v2269
        %v2634 = vunpack.c.l.b16 %v2270
        %v2635 = vunpack.c.h.b16 %v2270
        %v2636 = vunpack.c.l.b16 %v2271
        %v2637 = vunpack.c.h.b16 %v2271
        %v2638 = vunpack.c.l.b16 %v2272
        %v2639 = vunpack.c.h.b16 %v2272
        %v2640 = vunpack.c.l.b16 %v2273
        %v2641 = vunpack.c.h.b16 %v2273
        %v2642 = vunpack.c.l.b16 %v2274
        %v2643 = vunpack.c.h.b16 %v2274
        %v2644 = vunpack.c.l.b16 %v2275
        %v2645 = vunpack.c.h.b16 %v2275
        %v2646 = vunpack.c.l.b16 %v2276
        %v2647 = vunpack.c.h.b16 %v2276
        %v2648 = vunpack.c.l.b16 %v2277
        %v2649 = vunpack.c.h.b16 %v2277
        %v2650 = vunpack.c.l.b16 %v2278
        %v2651 = vunpack.c.h.b16 %v2278
        %v2652 = vunpack.c.l.b16 %v2279
        %v2653 = vunpack.c.h.b16 %v2279
        %v2654 = vunpack.c.l.b16 %v2280
        %v2655 = vunpack.c.h.b16 %v2280
        %v2656 = vunpack.c.l.b16 %v2281
        %v2657 = vunpack.c.h.b16 %v2281
        %v2658 = vunpack.c.l.b16 %v2282
        %v2659 = vunpack.c.h.b16 %v2282
        %v2660 = vunpack.c.l.b16 %v2283
        %v2661 = vunpack.c.h.b16 %v2283
        %v2662 = vunpack.c.l.b16 %v2284
        %v2663 = vunpack.c.h.b16 %v2284
        %v2664 = vunpack.c.l.b16 %v2285
        %v2665 = vunpack.c.h.b16 %v2285
        %v2666 = vunpack.c.l.b16 %v2286
        %v2667 = vunpack.c.h.b16 %v2286
        %v2668 = vunpack.c.l.b16 %v2287
        %v2669 = vunpack.c.h.b16 %v2287
        %v2670 = vunpack.c.l.b16 %v2288
        %v2671 = vunpack.c.h.b16 %v2288
        %v2672 = vunpack.c.l.b16 %v2289
        %v2673 = vunpack.c.h.b16 %v2289
        %v2674 = vunpack.c.l.b16 %v2290
        %v2675 = vunpack.c.h.b16 %v2290
        %v2676 = vunpack.c.l.b16 %v2291
        %v2677 = vunpack.c.h.b16 %v2291
        %v2678 = vunpack.c.l.b16 %v2292
        %v2679 = vunpack.c.h.b16 %v2292
        %v2680 = vunpack.c.l.b16 %v2293
        %v2681 = vunpack.c.h.b16 %v2293
        %v2682 = vunpack.c.l.b16 %v2294
        %v2683 = vunpack.c.h.b16 %v2294
        %v2684 = vunpack.c.l.b16 %v2295
        %v2685 = vunpack.c.h.b16 %v2295
        %v2686 = vunpack.c.l.b16 %v2296
        %v2687 = vunpack.c.h.b16 %v2296
        %v2688 = vpack.c.b16 %v2626, %v2624
        %v2689 = vpack.c.b16 %v2627, %v2625
        %v2690 = vpack.c.b16 %v2630, %v2628
        %v2691 = vpack.c.b16 %v2631, %v2629
        %v2692 = vpack.c.b16 %v2634, %v2632
        %v2693 = vpack.c.b16 %v2635, %v2633
        %v2694 = vpack.c.b16 %v2638, %v2636
        %v2695 = vpack.c.b16 %v2639, %v2637
        %v2696 = vpack.c.b16 %v2642, %v2640
        %v2697 = vpack.c.b16 %v2643, %v2641
        %v2698 = vpack.c.b16 %v2646, %v2644
        %v2699 = vpack.c.b16 %v2647, %v2645
        %v2700 = vpack.c.b16 %v2650, %v2648
        %v2701 = vpack.c.b16 %v2651, %v2649
        %v2702 = vpack.c.b16 %v2654, %v2652
        %v2703 = vpack.c.b16 %v2655, %v2653
        %v2704 = vpack.c.b16 %v2658, %v2656
        %v2705 = vpack.c.b16 %v2659, %v2657
        %v2706 = vpack.c.b16 %v2662, %v2660
        %v2707 = vpack.c.b16 %v2663, %v2661
        %v2708 = vpack.c.b16 %v2666, %v2664
        %v2709 = vpack.c.b16 %v2667, %v2665
        %v2710 = vpack.c.b16 %v2670, %v2668
        %v2711 = vpack.c.b16 %v2671, %v2669
        %v2712 = vpack.c.b16 %v2674, %v2672
        %v2713 = vpack.c.b16 %v2675, %v2673
        %v2714 = vpack.c.b16 %v2678, %v2676
        %v2715 = vpack.c.b16 %v2679, %v2677
        %v2716 = vpack.c.b16 %v2682, %v2680
        %v2717 = vpack.c.b16 %v2683, %v2681
        %v2718 = vpack.c.b16 %v2686, %v2684
        %v2719 = vpack.c.b16 %v2687, %v2685
        %2752 = vmatpush.bf16.msra.mxu0 %v2702
        %2753 = vmatpush.bf16.msra.mxu0 %v2700
        %2754 = vmatpush.bf16.msra.mxu0 %v2698
        %2755 = vmatpush.bf16.msra.mxu0 %v2696
        %2756 = vmatpush.bf16.msra.mxu0 %v2694
        %2757 = vmatpush.bf16.msra.mxu0 %v2692
        %2758 = vmatpush.bf16.msra.mxu0 %v2690
        %2759 = vmatpush.bf16.msra.mxu0 %v2688
        %2760 = vmatmul.bf16.gmra.mxu0 %v2584
        %v2761 = vpop.f32.mrf.mxu0
        %v2762 = vadd.f32 %v2535, %v2761
        %v2763 = vpop.f32.mrf.mxu0
        %v2764 = vadd.f32 %v2537, %v2763
        %2765 = vmatmul.bf16.gmra.mxu0 %v2586
        %v2766 = vpop.f32.mrf.mxu0
        %v2767 = vadd.f32 %v2540, %v2766
        %v2768 = vpop.f32.mrf.mxu0
        %v2769 = vadd.f32 %v2542, %v2768
        %2770 = vdwg.mxu0
        %2771 = vmatpush.bf16.msra.mxu0 %v2718
        %2772 = vmatpush.bf16.msra.mxu0 %v2716
        %2773 = vmatpush.bf16.msra.mxu0 %v2714
        %2774 = vmatpush.bf16.msra.mxu0 %v2712
        %2775 = vmatpush.bf16.msra.mxu0 %v2710
        %2776 = vmatpush.bf16.msra.mxu0 %v2708
        %2777 = vmatpush.bf16.msra.mxu0 %v2706
        %2778 = vmatpush.bf16.msra.mxu0 %v2704
        %2779 = vmatmul.bf16.gmra.mxu0 %v2585
        %v2780 = vpop.f32.mrf.mxu0
        %v2781 = vadd.f32 %v2762, %v2780
        %v2782 = vpop.f32.mrf.mxu0
        %v2783 = vadd.f32 %v2764, %v2782
        %2784 = vmatmul.bf16.gmra.mxu0 %v2587
        %v2785 = vpop.f32.mrf.mxu0
        %v2786 = vadd.f32 %v2767, %v2785
        %v2787 = vpop.f32.mrf.mxu0
        %v2788 = vadd.f32 %v2769, %v2787
        %2789 = vdwg.mxu0
        %2790 = vmatpush.bf16.msra.mxu0 %v2703
        %2791 = vmatpush.bf16.msra.mxu0 %v2701
        %2792 = vmatpush.bf16.msra.mxu0 %v2699
        %2793 = vmatpush.bf16.msra.mxu0 %v2697
        %2794 = vmatpush.bf16.msra.mxu0 %v2695
        %2795 = vmatpush.bf16.msra.mxu0 %v2693
        %2796 = vmatpush.bf16.msra.mxu0 %v2691
        %2797 = vmatpush.bf16.msra.mxu0 %v2689
        %2798 = vmatmul.bf16.gmra.mxu0 %v2584
        %v2799 = vpop.f32.mrf.mxu0
        %v2800 = vadd.f32 %v2573, %v2799
        %v2801 = vpop.f32.mrf.mxu0
        %v2802 = vadd.f32 %v2575, %v2801
        %2803 = vmatmul.bf16.gmra.mxu0 %v2586
        %v2804 = vpop.f32.mrf.mxu0
        %v2805 = vadd.f32 %v2578, %v2804
        %v2806 = vpop.f32.mrf.mxu0
        %v2807 = vadd.f32 %v2580, %v2806
        %2808 = vdwg.mxu0
        %2809 = vmatpush.bf16.msra.mxu0 %v2719
        %2810 = vmatpush.bf16.msra.mxu0 %v2717
        %2811 = vmatpush.bf16.msra.mxu0 %v2715
        %2812 = vmatpush.bf16.msra.mxu0 %v2713
        %2813 = vmatpush.bf16.msra.mxu0 %v2711
        %2814 = vmatpush.bf16.msra.mxu0 %v2709
        %2815 = vmatpush.bf16.msra.mxu0 %v2707
        %2816 = vmatpush.bf16.msra.mxu0 %v2705
        %2817 = vmatmul.bf16.gmra.mxu0 %v2585
        %v2818 = vpop.f32.mrf.mxu0
        %v2819 = vadd.f32 %v2800, %v2818
        %v2820 = vpop.f32.mrf.mxu0
        %v2821 = vadd.f32 %v2802, %v2820
        %2822 = vmatmul.bf16.gmra.mxu0 %v2587
        %v2823 = vpop.f32.mrf.mxu0
        %v2824 = vadd.f32 %v2805, %v2823
        %v2825 = vpop.f32.mrf.mxu0
        %v2826 = vadd.f32 %v2807, %v2825
        %2827 = vdwg.mxu0
        %s2828 = scalar_lea.vmem [#allocation5], 2048
        %v2829 = vld [vmem:[%s2828] sm:$0xff]
        %v2830 = vld [vmem:[%s2828 + $0x8] sm:$0xff]
        %v2831 = vld [vmem:[%s2828 + $0x10] sm:$0xff]
        %v2832 = vld [vmem:[%s2828 + $0x18] sm:$0xff]
        %v2833 = vld [vmem:[%s2828 + $0x20] sm:$0xff]
        %v2834 = vld [vmem:[%s2828 + $0x28] sm:$0xff]
        %v2835 = vld [vmem:[%s2828 + $0x30] sm:$0xff]
        %v2836 = vld [vmem:[%s2828 + $0x38] sm:$0xff]
        %v2837 = vld [vmem:[%s2828 + $0x40] sm:$0xff]
        %v2838 = vld [vmem:[%s2828 + $0x48] sm:$0xff]
        %v2839 = vld [vmem:[%s2828 + $0x50] sm:$0xff]
        %v2840 = vld [vmem:[%s2828 + $0x58] sm:$0xff]
        %v2841 = vld [vmem:[%s2828 + $0x60] sm:$0xff]
        %v2842 = vld [vmem:[%s2828 + $0x68] sm:$0xff]
        %v2843 = vld [vmem:[%s2828 + $0x70] sm:$0xff]
        %v2844 = vld [vmem:[%s2828 + $0x78] sm:$0xff]
        %v2845 = vld [vmem:[%s2828 + $0x80] sm:$0xff]
        %v2846 = vld [vmem:[%s2828 + $0x88] sm:$0xff]
        %v2847 = vld [vmem:[%s2828 + $0x90] sm:$0xff]
        %v2848 = vld [vmem:[%s2828 + $0x98] sm:$0xff]
        %v2849 = vld [vmem:[%s2828 + $0xa0] sm:$0xff]
        %v2850 = vld [vmem:[%s2828 + $0xa8] sm:$0xff]
        %v2851 = vld [vmem:[%s2828 + $0xb0] sm:$0xff]
        %v2852 = vld [vmem:[%s2828 + $0xb8] sm:$0xff]
        %v2853 = vld [vmem:[%s2828 + $0xc0] sm:$0xff]
        %v2854 = vld [vmem:[%s2828 + $0xc8] sm:$0xff]
        %v2855 = vld [vmem:[%s2828 + $0xd0] sm:$0xff]
        %v2856 = vld [vmem:[%s2828 + $0xd8] sm:$0xff]
        %v2857 = vld [vmem:[%s2828 + $0xe0] sm:$0xff]
        %v2858 = vld [vmem:[%s2828 + $0xe8] sm:$0xff]
        %v2859 = vld [vmem:[%s2828 + $0xf0] sm:$0xff]
        %v2860 = vld [vmem:[%s2828 + $0xf8] sm:$0xff]
        %v2861 = vunpack.c.l.b16 %v2263
        %v2862 = vunpack.c.h.b16 %v2263
        %v2863 = vpack.c.b16 %v2861, %v2336
        %v2864 = vpack.c.b16 %v2862, %v2337
        %v2899 = vunpack.c.l.b16 %v2829
        %v2900 = vunpack.c.h.b16 %v2829
        %v2901 = vunpack.c.l.b16 %v2830
        %v2902 = vunpack.c.h.b16 %v2830
        %v2903 = vunpack.c.l.b16 %v2831
        %v2904 = vunpack.c.h.b16 %v2831
        %v2905 = vunpack.c.l.b16 %v2832
        %v2906 = vunpack.c.h.b16 %v2832
        %v2907 = vunpack.c.l.b16 %v2833
        %v2908 = vunpack.c.h.b16 %v2833
        %v2909 = vunpack.c.l.b16 %v2834
        %v2910 = vunpack.c.h.b16 %v2834
        %v2911 = vunpack.c.l.b16 %v2835
        %v2912 = vunpack.c.h.b16 %v2835
        %v2913 = vunpack.c.l.b16 %v2836
        %v2914 = vunpack.c.h.b16 %v2836
        %v2915 = vunpack.c.l.b16 %v2837
        %v2916 = vunpack.c.h.b16 %v2837
        %v2917 = vunpack.c.l.b16 %v2838
        %v2918 = vunpack.c.h.b16 %v2838
        %v2919 = vunpack.c.l.b16 %v2839
        %v2920 = vunpack.c.h.b16 %v2839
        %v2921 = vunpack.c.l.b16 %v2840
        %v2922 = vunpack.c.h.b16 %v2840
        %v2923 = vunpack.c.l.b16 %v2841
        %v2924 = vunpack.c.h.b16 %v2841
        %v2925 = vunpack.c.l.b16 %v2842
        %v2926 = vunpack.c.h.b16 %v2842
        %v2927 = vunpack.c.l.b16 %v2843
        %v2928 = vunpack.c.h.b16 %v2843
        %v2929 = vunpack.c.l.b16 %v2844
        %v2930 = vunpack.c.h.b16 %v2844
        %v2931 = vunpack.c.l.b16 %v2845
        %v2932 = vunpack.c.h.b16 %v2845
        %v2933 = vunpack.c.l.b16 %v2846
        %v2934 = vunpack.c.h.b16 %v2846
        %v2935 = vunpack.c.l.b16 %v2847
        %v2936 = vunpack.c.h.b16 %v2847
        %v2937 = vunpack.c.l.b16 %v2848
        %v2938 = vunpack.c.h.b16 %v2848
        %v2939 = vunpack.c.l.b16 %v2849
        %v2940 = vunpack.c.h.b16 %v2849
        %v2941 = vunpack.c.l.b16 %v2850
        %v2942 = vunpack.c.h.b16 %v2850
        %v2943 = vunpack.c.l.b16 %v2851
        %v2944 = vunpack.c.h.b16 %v2851
        %v2945 = vunpack.c.l.b16 %v2852
        %v2946 = vunpack.c.h.b16 %v2852
        %v2947 = vunpack.c.l.b16 %v2853
        %v2948 = vunpack.c.h.b16 %v2853
        %v2949 = vunpack.c.l.b16 %v2854
        %v2950 = vunpack.c.h.b16 %v2854
        %v2951 = vunpack.c.l.b16 %v2855
        %v2952 = vunpack.c.h.b16 %v2855
        %v2953 = vunpack.c.l.b16 %v2856
        %v2954 = vunpack.c.h.b16 %v2856
        %v2955 = vunpack.c.l.b16 %v2857
        %v2956 = vunpack.c.h.b16 %v2857
        %v2957 = vunpack.c.l.b16 %v2858
        %v2958 = vunpack.c.h.b16 %v2858
        %v2959 = vunpack.c.l.b16 %v2859
        %v2960 = vunpack.c.h.b16 %v2859
        %v2961 = vunpack.c.l.b16 %v2860
        %v2962 = vunpack.c.h.b16 %v2860
        %v2963 = vpack.c.b16 %v2901, %v2899
        %v2964 = vpack.c.b16 %v2902, %v2900
        %v2965 = vpack.c.b16 %v2905, %v2903
        %v2966 = vpack.c.b16 %v2906, %v2904
        %v2967 = vpack.c.b16 %v2909, %v2907
        %v2968 = vpack.c.b16 %v2910, %v2908
        %v2969 = vpack.c.b16 %v2913, %v2911
        %v2970 = vpack.c.b16 %v2914, %v2912
        %v2971 = vpack.c.b16 %v2917, %v2915
        %v2972 = vpack.c.b16 %v2918, %v2916
        %v2973 = vpack.c.b16 %v2921, %v2919
        %v2974 = vpack.c.b16 %v2922, %v2920
        %v2975 = vpack.c.b16 %v2925, %v2923
        %v2976 = vpack.c.b16 %v2926, %v2924
        %v2977 = vpack.c.b16 %v2929, %v2927
        %v2978 = vpack.c.b16 %v2930, %v2928
        %v2979 = vpack.c.b16 %v2933, %v2931
        %v2980 = vpack.c.b16 %v2934, %v2932
        %v2981 = vpack.c.b16 %v2937, %v2935
        %v2982 = vpack.c.b16 %v2938, %v2936
        %v2983 = vpack.c.b16 %v2941, %v2939
        %v2984 = vpack.c.b16 %v2942, %v2940
        %v2985 = vpack.c.b16 %v2945, %v2943
        %v2986 = vpack.c.b16 %v2946, %v2944
        %v2987 = vpack.c.b16 %v2949, %v2947
        %v2988 = vpack.c.b16 %v2950, %v2948
        %v2989 = vpack.c.b16 %v2953, %v2951
        %v2990 = vpack.c.b16 %v2954, %v2952
        %v2991 = vpack.c.b16 %v2957, %v2955
        %v2992 = vpack.c.b16 %v2958, %v2956
        %v2993 = vpack.c.b16 %v2961, %v2959
        %v2994 = vpack.c.b16 %v2962, %v2960
        %3027 = vmatpush.bf16.msra.mxu0 %v2977
        %3028 = vmatpush.bf16.msra.mxu0 %v2975
        %3029 = vmatpush.bf16.msra.mxu0 %v2973
        %3030 = vmatpush.bf16.msra.mxu0 %v2971
        %3031 = vmatpush.bf16.msra.mxu0 %v2969
        %3032 = vmatpush.bf16.msra.mxu0 %v2967
        %3033 = vmatpush.bf16.msra.mxu0 %v2965
        %3034 = vmatpush.bf16.msra.mxu0 %v2963
        %3035 = vmatmul.bf16.gmra.mxu0 %v2586
        %v3036 = vpop.f32.mrf.mxu0
        %v3037 = vadd.f32 0.0, %v3036
        %v3038 = vpop.f32.mrf.mxu0
        %v3039 = vadd.f32 0.0, %v3038
        %3040 = vmatmul.bf16.gmra.mxu0 %v2863
        %v3041 = vpop.f32.mrf.mxu0
        %v3042 = vadd.f32 0.0, %v3041
        %v3043 = vpop.f32.mrf.mxu0
        %v3044 = vadd.f32 0.0, %v3043
        %3045 = vdwg.mxu0
        %3046 = vmatpush.bf16.msra.mxu0 %v2993
        %3047 = vmatpush.bf16.msra.mxu0 %v2991
        %3048 = vmatpush.bf16.msra.mxu0 %v2989
        %3049 = vmatpush.bf16.msra.mxu0 %v2987
        %3050 = vmatpush.bf16.msra.mxu0 %v2985
        %3051 = vmatpush.bf16.msra.mxu0 %v2983
        %3052 = vmatpush.bf16.msra.mxu0 %v2981
        %3053 = vmatpush.bf16.msra.mxu0 %v2979
        %3054 = vmatmul.bf16.gmra.mxu0 %v2587
        %v3055 = vpop.f32.mrf.mxu0
        %v3056 = vadd.f32 %v3037, %v3055
        %v3057 = vpop.f32.mrf.mxu0
        %v3058 = vadd.f32 %v3039, %v3057
        %3059 = vmatmul.bf16.gmra.mxu0 %v2864
        %v3060 = vpop.f32.mrf.mxu0
        %v3061 = vadd.f32 %v3042, %v3060
        %v3062 = vpop.f32.mrf.mxu0
        %v3063 = vadd.f32 %v3044, %v3062
        %3064 = vdwg.mxu0
        %3065 = vmatpush.bf16.msra.mxu0 %v2978
        %3066 = vmatpush.bf16.msra.mxu0 %v2976
        %3067 = vmatpush.bf16.msra.mxu0 %v2974
        %3068 = vmatpush.bf16.msra.mxu0 %v2972
        %3069 = vmatpush.bf16.msra.mxu0 %v2970
        %3070 = vmatpush.bf16.msra.mxu0 %v2968
        %3071 = vmatpush.bf16.msra.mxu0 %v2966
        %3072 = vmatpush.bf16.msra.mxu0 %v2964
        %3073 = vmatmul.bf16.gmra.mxu0 %v2586
        %v3074 = vpop.f32.mrf.mxu0
        %v3075 = vadd.f32 0.0, %v3074
        %v3076 = vpop.f32.mrf.mxu0
        %v3077 = vadd.f32 0.0, %v3076
        %3078 = vmatmul.bf16.gmra.mxu0 %v2863
        %v3079 = vpop.f32.mrf.mxu0
        %v3080 = vadd.f32 0.0, %v3079
        %v3081 = vpop.f32.mrf.mxu0
        %v3082 = vadd.f32 0.0, %v3081
        %3083 = vdwg.mxu0
        %3084 = vmatpush.bf16.msra.mxu0 %v2994
        %3085 = vmatpush.bf16.msra.mxu0 %v2992
        %3086 = vmatpush.bf16.msra.mxu0 %v2990
        %3087 = vmatpush.bf16.msra.mxu0 %v2988
        %3088 = vmatpush.bf16.msra.mxu0 %v2986
        %3089 = vmatpush.bf16.msra.mxu0 %v2984
        %3090 = vmatpush.bf16.msra.mxu0 %v2982
        %3091 = vmatpush.bf16.msra.mxu0 %v2980
        %3092 = vmatmul.bf16.gmra.mxu0 %v2587
        %v3093 = vpop.f32.mrf.mxu0
        %v3094 = vadd.f32 %v3075, %v3093
        %v3095 = vpop.f32.mrf.mxu0
        %v3096 = vadd.f32 %v3077, %v3095
        %3097 = vmatmul.bf16.gmra.mxu0 %v2864
        %v3098 = vpop.f32.mrf.mxu0
        %v3099 = vadd.f32 %v3080, %v3098
        %v3100 = vpop.f32.mrf.mxu0
        %v3101 = vadd.f32 %v3082, %v3100
        %3102 = vdwg.mxu0
        %v3103 = vadd.f32 %v2781, %v3056
        %v3104 = vadd.f32 %v2819, %v3094
        %v3105 = vadd.f32 %v2783, %v3058
        %v3106 = vadd.f32 %v2821, %v3096
        %v3107 = vadd.f32 %v2786, %v3061
        %v3108 = vadd.f32 %v2824, %v3099
        %v3109 = vadd.f32 %v2788, %v3063
        %v3110 = vadd.f32 %v2826, %v3101
        %v3111 = vadd.f32 %v2157, %v3103
        %v3112 = vadd.f32 %v2158, %v3104
        %v3113 = vadd.f32 %v2159, %v3105
        %v3114 = vadd.f32 %v2160, %v3106
        %v3115 = vadd.f32 %v2161, %v3107
        %v3116 = vadd.f32 %v2162, %v3108
        %v3117 = vadd.f32 %v2163, %v3109
        %v3118 = vadd.f32 %v2164, %v3110
        %v3119 = vld [vmem:[#allocation7] sm:$0x3]
        %v3121 = vperm.slane %v3119, 0
        %v3122 = vperm.slane %v3119, 1
        %v3125 = vadd.f32 %v3111, %v3121
        %v3126 = vadd.f32 %v3112, %v3122
        %v3127 = vadd.f32 %v3113, %v3121
        %v3128 = vadd.f32 %v3114, %v3122
        %v3129 = vadd.f32 %v3115, %v3121
        %v3130 = vadd.f32 %v3116, %v3122
        %v3131 = vadd.f32 %v3117, %v3121
        %v3132 = vadd.f32 %v3118, %v3122
        %v3133 = vpack.c.bf16 %v3126, %v3125
        %v3134 = vpack.c.bf16 %v3128, %v3127
        %v3135 = vpack.c.bf16 %v3130, %v3129
        %v3136 = vpack.c.bf16 %v3132, %v3131
        %v3141 = vrot.slane %v3133, 2
        %v3142 = vrot.slane %v3134, 2
        %v3143 = vrot.slane %v3135, 2
        %v3144 = vrot.slane %v3136, 2
        %vm3145 = vcmask 1041408
        %v3148 = vsel %vm3145, %v3133, %v3141
        %v3151 = vsel %vm3145, %v3134, %v3142
        %v3154 = vsel %vm3145, %v3135, %v3143
        %v3157 = vsel %vm3145, %v3136, %v3144
        %3162 = vst [vmem:[%s270] sm:$0xf] %v3148
        %3163 = vst [vmem:[%s270 + $0x4] sm:$0xf] %v3151
        %3164 = vst [vmem:[%s270 + $0x8] sm:$0xf] %v3154
        %3165 = vst [vmem:[%s270 + $0xc] sm:$0xf] %v3157
        %p3166 = scmp.lt.s32.totalorder %s19, 1
        %s3167 = scalar_select %p3166, %s19, 1
        %s3168 = smul.addr %s3167, 8
        %s3169 = smul.addr %s3168, 2
        %s3170 = scalar_lea.vmem %s4, %s3169
        // Predicated region
        $region49: #{feature_decoder_forward.7} parent=35 // pred_check
          %p3171 = pneg %p131
        $region50: #{feature_decoder_forward.7} parent=35 // pred_check_branch
          %3173 = sbr.rel (%p3171) target = $region52
        $region51: #{feature_decoder_forward.7} parent=35 // pred_region
          _
        $region52: #{feature_decoder_forward.7} parent=35 // pred_fallthru
          _
      $region36: #{feature_decoder_forward.7} parent=5 // pred_fallthru
        _
      %p3174 = scmp.le.s32.totalorder 2, %s14
      // Predicated region
      $region53: #{feature_decoder_forward.7} parent=5 // pred_check
        %p3175 = pneg %p3174
      $region54: #{feature_decoder_forward.7} parent=5 // pred_check_branch
        %3177 = sbr.rel (%p3175) target = $region56
      $region55: #{feature_decoder_forward.7} parent=5 // pred_region
        %s3178 = ssub.s32 %s14, 2
        // Predicated region
        $region57: #{feature_decoder_forward.7} parent=55 // pred_check
          %p3179 = pneg %p137
        $region58: #{feature_decoder_forward.7} parent=55 // pred_check_branch
          %3181 = sbr.rel (%p3179) target = $region60
        $region59: #{feature_decoder_forward.7} parent=55 // pred_region
          %p3182 = scmp.lt.s32.totalorder %s20, 1
          %s3183 = scalar_select %p3182, %s20, 1
          %s3184 = smul.addr %s3183, 8
          %s3185 = smul.addr %s3184, 2
          %s3186 = scalar_lea.vmem %s4, %s3185
        $region60: #{feature_decoder_forward.7} parent=55 // pred_fallthru
          _
      $region56: #{feature_decoder_forward.7} parent=5 // pred_fallthru
        _
    $region6: #{feature_decoder_forward.7} parent=1 // loop_footer
      %s18 = sadd.s32 1, %s14
    $region7: #{feature_decoder_forward.7} parent=1 // loop_footer_branch
      %13 = sbr.rel target = $region3
    $region8: #{feature_decoder_forward.7} parent=1 // loop_exit
      _
    %3187 = vsyncpa [#allocation4], 1
    %s3188 = scalar_lea.sflag [#allocation4], 1
    %3189 = vsyncpa %s3188, 1
    %3190 = vsyncpa [#allocation6], 1

// kernel: feature_decoder_forward.11
$region0: #{feature_decoder_forward.11}
  #allocation0 [shape = 'u32[]', space=smem, size = 0x4, offset = 0x4, fixed_abs, tag = 'smem constant byte address 0x4 - core index']
  #allocation1 [shape = 'u32[72,128]{1,0:T(1,128)}', space=vmem, size = 0x9000, scoped, tag = 'internal scratch']
  #allocation2 [shape = 'bf16[18,32,64]{2,1,0:T(8,128)(2,1)}', space=vmem, size = 0x24000, scoped, tag = 'scratch operand']
  %s0 = inlined_call_operand.vmem [shape: bf16[2,8,16,64], index: 0, kind: input, shape index: {}]
  %s1 = inlined_call_operand.hbm [shape: f32[2,16,16,64], index: 1, kind: input, shape index: {}]
  %s2 = inlined_call_operand.vmem [shape: f32[2,16,16,3], index: 2, kind: input, shape index: {}]
  %s3 = inlined_call_operand.hbm [shape: bf16[3,3,64,64], index: 3, kind: input, shape index: {}]
  %s4 = inlined_call_operand.hbm [shape: f32[1,64], index: 4, kind: input, shape index: {}]
  %s5 = inlined_call_operand.vmem [shape: bf16[64,3], index: 5, kind: input, shape index: {}]
  %s6 = inlined_call_operand.hbm [shape: f32[1,3], index: 6, kind: input, shape index: {}]
  %s7 = inlined_call_operand.hbm [shape: f32[3,3], index: 7, kind: input, shape index: {}]
  %s8 = inlined_call_operand.hbm [shape: f32[1,3], index: 8, kind: input, shape index: {}]
  %s9 = inlined_call_operand.vmem [shape: f32[2,16,16,3], index: 9, kind: output, shape index: {0}]
  %s10 = inlined_call_operand.vmem [shape: f32[2,16,16,3], index: 10, kind: output, shape index: {1}]
  %11 = xla_tuple %s9, %s10
  %s12 = sld [smem:[#allocation0]]
  $region101: #{feature_decoder_forward.11} parent=0
    _
  %s14 = ssub.s32 1, %s12
  %s15 = scalar_select 0, %s14, %s12
  $region1: #{feature_decoder_forward.11} parent=0
    #allocation3 [shape = 'u8[262144]{0}', space=vmem, size = 0x40000, scoped, tag = 'input window, operand 1']
    #allocation4 [shape = 's32[2]{0}', space=sflag, size = 0x8, scoped, tag = 'scoped memory for feature_decoder_forward.11']
    #allocation5 [shape = 'u8[147456]{0}', space=vmem, size = 0x24000, scoped, tag = 'input window, operand 3, single buffered']
    #allocation6 [shape = 's32[1]{0}', space=sflag, size = 0x4, scoped, tag = 'scoped memory for feature_decoder_forward.11']
    #allocation7 [shape = 'u8[512]{0}', space=vmem, size = 0x400, scoped, tag = 'input window, operand 4, single buffered']
    #allocation8 [shape = 'u8[512]{0}', space=vmem, size = 0x400, scoped, tag = 'input window, operand 6, single buffered']
    #allocation9 [shape = 's32[1]{0}', space=sflag, size = 0x4, scoped, tag = 'scoped memory for feature_decoder_forward.11']
    #allocation10 [shape = 'u8[2048]{0}', space=vmem, size = 0x800, scoped, tag = 'input window, operand 7, single buffered']
    #allocation11 [shape = 'u8[512]{0}', space=vmem, size = 0x400, scoped, tag = 'input window, operand 8, single buffered']
    #allocation12 [shape = 's32[1]{0}', space=sflag, size = 0x4, scoped, tag = 'scoped memory for feature_decoder_forward.11']
    %16 = vsyncpa [#allocation4], 0
    %s17 = scalar_lea.sflag [#allocation4], 1
    %18 = vsyncpa %s17, 0
    %19 = vsyncpa [#allocation6], 0
    %20 = vsyncpa [#allocation9], 0
    %21 = vsyncpa [#allocation12], 0
    loop: start=0, step=1, limit=4
    $region2: #{feature_decoder_forward.11} parent=1 // loop_pre_header
      _
    $region3: #{feature_decoder_forward.11} parent=1 // loop_header
      %s23 = sphi 0, %s27
      %p24 = scmp.ge.s32.totalorder %s23, 4
      %s33 = sphi 0, %s35
      %s36 = sphi 0, %s33
      %s37 = sphi 0, %s36
      %s53 = sphi 0, %s37
      %s59 = sphi 0, %s61
      %s62 = sphi 0, %s59
      %s63 = sphi 0, %s62
      %s79 = sphi 0, %s63
      %s85 = sphi 0, %s87
      %s88 = sphi 0, %s85
      %s89 = sphi 0, %s88
      %s105 = sphi 0, %s89
      %s109 = sphi 0, %s109
      %s111 = sphi 0, %s109
      %s112 = sphi 0, %s111
      %s126 = sphi 0, %s112
      %s130 = sphi 0, %s130
      %s132 = sphi 0, %s130
      %s133 = sphi 0, %s132
      %s147 = sphi 0, %s133
      %s151 = sphi 0, %s151
      %s153 = sphi 0, %s151
      %s154 = sphi 0, %s153
      %s168 = sphi 0, %s154
      %s172 = sphi 0, %s172
      %s174 = sphi 0, %s172
      %s175 = sphi 0, %s174
      %s189 = sphi 0, %s175
      %s193 = sphi 0, %s193
      %s195 = sphi 0, %s193
      %s196 = sphi 0, %s195
      %s210 = sphi 0, %s196
      %s214 = sphi 0, %s214
      %s216 = sphi 0, %s214
      %s217 = sphi 0, %s216
      %s231 = sphi 0, %s217
      %s237 = sphi 0, %s239
      %s240 = sphi 0, %s237
      %s241 = sphi 0, %s240
      %s257 = sphi 0, %s241
      %s263 = sphi 0, %s265
      %s266 = sphi 0, %s263
      %s267 = sphi 0, %s266
      %s283 = sphi 0, %s267
    $region4: #{feature_decoder_forward.11} parent=1 // loop_header_branch
      %26 = sbr.rel (%p24) target = $region8
    $region5: #{feature_decoder_forward.11} parent=1 // loop_body
      %s28 = ssub.s32 %s23, 1
      %s29 = ssub.s32 %s23, 2
      %s30 = sadd.s32 %s23, 1
      %s31 = ssub.s32 %s23, %s30
      %p32 = scmp.eq.s32.totalorder %s31, 0
      %s34 = sadd.s32 %s33, 1
      %s35 = scalar_select %p32, %s33, %s34
      %p38 = pneg %p32
      %p39 = scmp.eq.s32.totalorder %s23, 1
      %p40 = por %p38, %p39
      %p41 = scmp.ne.s32.totalorder %s33, %s36
      %p42 = scmp.eq.s32.totalorder %s23, 0
      %p43 = por %p41, %p42
      %p44 = scmp.ne.s32.totalorder %s33, %s36
      %p45 = scmp.eq.s32.totalorder %s28, 1
      %p46 = por %p44, %p45
      %p47 = scmp.ne.s32.totalorder %s36, %s37
      %p48 = scmp.eq.s32.totalorder %s28, 0
      %p49 = por %p47, %p48
      %p50 = scmp.ne.s32.totalorder %s36, %s37
      %p51 = scmp.eq.s32.totalorder %s29, 1
      %p52 = por %p50, %p51
      %p54 = scmp.ne.s32.totalorder %s37, %s53
      %p55 = scmp.eq.s32.totalorder %s29, 0
      %p56 = por %p54, %p55
      %s57 = ssub.s32 %s23, %s30
      %p58 = scmp.eq.s32.totalorder %s57, 0
      %s60 = sadd.s32 %s59, 1
      %s61 = scalar_select %p58, %s59, %s60
      %p64 = pneg %p58
      %p65 = scmp.eq.s32.totalorder %s23, 1
      %p66 = por %p64, %p65
      %p67 = scmp.ne.s32.totalorder %s59, %s62
      %p68 = scmp.eq.s32.totalorder %s23, 0
      %p69 = por %p67, %p68
      %p70 = scmp.ne.s32.totalorder %s59, %s62
      %p71 = scmp.eq.s32.totalorder %s28, 1
      %p72 = por %p70, %p71
      %p73 = scmp.ne.s32.totalorder %s62, %s63
      %p74 = scmp.eq.s32.totalorder %s28, 0
      %p75 = por %p73, %p74
      %p76 = scmp.ne.s32.totalorder %s62, %s63
      %p77 = scmp.eq.s32.totalorder %s29, 1
      %p78 = por %p76, %p77
      %p80 = scmp.ne.s32.totalorder %s63, %s79
      %p81 = scmp.eq.s32.totalorder %s29, 0
      %p82 = por %p80, %p81
      %s83 = ssub.s32 %s23, %s30
      %p84 = scmp.eq.s32.totalorder %s83, 0
      %s86 = sadd.s32 %s85, 1
      %s87 = scalar_select %p84, %s85, %s86
      %p90 = pneg %p84
      %p91 = scmp.eq.s32.totalorder %s23, 1
      %p92 = por %p90, %p91
      %p93 = scmp.ne.s32.totalorder %s85, %s88
      %p94 = scmp.eq.s32.totalorder %s23, 0
      %p95 = por %p93, %p94
      %p96 = scmp.ne.s32.totalorder %s85, %s88
      %p97 = scmp.eq.s32.totalorder %s28, 1
      %p98 = por %p96, %p97
      %p99 = scmp.ne.s32.totalorder %s88, %s89
      %p100 = scmp.eq.s32.totalorder %s28, 0
      %p101 = por %p99, %p100
      %p102 = scmp.ne.s32.totalorder %s88, %s89
      %p103 = scmp.eq.s32.totalorder %s29, 1
      %p104 = por %p102, %p103
      %p106 = scmp.ne.s32.totalorder %s89, %s105
      %p107 = scmp.eq.s32.totalorder %s29, 0
      %p108 = por %p106, %p107
      %s110 = sadd.s32 %s109, 1
      %p113 = scmp.eq.s32.totalorder %s23, 1
      %p114 = scmp.ne.s32.totalorder %s109, %s111
      %p115 = scmp.eq.s32.totalorder %s23, 0
      %p116 = por %p114, %p115
      %p117 = scmp.ne.s32.totalorder %s109, %s111
      %p118 = scmp.eq.s32.totalorder %s28, 1
      %p119 = por %p117, %p118
      %p120 = scmp.ne.s32.totalorder %s111, %s112
      %p121 = scmp.eq.s32.totalorder %s28, 0
      %p122 = por %p120, %p121
      %p123 = scmp.ne.s32.totalorder %s111, %s112
      %p124 = scmp.eq.s32.totalorder %s29, 1
      %p125 = por %p123, %p124
      %p127 = scmp.ne.s32.totalorder %s112, %s126
      %p128 = scmp.eq.s32.totalorder %s29, 0
      %p129 = por %p127, %p128
      %s131 = sadd.s32 %s130, 1
      %p134 = scmp.eq.s32.totalorder %s23, 1
      %p135 = scmp.ne.s32.totalorder %s130, %s132
      %p136 = scmp.eq.s32.totalorder %s23, 0
      %p137 = por %p135, %p136
      %p138 = scmp.ne.s32.totalorder %s130, %s132
      %p139 = scmp.eq.s32.totalorder %s28, 1
      %p140 = por %p138, %p139
      %p141 = scmp.ne.s32.totalorder %s132, %s133
      %p142 = scmp.eq.s32.totalorder %s28, 0
      %p143 = por %p141, %p142
      %p144 = scmp.ne.s32.totalorder %s132, %s133
      %p145 = scmp.eq.s32.totalorder %s29, 1
      %p146 = por %p144, %p145
      %p148 = scmp.ne.s32.totalorder %s133, %s147
      %p149 = scmp.eq.s32.totalorder %s29, 0
      %p150 = por %p148, %p149
      %s152 = sadd.s32 %s151, 1
      %p155 = scmp.eq.s32.totalorder %s23, 1
      %p156 = scmp.ne.s32.totalorder %s151, %s153
      %p157 = scmp.eq.s32.totalorder %s23, 0
      %p158 = por %p156, %p157
      %p159 = scmp.ne.s32.totalorder %s151, %s153
      %p160 = scmp.eq.s32.totalorder %s28, 1
      %p161 = por %p159, %p160
      %p162 = scmp.ne.s32.totalorder %s153, %s154
      %p163 = scmp.eq.s32.totalorder %s28, 0
      %p164 = por %p162, %p163
      %p165 = scmp.ne.s32.totalorder %s153, %s154
      %p166 = scmp.eq.s32.totalorder %s29, 1
      %p167 = por %p165, %p166
      %p169 = scmp.ne.s32.totalorder %s154, %s168
      %p170 = scmp.eq.s32.totalorder %s29, 0
      %p171 = por %p169, %p170
      %s173 = sadd.s32 %s172, 1
      %p176 = scmp.eq.s32.totalorder %s23, 1
      %p177 = scmp.ne.s32.totalorder %s172, %s174
      %p178 = scmp.eq.s32.totalorder %s23, 0
      %p179 = por %p177, %p178
      %p180 = scmp.ne.s32.totalorder %s172, %s174
      %p181 = scmp.eq.s32.totalorder %s28, 1
      %p182 = por %p180, %p181
      %p183 = scmp.ne.s32.totalorder %s174, %s175
      %p184 = scmp.eq.s32.totalorder %s28, 0
      %p185 = por %p183, %p184
      %p186 = scmp.ne.s32.totalorder %s174, %s175
      %p187 = scmp.eq.s32.totalorder %s29, 1
      %p188 = por %p186, %p187
      %p190 = scmp.ne.s32.totalorder %s175, %s189
      %p191 = scmp.eq.s32.totalorder %s29, 0
      %p192 = por %p190, %p191
      %s194 = sadd.s32 %s193, 1
      %p197 = scmp.eq.s32.totalorder %s23, 1
      %p198 = scmp.ne.s32.totalorder %s193, %s195
      %p199 = scmp.eq.s32.totalorder %s23, 0
      %p200 = por %p198, %p199
      %p201 = scmp.ne.s32.totalorder %s193, %s195
      %p202 = scmp.eq.s32.totalorder %s28, 1
      %p203 = por %p201, %p202
      %p204 = scmp.ne.s32.totalorder %s195, %s196
      %p205 = scmp.eq.s32.totalorder %s28, 0
      %p206 = por %p204, %p205
      %p207 = scmp.ne.s32.totalorder %s195, %s196
      %p208 = scmp.eq.s32.totalorder %s29, 1
      %p209 = por %p207, %p208
      %p211 = scmp.ne.s32.totalorder %s196, %s210
      %p212 = scmp.eq.s32.totalorder %s29, 0
      %p213 = por %p211, %p212
      %s215 = sadd.s32 %s214, 1
      %p218 = scmp.eq.s32.totalorder %s23, 1
      %p219 = scmp.ne.s32.totalorder %s214, %s216
      %p220 = scmp.eq.s32.totalorder %s23, 0
      %p221 = por %p219, %p220
      %p222 = scmp.ne.s32.totalorder %s214, %s216
      %p223 = scmp.eq.s32.totalorder %s28, 1
      %p224 = por %p222, %p223
      %p225 = scmp.ne.s32.totalorder %s216, %s217
      %p226 = scmp.eq.s32.totalorder %s28, 0
      %p227 = por %p225, %p226
      %p228 = scmp.ne.s32.totalorder %s216, %s217
      %p229 = scmp.eq.s32.totalorder %s29, 1
      %p230 = por %p228, %p229
      %p232 = scmp.ne.s32.totalorder %s217, %s231
      %p233 = scmp.eq.s32.totalorder %s29, 0
      %p234 = por %p232, %p233
      %s235 = ssub.s32 %s23, %s30
      %p236 = scmp.eq.s32.totalorder %s235, 0
      %s238 = sadd.s32 %s237, 1
      %s239 = scalar_select %p236, %s237, %s238
      %p242 = pneg %p236
      %p243 = scmp.eq.s32.totalorder %s23, 1
      %p244 = por %p242, %p243
      %p245 = scmp.ne.s32.totalorder %s237, %s240
      %p246 = scmp.eq.s32.totalorder %s23, 0
      %p247 = por %p245, %p246
      %p248 = scmp.ne.s32.totalorder %s237, %s240
      %p249 = scmp.eq.s32.totalorder %s28, 1
      %p250 = por %p248, %p249
      %p251 = scmp.ne.s32.totalorder %s240, %s241
      %p252 = scmp.eq.s32.totalorder %s28, 0
      %p253 = por %p251, %p252
      %p254 = scmp.ne.s32.totalorder %s240, %s241
      %p255 = scmp.eq.s32.totalorder %s29, 1
      %p256 = por %p254, %p255
      %p258 = scmp.ne.s32.totalorder %s241, %s257
      %p259 = scmp.eq.s32.totalorder %s29, 0
      %p260 = por %p258, %p259
      %s261 = ssub.s32 %s23, %s30
      %p262 = scmp.eq.s32.totalorder %s261, 0
      %s264 = sadd.s32 %s263, 1
      %s265 = scalar_select %p262, %s263, %s264
      %p268 = pneg %p262
      %p269 = scmp.eq.s32.totalorder %s23, 1
      %p270 = por %p268, %p269
      %p271 = scmp.ne.s32.totalorder %s263, %s266
      %p272 = scmp.eq.s32.totalorder %s23, 0
      %p273 = por %p271, %p272
      %p274 = scmp.ne.s32.totalorder %s263, %s266
      %p275 = scmp.eq.s32.totalorder %s28, 1
      %p276 = por %p274, %p275
      %p277 = scmp.ne.s32.totalorder %s266, %s267
      %p278 = scmp.eq.s32.totalorder %s28, 0
      %p279 = por %p277, %p278
      %p280 = scmp.ne.s32.totalorder %s266, %s267
      %p281 = scmp.eq.s32.totalorder %s29, 1
      %p282 = por %p280, %p281
      %p284 = scmp.ne.s32.totalorder %s267, %s283
      %p285 = scmp.eq.s32.totalorder %s29, 0
      %p286 = por %p284, %p285
      %p287 = scmp.le.s32.totalorder 1, %s23
      %p288 = scmp.lt.s32.totalorder %s23, 3
      %p289 = pnand %p287, %p288
      %p290 = pneg %p289
      // Predicated region
      $region9: #{feature_decoder_forward.11} parent=5 // pred_check
        _
      $region10: #{feature_decoder_forward.11} parent=5 // pred_check_branch
        %292 = sbr.rel (%p289) target = $region12
      $region11: #{feature_decoder_forward.11} parent=5 // pred_region
        %s293 = ssub.s32 %s23, 1
        // Predicated region
        $region13: #{feature_decoder_forward.11} parent=11 // pred_check
          %p294 = pneg %p122
        $region14: #{feature_decoder_forward.11} parent=11 // pred_check_branch
          %296 = sbr.rel (%p294) target = $region16
        $region15: #{feature_decoder_forward.11} parent=11 // pred_region
          %298 = vsyncadd [#allocation6], 0
          %s299 = sshll.u32 %s3, 4
          %s300 = int_to_ptr.hbm [resolvable:$true] %s299
          %s301 = sshll.u32 [#allocation5], 4
          %s302 = int_to_ptr.vmem [resolvable:$true] %s301
          %307 = dma.hbm_to_vmem [thread:$0]  %s300, 4608, %s302, [#allocation6], 64, 64, 4
        $region16: #{feature_decoder_forward.11} parent=11 // pred_fallthru
          _
        // Predicated region
        $region17: #{feature_decoder_forward.11} parent=11 // pred_check
          %p308 = pneg %p143
        $region18: #{feature_decoder_forward.11} parent=11 // pred_check_branch
          %310 = sbr.rel (%p308) target = $region20
        $region19: #{feature_decoder_forward.11} parent=11 // pred_region
          %312 = vsyncadd [#allocation6], 0
          %s314 = sshll.u32 %s4, 4
          %s315 = int_to_ptr.hbm [resolvable:$true] %s314
          %s316 = sshll.u32 [#allocation7], 4
          %s317 = int_to_ptr.vmem [resolvable:$true] %s316
          %319 = dma.hbm_to_vmem [thread:$0]  %s315, 16, %s317, [#allocation6]
        $region20: #{feature_decoder_forward.11} parent=11 // pred_fallthru
          _
        // Predicated region
        $region21: #{feature_decoder_forward.11} parent=11 // pred_check
          %p320 = pneg %p164
        $region22: #{feature_decoder_forward.11} parent=11 // pred_check_branch
          %322 = sbr.rel (%p320) target = $region24
        $region23: #{feature_decoder_forward.11} parent=11 // pred_region
          _
        $region24: #{feature_decoder_forward.11} parent=11 // pred_fallthru
          _
        // Predicated region
        $region25: #{feature_decoder_forward.11} parent=11 // pred_check
          %p323 = pneg %p185
        $region26: #{feature_decoder_forward.11} parent=11 // pred_check_branch
          %325 = sbr.rel (%p323) target = $region28
        $region27: #{feature_decoder_forward.11} parent=11 // pred_region
          %327 = vsyncadd [#allocation9], 0
          %s329 = sshll.u32 %s6, 4
          %s330 = int_to_ptr.hbm [resolvable:$true] %s329
          %s331 = sshll.u32 [#allocation8], 4
          %s332 = int_to_ptr.vmem [resolvable:$true] %s331
          %334 = dma.hbm_to_vmem [thread:$0]  %s330, 16, %s332, [#allocation9]
        $region28: #{feature_decoder_forward.11} parent=11 // pred_fallthru
          _
        // Predicated region
        $region29: #{feature_decoder_forward.11} parent=11 // pred_check
          %p335 = pneg %p206
        $region30: #{feature_decoder_forward.11} parent=11 // pred_check_branch
          %337 = sbr.rel (%p335) target = $region32
        $region31: #{feature_decoder_forward.11} parent=11 // pred_region
          %339 = vsyncadd [#allocation9], 0
          %s341 = sshll.u32 %s7, 4
          %s342 = int_to_ptr.hbm [resolvable:$true] %s341
          %s343 = sshll.u32 [#allocation10], 4
          %s344 = int_to_ptr.vmem [resolvable:$true] %s343
          %346 = dma.hbm_to_vmem [thread:$0]  %s342, 64, %s344, [#allocation9]
        $region32: #{feature_decoder_forward.11} parent=11 // pred_fallthru
          _
        // Predicated region
        $region33: #{feature_decoder_forward.11} parent=11 // pred_check
          %p347 = pneg %p227
        $region34: #{feature_decoder_forward.11} parent=11 // pred_check_branch
          %349 = sbr.rel (%p347) target = $region36
        $region35: #{feature_decoder_forward.11} parent=11 // pred_region
          %351 = vsyncadd [#allocation12], 0
          %s353 = sshll.u32 %s8, 4
          %s354 = int_to_ptr.hbm [resolvable:$true] %s353
          %s355 = sshll.u32 [#allocation11], 4
          %s356 = int_to_ptr.vmem [resolvable:$true] %s355
          %358 = dma.hbm_to_vmem [thread:$0]  %s354, 16, %s356, [#allocation12]
        $region36: #{feature_decoder_forward.11} parent=11 // pred_fallthru
          _
      $region12: #{feature_decoder_forward.11} parent=5 // pred_fallthru
        _
      %p359 = scmp.lt.s32.totalorder %s23, 2
      // Predicated region
      $region37: #{feature_decoder_forward.11} parent=5 // pred_check
        %p360 = pneg %p359
      $region38: #{feature_decoder_forward.11} parent=5 // pred_check_branch
        %362 = sbr.rel (%p360) target = $region40
      $region39: #{feature_decoder_forward.11} parent=5 // pred_region
        // Predicated region
        $region41: #{feature_decoder_forward.11} parent=39 // pred_check
          %p363 = pneg %p43
        $region42: #{feature_decoder_forward.11} parent=39 // pred_check_branch
          %365 = sbr.rel (%p363) target = $region44
        $region43: #{feature_decoder_forward.11} parent=39 // pred_region
          %p366 = scmp.lt.s32.totalorder %s23, 1
          %s367 = scalar_select %p366, %s23, 1
          %s368 = smul.addr %s367, 16
          %s369 = smul.addr %s368, 4
          %s370 = scalar_lea.vmem %s0, %s369
        $region44: #{feature_decoder_forward.11} parent=39 // pred_fallthru
          _
        // Predicated region
        $region45: #{feature_decoder_forward.11} parent=39 // pred_check
          %p371 = pneg %p69
        $region46: #{feature_decoder_forward.11} parent=39 // pred_check_branch
          %373 = sbr.rel (%p371) target = $region48
        $region47: #{feature_decoder_forward.11} parent=39 // pred_region
          %s374 = sand.u32 %s59, 1
          %s375 = scalar_lea.sflag [#allocation4], %s374
          %s376 = sand.u32 %s59, 1
          %s377 = smul.addr %s376, 256
          %s378 = scalar_lea.vmem [#allocation3], %s377
          %380 = vsyncadd %s375, 0
          %s381 = smul.addr %s23, 32
          %s382 = smul.addr %s381, 8
          %s383 = scalar_lea.hbm %s1, %s382
          %s384 = sshll.u32 %s383, 4
          %s385 = int_to_ptr.hbm [resolvable:$true] %s384
          %s386 = sshll.u32 %s378, 4
          %s387 = int_to_ptr.vmem [resolvable:$true] %s386
          %392 = dma.hbm_to_vmem [thread:$0]  %s385, 4096, %s387, %s375, 128, 128, 8
        $region48: #{feature_decoder_forward.11} parent=39 // pred_fallthru
          _
        // Predicated region
        $region49: #{feature_decoder_forward.11} parent=39 // pred_check
          %p393 = pneg %p95
        $region50: #{feature_decoder_forward.11} parent=39 // pred_check_branch
          %395 = sbr.rel (%p393) target = $region52
        $region51: #{feature_decoder_forward.11} parent=39 // pred_region
          %p396 = scmp.lt.s32.totalorder %s23, 1
          %s397 = scalar_select %p396, %s23, 1
          %s398 = smul.addr %s397, 32
          %s399 = smul.addr %s398, 8
          %s400 = scalar_lea.vmem %s2, %s399
        $region52: #{feature_decoder_forward.11} parent=39 // pred_fallthru
          _
      $region40: #{feature_decoder_forward.11} parent=5 // pred_fallthru
        _
      %p401 = scmp.le.s32.totalorder 1, %s23
      %p402 = scmp.lt.s32.totalorder %s23, 3
      %p403 = pnand %p401, %p402
      %p404 = pneg %p403
      // Predicated region
      $region53: #{feature_decoder_forward.11} parent=5 // pred_check
        _
      $region54: #{feature_decoder_forward.11} parent=5 // pred_check_branch
        %406 = sbr.rel (%p403) target = $region56
      $region55: #{feature_decoder_forward.11} parent=5 // pred_region
        %s407 = ssub.s32 %s23, 1
        %s408 = sand.u32 %s62, 1
        %s409 = scalar_lea.sflag [#allocation4], %s408
        %s410 = sand.u32 %s62, 1
        %s411 = smul.addr %s410, 256
        %s412 = scalar_lea.vmem [#allocation3], %s411
        // Predicated region
        $region57: #{feature_decoder_forward.11} parent=55 // pred_check
          %p413 = pneg %p75
        $region58: #{feature_decoder_forward.11} parent=55 // pred_check_branch
          %415 = sbr.rel (%p413) target = $region60
        $region59: #{feature_decoder_forward.11} parent=55 // pred_region
          %417 = dma.done %s409, 4096
        $region60: #{feature_decoder_forward.11} parent=55 // pred_fallthru
          _
        // Predicated region
        $region61: #{feature_decoder_forward.11} parent=55 // pred_check
          %p418 = pneg %p122
        $region62: #{feature_decoder_forward.11} parent=55 // pred_check_branch
          %420 = sbr.rel (%p418) target = $region64
        $region63: #{feature_decoder_forward.11} parent=55 // pred_region
          %422 = dma.done [#allocation6], 4608
        $region64: #{feature_decoder_forward.11} parent=55 // pred_fallthru
          _
        // Predicated region
        $region65: #{feature_decoder_forward.11} parent=55 // pred_check
          %p423 = pneg %p143
        $region66: #{feature_decoder_forward.11} parent=55 // pred_check_branch
          %425 = sbr.rel (%p423) target = $region68
        $region67: #{feature_decoder_forward.11} parent=55 // pred_region
          %427 = dma.done [#allocation6], 16
        $region68: #{feature_decoder_forward.11} parent=55 // pred_fallthru
          _
        // Predicated region
        $region69: #{feature_decoder_forward.11} parent=55 // pred_check
          %p428 = pneg %p185
        $region70: #{feature_decoder_forward.11} parent=55 // pred_check_branch
          %430 = sbr.rel (%p428) target = $region72
        $region71: #{feature_decoder_forward.11} parent=55 // pred_region
          %432 = dma.done [#allocation9], 16
        $region72: #{feature_decoder_forward.11} parent=55 // pred_fallthru
          _
        // Predicated region
        $region73: #{feature_decoder_forward.11} parent=55 // pred_check
          %p433 = pneg %p206
        $region74: #{feature_decoder_forward.11} parent=55 // pred_check_branch
          %435 = sbr.rel (%p433) target = $region76
        $region75: #{feature_decoder_forward.11} parent=55 // pred_region
          %437 = dma.done [#allocation9], 64
        $region76: #{feature_decoder_forward.11} parent=55 // pred_fallthru
          _
        // Predicated region
        $region77: #{feature_decoder_forward.11} parent=55 // pred_check
          %p438 = pneg %p227
        $region78: #{feature_decoder_forward.11} parent=55 // pred_check_branch
          %440 = sbr.rel (%p438) target = $region80
        $region79: #{feature_decoder_forward.11} parent=55 // pred_region
          %442 = dma.done [#allocation12], 16
        $region80: #{feature_decoder_forward.11} parent=55 // pred_fallthru
          _
        %p443 = scmp.lt.s32.totalorder %s28, 1
        %s444 = scalar_select %p443, %s28, 1
        %s445 = smul.addr %s444, 16
        %s446 = smul.addr %s445, 4
        %s447 = scalar_lea.vmem %s0, %s446
        %p448 = pneg %p49
        %p449 = pneg %p46
        %s450 = sand.u32 %s62, 1
        %s451 = scalar_lea.sflag [#allocation4], %s450
        %s452 = sand.u32 %s62, 1
        %s453 = smul.addr %s452, 256
        %s454 = scalar_lea.vmem [#allocation3], %s453
        %p455 = pneg %p75
        %p456 = pneg %p72
        %p457 = scmp.lt.s32.totalorder %s28, 1
        %s458 = scalar_select %p457, %s28, 1
        %s459 = smul.addr %s458, 32
        %s460 = smul.addr %s459, 8
        %s461 = scalar_lea.vmem %s2, %s460
        %p462 = pneg %p101
        %p463 = pneg %p98
        %p464 = pneg %p122
        %p465 = pneg %p119
        %p466 = pneg %p143
        %p467 = pneg %p140
        %p468 = pneg %p164
        %p469 = pneg %p161
        %p470 = pneg %p185
        %p471 = pneg %p182
        %p472 = pneg %p206
        %p473 = pneg %p203
        %p474 = pneg %p227
        %p475 = pneg %p224
        %p476 = pneg %p253
        %p477 = pneg %p250
        %p478 = scmp.lt.s32.totalorder %s28, 1
        %s479 = scalar_select %p478, %s28, 1
        %s480 = smul.addr %s479, 32
        %s481 = smul.addr %s480, 8
        %s482 = scalar_lea.vmem %s9, %s481
        %p483 = pneg %p279
        %p484 = pneg %p276
        %p485 = scmp.lt.s32.totalorder %s28, 1
        %s486 = scalar_select %p485, %s28, 1
        %s487 = smul.addr %s486, 32
        %s488 = smul.addr %s487, 8
        %s489 = scalar_lea.vmem %s10, %s488
        %p490 = scmp.lt.s32.totalorder %s28, 1
        %s491 = scalar_select %p490, %s28, 1
        %s492 = smul.addr %s491, 16
        %s493 = smul.addr %s492, 4
        %s494 = scalar_lea.vmem %s0, %s493
        %p495 = scmp.lt.s32.totalorder %s28, 1
        %s496 = scalar_select %p495, %s28, 1
        %s497 = smul.addr %s496, 32
        %s498 = smul.addr %s497, 8
        %s499 = scalar_lea.vmem %s2, %s498
        %p500 = scmp.lt.s32.totalorder %s28, 1
        %s501 = scalar_select %p500, %s28, 1
        %s502 = smul.addr %s501, 32
        %s503 = smul.addr %s502, 8
        %s504 = scalar_lea.vmem %s9, %s503
        %p505 = scmp.lt.s32.totalorder %s28, 1
        %s506 = scalar_select %p505, %s28, 1
        %s507 = smul.addr %s506, 32
        %s508 = smul.addr %s507, 8
        %s509 = scalar_lea.vmem %s10, %s508
        %vm511 = vcmask 519168
        %512 = vst.msk [vmem:[#allocation2] sm:$0xf] %vm511, 0
        %513 = vst.msk [vmem:[#allocation2 + $0x4] sm:$0xf] %vm511, 0
        %514 = vst.msk [vmem:[#allocation2 + $0x8] sm:$0xf] %vm511, 0
        %515 = vst.msk [vmem:[#allocation2 + $0xc] sm:$0xf] %vm511, 0
        %s516 = scalar_lea.vmem [#allocation2], 272
        %517 = vst.msk [vmem:[%s516] sm:$0xf] %vm511, 0
        %518 = vst.msk [vmem:[%s516 + $0x4] sm:$0xf] %vm511, 0
        %519 = vst.msk [vmem:[%s516 + $0x8] sm:$0xf] %vm511, 0
        %520 = vst.msk [vmem:[%s516 + $0xc] sm:$0xf] %vm511, 0
        %s521 = scalar_lea.vmem [#allocation2], 16
        %vm522 = vcmask 519171
        %vm523 = vsmask.f32 7950
        %vm524 = vmand %vm522, %vm523
        %v525 = vld [vmem:[%s521] sm:$0x8]
        %v526 = vsel %vm524, 0, %v525
        %527 = vst [vmem:[%s521] sm:$0x8] %v526
        %v528 = vld [vmem:[%s521 + $0x10] sm:$0x8]
        %v529 = vsel %vm524, 0, %v528
        %530 = vst [vmem:[%s521 + $0x10] sm:$0x8] %v529
        %v531 = vld [vmem:[%s521 + $0x20] sm:$0x8]
        %v532 = vsel %vm524, 0, %v531
        %533 = vst [vmem:[%s521 + $0x20] sm:$0x8] %v532
        %v534 = vld [vmem:[%s521 + $0x30] sm:$0x8]
        %v535 = vsel %vm524, 0, %v534
        %536 = vst [vmem:[%s521 + $0x30] sm:$0x8] %v535
        %v537 = vld [vmem:[%s521 + $0x40] sm:$0x8]
        %v538 = vsel %vm524, 0, %v537
        %539 = vst [vmem:[%s521 + $0x40] sm:$0x8] %v538
        %v540 = vld [vmem:[%s521 + $0x50] sm:$0x8]
        %v541 = vsel %vm524, 0, %v540
        %542 = vst [vmem:[%s521 + $0x50] sm:$0x8] %v541
        %v543 = vld [vmem:[%s521 + $0x60] sm:$0x8]
        %v544 = vsel %vm524, 0, %v543
        %545 = vst [vmem:[%s521 + $0x60] sm:$0x8] %v544
        %v546 = vld [vmem:[%s521 + $0x70] sm:$0x8]
        %v547 = vsel %vm524, 0, %v546
        %548 = vst [vmem:[%s521 + $0x70] sm:$0x8] %v547
        %v549 = vld [vmem:[%s521 + $0x80] sm:$0x8]
        %v550 = vsel %vm524, 0, %v549
        %551 = vst [vmem:[%s521 + $0x80] sm:$0x8] %v550
        %v552 = vld [vmem:[%s521 + $0x90] sm:$0x8]
        %v553 = vsel %vm524, 0, %v552
        %554 = vst [vmem:[%s521 + $0x90] sm:$0x8] %v553
        %v555 = vld [vmem:[%s521 + $0xa0] sm:$0x8]
        %v556 = vsel %vm524, 0, %v555
        %557 = vst [vmem:[%s521 + $0xa0] sm:$0x8] %v556
        %v558 = vld [vmem:[%s521 + $0xb0] sm:$0x8]
        %v559 = vsel %vm524, 0, %v558
        %560 = vst [vmem:[%s521 + $0xb0] sm:$0x8] %v559
        %v561 = vld [vmem:[%s521 + $0xc0] sm:$0x8]
        %v562 = vsel %vm524, 0, %v561
        %563 = vst [vmem:[%s521 + $0xc0] sm:$0x8] %v562
        %v564 = vld [vmem:[%s521 + $0xd0] sm:$0x8]
        %v565 = vsel %vm524, 0, %v564
        %566 = vst [vmem:[%s521 + $0xd0] sm:$0x8] %v565
        %v567 = vld [vmem:[%s521 + $0xe0] sm:$0x8]
        %v568 = vsel %vm524, 0, %v567
        %569 = vst [vmem:[%s521 + $0xe0] sm:$0x8] %v568
        %v570 = vld [vmem:[%s521 + $0xf0] sm:$0x8]
        %v571 = vsel %vm524, 0, %v570
        %572 = vst [vmem:[%s521 + $0xf0] sm:$0x8] %v571
        %vm573 = vcmask 516096
        %vm574 = vsmask.f32 256
        %vm575 = vmand %vm573, %vm574
        %v576 = vld [vmem:[%s521 + $0xc] sm:$0x1]
        %v577 = vsel %vm575, 0, %v576
        %578 = vst [vmem:[%s521 + $0xc] sm:$0x1] %v577
        %v579 = vld [vmem:[%s521 + $0x1c] sm:$0x1]
        %v580 = vsel %vm575, 0, %v579
        %581 = vst [vmem:[%s521 + $0x1c] sm:$0x1] %v580
        %v582 = vld [vmem:[%s521 + $0x2c] sm:$0x1]
        %v583 = vsel %vm575, 0, %v582
        %584 = vst [vmem:[%s521 + $0x2c] sm:$0x1] %v583
        %v585 = vld [vmem:[%s521 + $0x3c] sm:$0x1]
        %v586 = vsel %vm575, 0, %v585
        %587 = vst [vmem:[%s521 + $0x3c] sm:$0x1] %v586
        %v588 = vld [vmem:[%s521 + $0x4c] sm:$0x1]
        %v589 = vsel %vm575, 0, %v588
        %590 = vst [vmem:[%s521 + $0x4c] sm:$0x1] %v589
        %v591 = vld [vmem:[%s521 + $0x5c] sm:$0x1]
        %v592 = vsel %vm575, 0, %v591
        %593 = vst [vmem:[%s521 + $0x5c] sm:$0x1] %v592
        %v594 = vld [vmem:[%s521 + $0x6c] sm:$0x1]
        %v595 = vsel %vm575, 0, %v594
        %596 = vst [vmem:[%s521 + $0x6c] sm:$0x1] %v595
        %v597 = vld [vmem:[%s521 + $0x7c] sm:$0x1]
        %v598 = vsel %vm575, 0, %v597
        %599 = vst [vmem:[%s521 + $0x7c] sm:$0x1] %v598
        %v600 = vld [vmem:[%s521 + $0x8c] sm:$0x1]
        %v601 = vsel %vm575, 0, %v600
        %602 = vst [vmem:[%s521 + $0x8c] sm:$0x1] %v601
        %v603 = vld [vmem:[%s521 + $0x9c] sm:$0x1]
        %v604 = vsel %vm575, 0, %v603
        %605 = vst [vmem:[%s521 + $0x9c] sm:$0x1] %v604
        %v606 = vld [vmem:[%s521 + $0xac] sm:$0x1]
        %v607 = vsel %vm575, 0, %v606
        %608 = vst [vmem:[%s521 + $0xac] sm:$0x1] %v607
        %v609 = vld [vmem:[%s521 + $0xbc] sm:$0x1]
        %v610 = vsel %vm575, 0, %v609
        %611 = vst [vmem:[%s521 + $0xbc] sm:$0x1] %v610
        %v612 = vld [vmem:[%s521 + $0xcc] sm:$0x1]
        %v613 = vsel %vm575, 0, %v612
        %614 = vst [vmem:[%s521 + $0xcc] sm:$0x1] %v613
        %v615 = vld [vmem:[%s521 + $0xdc] sm:$0x1]
        %v616 = vsel %vm575, 0, %v615
        %617 = vst [vmem:[%s521 + $0xdc] sm:$0x1] %v616
        %v618 = vld [vmem:[%s521 + $0xec] sm:$0x1]
        %v619 = vsel %vm575, 0, %v618
        %620 = vst [vmem:[%s521 + $0xec] sm:$0x1] %v619
        %v621 = vld [vmem:[%s521 + $0xfc] sm:$0x1]
        %v622 = vsel %vm575, 0, %v621
        %623 = vst [vmem:[%s521 + $0xfc] sm:$0x1] %v622
        %v624 = vld [vmem:[%s494] sm:$0xf]
        %v625 = vld [vmem:[%s494 + $0x4] sm:$0xf]
        %v626 = vld [vmem:[%s494 + $0x8] sm:$0xf]
        %v627 = vld [vmem:[%s494 + $0xc] sm:$0xf]
        %v628 = vld [vmem:[%s494 + $0x10] sm:$0xf]
        %v629 = vld [vmem:[%s494 + $0x14] sm:$0xf]
        %v630 = vld [vmem:[%s494 + $0x18] sm:$0xf]
        %v631 = vld [vmem:[%s494 + $0x1c] sm:$0xf]
        %v632 = vld [vmem:[%s494 + $0x20] sm:$0xf]
        %v633 = vld [vmem:[%s494 + $0x24] sm:$0xf]
        %v634 = vld [vmem:[%s494 + $0x28] sm:$0xf]
        %v635 = vld [vmem:[%s494 + $0x2c] sm:$0xf]
        %v636 = vld [vmem:[%s494 + $0x30] sm:$0xf]
        %v637 = vld [vmem:[%s494 + $0x34] sm:$0xf]
        %v638 = vld [vmem:[%s494 + $0x38] sm:$0xf]
        %v639 = vld [vmem:[%s494 + $0x3c] sm:$0xf]
        %v640 = vunpack.c.l.bf16 %v624
        %v641 = vunpack.c.l.bf16 %v625
        %v642 = vunpack.c.l.bf16 %v626
        %v643 = vunpack.c.l.bf16 %v627
        %v644 = vunpack.c.l.bf16 %v628
        %v645 = vunpack.c.l.bf16 %v629
        %v646 = vunpack.c.l.bf16 %v630
        %v647 = vunpack.c.l.bf16 %v631
        %v648 = vunpack.c.l.bf16 %v632
        %v649 = vunpack.c.l.bf16 %v633
        %v650 = vunpack.c.l.bf16 %v634
        %v651 = vunpack.c.l.bf16 %v635
        %v652 = vunpack.c.l.bf16 %v636
        %v653 = vunpack.c.l.bf16 %v637
        %v654 = vunpack.c.l.bf16 %v638
        %v655 = vunpack.c.l.bf16 %v639
        %v656 = vld [vmem:[%s412] sm:$0xff]
        %v657 = vld [vmem:[%s412 + $0x8] sm:$0xff]
        %v658 = vld [vmem:[%s412 + $0x10] sm:$0xff]
        %v659 = vld [vmem:[%s412 + $0x18] sm:$0xff]
        %v660 = vld [vmem:[%s412 + $0x20] sm:$0xff]
        %v661 = vld [vmem:[%s412 + $0x28] sm:$0xff]
        %v662 = vld [vmem:[%s412 + $0x30] sm:$0xff]
        %v663 = vld [vmem:[%s412 + $0x38] sm:$0xff]
        %v664 = vld [vmem:[%s412 + $0x40] sm:$0xff]
        %v665 = vld [vmem:[%s412 + $0x48] sm:$0xff]
        %v666 = vld [vmem:[%s412 + $0x50] sm:$0xff]
        %v667 = vld [vmem:[%s412 + $0x58] sm:$0xff]
        %v668 = vld [vmem:[%s412 + $0x60] sm:$0xff]
        %v669 = vld [vmem:[%s412 + $0x68] sm:$0xff]
        %v670 = vld [vmem:[%s412 + $0x70] sm:$0xff]
        %v671 = vld [vmem:[%s412 + $0x78] sm:$0xff]
        %v672 = vld [vmem:[%s412 + $0x80] sm:$0xff]
        %v673 = vld [vmem:[%s412 + $0x88] sm:$0xff]
        %v674 = vld [vmem:[%s412 + $0x90] sm:$0xff]
        %v675 = vld [vmem:[%s412 + $0x98] sm:$0xff]
        %v676 = vld [vmem:[%s412 + $0xa0] sm:$0xff]
        %v677 = vld [vmem:[%s412 + $0xa8] sm:$0xff]
        %v678 = vld [vmem:[%s412 + $0xb0] sm:$0xff]
        %v679 = vld [vmem:[%s412 + $0xb8] sm:$0xff]
        %v680 = vld [vmem:[%s412 + $0xc0] sm:$0xff]
        %v681 = vld [vmem:[%s412 + $0xc8] sm:$0xff]
        %v682 = vld [vmem:[%s412 + $0xd0] sm:$0xff]
        %v683 = vld [vmem:[%s412 + $0xd8] sm:$0xff]
        %v684 = vld [vmem:[%s412 + $0xe0] sm:$0xff]
        %v685 = vld [vmem:[%s412 + $0xe8] sm:$0xff]
        %v686 = vld [vmem:[%s412 + $0xf0] sm:$0xff]
        %v687 = vld [vmem:[%s412 + $0xf8] sm:$0xff]
        %v688 = vadd.f32 %v640, %v656
        %v689 = vadd.f32 %v641, %v657
        %v690 = vadd.f32 %v640, %v658
        %v691 = vadd.f32 %v641, %v659
        %v692 = vadd.f32 %v642, %v660
        %v693 = vadd.f32 %v643, %v661
        %v694 = vadd.f32 %v642, %v662
        %v695 = vadd.f32 %v643, %v663
        %v696 = vadd.f32 %v644, %v664
        %v697 = vadd.f32 %v645, %v665
        %v698 = vadd.f32 %v644, %v666
        %v699 = vadd.f32 %v645, %v667
        %v700 = vadd.f32 %v646, %v668
        %v701 = vadd.f32 %v647, %v669
        %v702 = vadd.f32 %v646, %v670
        %v703 = vadd.f32 %v647, %v671
        %v704 = vadd.f32 %v648, %v672
        %v705 = vadd.f32 %v649, %v673
        %v706 = vadd.f32 %v648, %v674
        %v707 = vadd.f32 %v649, %v675
        %v708 = vadd.f32 %v650, %v676
        %v709 = vadd.f32 %v651, %v677
        %v710 = vadd.f32 %v650, %v678
        %v711 = vadd.f32 %v651, %v679
        %v712 = vadd.f32 %v652, %v680
        %v713 = vadd.f32 %v653, %v681
        %v714 = vadd.f32 %v652, %v682
        %v715 = vadd.f32 %v653, %v683
        %v716 = vadd.f32 %v654, %v684
        %v717 = vadd.f32 %v655, %v685
        %v718 = vadd.f32 %v654, %v686
        %v719 = vadd.f32 %v655, %v687
        %v720 = vpack.c.bf16 %v688, %v688
        %v721 = vpack.c.bf16 %v689, %v689
        %v722 = vpack.c.bf16 %v690, %v690
        %v723 = vpack.c.bf16 %v691, %v691
        %v724 = vpack.c.bf16 %v692, %v692
        %v725 = vpack.c.bf16 %v693, %v693
        %v726 = vpack.c.bf16 %v694, %v694
        %v727 = vpack.c.bf16 %v695, %v695
        %v728 = vpack.c.bf16 %v696, %v696
        %v729 = vpack.c.bf16 %v697, %v697
        %v730 = vpack.c.bf16 %v698, %v698
        %v731 = vpack.c.bf16 %v699, %v699
        %v732 = vpack.c.bf16 %v700, %v700
        %v733 = vpack.c.bf16 %v701, %v701
        %v734 = vpack.c.bf16 %v702, %v702
        %v735 = vpack.c.bf16 %v703, %v703
        %v736 = vpack.c.bf16 %v704, %v704
        %v737 = vpack.c.bf16 %v705, %v705
        %v738 = vpack.c.bf16 %v706, %v706
        %v739 = vpack.c.bf16 %v707, %v707
        %v740 = vpack.c.bf16 %v708, %v708
        %v741 = vpack.c.bf16 %v709, %v709
        %v742 = vpack.c.bf16 %v710, %v710
        %v743 = vpack.c.bf16 %v711, %v711
        %v744 = vpack.c.bf16 %v712, %v712
        %v745 = vpack.c.bf16 %v713, %v713
        %v746 = vpack.c.bf16 %v714, %v714
        %v747 = vpack.c.bf16 %v715, %v715
        %v748 = vpack.c.bf16 %v716, %v716
        %v749 = vpack.c.bf16 %v717, %v717
        %v750 = vpack.c.bf16 %v718, %v718
        %v751 = vpack.c.bf16 %v719, %v719
        %752 = vst.msk [vmem:[%s521 + $0x4] sm:$0xf] %vm511, %v720
        %753 = vst.msk [vmem:[%s521 + $0x8] sm:$0xf] %vm511, %v721
        %754 = vst.msk [vmem:[%s521 + $0x14] sm:$0xf] %vm511, %v722
        %755 = vst.msk [vmem:[%s521 + $0x18] sm:$0xf] %vm511, %v723
        %756 = vst.msk [vmem:[%s521 + $0x24] sm:$0xf] %vm511, %v724
        %757 = vst.msk [vmem:[%s521 + $0x28] sm:$0xf] %vm511, %v725
        %758 = vst.msk [vmem:[%s521 + $0x34] sm:$0xf] %vm511, %v726
        %759 = vst.msk [vmem:[%s521 + $0x38] sm:$0xf] %vm511, %v727
        %760 = vst.msk [vmem:[%s521 + $0x44] sm:$0xf] %vm511, %v728
        %761 = vst.msk [vmem:[%s521 + $0x48] sm:$0xf] %vm511, %v729
        %762 = vst.msk [vmem:[%s521 + $0x54] sm:$0xf] %vm511, %v730
        %763 = vst.msk [vmem:[%s521 + $0x58] sm:$0xf] %vm511, %v731
        %764 = vst.msk [vmem:[%s521 + $0x64] sm:$0xf] %vm511, %v732
        %765 = vst.msk [vmem:[%s521 + $0x68] sm:$0xf] %vm511, %v733
        %766 = vst.msk [vmem:[%s521 + $0x74] sm:$0xf] %vm511, %v734
        %767 = vst.msk [vmem:[%s521 + $0x78] sm:$0xf] %vm511, %v735
        %768 = vst.msk [vmem:[%s521 + $0x84] sm:$0xf] %vm511, %v736
        %769 = vst.msk [vmem:[%s521 + $0x88] sm:$0xf] %vm511, %v737
        %770 = vst.msk [vmem:[%s521 + $0x94] sm:$0xf] %vm511, %v738
        %771 = vst.msk [vmem:[%s521 + $0x98] sm:$0xf] %vm511, %v739
        %772 = vst.msk [vmem:[%s521 + $0xa4] sm:$0xf] %vm511, %v740
        %773 = vst.msk [vmem:[%s521 + $0xa8] sm:$0xf] %vm511, %v741
        %774 = vst.msk [vmem:[%s521 + $0xb4] sm:$0xf] %vm511, %v742
        %775 = vst.msk [vmem:[%s521 + $0xb8] sm:$0xf] %vm511, %v743
        %776 = vst.msk [vmem:[%s521 + $0xc4] sm:$0xf] %vm511, %v744
        %777 = vst.msk [vmem:[%s521 + $0xc8] sm:$0xf] %vm511, %v745
        %778 = vst.msk [vmem:[%s521 + $0xd4] sm:$0xf] %vm511, %v746
        %779 = vst.msk [vmem:[%s521 + $0xd8] sm:$0xf] %vm511, %v747
        %780 = vst.msk [vmem:[%s521 + $0xe4] sm:$0xf] %vm511, %v748
        %781 = vst.msk [vmem:[%s521 + $0xe8] sm:$0xf] %vm511, %v749
        %782 = vst.msk [vmem:[%s521 + $0xf4] sm:$0xf] %vm511, %v750
        %783 = vst.msk [vmem:[%s521 + $0xf8] sm:$0xf] %vm511, %v751
        %v784 = vld [vmem:[#allocation2] sm:$0x8]
        %v785 = vld [vmem:[#allocation2 + $0x4] sm:$0xf]
        %v786 = vld [vmem:[#allocation2 + $0x8] sm:$0xf]
        %v787 = vld [vmem:[#allocation2 + $0x10] sm:$0x8]
        %v788 = vld [vmem:[#allocation2 + $0x14] sm:$0xf]
        %v789 = vld [vmem:[#allocation2 + $0x18] sm:$0xf]
        %v790 = vld [vmem:[#allocation2 + $0x20] sm:$0x8]
        %v791 = vld [vmem:[#allocation2 + $0x24] sm:$0xf]
        %v792 = vld [vmem:[#allocation2 + $0x28] sm:$0xf]
        %v793 = vld [vmem:[#allocation2 + $0x30] sm:$0x8]
        %v794 = vld [vmem:[#allocation2 + $0x34] sm:$0xf]
        %v795 = vld [vmem:[#allocation2 + $0x38] sm:$0xf]
        %v796 = vld [vmem:[#allocation2 + $0x40] sm:$0x8]
        %v797 = vld [vmem:[#allocation2 + $0x44] sm:$0xf]
        %v798 = vld [vmem:[#allocation2 + $0x48] sm:$0xf]
        %v799 = vld [vmem:[#allocation2 + $0x50] sm:$0x8]
        %v800 = vld [vmem:[#allocation2 + $0x54] sm:$0xf]
        %v801 = vld [vmem:[#allocation2 + $0x58] sm:$0xf]
        %v802 = vld [vmem:[#allocation2 + $0x60] sm:$0x8]
        %v803 = vld [vmem:[#allocation2 + $0x64] sm:$0xf]
        %v804 = vld [vmem:[#allocation2 + $0x68] sm:$0xf]
        %v805 = vld [vmem:[#allocation2 + $0x70] sm:$0x8]
        %v806 = vld [vmem:[#allocation2 + $0x74] sm:$0xf]
        %v807 = vld [vmem:[#allocation2 + $0x78] sm:$0xf]
        %v808 = vld [vmem:[#allocation2 + $0x80] sm:$0x8]
        %v809 = vld [vmem:[#allocation2 + $0x84] sm:$0xf]
        %v810 = vld [vmem:[#allocation2 + $0x88] sm:$0xf]
        %v811 = vld [vmem:[#allocation2 + $0x90] sm:$0x8]
        %v812 = vld [vmem:[#allocation2 + $0x94] sm:$0xf]
        %v813 = vld [vmem:[#allocation2 + $0x98] sm:$0xf]
        %v814 = vld [vmem:[#allocation2 + $0xa0] sm:$0x8]
        %v815 = vld [vmem:[#allocation2 + $0xa4] sm:$0xf]
        %v816 = vld [vmem:[#allocation2 + $0xa8] sm:$0xf]
        %v817 = vld [vmem:[#allocation2 + $0xb0] sm:$0x8]
        %v818 = vld [vmem:[#allocation2 + $0xb4] sm:$0xf]
        %v819 = vld [vmem:[#allocation2 + $0xb8] sm:$0xf]
        %v820 = vld [vmem:[#allocation2 + $0xc0] sm:$0x8]
        %v821 = vld [vmem:[#allocation2 + $0xc4] sm:$0xf]
        %v822 = vld [vmem:[#allocation2 + $0xc8] sm:$0xf]
        %v823 = vld [vmem:[#allocation2 + $0xd0] sm:$0x8]
        %v824 = vld [vmem:[#allocation2 + $0xd4] sm:$0xf]
        %v825 = vld [vmem:[#allocation2 + $0xd8] sm:$0xf]
        %v826 = vld [vmem:[#allocation2 + $0xe0] sm:$0x8]
        %v827 = vld [vmem:[#allocation2 + $0xe4] sm:$0xf]
        %v828 = vld [vmem:[#allocation2 + $0xe8] sm:$0xf]
        %v829 = vld [vmem:[#allocation2 + $0xf0] sm:$0x8]
        %v830 = vld [vmem:[#allocation2 + $0xf4] sm:$0xf]
        %v831 = vld [vmem:[#allocation2 + $0xf8] sm:$0xf]
        %v832 = vld [vmem:[#allocation2 + $0x100] sm:$0x8]
        %v833 = vld [vmem:[#allocation2 + $0x104] sm:$0xf]
        %v834 = vld [vmem:[#allocation2 + $0x108] sm:$0xf]
        %v835 = vld [vmem:[#allocation2 + $0x110] sm:$0x8]
        %v836 = vld [vmem:[#allocation2 + $0x114] sm:$0xf]
        %v837 = vld [vmem:[#allocation2 + $0x118] sm:$0xf]
        %vm838 = vsmask.f32 4368
        %vm839 = vmor %vm574, %vm838
        %v841 = vshrl.u32 %v784, 16
        %v843 = vrot.slane %v841, 7
        %v844 = vrot.slane %v843, 4
        %v846 = vshrl.u32 %v785, 16
        %v848 = vrot.slane %v846, 7
        %v849 = vshll.u32 %v785, 16
        %v851 = vor.u32 %v848, %v849
        %v852 = vsel %vm839, %v844, %v851
        %v853 = vrot.slane %v848, 4
        %v855 = vshrl.u32 %v786, 16
        %v857 = vrot.slane %v855, 7
        %v858 = vshll.u32 %v786, 16
        %v860 = vor.u32 %v857, %v858
        %v861 = vsel %vm839, %v853, %v860
        %v863 = vshrl.u32 %v787, 16
        %v865 = vrot.slane %v863, 7
        %v866 = vrot.slane %v865, 4
        %v868 = vshrl.u32 %v788, 16
        %v870 = vrot.slane %v868, 7
        %v871 = vshll.u32 %v788, 16
        %v873 = vor.u32 %v870, %v871
        %v874 = vsel %vm839, %v866, %v873
        %v875 = vrot.slane %v870, 4
        %v877 = vshrl.u32 %v789, 16
        %v879 = vrot.slane %v877, 7
        %v880 = vshll.u32 %v789, 16
        %v882 = vor.u32 %v879, %v880
        %v883 = vsel %vm839, %v875, %v882
        %v885 = vshrl.u32 %v790, 16
        %v887 = vrot.slane %v885, 7
        %v888 = vrot.slane %v887, 4
        %v890 = vshrl.u32 %v791, 16
        %v892 = vrot.slane %v890, 7
        %v893 = vshll.u32 %v791, 16
        %v895 = vor.u32 %v892, %v893
        %v896 = vsel %vm839, %v888, %v895
        %v897 = vrot.slane %v892, 4
        %v899 = vshrl.u32 %v792, 16
        %v901 = vrot.slane %v899, 7
        %v902 = vshll.u32 %v792, 16
        %v904 = vor.u32 %v901, %v902
        %v905 = vsel %vm839, %v897, %v904
        %v907 = vshrl.u32 %v793, 16
        %v909 = vrot.slane %v907, 7
        %v910 = vrot.slane %v909, 4
        %v912 = vshrl.u32 %v794, 16
        %v914 = vrot.slane %v912, 7
        %v915 = vshll.u32 %v794, 16
        %v917 = vor.u32 %v914, %v915
        %v918 = vsel %vm839, %v910, %v917
        %v919 = vrot.slane %v914, 4
        %v921 = vshrl.u32 %v795, 16
        %v923 = vrot.slane %v921, 7
        %v924 = vshll.u32 %v795, 16
        %v926 = vor.u32 %v923, %v924
        %v927 = vsel %vm839, %v919, %v926
        %v929 = vshrl.u32 %v796, 16
        %v931 = vrot.slane %v929, 7
        %v932 = vrot.slane %v931, 4
        %v934 = vshrl.u32 %v797, 16
        %v936 = vrot.slane %v934, 7
        %v937 = vshll.u32 %v797, 16
        %v939 = vor.u32 %v936, %v937
        %v940 = vsel %vm839, %v932, %v939
        %v941 = vrot.slane %v936, 4
        %v943 = vshrl.u32 %v798, 16
        %v945 = vrot.slane %v943, 7
        %v946 = vshll.u32 %v798, 16
        %v948 = vor.u32 %v945, %v946
        %v949 = vsel %vm839, %v941, %v948
        %v951 = vshrl.u32 %v799, 16
        %v953 = vrot.slane %v951, 7
        %v954 = vrot.slane %v953, 4
        %v956 = vshrl.u32 %v800, 16
        %v958 = vrot.slane %v956, 7
        %v959 = vshll.u32 %v800, 16
        %v961 = vor.u32 %v958, %v959
        %v962 = vsel %vm839, %v954, %v961
        %v963 = vrot.slane %v958, 4
        %v965 = vshrl.u32 %v801, 16
        %v967 = vrot.slane %v965, 7
        %v968 = vshll.u32 %v801, 16
        %v970 = vor.u32 %v967, %v968
        %v971 = vsel %vm839, %v963, %v970
        %v973 = vshrl.u32 %v802, 16
        %v975 = vrot.slane %v973, 7
        %v976 = vrot.slane %v975, 4
        %v978 = vshrl.u32 %v803, 16
        %v980 = vrot.slane %v978, 7
        %v981 = vshll.u32 %v803, 16
        %v983 = vor.u32 %v980, %v981
        %v984 = vsel %vm839, %v976, %v983
        %v985 = vrot.slane %v980, 4
        %v987 = vshrl.u32 %v804, 16
        %v989 = vrot.slane %v987, 7
        %v990 = vshll.u32 %v804, 16
        %v992 = vor.u32 %v989, %v990
        %v993 = vsel %vm839, %v985, %v992
        %v995 = vshrl.u32 %v805, 16
        %v997 = vrot.slane %v995, 7
        %v998 = vrot.slane %v997, 4
        %v1000 = vshrl.u32 %v806, 16
        %v1002 = vrot.slane %v1000, 7
        %v1003 = vshll.u32 %v806, 16
        %v1005 = vor.u32 %v1002, %v1003
        %v1006 = vsel %vm839, %v998, %v1005
        %v1007 = vrot.slane %v1002, 4
        %v1009 = vshrl.u32 %v807, 16
        %v1011 = vrot.slane %v1009, 7
        %v1012 = vshll.u32 %v807, 16
        %v1014 = vor.u32 %v1011, %v1012
        %v1015 = vsel %vm839, %v1007, %v1014
        %v1017 = vshrl.u32 %v808, 16
        %v1019 = vrot.slane %v1017, 7
        %v1020 = vrot.slane %v1019, 4
        %v1022 = vshrl.u32 %v809, 16
        %v1024 = vrot.slane %v1022, 7
        %v1025 = vshll.u32 %v809, 16
        %v1027 = vor.u32 %v1024, %v1025
        %v1028 = vsel %vm839, %v1020, %v1027
        %v1029 = vrot.slane %v1024, 4
        %v1031 = vshrl.u32 %v810, 16
        %v1033 = vrot.slane %v1031, 7
        %v1034 = vshll.u32 %v810, 16
        %v1036 = vor.u32 %v1033, %v1034
        %v1037 = vsel %vm839, %v1029, %v1036
        %v1039 = vshrl.u32 %v811, 16
        %v1041 = vrot.slane %v1039, 7
        %v1042 = vrot.slane %v1041, 4
        %v1044 = vshrl.u32 %v812, 16
        %v1046 = vrot.slane %v1044, 7
        %v1047 = vshll.u32 %v812, 16
        %v1049 = vor.u32 %v1046, %v1047
        %v1050 = vsel %vm839, %v1042, %v1049
        %v1051 = vrot.slane %v1046, 4
        %v1053 = vshrl.u32 %v813, 16
        %v1055 = vrot.slane %v1053, 7
        %v1056 = vshll.u32 %v813, 16
        %v1058 = vor.u32 %v1055, %v1056
        %v1059 = vsel %vm839, %v1051, %v1058
        %v1061 = vshrl.u32 %v814, 16
        %v1063 = vrot.slane %v1061, 7
        %v1064 = vrot.slane %v1063, 4
        %v1066 = vshrl.u32 %v815, 16
        %v1068 = vrot.slane %v1066, 7
        %v1069 = vshll.u32 %v815, 16
        %v1071 = vor.u32 %v1068, %v1069
        %v1072 = vsel %vm839, %v1064, %v1071
        %v1073 = vrot.slane %v1068, 4
        %v1075 = vshrl.u32 %v816, 16
        %v1077 = vrot.slane %v1075, 7
        %v1078 = vshll.u32 %v816, 16
        %v1080 = vor.u32 %v1077, %v1078
        %v1081 = vsel %vm839, %v1073, %v1080
        %v1083 = vshrl.u32 %v817, 16
        %v1085 = vrot.slane %v1083, 7
        %v1086 = vrot.slane %v1085, 4
        %v1088 = vshrl.u32 %v818, 16
        %v1090 = vrot.slane %v1088, 7
        %v1091 = vshll.u32 %v818, 16
        %v1093 = vor.u32 %v1090, %v1091
        %v1094 = vsel %vm839, %v1086, %v1093
        %v1095 = vrot.slane %v1090, 4
        %v1097 = vshrl.u32 %v819, 16
        %v1099 = vrot.slane %v1097, 7
        %v1100 = vshll.u32 %v819, 16
        %v1102 = vor.u32 %v1099, %v1100
        %v1103 = vsel %vm839, %v1095, %v1102
        %v1105 = vshrl.u32 %v820, 16
        %v1107 = vrot.slane %v1105, 7
        %v1108 = vrot.slane %v1107, 4
        %v1110 = vshrl.u32 %v821, 16
        %v1112 = vrot.slane %v1110, 7
        %v1113 = vshll.u32 %v821, 16
        %v1115 = vor.u32 %v1112, %v1113
        %v1116 = vsel %vm839, %v1108, %v1115
        %v1117 = vrot.slane %v1112, 4
        %v1119 = vshrl.u32 %v822, 16
        %v1121 = vrot.slane %v1119, 7
        %v1122 = vshll.u32 %v822, 16
        %v1124 = vor.u32 %v1121, %v1122
        %v1125 = vsel %vm839, %v1117, %v1124
        %v1127 = vshrl.u32 %v823, 16
        %v1129 = vrot.slane %v1127, 7
        %v1130 = vrot.slane %v1129, 4
        %v1132 = vshrl.u32 %v824, 16
        %v1134 = vrot.slane %v1132, 7
        %v1135 = vshll.u32 %v824, 16
        %v1137 = vor.u32 %v1134, %v1135
        %v1138 = vsel %vm839, %v1130, %v1137
        %v1139 = vrot.slane %v1134, 4
        %v1141 = vshrl.u32 %v825, 16
        %v1143 = vrot.slane %v1141, 7
        %v1144 = vshll.u32 %v825, 16
        %v1146 = vor.u32 %v1143, %v1144
        %v1147 = vsel %vm839, %v1139, %v1146
        %v1149 = vshrl.u32 %v826, 16
        %v1151 = vrot.slane %v1149, 7
        %v1152 = vrot.slane %v1151, 4
        %v1154 = vshrl.u32 %v827, 16
        %v1156 = vrot.slane %v1154, 7
        %v1157 = vshll.u32 %v827, 16
        %v1159 = vor.u32 %v1156, %v1157
        %v1160 = vsel %vm839, %v1152, %v1159
        %v1161 = vrot.slane %v1156, 4
        %v1163 = vshrl.u32 %v828, 16
        %v1165 = vrot.slane %v1163, 7
        %v1166 = vshll.u32 %v828, 16
        %v1168 = vor.u32 %v1165, %v1166
        %v1169 = vsel %vm839, %v1161, %v1168
        %v1171 = vshrl.u32 %v829, 16
        %v1173 = vrot.slane %v1171, 7
        %v1174 = vrot.slane %v1173, 4
        %v1176 = vshrl.u32 %v830, 16
        %v1178 = vrot.slane %v1176, 7
        %v1179 = vshll.u32 %v830, 16
        %v1181 = vor.u32 %v1178, %v1179
        %v1182 = vsel %vm839, %v1174, %v1181
        %v1183 = vrot.slane %v1178, 4
        %v1185 = vshrl.u32 %v831, 16
        %v1187 = vrot.slane %v1185, 7
        %v1188 = vshll.u32 %v831, 16
        %v1190 = vor.u32 %v1187, %v1188
        %v1191 = vsel %vm839, %v1183, %v1190
        %v1193 = vshrl.u32 %v832, 16
        %v1195 = vrot.slane %v1193, 7
        %v1196 = vrot.slane %v1195, 4
        %v1198 = vshrl.u32 %v833, 16
        %v1200 = vrot.slane %v1198, 7
        %v1201 = vshll.u32 %v833, 16
        %v1203 = vor.u32 %v1200, %v1201
        %v1204 = vsel %vm839, %v1196, %v1203
        %v1205 = vrot.slane %v1200, 4
        %v1207 = vshrl.u32 %v834, 16
        %v1209 = vrot.slane %v1207, 7
        %v1210 = vshll.u32 %v834, 16
        %v1212 = vor.u32 %v1209, %v1210
        %v1213 = vsel %vm839, %v1205, %v1212
        %v1215 = vshrl.u32 %v835, 16
        %v1217 = vrot.slane %v1215, 7
        %v1218 = vrot.slane %v1217, 4
        %v1220 = vshrl.u32 %v836, 16
        %v1222 = vrot.slane %v1220, 7
        %v1223 = vshll.u32 %v836, 16
        %v1225 = vor.u32 %v1222, %v1223
        %v1226 = vsel %vm839, %v1218, %v1225
        %v1227 = vrot.slane %v1222, 4
        %v1229 = vshrl.u32 %v837, 16
        %v1231 = vrot.slane %v1229, 7
        %v1232 = vshll.u32 %v837, 16
        %v1234 = vor.u32 %v1231, %v1232
        %v1235 = vsel %vm839, %v1227, %v1234
        %v1236 = vld [vmem:[#allocation5] sm:$0xf]
        %v1237 = vld [vmem:[#allocation5 + $0x4] sm:$0xf]
        %v1238 = vld [vmem:[#allocation5 + $0x8] sm:$0xf]
        %v1239 = vld [vmem:[#allocation5 + $0xc] sm:$0xf]
        %v1240 = vld [vmem:[#allocation5 + $0x10] sm:$0xf]
        %v1241 = vld [vmem:[#allocation5 + $0x14] sm:$0xf]
        %v1242 = vld [vmem:[#allocation5 + $0x18] sm:$0xf]
        %v1243 = vld [vmem:[#allocation5 + $0x1c] sm:$0xf]
        %s1244 = scalar_lea.vmem [#allocation5], 96
        %v1245 = vld [vmem:[%s1244] sm:$0xf]
        %v1246 = vld [vmem:[%s1244 + $0x4] sm:$0xf]
        %v1247 = vld [vmem:[%s1244 + $0x8] sm:$0xf]
        %v1248 = vld [vmem:[%s1244 + $0xc] sm:$0xf]
        %v1249 = vld [vmem:[%s1244 + $0x10] sm:$0xf]
        %v1250 = vld [vmem:[%s1244 + $0x14] sm:$0xf]
        %v1251 = vld [vmem:[%s1244 + $0x18] sm:$0xf]
        %v1252 = vld [vmem:[%s1244 + $0x1c] sm:$0xf]
        %v1253 = vunpack.c.l.b16 %v874
        %v1254 = vunpack.c.l.b16 %v883
        %v1255 = vunpack.c.l.b16 %v896
        %v1256 = vunpack.c.l.b16 %v905
        %v1257 = vunpack.c.l.b16 %v918
        %v1258 = vunpack.c.l.b16 %v927
        %v1259 = vunpack.c.l.b16 %v940
        %v1260 = vunpack.c.l.b16 %v949
        %v1261 = vunpack.c.l.b16 %v962
        %v1262 = vunpack.c.l.b16 %v971
        %v1263 = vunpack.c.l.b16 %v984
        %v1264 = vunpack.c.l.b16 %v993
        %v1265 = vunpack.c.l.b16 %v1006
        %v1266 = vunpack.c.l.b16 %v1015
        %v1267 = vunpack.c.l.b16 %v1028
        %v1268 = vunpack.c.l.b16 %v1037
        %v1269 = vunpack.c.l.b16 %v1050
        %v1270 = vunpack.c.l.b16 %v1059
        %v1271 = vunpack.c.l.b16 %v1072
        %v1272 = vunpack.c.l.b16 %v1081
        %v1273 = vunpack.c.l.b16 %v1094
        %v1274 = vunpack.c.l.b16 %v1103
        %v1275 = vunpack.c.l.b16 %v1116
        %v1276 = vunpack.c.l.b16 %v1125
        %v1277 = vunpack.c.l.b16 %v1138
        %v1278 = vunpack.c.l.b16 %v1147
        %v1279 = vunpack.c.l.b16 %v1160
        %v1280 = vunpack.c.l.b16 %v1169
        %v1281 = vunpack.c.l.b16 %v1182
        %v1282 = vunpack.c.l.b16 %v1191
        %v1283 = vunpack.c.l.b16 %v1204
        %v1284 = vunpack.c.l.b16 %v1213
        %v1285 = vpack.c.b16 %v1254, %v1253
        %v1286 = vpack.c.b16 %v1256, %v1255
        %v1287 = vpack.c.b16 %v1258, %v1257
        %v1288 = vpack.c.b16 %v1260, %v1259
        %v1289 = vpack.c.b16 %v1262, %v1261
        %v1290 = vpack.c.b16 %v1264, %v1263
        %v1291 = vpack.c.b16 %v1266, %v1265
        %v1292 = vpack.c.b16 %v1268, %v1267
        %v1293 = vpack.c.b16 %v1270, %v1269
        %v1294 = vpack.c.b16 %v1272, %v1271
        %v1295 = vpack.c.b16 %v1274, %v1273
        %v1296 = vpack.c.b16 %v1276, %v1275
        %v1297 = vpack.c.b16 %v1278, %v1277
        %v1298 = vpack.c.b16 %v1280, %v1279
        %v1299 = vpack.c.b16 %v1282, %v1281
        %v1300 = vpack.c.b16 %v1284, %v1283
        %v1309 = vunpack.c.l.b16 %v1245
        %v1310 = vunpack.c.l.b16 %v1246
        %v1311 = vunpack.c.l.b16 %v1247
        %v1312 = vunpack.c.l.b16 %v1248
        %v1313 = vunpack.c.l.b16 %v1249
        %v1314 = vunpack.c.l.b16 %v1250
        %v1315 = vunpack.c.l.b16 %v1251
        %v1316 = vunpack.c.l.b16 %v1252
        %v1317 = vpack.c.b16 %v1310, %v1309
        %v1318 = vpack.c.b16 %v1312, %v1311
        %v1319 = vpack.c.b16 %v1314, %v1313
        %v1320 = vpack.c.b16 %v1316, %v1315
        %vm1325 = vcmask 523264
        %v1327 = vsel %vm1325, %v1285, 0
        %v1330 = vsel %vm1325, %v1286, 0
        %v1333 = vsel %vm1325, %v1287, 0
        %v1336 = vsel %vm1325, %v1288, 0
        %v1339 = vsel %vm1325, %v1289, 0
        %v1342 = vsel %vm1325, %v1290, 0
        %v1345 = vsel %vm1325, %v1291, 0
        %v1348 = vsel %vm1325, %v1292, 0
        %v1351 = vsel %vm1325, %v1293, 0
        %v1354 = vsel %vm1325, %v1294, 0
        %v1357 = vsel %vm1325, %v1295, 0
        %v1360 = vsel %vm1325, %v1296, 0
        %v1363 = vsel %vm1325, %v1297, 0
        %v1366 = vsel %vm1325, %v1298, 0
        %v1369 = vsel %vm1325, %v1299, 0
        %v1372 = vsel %vm1325, %v1300, 0
        %1374 = vmatpush.bf16.msra.mxu0 0
        %1375 = vmatpush.bf16.msra.mxu0 0
        %1376 = vmatpush.bf16.msra.mxu0 0
        %1377 = vmatpush.bf16.msra.mxu0 0
        %1378 = vmatpush.bf16.msra.mxu0 %v1320
        %1379 = vmatpush.bf16.msra.mxu0 %v1319
        %1380 = vmatpush.bf16.msra.mxu0 %v1318
        %1381 = vmatpush.bf16.msra.mxu0 %v1317
        %1382 = vmatmul.bf16.gmra.mxu0 %v1327
        %v1383 = vpop.f32.mrf.mxu0
        %v1384 = vadd.f32 0.0, %v1383
        %v1385 = vpop.f32.mrf.mxu0
        %v1386 = vadd.f32 0.0, %v1385
        %1387 = vmatmul.bf16.gmra.mxu0 %v1330
        %v1388 = vpop.f32.mrf.mxu0
        %v1389 = vadd.f32 0.0, %v1388
        %v1390 = vpop.f32.mrf.mxu0
        %v1391 = vadd.f32 0.0, %v1390
        %1392 = vmatmul.bf16.gmra.mxu0 %v1333
        %v1393 = vpop.f32.mrf.mxu0
        %v1394 = vadd.f32 0.0, %v1393
        %v1395 = vpop.f32.mrf.mxu0
        %v1396 = vadd.f32 0.0, %v1395
        %1397 = vmatmul.bf16.gmra.mxu0 %v1336
        %v1398 = vpop.f32.mrf.mxu0
        %v1399 = vadd.f32 0.0, %v1398
        %v1400 = vpop.f32.mrf.mxu0
        %v1401 = vadd.f32 0.0, %v1400
        %1402 = vmatmul.bf16.gmra.mxu0 %v1339
        %v1403 = vpop.f32.mrf.mxu0
        %v1404 = vadd.f32 0.0, %v1403
        %v1405 = vpop.f32.mrf.mxu0
        %v1406 = vadd.f32 0.0, %v1405
        %1407 = vmatmul.bf16.gmra.mxu0 %v1342
        %v1408 = vpop.f32.mrf.mxu0
        %v1409 = vadd.f32 0.0, %v1408
        %v1410 = vpop.f32.mrf.mxu0
        %v1411 = vadd.f32 0.0, %v1410
        %1412 = vmatmul.bf16.gmra.mxu0 %v1345
        %v1413 = vpop.f32.mrf.mxu0
        %v1414 = vadd.f32 0.0, %v1413
        %v1415 = vpop.f32.mrf.mxu0
        %v1416 = vadd.f32 0.0, %v1415
        %1417 = vmatmul.bf16.gmra.mxu0 %v1348
        %v1418 = vpop.f32.mrf.mxu0
        %v1419 = vadd.f32 0.0, %v1418
        %v1420 = vpop.f32.mrf.mxu0
        %v1421 = vadd.f32 0.0, %v1420
        %1422 = vmatmul.bf16.gmra.mxu0 %v1351
        %v1423 = vpop.f32.mrf.mxu0
        %v1424 = vadd.f32 0.0, %v1423
        %v1425 = vpop.f32.mrf.mxu0
        %v1426 = vadd.f32 0.0, %v1425
        %1427 = vmatmul.bf16.gmra.mxu0 %v1354
        %v1428 = vpop.f32.mrf.mxu0
        %v1429 = vadd.f32 0.0, %v1428
        %v1430 = vpop.f32.mrf.mxu0
        %v1431 = vadd.f32 0.0, %v1430
        %1432 = vmatmul.bf16.gmra.mxu0 %v1357
        %v1433 = vpop.f32.mrf.mxu0
        %v1434 = vadd.f32 0.0, %v1433
        %v1435 = vpop.f32.mrf.mxu0
        %v1436 = vadd.f32 0.0, %v1435
        %1437 = vmatmul.bf16.gmra.mxu0 %v1360
        %v1438 = vpop.f32.mrf.mxu0
        %v1439 = vadd.f32 0.0, %v1438
        %v1440 = vpop.f32.mrf.mxu0
        %v1441 = vadd.f32 0.0, %v1440
        %1442 = vmatmul.bf16.gmra.mxu0 %v1363
        %v1443 = vpop.f32.mrf.mxu0
        %v1444 = vadd.f32 0.0, %v1443
        %v1445 = vpop.f32.mrf.mxu0
        %v1446 = vadd.f32 0.0, %v1445
        %1447 = vmatmul.bf16.gmra.mxu0 %v1366
        %v1448 = vpop.f32.mrf.mxu0
        %v1449 = vadd.f32 0.0, %v1448
        %v1450 = vpop.f32.mrf.mxu0
        %v1451 = vadd.f32 0.0, %v1450
        %1452 = vmatmul.bf16.gmra.mxu0 %v1369
        %v1453 = vpop.f32.mrf.mxu0
        %v1454 = vadd.f32 0.0, %v1453
        %v1455 = vpop.f32.mrf.mxu0
        %v1456 = vadd.f32 0.0, %v1455
        %1457 = vmatmul.bf16.gmra.mxu0 %v1372
        %v1458 = vpop.f32.mrf.mxu0
        %v1459 = vadd.f32 0.0, %v1458
        %v1460 = vpop.f32.mrf.mxu0
        %v1461 = vadd.f32 0.0, %v1460
        %1462 = vdwg.mxu0
        %v1463 = vunpack.c.l.b16 %v852
        %v1464 = vunpack.c.l.b16 %v861
        %v1465 = vpack.c.b16 %v1464, %v1463
        %v1474 = vunpack.c.l.b16 %v1236
        %v1475 = vunpack.c.l.b16 %v1237
        %v1476 = vunpack.c.l.b16 %v1238
        %v1477 = vunpack.c.l.b16 %v1239
        %v1478 = vunpack.c.l.b16 %v1240
        %v1479 = vunpack.c.l.b16 %v1241
        %v1480 = vunpack.c.l.b16 %v1242
        %v1481 = vunpack.c.l.b16 %v1243
        %v1482 = vpack.c.b16 %v1475, %v1474
        %v1483 = vpack.c.b16 %v1477, %v1476
        %v1484 = vpack.c.b16 %v1479, %v1478
        %v1485 = vpack.c.b16 %v1481, %v1480
        %v1491 = vsel %vm1325, %v1465, 0
        %1493 = vmatpush.bf16.msra.mxu0 0
        %1494 = vmatpush.bf16.msra.mxu0 0
        %1495 = vmatpush.bf16.msra.mxu0 0
        %1496 = vmatpush.bf16.msra.mxu0 0
        %1497 = vmatpush.bf16.msra.mxu0 %v1485
        %1498 = vmatpush.bf16.msra.mxu0 %v1484
        %1499 = vmatpush.bf16.msra.mxu0 %v1483
        %1500 = vmatpush.bf16.msra.mxu0 %v1482
        %1501 = vmatmul.bf16.gmra.mxu0 %v1491
        %v1502 = vpop.f32.mrf.mxu0
        %v1503 = vadd.f32 %v1384, %v1502
        %v1504 = vpop.f32.mrf.mxu0
        %v1505 = vadd.f32 %v1386, %v1504
        %1506 = vmatmul.bf16.gmra.mxu0 %v1327
        %v1507 = vpop.f32.mrf.mxu0
        %v1508 = vadd.f32 %v1389, %v1507
        %v1509 = vpop.f32.mrf.mxu0
        %v1510 = vadd.f32 %v1391, %v1509
        %1511 = vmatmul.bf16.gmra.mxu0 %v1330
        %v1512 = vpop.f32.mrf.mxu0
        %v1513 = vadd.f32 %v1394, %v1512
        %v1514 = vpop.f32.mrf.mxu0
        %v1515 = vadd.f32 %v1396, %v1514
        %1516 = vmatmul.bf16.gmra.mxu0 %v1333
        %v1517 = vpop.f32.mrf.mxu0
        %v1518 = vadd.f32 %v1399, %v1517
        %v1519 = vpop.f32.mrf.mxu0
        %v1520 = vadd.f32 %v1401, %v1519
        %1521 = vmatmul.bf16.gmra.mxu0 %v1336
        %v1522 = vpop.f32.mrf.mxu0
        %v1523 = vadd.f32 %v1404, %v1522
        %v1524 = vpop.f32.mrf.mxu0
        %v1525 = vadd.f32 %v1406, %v1524
        %1526 = vmatmul.bf16.gmra.mxu0 %v1339
        %v1527 = vpop.f32.mrf.mxu0
        %v1528 = vadd.f32 %v1409, %v1527
        %v1529 = vpop.f32.mrf.mxu0
        %v1530 = vadd.f32 %v1411, %v1529
        %1531 = vmatmul.bf16.gmra.mxu0 %v1342
        %v1532 = vpop.f32.mrf.mxu0
        %v1533 = vadd.f32 %v1414, %v1532
        %v1534 = vpop.f32.mrf.mxu0
        %v1535 = vadd.f32 %v1416, %v1534
        %1536 = vmatmul.bf16.gmra.mxu0 %v1345
        %v1537 = vpop.f32.mrf.mxu0
        %v1538 = vadd.f32 %v1419, %v1537
        %v1539 = vpop.f32.mrf.mxu0
        %v1540 = vadd.f32 %v1421, %v1539
        %1541 = vmatmul.bf16.gmra.mxu0 %v1348
        %v1542 = vpop.f32.mrf.mxu0
        %v1543 = vadd.f32 %v1424, %v1542
        %v1544 = vpop.f32.mrf.mxu0
        %v1545 = vadd.f32 %v1426, %v1544
        %1546 = vmatmul.bf16.gmra.mxu0 %v1351
        %v1547 = vpop.f32.mrf.mxu0
        %v1548 = vadd.f32 %v1429, %v1547
        %v1549 = vpop.f32.mrf.mxu0
        %v1550 = vadd.f32 %v1431, %v1549
        %1551 = vmatmul.bf16.gmra.mxu0 %v1354
        %v1552 = vpop.f32.mrf.mxu0
        %v1553 = vadd.f32 %v1434, %v1552
        %v1554 = vpop.f32.mrf.mxu0
        %v1555 = vadd.f32 %v1436, %v1554
        %1556 = vmatmul.bf16.gmra.mxu0 %v1357
        %v1557 = vpop.f32.mrf.mxu0
        %v1558 = vadd.f32 %v1439, %v1557
        %v1559 = vpop.f32.mrf.mxu0
        %v1560 = vadd.f32 %v1441, %v1559
        %1561 = vmatmul.bf16.gmra.mxu0 %v1360
        %v1562 = vpop.f32.mrf.mxu0
        %v1563 = vadd.f32 %v1444, %v1562
        %v1564 = vpop.f32.mrf.mxu0
        %v1565 = vadd.f32 %v1446, %v1564
        %1566 = vmatmul.bf16.gmra.mxu0 %v1363
        %v1567 = vpop.f32.mrf.mxu0
        %v1568 = vadd.f32 %v1449, %v1567
        %v1569 = vpop.f32.mrf.mxu0
        %v1570 = vadd.f32 %v1451, %v1569
        %1571 = vmatmul.bf16.gmra.mxu0 %v1366
        %v1572 = vpop.f32.mrf.mxu0
        %v1573 = vadd.f32 %v1454, %v1572
        %v1574 = vpop.f32.mrf.mxu0
        %v1575 = vadd.f32 %v1456, %v1574
        %1576 = vmatmul.bf16.gmra.mxu0 %v1369
        %v1577 = vpop.f32.mrf.mxu0
        %v1578 = vadd.f32 %v1459, %v1577
        %v1579 = vpop.f32.mrf.mxu0
        %v1580 = vadd.f32 %v1461, %v1579
        %1581 = vdwg.mxu0
        %s1582 = scalar_lea.vmem [#allocation5], 192
        %v1583 = vld [vmem:[%s1582] sm:$0xf]
        %v1584 = vld [vmem:[%s1582 + $0x4] sm:$0xf]
        %v1585 = vld [vmem:[%s1582 + $0x8] sm:$0xf]
        %v1586 = vld [vmem:[%s1582 + $0xc] sm:$0xf]
        %v1587 = vld [vmem:[%s1582 + $0x10] sm:$0xf]
        %v1588 = vld [vmem:[%s1582 + $0x14] sm:$0xf]
        %v1589 = vld [vmem:[%s1582 + $0x18] sm:$0xf]
        %v1590 = vld [vmem:[%s1582 + $0x1c] sm:$0xf]
        %v1591 = vunpack.c.l.b16 %v1226
        %v1592 = vunpack.c.l.b16 %v1235
        %v1593 = vpack.c.b16 %v1592, %v1591
        %v1602 = vunpack.c.l.b16 %v1583
        %v1603 = vunpack.c.l.b16 %v1584
        %v1604 = vunpack.c.l.b16 %v1585
        %v1605 = vunpack.c.l.b16 %v1586
        %v1606 = vunpack.c.l.b16 %v1587
        %v1607 = vunpack.c.l.b16 %v1588
        %v1608 = vunpack.c.l.b16 %v1589
        %v1609 = vunpack.c.l.b16 %v1590
        %v1610 = vpack.c.b16 %v1603, %v1602
        %v1611 = vpack.c.b16 %v1605, %v1604
        %v1612 = vpack.c.b16 %v1607, %v1606
        %v1613 = vpack.c.b16 %v1609, %v1608
        %v1619 = vsel %vm1325, %v1593, 0
        %1621 = vmatpush.bf16.msra.mxu0 0
        %1622 = vmatpush.bf16.msra.mxu0 0
        %1623 = vmatpush.bf16.msra.mxu0 0
        %1624 = vmatpush.bf16.msra.mxu0 0
        %1625 = vmatpush.bf16.msra.mxu0 %v1613
        %1626 = vmatpush.bf16.msra.mxu0 %v1612
        %1627 = vmatpush.bf16.msra.mxu0 %v1611
        %1628 = vmatpush.bf16.msra.mxu0 %v1610
        %1629 = vmatmul.bf16.gmra.mxu0 %v1330
        %v1630 = vpop.f32.mrf.mxu0
        %v1631 = vadd.f32 0.0, %v1630
        %v1632 = vpop.f32.mrf.mxu0
        %v1633 = vadd.f32 0.0, %v1632
        %1634 = vmatmul.bf16.gmra.mxu0 %v1333
        %v1635 = vpop.f32.mrf.mxu0
        %v1636 = vadd.f32 0.0, %v1635
        %v1637 = vpop.f32.mrf.mxu0
        %v1638 = vadd.f32 0.0, %v1637
        %1639 = vmatmul.bf16.gmra.mxu0 %v1336
        %v1640 = vpop.f32.mrf.mxu0
        %v1641 = vadd.f32 0.0, %v1640
        %v1642 = vpop.f32.mrf.mxu0
        %v1643 = vadd.f32 0.0, %v1642
        %1644 = vmatmul.bf16.gmra.mxu0 %v1339
        %v1645 = vpop.f32.mrf.mxu0
        %v1646 = vadd.f32 0.0, %v1645
        %v1647 = vpop.f32.mrf.mxu0
        %v1648 = vadd.f32 0.0, %v1647
        %1649 = vmatmul.bf16.gmra.mxu0 %v1342
        %v1650 = vpop.f32.mrf.mxu0
        %v1651 = vadd.f32 0.0, %v1650
        %v1652 = vpop.f32.mrf.mxu0
        %v1653 = vadd.f32 0.0, %v1652
        %1654 = vmatmul.bf16.gmra.mxu0 %v1345
        %v1655 = vpop.f32.mrf.mxu0
        %v1656 = vadd.f32 0.0, %v1655
        %v1657 = vpop.f32.mrf.mxu0
        %v1658 = vadd.f32 0.0, %v1657
        %1659 = vmatmul.bf16.gmra.mxu0 %v1348
        %v1660 = vpop.f32.mrf.mxu0
        %v1661 = vadd.f32 0.0, %v1660
        %v1662 = vpop.f32.mrf.mxu0
        %v1663 = vadd.f32 0.0, %v1662
        %1664 = vmatmul.bf16.gmra.mxu0 %v1351
        %v1665 = vpop.f32.mrf.mxu0
        %v1666 = vadd.f32 0.0, %v1665
        %v1667 = vpop.f32.mrf.mxu0
        %v1668 = vadd.f32 0.0, %v1667
        %1669 = vmatmul.bf16.gmra.mxu0 %v1354
        %v1670 = vpop.f32.mrf.mxu0
        %v1671 = vadd.f32 0.0, %v1670
        %v1672 = vpop.f32.mrf.mxu0
        %v1673 = vadd.f32 0.0, %v1672
        %1674 = vmatmul.bf16.gmra.mxu0 %v1357
        %v1675 = vpop.f32.mrf.mxu0
        %v1676 = vadd.f32 0.0, %v1675
        %v1677 = vpop.f32.mrf.mxu0
        %v1678 = vadd.f32 0.0, %v1677
        %1679 = vmatmul.bf16.gmra.mxu0 %v1360
        %v1680 = vpop.f32.mrf.mxu0
        %v1681 = vadd.f32 0.0, %v1680
        %v1682 = vpop.f32.mrf.mxu0
        %v1683 = vadd.f32 0.0, %v1682
        %1684 = vmatmul.bf16.gmra.mxu0 %v1363
        %v1685 = vpop.f32.mrf.mxu0
        %v1686 = vadd.f32 0.0, %v1685
        %v1687 = vpop.f32.mrf.mxu0
        %v1688 = vadd.f32 0.0, %v1687
        %1689 = vmatmul.bf16.gmra.mxu0 %v1366
        %v1690 = vpop.f32.mrf.mxu0
        %v1691 = vadd.f32 0.0, %v1690
        %v1692 = vpop.f32.mrf.mxu0
        %v1693 = vadd.f32 0.0, %v1692
        %1694 = vmatmul.bf16.gmra.mxu0 %v1369
        %v1695 = vpop.f32.mrf.mxu0
        %v1696 = vadd.f32 0.0, %v1695
        %v1697 = vpop.f32.mrf.mxu0
        %v1698 = vadd.f32 0.0, %v1697
        %1699 = vmatmul.bf16.gmra.mxu0 %v1372
        %v1700 = vpop.f32.mrf.mxu0
        %v1701 = vadd.f32 0.0, %v1700
        %v1702 = vpop.f32.mrf.mxu0
        %v1703 = vadd.f32 0.0, %v1702
        %1704 = vmatmul.bf16.gmra.mxu0 %v1619
        %v1705 = vpop.f32.mrf.mxu0
        %v1706 = vadd.f32 0.0, %v1705
        %v1707 = vpop.f32.mrf.mxu0
        %v1708 = vadd.f32 0.0, %v1707
        %1709 = vdwg.mxu0
        %v1710 = vadd.f32 %v1503, %v1631
        %v1711 = vadd.f32 %v1505, %v1633
        %v1712 = vadd.f32 %v1508, %v1636
        %v1713 = vadd.f32 %v1510, %v1638
        %v1714 = vadd.f32 %v1513, %v1641
        %v1715 = vadd.f32 %v1515, %v1643
        %v1716 = vadd.f32 %v1518, %v1646
        %v1717 = vadd.f32 %v1520, %v1648
        %v1718 = vadd.f32 %v1523, %v1651
        %v1719 = vadd.f32 %v1525, %v1653
        %v1720 = vadd.f32 %v1528, %v1656
        %v1721 = vadd.f32 %v1530, %v1658
        %v1722 = vadd.f32 %v1533, %v1661
        %v1723 = vadd.f32 %v1535, %v1663
        %v1724 = vadd.f32 %v1538, %v1666
        %v1725 = vadd.f32 %v1540, %v1668
        %v1726 = vadd.f32 %v1543, %v1671
        %v1727 = vadd.f32 %v1545, %v1673
        %v1728 = vadd.f32 %v1548, %v1676
        %v1729 = vadd.f32 %v1550, %v1678
        %v1730 = vadd.f32 %v1553, %v1681
        %v1731 = vadd.f32 %v1555, %v1683
        %v1732 = vadd.f32 %v1558, %v1686
        %v1733 = vadd.f32 %v1560, %v1688
        %v1734 = vadd.f32 %v1563, %v1691
        %v1735 = vadd.f32 %v1565, %v1693
        %v1736 = vadd.f32 %v1568, %v1696
        %v1737 = vadd.f32 %v1570, %v1698
        %v1738 = vadd.f32 %v1573, %v1701
        %v1739 = vadd.f32 %v1575, %v1703
        %v1740 = vadd.f32 %v1578, %v1706
        %v1741 = vadd.f32 %v1580, %v1708
        %s1742 = scalar_lea.vmem [#allocation5], 32
        %v1743 = vld [vmem:[%s1742] sm:$0xf]
        %v1744 = vld [vmem:[%s1742 + $0x4] sm:$0xf]
        %v1745 = vld [vmem:[%s1742 + $0x8] sm:$0xf]
        %v1746 = vld [vmem:[%s1742 + $0xc] sm:$0xf]
        %v1747 = vld [vmem:[%s1742 + $0x10] sm:$0xf]
        %v1748 = vld [vmem:[%s1742 + $0x14] sm:$0xf]
        %v1749 = vld [vmem:[%s1742 + $0x18] sm:$0xf]
        %v1750 = vld [vmem:[%s1742 + $0x1c] sm:$0xf]
        %s1751 = scalar_lea.vmem [#allocation5], 128
        %v1752 = vld [vmem:[%s1751] sm:$0xf]
        %v1753 = vld [vmem:[%s1751 + $0x4] sm:$0xf]
        %v1754 = vld [vmem:[%s1751 + $0x8] sm:$0xf]
        %v1755 = vld [vmem:[%s1751 + $0xc] sm:$0xf]
        %v1756 = vld [vmem:[%s1751 + $0x10] sm:$0xf]
        %v1757 = vld [vmem:[%s1751 + $0x14] sm:$0xf]
        %v1758 = vld [vmem:[%s1751 + $0x18] sm:$0xf]
        %v1759 = vld [vmem:[%s1751 + $0x1c] sm:$0xf]
        %v1792 = vunpack.c.l.b16 %v788
        %v1793 = vunpack.c.l.b16 %v789
        %v1794 = vunpack.c.l.b16 %v791
        %v1795 = vunpack.c.l.b16 %v792
        %v1796 = vunpack.c.l.b16 %v794
        %v1797 = vunpack.c.l.b16 %v795
        %v1798 = vunpack.c.l.b16 %v797
        %v1799 = vunpack.c.l.b16 %v798
        %v1800 = vunpack.c.l.b16 %v800
        %v1801 = vunpack.c.l.b16 %v801
        %v1802 = vunpack.c.l.b16 %v803
        %v1803 = vunpack.c.l.b16 %v804
        %v1804 = vunpack.c.l.b16 %v806
        %v1805 = vunpack.c.l.b16 %v807
        %v1806 = vunpack.c.l.b16 %v809
        %v1807 = vunpack.c.l.b16 %v810
        %v1808 = vunpack.c.l.b16 %v812
        %v1809 = vunpack.c.l.b16 %v813
        %v1810 = vunpack.c.l.b16 %v815
        %v1811 = vunpack.c.l.b16 %v816
        %v1812 = vunpack.c.l.b16 %v818
        %v1813 = vunpack.c.l.b16 %v819
        %v1814 = vunpack.c.l.b16 %v821
        %v1815 = vunpack.c.l.b16 %v822
        %v1816 = vunpack.c.l.b16 %v824
        %v1817 = vunpack.c.l.b16 %v825
        %v1818 = vunpack.c.l.b16 %v827
        %v1819 = vunpack.c.l.b16 %v828
        %v1820 = vunpack.c.l.b16 %v830
        %v1821 = vunpack.c.l.b16 %v831
        %v1822 = vunpack.c.l.b16 %v833
        %v1823 = vunpack.c.l.b16 %v834
        %v1824 = vpack.c.b16 %v1793, %v1792
        %v1825 = vpack.c.b16 %v1795, %v1794
        %v1826 = vpack.c.b16 %v1797, %v1796
        %v1827 = vpack.c.b16 %v1799, %v1798
        %v1828 = vpack.c.b16 %v1801, %v1800
        %v1829 = vpack.c.b16 %v1803, %v1802
        %v1830 = vpack.c.b16 %v1805, %v1804
        %v1831 = vpack.c.b16 %v1807, %v1806
        %v1832 = vpack.c.b16 %v1809, %v1808
        %v1833 = vpack.c.b16 %v1811, %v1810
        %v1834 = vpack.c.b16 %v1813, %v1812
        %v1835 = vpack.c.b16 %v1815, %v1814
        %v1836 = vpack.c.b16 %v1817, %v1816
        %v1837 = vpack.c.b16 %v1819, %v1818
        %v1838 = vpack.c.b16 %v1821, %v1820
        %v1839 = vpack.c.b16 %v1823, %v1822
        %v1848 = vunpack.c.l.b16 %v1752
        %v1849 = vunpack.c.l.b16 %v1753
        %v1850 = vunpack.c.l.b16 %v1754
        %v1851 = vunpack.c.l.b16 %v1755
        %v1852 = vunpack.c.l.b16 %v1756
        %v1853 = vunpack.c.l.b16 %v1757
        %v1854 = vunpack.c.l.b16 %v1758
        %v1855 = vunpack.c.l.b16 %v1759
        %v1856 = vpack.c.b16 %v1849, %v1848
        %v1857 = vpack.c.b16 %v1851, %v1850
        %v1858 = vpack.c.b16 %v1853, %v1852
        %v1859 = vpack.c.b16 %v1855, %v1854
        %v1865 = vsel %vm1325, %v1824, 0
        %v1868 = vsel %vm1325, %v1825, 0
        %v1871 = vsel %vm1325, %v1826, 0
        %v1874 = vsel %vm1325, %v1827, 0
        %v1877 = vsel %vm1325, %v1828, 0
        %v1880 = vsel %vm1325, %v1829, 0
        %v1883 = vsel %vm1325, %v1830, 0
        %v1886 = vsel %vm1325, %v1831, 0
        %v1889 = vsel %vm1325, %v1832, 0
        %v1892 = vsel %vm1325, %v1833, 0
        %v1895 = vsel %vm1325, %v1834, 0
        %v1898 = vsel %vm1325, %v1835, 0
        %v1901 = vsel %vm1325, %v1836, 0
        %v1904 = vsel %vm1325, %v1837, 0
        %v1907 = vsel %vm1325, %v1838, 0
        %v1910 = vsel %vm1325, %v1839, 0
        %1912 = vmatpush.bf16.msra.mxu0 0
        %1913 = vmatpush.bf16.msra.mxu0 0
        %1914 = vmatpush.bf16.msra.mxu0 0
        %1915 = vmatpush.bf16.msra.mxu0 0
        %1916 = vmatpush.bf16.msra.mxu0 %v1859
        %1917 = vmatpush.bf16.msra.mxu0 %v1858
        %1918 = vmatpush.bf16.msra.mxu0 %v1857
        %1919 = vmatpush.bf16.msra.mxu0 %v1856
        %1920 = vmatmul.bf16.gmra.mxu0 %v1865
        %v1921 = vpop.f32.mrf.mxu0
        %v1922 = vadd.f32 0.0, %v1921
        %v1923 = vpop.f32.mrf.mxu0
        %v1924 = vadd.f32 0.0, %v1923
        %1925 = vmatmul.bf16.gmra.mxu0 %v1868
        %v1926 = vpop.f32.mrf.mxu0
        %v1927 = vadd.f32 0.0, %v1926
        %v1928 = vpop.f32.mrf.mxu0
        %v1929 = vadd.f32 0.0, %v1928
        %1930 = vmatmul.bf16.gmra.mxu0 %v1871
        %v1931 = vpop.f32.mrf.mxu0
        %v1932 = vadd.f32 0.0, %v1931
        %v1933 = vpop.f32.mrf.mxu0
        %v1934 = vadd.f32 0.0, %v1933
        %1935 = vmatmul.bf16.gmra.mxu0 %v1874
        %v1936 = vpop.f32.mrf.mxu0
        %v1937 = vadd.f32 0.0, %v1936
        %v1938 = vpop.f32.mrf.mxu0
        %v1939 = vadd.f32 0.0, %v1938
        %1940 = vmatmul.bf16.gmra.mxu0 %v1877
        %v1941 = vpop.f32.mrf.mxu0
        %v1942 = vadd.f32 0.0, %v1941
        %v1943 = vpop.f32.mrf.mxu0
        %v1944 = vadd.f32 0.0, %v1943
        %1945 = vmatmul.bf16.gmra.mxu0 %v1880
        %v1946 = vpop.f32.mrf.mxu0
        %v1947 = vadd.f32 0.0, %v1946
        %v1948 = vpop.f32.mrf.mxu0
        %v1949 = vadd.f32 0.0, %v1948
        %1950 = vmatmul.bf16.gmra.mxu0 %v1883
        %v1951 = vpop.f32.mrf.mxu0
        %v1952 = vadd.f32 0.0, %v1951
        %v1953 = vpop.f32.mrf.mxu0
        %v1954 = vadd.f32 0.0, %v1953
        %1955 = vmatmul.bf16.gmra.mxu0 %v1886
        %v1956 = vpop.f32.mrf.mxu0
        %v1957 = vadd.f32 0.0, %v1956
        %v1958 = vpop.f32.mrf.mxu0
        %v1959 = vadd.f32 0.0, %v1958
        %1960 = vmatmul.bf16.gmra.mxu0 %v1889
        %v1961 = vpop.f32.mrf.mxu0
        %v1962 = vadd.f32 0.0, %v1961
        %v1963 = vpop.f32.mrf.mxu0
        %v1964 = vadd.f32 0.0, %v1963
        %1965 = vmatmul.bf16.gmra.mxu0 %v1892
        %v1966 = vpop.f32.mrf.mxu0
        %v1967 = vadd.f32 0.0, %v1966
        %v1968 = vpop.f32.mrf.mxu0
        %v1969 = vadd.f32 0.0, %v1968
        %1970 = vmatmul.bf16.gmra.mxu0 %v1895
        %v1971 = vpop.f32.mrf.mxu0
        %v1972 = vadd.f32 0.0, %v1971
        %v1973 = vpop.f32.mrf.mxu0
        %v1974 = vadd.f32 0.0, %v1973
        %1975 = vmatmul.bf16.gmra.mxu0 %v1898
        %v1976 = vpop.f32.mrf.mxu0
        %v1977 = vadd.f32 0.0, %v1976
        %v1978 = vpop.f32.mrf.mxu0
        %v1979 = vadd.f32 0.0, %v1978
        %1980 = vmatmul.bf16.gmra.mxu0 %v1901
        %v1981 = vpop.f32.mrf.mxu0
        %v1982 = vadd.f32 0.0, %v1981
        %v1983 = vpop.f32.mrf.mxu0
        %v1984 = vadd.f32 0.0, %v1983
        %1985 = vmatmul.bf16.gmra.mxu0 %v1904
        %v1986 = vpop.f32.mrf.mxu0
        %v1987 = vadd.f32 0.0, %v1986
        %v1988 = vpop.f32.mrf.mxu0
        %v1989 = vadd.f32 0.0, %v1988
        %1990 = vmatmul.bf16.gmra.mxu0 %v1907
        %v1991 = vpop.f32.mrf.mxu0
        %v1992 = vadd.f32 0.0, %v1991
        %v1993 = vpop.f32.mrf.mxu0
        %v1994 = vadd.f32 0.0, %v1993
        %1995 = vmatmul.bf16.gmra.mxu0 %v1910
        %v1996 = vpop.f32.mrf.mxu0
        %v1997 = vadd.f32 0.0, %v1996
        %v1998 = vpop.f32.mrf.mxu0
        %v1999 = vadd.f32 0.0, %v1998
        %2000 = vdwg.mxu0
        %v2003 = vunpack.c.l.b16 %v785
        %v2004 = vunpack.c.l.b16 %v786
        %v2005 = vpack.c.b16 %v2004, %v2003
        %v2014 = vunpack.c.l.b16 %v1743
        %v2015 = vunpack.c.l.b16 %v1744
        %v2016 = vunpack.c.l.b16 %v1745
        %v2017 = vunpack.c.l.b16 %v1746
        %v2018 = vunpack.c.l.b16 %v1747
        %v2019 = vunpack.c.l.b16 %v1748
        %v2020 = vunpack.c.l.b16 %v1749
        %v2021 = vunpack.c.l.b16 %v1750
        %v2022 = vpack.c.b16 %v2015, %v2014
        %v2023 = vpack.c.b16 %v2017, %v2016
        %v2024 = vpack.c.b16 %v2019, %v2018
        %v2025 = vpack.c.b16 %v2021, %v2020
        %v2031 = vsel %vm1325, %v2005, 0
        %2033 = vmatpush.bf16.msra.mxu0 0
        %2034 = vmatpush.bf16.msra.mxu0 0
        %2035 = vmatpush.bf16.msra.mxu0 0
        %2036 = vmatpush.bf16.msra.mxu0 0
        %2037 = vmatpush.bf16.msra.mxu0 %v2025
        %2038 = vmatpush.bf16.msra.mxu0 %v2024
        %2039 = vmatpush.bf16.msra.mxu0 %v2023
        %2040 = vmatpush.bf16.msra.mxu0 %v2022
        %2041 = vmatmul.bf16.gmra.mxu0 %v2031
        %v2042 = vpop.f32.mrf.mxu0
        %v2043 = vadd.f32 %v1922, %v2042
        %v2044 = vpop.f32.mrf.mxu0
        %v2045 = vadd.f32 %v1924, %v2044
        %2046 = vmatmul.bf16.gmra.mxu0 %v1865
        %v2047 = vpop.f32.mrf.mxu0
        %v2048 = vadd.f32 %v1927, %v2047
        %v2049 = vpop.f32.mrf.mxu0
        %v2050 = vadd.f32 %v1929, %v2049
        %2051 = vmatmul.bf16.gmra.mxu0 %v1868
        %v2052 = vpop.f32.mrf.mxu0
        %v2053 = vadd.f32 %v1932, %v2052
        %v2054 = vpop.f32.mrf.mxu0
        %v2055 = vadd.f32 %v1934, %v2054
        %2056 = vmatmul.bf16.gmra.mxu0 %v1871
        %v2057 = vpop.f32.mrf.mxu0
        %v2058 = vadd.f32 %v1937, %v2057
        %v2059 = vpop.f32.mrf.mxu0
        %v2060 = vadd.f32 %v1939, %v2059
        %2061 = vmatmul.bf16.gmra.mxu0 %v1874
        %v2062 = vpop.f32.mrf.mxu0
        %v2063 = vadd.f32 %v1942, %v2062
        %v2064 = vpop.f32.mrf.mxu0
        %v2065 = vadd.f32 %v1944, %v2064
        %2066 = vmatmul.bf16.gmra.mxu0 %v1877
        %v2067 = vpop.f32.mrf.mxu0
        %v2068 = vadd.f32 %v1947, %v2067
        %v2069 = vpop.f32.mrf.mxu0
        %v2070 = vadd.f32 %v1949, %v2069
        %2071 = vmatmul.bf16.gmra.mxu0 %v1880
        %v2072 = vpop.f32.mrf.mxu0
        %v2073 = vadd.f32 %v1952, %v2072
        %v2074 = vpop.f32.mrf.mxu0
        %v2075 = vadd.f32 %v1954, %v2074
        %2076 = vmatmul.bf16.gmra.mxu0 %v1883
        %v2077 = vpop.f32.mrf.mxu0
        %v2078 = vadd.f32 %v1957, %v2077
        %v2079 = vpop.f32.mrf.mxu0
        %v2080 = vadd.f32 %v1959, %v2079
        %2081 = vmatmul.bf16.gmra.mxu0 %v1886
        %v2082 = vpop.f32.mrf.mxu0
        %v2083 = vadd.f32 %v1962, %v2082
        %v2084 = vpop.f32.mrf.mxu0
        %v2085 = vadd.f32 %v1964, %v2084
        %2086 = vmatmul.bf16.gmra.mxu0 %v1889
        %v2087 = vpop.f32.mrf.mxu0
        %v2088 = vadd.f32 %v1967, %v2087
        %v2089 = vpop.f32.mrf.mxu0
        %v2090 = vadd.f32 %v1969, %v2089
        %2091 = vmatmul.bf16.gmra.mxu0 %v1892
        %v2092 = vpop.f32.mrf.mxu0
        %v2093 = vadd.f32 %v1972, %v2092
        %v2094 = vpop.f32.mrf.mxu0
        %v2095 = vadd.f32 %v1974, %v2094
        %2096 = vmatmul.bf16.gmra.mxu0 %v1895
        %v2097 = vpop.f32.mrf.mxu0
        %v2098 = vadd.f32 %v1977, %v2097
        %v2099 = vpop.f32.mrf.mxu0
        %v2100 = vadd.f32 %v1979, %v2099
        %2101 = vmatmul.bf16.gmra.mxu0 %v1898
        %v2102 = vpop.f32.mrf.mxu0
        %v2103 = vadd.f32 %v1982, %v2102
        %v2104 = vpop.f32.mrf.mxu0
        %v2105 = vadd.f32 %v1984, %v2104
        %2106 = vmatmul.bf16.gmra.mxu0 %v1901
        %v2107 = vpop.f32.mrf.mxu0
        %v2108 = vadd.f32 %v1987, %v2107
        %v2109 = vpop.f32.mrf.mxu0
        %v2110 = vadd.f32 %v1989, %v2109
        %2111 = vmatmul.bf16.gmra.mxu0 %v1904
        %v2112 = vpop.f32.mrf.mxu0
        %v2113 = vadd.f32 %v1992, %v2112
        %v2114 = vpop.f32.mrf.mxu0
        %v2115 = vadd.f32 %v1994, %v2114
        %2116 = vmatmul.bf16.gmra.mxu0 %v1907
        %v2117 = vpop.f32.mrf.mxu0
        %v2118 = vadd.f32 %v1997, %v2117
        %v2119 = vpop.f32.mrf.mxu0
        %v2120 = vadd.f32 %v1999, %v2119
        %2121 = vdwg.mxu0
        %s2122 = scalar_lea.vmem [#allocation5], 224
        %v2123 = vld [vmem:[%s2122] sm:$0xf]
        %v2124 = vld [vmem:[%s2122 + $0x4] sm:$0xf]
        %v2125 = vld [vmem:[%s2122 + $0x8] sm:$0xf]
        %v2126 = vld [vmem:[%s2122 + $0xc] sm:$0xf]
        %v2127 = vld [vmem:[%s2122 + $0x10] sm:$0xf]
        %v2128 = vld [vmem:[%s2122 + $0x14] sm:$0xf]
        %v2129 = vld [vmem:[%s2122 + $0x18] sm:$0xf]
        %v2130 = vld [vmem:[%s2122 + $0x1c] sm:$0xf]
        %v2133 = vunpack.c.l.b16 %v836
        %v2134 = vunpack.c.l.b16 %v837
        %v2135 = vpack.c.b16 %v2134, %v2133
        %v2144 = vunpack.c.l.b16 %v2123
        %v2145 = vunpack.c.l.b16 %v2124
        %v2146 = vunpack.c.l.b16 %v2125
        %v2147 = vunpack.c.l.b16 %v2126
        %v2148 = vunpack.c.l.b16 %v2127
        %v2149 = vunpack.c.l.b16 %v2128
        %v2150 = vunpack.c.l.b16 %v2129
        %v2151 = vunpack.c.l.b16 %v2130
        %v2152 = vpack.c.b16 %v2145, %v2144
        %v2153 = vpack.c.b16 %v2147, %v2146
        %v2154 = vpack.c.b16 %v2149, %v2148
        %v2155 = vpack.c.b16 %v2151, %v2150
        %v2161 = vsel %vm1325, %v2135, 0
        %2163 = vmatpush.bf16.msra.mxu0 0
        %2164 = vmatpush.bf16.msra.mxu0 0
        %2165 = vmatpush.bf16.msra.mxu0 0
        %2166 = vmatpush.bf16.msra.mxu0 0
        %2167 = vmatpush.bf16.msra.mxu0 %v2155
        %2168 = vmatpush.bf16.msra.mxu0 %v2154
        %2169 = vmatpush.bf16.msra.mxu0 %v2153
        %2170 = vmatpush.bf16.msra.mxu0 %v2152
        %2171 = vmatmul.bf16.gmra.mxu0 %v1868
        %v2172 = vpop.f32.mrf.mxu0
        %v2173 = vadd.f32 0.0, %v2172
        %v2174 = vpop.f32.mrf.mxu0
        %v2175 = vadd.f32 0.0, %v2174
        %2176 = vmatmul.bf16.gmra.mxu0 %v1871
        %v2177 = vpop.f32.mrf.mxu0
        %v2178 = vadd.f32 0.0, %v2177
        %v2179 = vpop.f32.mrf.mxu0
        %v2180 = vadd.f32 0.0, %v2179
        %2181 = vmatmul.bf16.gmra.mxu0 %v1874
        %v2182 = vpop.f32.mrf.mxu0
        %v2183 = vadd.f32 0.0, %v2182
        %v2184 = vpop.f32.mrf.mxu0
        %v2185 = vadd.f32 0.0, %v2184
        %2186 = vmatmul.bf16.gmra.mxu0 %v1877
        %v2187 = vpop.f32.mrf.mxu0
        %v2188 = vadd.f32 0.0, %v2187
        %v2189 = vpop.f32.mrf.mxu0
        %v2190 = vadd.f32 0.0, %v2189
        %2191 = vmatmul.bf16.gmra.mxu0 %v1880
        %v2192 = vpop.f32.mrf.mxu0
        %v2193 = vadd.f32 0.0, %v2192
        %v2194 = vpop.f32.mrf.mxu0
        %v2195 = vadd.f32 0.0, %v2194
        %2196 = vmatmul.bf16.gmra.mxu0 %v1883
        %v2197 = vpop.f32.mrf.mxu0
        %v2198 = vadd.f32 0.0, %v2197
        %v2199 = vpop.f32.mrf.mxu0
        %v2200 = vadd.f32 0.0, %v2199
        %2201 = vmatmul.bf16.gmra.mxu0 %v1886
        %v2202 = vpop.f32.mrf.mxu0
        %v2203 = vadd.f32 0.0, %v2202
        %v2204 = vpop.f32.mrf.mxu0
        %v2205 = vadd.f32 0.0, %v2204
        %2206 = vmatmul.bf16.gmra.mxu0 %v1889
        %v2207 = vpop.f32.mrf.mxu0
        %v2208 = vadd.f32 0.0, %v2207
        %v2209 = vpop.f32.mrf.mxu0
        %v2210 = vadd.f32 0.0, %v2209
        %2211 = vmatmul.bf16.gmra.mxu0 %v1892
        %v2212 = vpop.f32.mrf.mxu0
        %v2213 = vadd.f32 0.0, %v2212
        %v2214 = vpop.f32.mrf.mxu0
        %v2215 = vadd.f32 0.0, %v2214
        %2216 = vmatmul.bf16.gmra.mxu0 %v1895
        %v2217 = vpop.f32.mrf.mxu0
        %v2218 = vadd.f32 0.0, %v2217
        %v2219 = vpop.f32.mrf.mxu0
        %v2220 = vadd.f32 0.0, %v2219
        %2221 = vmatmul.bf16.gmra.mxu0 %v1898
        %v2222 = vpop.f32.mrf.mxu0
        %v2223 = vadd.f32 0.0, %v2222
        %v2224 = vpop.f32.mrf.mxu0
        %v2225 = vadd.f32 0.0, %v2224
        %2226 = vmatmul.bf16.gmra.mxu0 %v1901
        %v2227 = vpop.f32.mrf.mxu0
        %v2228 = vadd.f32 0.0, %v2227
        %v2229 = vpop.f32.mrf.mxu0
        %v2230 = vadd.f32 0.0, %v2229
        %2231 = vmatmul.bf16.gmra.mxu0 %v1904
        %v2232 = vpop.f32.mrf.mxu0
        %v2233 = vadd.f32 0.0, %v2232
        %v2234 = vpop.f32.mrf.mxu0
        %v2235 = vadd.f32 0.0, %v2234
        %2236 = vmatmul.bf16.gmra.mxu0 %v1907
        %v2237 = vpop.f32.mrf.mxu0
        %v2238 = vadd.f32 0.0, %v2237
        %v2239 = vpop.f32.mrf.mxu0
        %v2240 = vadd.f32 0.0, %v2239
        %2241 = vmatmul.bf16.gmra.mxu0 %v1910
        %v2242 = vpop.f32.mrf.mxu0
        %v2243 = vadd.f32 0.0, %v2242
        %v2244 = vpop.f32.mrf.mxu0
        %v2245 = vadd.f32 0.0, %v2244
        %2246 = vmatmul.bf16.gmra.mxu0 %v2161
        %v2247 = vpop.f32.mrf.mxu0
        %v2248 = vadd.f32 0.0, %v2247
        %v2249 = vpop.f32.mrf.mxu0
        %v2250 = vadd.f32 0.0, %v2249
        %2251 = vdwg.mxu0
        %v2252 = vadd.f32 %v2043, %v2173
        %v2253 = vadd.f32 %v2045, %v2175
        %v2254 = vadd.f32 %v2048, %v2178
        %v2255 = vadd.f32 %v2050, %v2180
        %v2256 = vadd.f32 %v2053, %v2183
        %v2257 = vadd.f32 %v2055, %v2185
        %v2258 = vadd.f32 %v2058, %v2188
        %v2259 = vadd.f32 %v2060, %v2190
        %v2260 = vadd.f32 %v2063, %v2193
        %v2261 = vadd.f32 %v2065, %v2195
        %v2262 = vadd.f32 %v2068, %v2198
        %v2263 = vadd.f32 %v2070, %v2200
        %v2264 = vadd.f32 %v2073, %v2203
        %v2265 = vadd.f32 %v2075, %v2205
        %v2266 = vadd.f32 %v2078, %v2208
        %v2267 = vadd.f32 %v2080, %v2210
        %v2268 = vadd.f32 %v2083, %v2213
        %v2269 = vadd.f32 %v2085, %v2215
        %v2270 = vadd.f32 %v2088, %v2218
        %v2271 = vadd.f32 %v2090, %v2220
        %v2272 = vadd.f32 %v2093, %v2223
        %v2273 = vadd.f32 %v2095, %v2225
        %v2274 = vadd.f32 %v2098, %v2228
        %v2275 = vadd.f32 %v2100, %v2230
        %v2276 = vadd.f32 %v2103, %v2233
        %v2277 = vadd.f32 %v2105, %v2235
        %v2278 = vadd.f32 %v2108, %v2238
        %v2279 = vadd.f32 %v2110, %v2240
        %v2280 = vadd.f32 %v2113, %v2243
        %v2281 = vadd.f32 %v2115, %v2245
        %v2282 = vadd.f32 %v2118, %v2248
        %v2283 = vadd.f32 %v2120, %v2250
        %v2284 = vadd.f32 %v1710, %v2252
        %v2285 = vadd.f32 %v1711, %v2253
        %v2286 = vadd.f32 %v1712, %v2254
        %v2287 = vadd.f32 %v1713, %v2255
        %v2288 = vadd.f32 %v1714, %v2256
        %v2289 = vadd.f32 %v1715, %v2257
        %v2290 = vadd.f32 %v1716, %v2258
        %v2291 = vadd.f32 %v1717, %v2259
        %v2292 = vadd.f32 %v1718, %v2260
        %v2293 = vadd.f32 %v1719, %v2261
        %v2294 = vadd.f32 %v1720, %v2262
        %v2295 = vadd.f32 %v1721, %v2263
        %v2296 = vadd.f32 %v1722, %v2264
        %v2297 = vadd.f32 %v1723, %v2265
        %v2298 = vadd.f32 %v1724, %v2266
        %v2299 = vadd.f32 %v1725, %v2267
        %v2300 = vadd.f32 %v1726, %v2268
        %v2301 = vadd.f32 %v1727, %v2269
        %v2302 = vadd.f32 %v1728, %v2270
        %v2303 = vadd.f32 %v1729, %v2271
        %v2304 = vadd.f32 %v1730, %v2272
        %v2305 = vadd.f32 %v1731, %v2273
        %v2306 = vadd.f32 %v1732, %v2274
        %v2307 = vadd.f32 %v1733, %v2275
        %v2308 = vadd.f32 %v1734, %v2276
        %v2309 = vadd.f32 %v1735, %v2277
        %v2310 = vadd.f32 %v1736, %v2278
        %v2311 = vadd.f32 %v1737, %v2279
        %v2312 = vadd.f32 %v1738, %v2280
        %v2313 = vadd.f32 %v1739, %v2281
        %v2314 = vadd.f32 %v1740, %v2282
        %v2315 = vadd.f32 %v1741, %v2283
        %v2316 = vld [vmem:[#allocation2 + $0x4] sm:$0xf]
        %v2317 = vld [vmem:[#allocation2 + $0x8] sm:$0xf]
        %v2318 = vld [vmem:[#allocation2 + $0xc] sm:$0x1]
        %v2319 = vld [vmem:[#allocation2 + $0x14] sm:$0xf]
        %v2320 = vld [vmem:[#allocation2 + $0x18] sm:$0xf]
        %v2321 = vld [vmem:[#allocation2 + $0x1c] sm:$0x1]
        %v2322 = vld [vmem:[#allocation2 + $0x24] sm:$0xf]
        %v2323 = vld [vmem:[#allocation2 + $0x28] sm:$0xf]
        %v2324 = vld [vmem:[#allocation2 + $0x2c] sm:$0x1]
        %v2325 = vld [vmem:[#allocation2 + $0x34] sm:$0xf]
        %v2326 = vld [vmem:[#allocation2 + $0x38] sm:$0xf]
        %v2327 = vld [vmem:[#allocation2 + $0x3c] sm:$0x1]
        %v2328 = vld [vmem:[#allocation2 + $0x44] sm:$0xf]
        %v2329 = vld [vmem:[#allocation2 + $0x48] sm:$0xf]
        %v2330 = vld [vmem:[#allocation2 + $0x4c] sm:$0x1]
        %v2331 = vld [vmem:[#allocation2 + $0x54] sm:$0xf]
        %v2332 = vld [vmem:[#allocation2 + $0x58] sm:$0xf]
        %v2333 = vld [vmem:[#allocation2 + $0x5c] sm:$0x1]
        %v2334 = vld [vmem:[#allocation2 + $0x64] sm:$0xf]
        %v2335 = vld [vmem:[#allocation2 + $0x68] sm:$0xf]
        %v2336 = vld [vmem:[#allocation2 + $0x6c] sm:$0x1]
        %v2337 = vld [vmem:[#allocation2 + $0x74] sm:$0xf]
        %v2338 = vld [vmem:[#allocation2 + $0x78] sm:$0xf]
        %v2339 = vld [vmem:[#allocation2 + $0x7c] sm:$0x1]
        %v2340 = vld [vmem:[#allocation2 + $0x84] sm:$0xf]
        %v2341 = vld [vmem:[#allocation2 + $0x88] sm:$0xf]
        %v2342 = vld [vmem:[#allocation2 + $0x8c] sm:$0x1]
        %v2343 = vld [vmem:[#allocation2 + $0x94] sm:$0xf]
        %v2344 = vld [vmem:[#allocation2 + $0x98] sm:$0xf]
        %v2345 = vld [vmem:[#allocation2 + $0x9c] sm:$0x1]
        %v2346 = vld [vmem:[#allocation2 + $0xa4] sm:$0xf]
        %v2347 = vld [vmem:[#allocation2 + $0xa8] sm:$0xf]
        %v2348 = vld [vmem:[#allocation2 + $0xac] sm:$0x1]
        %v2349 = vld [vmem:[#allocation2 + $0xb4] sm:$0xf]
        %v2350 = vld [vmem:[#allocation2 + $0xb8] sm:$0xf]
        %v2351 = vld [vmem:[#allocation2 + $0xbc] sm:$0x1]
        %v2352 = vld [vmem:[#allocation2 + $0xc4] sm:$0xf]
        %v2353 = vld [vmem:[#allocation2 + $0xc8] sm:$0xf]
        %v2354 = vld [vmem:[#allocation2 + $0xcc] sm:$0x1]
        %v2355 = vld [vmem:[#allocation2 + $0xd4] sm:$0xf]
        %v2356 = vld [vmem:[#allocation2 + $0xd8] sm:$0xf]
        %v2357 = vld [vmem:[#allocation2 + $0xdc] sm:$0x1]
        %v2358 = vld [vmem:[#allocation2 + $0xe4] sm:$0xf]
        %v2359 = vld [vmem:[#allocation2 + $0xe8] sm:$0xf]
        %v2360 = vld [vmem:[#allocation2 + $0xec] sm:$0x1]
        %v2361 = vld [vmem:[#allocation2 + $0xf4] sm:$0xf]
        %v2362 = vld [vmem:[#allocation2 + $0xf8] sm:$0xf]
        %v2363 = vld [vmem:[#allocation2 + $0xfc] sm:$0x1]
        %v2364 = vld [vmem:[#allocation2 + $0x104] sm:$0xf]
        %v2365 = vld [vmem:[#allocation2 + $0x108] sm:$0xf]
        %v2366 = vld [vmem:[#allocation2 + $0x10c] sm:$0x1]
        %v2367 = vld [vmem:[#allocation2 + $0x114] sm:$0xf]
        %v2368 = vld [vmem:[#allocation2 + $0x118] sm:$0xf]
        %v2369 = vld [vmem:[#allocation2 + $0x11c] sm:$0x1]
        %vm2370 = vsmask.f32 3328
        %vm2371 = vsmask.f32 7440
        %vm2372 = vmor %vm2370, %vm2371
        %v2374 = vshrl.u32 %v2316, 16
        %v2376 = vrot.slane %v2374, 4
        %v2377 = vshll.u32 %v2316, 16
        %v2379 = vrot.slane %v2377, 5
        %v2380 = vor.u32 %v2376, %v2379
        %v2381 = vrot.slane %v2380, 4
        %v2383 = vshll.u32 %v2317, 16
        %v2385 = vrot.slane %v2383, 5
        %v2386 = vsel %vm2372, %v2381, %v2385
        %v2387 = vshrl.u32 %v2317, 16
        %v2389 = vrot.slane %v2387, 4
        %v2390 = vor.u32 %v2389, %v2385
        %v2391 = vrot.slane %v2390, 4
        %v2393 = vshll.u32 %v2318, 16
        %v2395 = vrot.slane %v2393, 5
        %v2396 = vsel %vm2372, %v2391, %v2395
        %v2398 = vshrl.u32 %v2319, 16
        %v2400 = vrot.slane %v2398, 4
        %v2401 = vshll.u32 %v2319, 16
        %v2403 = vrot.slane %v2401, 5
        %v2404 = vor.u32 %v2400, %v2403
        %v2405 = vrot.slane %v2404, 4
        %v2407 = vshll.u32 %v2320, 16
        %v2409 = vrot.slane %v2407, 5
        %v2410 = vsel %vm2372, %v2405, %v2409
        %v2411 = vshrl.u32 %v2320, 16
        %v2413 = vrot.slane %v2411, 4
        %v2414 = vor.u32 %v2413, %v2409
        %v2415 = vrot.slane %v2414, 4
        %v2417 = vshll.u32 %v2321, 16
        %v2419 = vrot.slane %v2417, 5
        %v2420 = vsel %vm2372, %v2415, %v2419
        %v2422 = vshrl.u32 %v2322, 16
        %v2424 = vrot.slane %v2422, 4
        %v2425 = vshll.u32 %v2322, 16
        %v2427 = vrot.slane %v2425, 5
        %v2428 = vor.u32 %v2424, %v2427
        %v2429 = vrot.slane %v2428, 4
        %v2431 = vshll.u32 %v2323, 16
        %v2433 = vrot.slane %v2431, 5
        %v2434 = vsel %vm2372, %v2429, %v2433
        %v2435 = vshrl.u32 %v2323, 16
        %v2437 = vrot.slane %v2435, 4
        %v2438 = vor.u32 %v2437, %v2433
        %v2439 = vrot.slane %v2438, 4
        %v2441 = vshll.u32 %v2324, 16
        %v2443 = vrot.slane %v2441, 5
        %v2444 = vsel %vm2372, %v2439, %v2443
        %v2446 = vshrl.u32 %v2325, 16
        %v2448 = vrot.slane %v2446, 4
        %v2449 = vshll.u32 %v2325, 16
        %v2451 = vrot.slane %v2449, 5
        %v2452 = vor.u32 %v2448, %v2451
        %v2453 = vrot.slane %v2452, 4
        %v2455 = vshll.u32 %v2326, 16
        %v2457 = vrot.slane %v2455, 5
        %v2458 = vsel %vm2372, %v2453, %v2457
        %v2459 = vshrl.u32 %v2326, 16
        %v2461 = vrot.slane %v2459, 4
        %v2462 = vor.u32 %v2461, %v2457
        %v2463 = vrot.slane %v2462, 4
        %v2465 = vshll.u32 %v2327, 16
        %v2467 = vrot.slane %v2465, 5
        %v2468 = vsel %vm2372, %v2463, %v2467
        %v2470 = vshrl.u32 %v2328, 16
        %v2472 = vrot.slane %v2470, 4
        %v2473 = vshll.u32 %v2328, 16
        %v2475 = vrot.slane %v2473, 5
        %v2476 = vor.u32 %v2472, %v2475
        %v2477 = vrot.slane %v2476, 4
        %v2479 = vshll.u32 %v2329, 16
        %v2481 = vrot.slane %v2479, 5
        %v2482 = vsel %vm2372, %v2477, %v2481
        %v2483 = vshrl.u32 %v2329, 16
        %v2485 = vrot.slane %v2483, 4
        %v2486 = vor.u32 %v2485, %v2481
        %v2487 = vrot.slane %v2486, 4
        %v2489 = vshll.u32 %v2330, 16
        %v2491 = vrot.slane %v2489, 5
        %v2492 = vsel %vm2372, %v2487, %v2491
        %v2494 = vshrl.u32 %v2331, 16
        %v2496 = vrot.slane %v2494, 4
        %v2497 = vshll.u32 %v2331, 16
        %v2499 = vrot.slane %v2497, 5
        %v2500 = vor.u32 %v2496, %v2499
        %v2501 = vrot.slane %v2500, 4
        %v2503 = vshll.u32 %v2332, 16
        %v2505 = vrot.slane %v2503, 5
        %v2506 = vsel %vm2372, %v2501, %v2505
        %v2507 = vshrl.u32 %v2332, 16
        %v2509 = vrot.slane %v2507, 4
        %v2510 = vor.u32 %v2509, %v2505
        %v2511 = vrot.slane %v2510, 4
        %v2513 = vshll.u32 %v2333, 16
        %v2515 = vrot.slane %v2513, 5
        %v2516 = vsel %vm2372, %v2511, %v2515
        %v2518 = vshrl.u32 %v2334, 16
        %v2520 = vrot.slane %v2518, 4
        %v2521 = vshll.u32 %v2334, 16
        %v2523 = vrot.slane %v2521, 5
        %v2524 = vor.u32 %v2520, %v2523
        %v2525 = vrot.slane %v2524, 4
        %v2527 = vshll.u32 %v2335, 16
        %v2529 = vrot.slane %v2527, 5
        %v2530 = vsel %vm2372, %v2525, %v2529
        %v2531 = vshrl.u32 %v2335, 16
        %v2533 = vrot.slane %v2531, 4
        %v2534 = vor.u32 %v2533, %v2529
        %v2535 = vrot.slane %v2534, 4
        %v2537 = vshll.u32 %v2336, 16
        %v2539 = vrot.slane %v2537, 5
        %v2540 = vsel %vm2372, %v2535, %v2539
        %v2542 = vshrl.u32 %v2337, 16
        %v2544 = vrot.slane %v2542, 4
        %v2545 = vshll.u32 %v2337, 16
        %v2547 = vrot.slane %v2545, 5
        %v2548 = vor.u32 %v2544, %v2547
        %v2549 = vrot.slane %v2548, 4
        %v2551 = vshll.u32 %v2338, 16
        %v2553 = vrot.slane %v2551, 5
        %v2554 = vsel %vm2372, %v2549, %v2553
        %v2555 = vshrl.u32 %v2338, 16
        %v2557 = vrot.slane %v2555, 4
        %v2558 = vor.u32 %v2557, %v2553
        %v2559 = vrot.slane %v2558, 4
        %v2561 = vshll.u32 %v2339, 16
        %v2563 = vrot.slane %v2561, 5
        %v2564 = vsel %vm2372, %v2559, %v2563
        %v2566 = vshrl.u32 %v2340, 16
        %v2568 = vrot.slane %v2566, 4
        %v2569 = vshll.u32 %v2340, 16
        %v2571 = vrot.slane %v2569, 5
        %v2572 = vor.u32 %v2568, %v2571
        %v2573 = vrot.slane %v2572, 4
        %v2575 = vshll.u32 %v2341, 16
        %v2577 = vrot.slane %v2575, 5
        %v2578 = vsel %vm2372, %v2573, %v2577
        %v2579 = vshrl.u32 %v2341, 16
        %v2581 = vrot.slane %v2579, 4
        %v2582 = vor.u32 %v2581, %v2577
        %v2583 = vrot.slane %v2582, 4
        %v2585 = vshll.u32 %v2342, 16
        %v2587 = vrot.slane %v2585, 5
        %v2588 = vsel %vm2372, %v2583, %v2587
        %v2590 = vshrl.u32 %v2343, 16
        %v2592 = vrot.slane %v2590, 4
        %v2593 = vshll.u32 %v2343, 16
        %v2595 = vrot.slane %v2593, 5
        %v2596 = vor.u32 %v2592, %v2595
        %v2597 = vrot.slane %v2596, 4
        %v2599 = vshll.u32 %v2344, 16
        %v2601 = vrot.slane %v2599, 5
        %v2602 = vsel %vm2372, %v2597, %v2601
        %v2603 = vshrl.u32 %v2344, 16
        %v2605 = vrot.slane %v2603, 4
        %v2606 = vor.u32 %v2605, %v2601
        %v2607 = vrot.slane %v2606, 4
        %v2609 = vshll.u32 %v2345, 16
        %v2611 = vrot.slane %v2609, 5
        %v2612 = vsel %vm2372, %v2607, %v2611
        %v2614 = vshrl.u32 %v2346, 16
        %v2616 = vrot.slane %v2614, 4
        %v2617 = vshll.u32 %v2346, 16
        %v2619 = vrot.slane %v2617, 5
        %v2620 = vor.u32 %v2616, %v2619
        %v2621 = vrot.slane %v2620, 4
        %v2623 = vshll.u32 %v2347, 16
        %v2625 = vrot.slane %v2623, 5
        %v2626 = vsel %vm2372, %v2621, %v2625
        %v2627 = vshrl.u32 %v2347, 16
        %v2629 = vrot.slane %v2627, 4
        %v2630 = vor.u32 %v2629, %v2625
        %v2631 = vrot.slane %v2630, 4
        %v2633 = vshll.u32 %v2348, 16
        %v2635 = vrot.slane %v2633, 5
        %v2636 = vsel %vm2372, %v2631, %v2635
        %v2638 = vshrl.u32 %v2349, 16
        %v2640 = vrot.slane %v2638, 4
        %v2641 = vshll.u32 %v2349, 16
        %v2643 = vrot.slane %v2641, 5
        %v2644 = vor.u32 %v2640, %v2643
        %v2645 = vrot.slane %v2644, 4
        %v2647 = vshll.u32 %v2350, 16
        %v2649 = vrot.slane %v2647, 5
        %v2650 = vsel %vm2372, %v2645, %v2649
        %v2651 = vshrl.u32 %v2350, 16
        %v2653 = vrot.slane %v2651, 4
        %v2654 = vor.u32 %v2653, %v2649
        %v2655 = vrot.slane %v2654, 4
        %v2657 = vshll.u32 %v2351, 16
        %v2659 = vrot.slane %v2657, 5
        %v2660 = vsel %vm2372, %v2655, %v2659
        %v2662 = vshrl.u32 %v2352, 16
        %v2664 = vrot.slane %v2662, 4
        %v2665 = vshll.u32 %v2352, 16
        %v2667 = vrot.slane %v2665, 5
        %v2668 = vor.u32 %v2664, %v2667
        %v2669 = vrot.slane %v2668, 4
        %v2671 = vshll.u32 %v2353, 16
        %v2673 = vrot.slane %v2671, 5
        %v2674 = vsel %vm2372, %v2669, %v2673
        %v2675 = vshrl.u32 %v2353, 16
        %v2677 = vrot.slane %v2675, 4
        %v2678 = vor.u32 %v2677, %v2673
        %v2679 = vrot.slane %v2678, 4
        %v2681 = vshll.u32 %v2354, 16
        %v2683 = vrot.slane %v2681, 5
        %v2684 = vsel %vm2372, %v2679, %v2683
        %v2686 = vshrl.u32 %v2355, 16
        %v2688 = vrot.slane %v2686, 4
        %v2689 = vshll.u32 %v2355, 16
        %v2691 = vrot.slane %v2689, 5
        %v2692 = vor.u32 %v2688, %v2691
        %v2693 = vrot.slane %v2692, 4
        %v2695 = vshll.u32 %v2356, 16
        %v2697 = vrot.slane %v2695, 5
        %v2698 = vsel %vm2372, %v2693, %v2697
        %v2699 = vshrl.u32 %v2356, 16
        %v2701 = vrot.slane %v2699, 4
        %v2702 = vor.u32 %v2701, %v2697
        %v2703 = vrot.slane %v2702, 4
        %v2705 = vshll.u32 %v2357, 16
        %v2707 = vrot.slane %v2705, 5
        %v2708 = vsel %vm2372, %v2703, %v2707
        %v2710 = vshrl.u32 %v2358, 16
        %v2712 = vrot.slane %v2710, 4
        %v2713 = vshll.u32 %v2358, 16
        %v2715 = vrot.slane %v2713, 5
        %v2716 = vor.u32 %v2712, %v2715
        %v2717 = vrot.slane %v2716, 4
        %v2719 = vshll.u32 %v2359, 16
        %v2721 = vrot.slane %v2719, 5
        %v2722 = vsel %vm2372, %v2717, %v2721
        %v2723 = vshrl.u32 %v2359, 16
        %v2725 = vrot.slane %v2723, 4
        %v2726 = vor.u32 %v2725, %v2721
        %v2727 = vrot.slane %v2726, 4
        %v2729 = vshll.u32 %v2360, 16
        %v2731 = vrot.slane %v2729, 5
        %v2732 = vsel %vm2372, %v2727, %v2731
        %v2734 = vshrl.u32 %v2361, 16
        %v2736 = vrot.slane %v2734, 4
        %v2737 = vshll.u32 %v2361, 16
        %v2739 = vrot.slane %v2737, 5
        %v2740 = vor.u32 %v2736, %v2739
        %v2741 = vrot.slane %v2740, 4
        %v2743 = vshll.u32 %v2362, 16
        %v2745 = vrot.slane %v2743, 5
        %v2746 = vsel %vm2372, %v2741, %v2745
        %v2747 = vshrl.u32 %v2362, 16
        %v2749 = vrot.slane %v2747, 4
        %v2750 = vor.u32 %v2749, %v2745
        %v2751 = vrot.slane %v2750, 4
        %v2753 = vshll.u32 %v2363, 16
        %v2755 = vrot.slane %v2753, 5
        %v2756 = vsel %vm2372, %v2751, %v2755
        %v2758 = vshrl.u32 %v2364, 16
        %v2760 = vrot.slane %v2758, 4
        %v2761 = vshll.u32 %v2364, 16
        %v2763 = vrot.slane %v2761, 5
        %v2764 = vor.u32 %v2760, %v2763
        %v2765 = vrot.slane %v2764, 4
        %v2767 = vshll.u32 %v2365, 16
        %v2769 = vrot.slane %v2767, 5
        %v2770 = vsel %vm2372, %v2765, %v2769
        %v2771 = vshrl.u32 %v2365, 16
        %v2773 = vrot.slane %v2771, 4
        %v2774 = vor.u32 %v2773, %v2769
        %v2775 = vrot.slane %v2774, 4
        %v2777 = vshll.u32 %v2366, 16
        %v2779 = vrot.slane %v2777, 5
        %v2780 = vsel %vm2372, %v2775, %v2779
        %v2782 = vshrl.u32 %v2367, 16
        %v2784 = vrot.slane %v2782, 4
        %v2785 = vshll.u32 %v2367, 16
        %v2787 = vrot.slane %v2785, 5
        %v2788 = vor.u32 %v2784, %v2787
        %v2789 = vrot.slane %v2788, 4
        %v2791 = vshll.u32 %v2368, 16
        %v2793 = vrot.slane %v2791, 5
        %v2794 = vsel %vm2372, %v2789, %v2793
        %v2795 = vshrl.u32 %v2368, 16
        %v2797 = vrot.slane %v2795, 4
        %v2798 = vor.u32 %v2797, %v2793
        %v2799 = vrot.slane %v2798, 4
        %v2801 = vshll.u32 %v2369, 16
        %v2803 = vrot.slane %v2801, 5
        %v2804 = vsel %vm2372, %v2799, %v2803
        %s2805 = scalar_lea.vmem [#allocation5], 64
        %v2806 = vld [vmem:[%s2805] sm:$0xf]
        %v2807 = vld [vmem:[%s2805 + $0x4] sm:$0xf]
        %v2808 = vld [vmem:[%s2805 + $0x8] sm:$0xf]
        %v2809 = vld [vmem:[%s2805 + $0xc] sm:$0xf]
        %v2810 = vld [vmem:[%s2805 + $0x10] sm:$0xf]
        %v2811 = vld [vmem:[%s2805 + $0x14] sm:$0xf]
        %v2812 = vld [vmem:[%s2805 + $0x18] sm:$0xf]
        %v2813 = vld [vmem:[%s2805 + $0x1c] sm:$0xf]
        %s2814 = scalar_lea.vmem [#allocation5], 160
        %v2815 = vld [vmem:[%s2814] sm:$0xf]
        %v2816 = vld [vmem:[%s2814 + $0x4] sm:$0xf]
        %v2817 = vld [vmem:[%s2814 + $0x8] sm:$0xf]
        %v2818 = vld [vmem:[%s2814 + $0xc] sm:$0xf]
        %v2819 = vld [vmem:[%s2814 + $0x10] sm:$0xf]
        %v2820 = vld [vmem:[%s2814 + $0x14] sm:$0xf]
        %v2821 = vld [vmem:[%s2814 + $0x18] sm:$0xf]
        %v2822 = vld [vmem:[%s2814 + $0x1c] sm:$0xf]
        %v2823 = vunpack.c.l.b16 %v2410
        %v2824 = vunpack.c.l.b16 %v2420
        %v2825 = vunpack.c.l.b16 %v2434
        %v2826 = vunpack.c.l.b16 %v2444
        %v2827 = vunpack.c.l.b16 %v2458
        %v2828 = vunpack.c.l.b16 %v2468
        %v2829 = vunpack.c.l.b16 %v2482
        %v2830 = vunpack.c.l.b16 %v2492
        %v2831 = vunpack.c.l.b16 %v2506
        %v2832 = vunpack.c.l.b16 %v2516
        %v2833 = vunpack.c.l.b16 %v2530
        %v2834 = vunpack.c.l.b16 %v2540
        %v2835 = vunpack.c.l.b16 %v2554
        %v2836 = vunpack.c.l.b16 %v2564
        %v2837 = vunpack.c.l.b16 %v2578
        %v2838 = vunpack.c.l.b16 %v2588
        %v2839 = vunpack.c.l.b16 %v2602
        %v2840 = vunpack.c.l.b16 %v2612
        %v2841 = vunpack.c.l.b16 %v2626
        %v2842 = vunpack.c.l.b16 %v2636
        %v2843 = vunpack.c.l.b16 %v2650
        %v2844 = vunpack.c.l.b16 %v2660
        %v2845 = vunpack.c.l.b16 %v2674
        %v2846 = vunpack.c.l.b16 %v2684
        %v2847 = vunpack.c.l.b16 %v2698
        %v2848 = vunpack.c.l.b16 %v2708
        %v2849 = vunpack.c.l.b16 %v2722
        %v2850 = vunpack.c.l.b16 %v2732
        %v2851 = vunpack.c.l.b16 %v2746
        %v2852 = vunpack.c.l.b16 %v2756
        %v2853 = vunpack.c.l.b16 %v2770
        %v2854 = vunpack.c.l.b16 %v2780
        %v2855 = vpack.c.b16 %v2824, %v2823
        %v2856 = vpack.c.b16 %v2826, %v2825
        %v2857 = vpack.c.b16 %v2828, %v2827
        %v2858 = vpack.c.b16 %v2830, %v2829
        %v2859 = vpack.c.b16 %v2832, %v2831
        %v2860 = vpack.c.b16 %v2834, %v2833
        %v2861 = vpack.c.b16 %v2836, %v2835
        %v2862 = vpack.c.b16 %v2838, %v2837
        %v2863 = vpack.c.b16 %v2840, %v2839
        %v2864 = vpack.c.b16 %v2842, %v2841
        %v2865 = vpack.c.b16 %v2844, %v2843
        %v2866 = vpack.c.b16 %v2846, %v2845
        %v2867 = vpack.c.b16 %v2848, %v2847
        %v2868 = vpack.c.b16 %v2850, %v2849
        %v2869 = vpack.c.b16 %v2852, %v2851
        %v2870 = vpack.c.b16 %v2854, %v2853
        %v2879 = vunpack.c.l.b16 %v2815
        %v2880 = vunpack.c.l.b16 %v2816
        %v2881 = vunpack.c.l.b16 %v2817
        %v2882 = vunpack.c.l.b16 %v2818
        %v2883 = vunpack.c.l.b16 %v2819
        %v2884 = vunpack.c.l.b16 %v2820
        %v2885 = vunpack.c.l.b16 %v2821
        %v2886 = vunpack.c.l.b16 %v2822
        %v2887 = vpack.c.b16 %v2880, %v2879
        %v2888 = vpack.c.b16 %v2882, %v2881
        %v2889 = vpack.c.b16 %v2884, %v2883
        %v2890 = vpack.c.b16 %v2886, %v2885
        %v2896 = vsel %vm1325, %v2855, 0
        %v2899 = vsel %vm1325, %v2856, 0
        %v2902 = vsel %vm1325, %v2857, 0
        %v2905 = vsel %vm1325, %v2858, 0
        %v2908 = vsel %vm1325, %v2859, 0
        %v2911 = vsel %vm1325, %v2860, 0
        %v2914 = vsel %vm1325, %v2861, 0
        %v2917 = vsel %vm1325, %v2862, 0
        %v2920 = vsel %vm1325, %v2863, 0
        %v2923 = vsel %vm1325, %v2864, 0
        %v2926 = vsel %vm1325, %v2865, 0
        %v2929 = vsel %vm1325, %v2866, 0
        %v2932 = vsel %vm1325, %v2867, 0
        %v2935 = vsel %vm1325, %v2868, 0
        %v2938 = vsel %vm1325, %v2869, 0
        %v2941 = vsel %vm1325, %v2870, 0
        %2943 = vmatpush.bf16.msra.mxu0 0
        %2944 = vmatpush.bf16.msra.mxu0 0
        %2945 = vmatpush.bf16.msra.mxu0 0
        %2946 = vmatpush.bf16.msra.mxu0 0
        %2947 = vmatpush.bf16.msra.mxu0 %v2890
        %2948 = vmatpush.bf16.msra.mxu0 %v2889
        %2949 = vmatpush.bf16.msra.mxu0 %v2888
        %2950 = vmatpush.bf16.msra.mxu0 %v2887
        %2951 = vmatmul.bf16.gmra.mxu0 %v2896
        %v2952 = vpop.f32.mrf.mxu0
        %v2953 = vadd.f32 0.0, %v2952
        %v2954 = vpop.f32.mrf.mxu0
        %v2955 = vadd.f32 0.0, %v2954
        %2956 = vmatmul.bf16.gmra.mxu0 %v2899
        %v2957 = vpop.f32.mrf.mxu0
        %v2958 = vadd.f32 0.0, %v2957
        %v2959 = vpop.f32.mrf.mxu0
        %v2960 = vadd.f32 0.0, %v2959
        %2961 = vmatmul.bf16.gmra.mxu0 %v2902
        %v2962 = vpop.f32.mrf.mxu0
        %v2963 = vadd.f32 0.0, %v2962
        %v2964 = vpop.f32.mrf.mxu0
        %v2965 = vadd.f32 0.0, %v2964
        %2966 = vmatmul.bf16.gmra.mxu0 %v2905
        %v2967 = vpop.f32.mrf.mxu0
        %v2968 = vadd.f32 0.0, %v2967
        %v2969 = vpop.f32.mrf.mxu0
        %v2970 = vadd.f32 0.0, %v2969
        %2971 = vmatmul.bf16.gmra.mxu0 %v2908
        %v2972 = vpop.f32.mrf.mxu0
        %v2973 = vadd.f32 0.0, %v2972
        %v2974 = vpop.f32.mrf.mxu0
        %v2975 = vadd.f32 0.0, %v2974
        %2976 = vmatmul.bf16.gmra.mxu0 %v2911
        %v2977 = vpop.f32.mrf.mxu0
        %v2978 = vadd.f32 0.0, %v2977
        %v2979 = vpop.f32.mrf.mxu0
        %v2980 = vadd.f32 0.0, %v2979
        %2981 = vmatmul.bf16.gmra.mxu0 %v2914
        %v2982 = vpop.f32.mrf.mxu0
        %v2983 = vadd.f32 0.0, %v2982
        %v2984 = vpop.f32.mrf.mxu0
        %v2985 = vadd.f32 0.0, %v2984
        %2986 = vmatmul.bf16.gmra.mxu0 %v2917
        %v2987 = vpop.f32.mrf.mxu0
        %v2988 = vadd.f32 0.0, %v2987
        %v2989 = vpop.f32.mrf.mxu0
        %v2990 = vadd.f32 0.0, %v2989
        %2991 = vmatmul.bf16.gmra.mxu0 %v2920
        %v2992 = vpop.f32.mrf.mxu0
        %v2993 = vadd.f32 0.0, %v2992
        %v2994 = vpop.f32.mrf.mxu0
        %v2995 = vadd.f32 0.0, %v2994
        %2996 = vmatmul.bf16.gmra.mxu0 %v2923
        %v2997 = vpop.f32.mrf.mxu0
        %v2998 = vadd.f32 0.0, %v2997
        %v2999 = vpop.f32.mrf.mxu0
        %v3000 = vadd.f32 0.0, %v2999
        %3001 = vmatmul.bf16.gmra.mxu0 %v2926
        %v3002 = vpop.f32.mrf.mxu0
        %v3003 = vadd.f32 0.0, %v3002
        %v3004 = vpop.f32.mrf.mxu0
        %v3005 = vadd.f32 0.0, %v3004
        %3006 = vmatmul.bf16.gmra.mxu0 %v2929
        %v3007 = vpop.f32.mrf.mxu0
        %v3008 = vadd.f32 0.0, %v3007
        %v3009 = vpop.f32.mrf.mxu0
        %v3010 = vadd.f32 0.0, %v3009
        %3011 = vmatmul.bf16.gmra.mxu0 %v2932
        %v3012 = vpop.f32.mrf.mxu0
        %v3013 = vadd.f32 0.0, %v3012
        %v3014 = vpop.f32.mrf.mxu0
        %v3015 = vadd.f32 0.0, %v3014
        %3016 = vmatmul.bf16.gmra.mxu0 %v2935
        %v3017 = vpop.f32.mrf.mxu0
        %v3018 = vadd.f32 0.0, %v3017
        %v3019 = vpop.f32.mrf.mxu0
        %v3020 = vadd.f32 0.0, %v3019
        %3021 = vmatmul.bf16.gmra.mxu0 %v2938
        %v3022 = vpop.f32.mrf.mxu0
        %v3023 = vadd.f32 0.0, %v3022
        %v3024 = vpop.f32.mrf.mxu0
        %v3025 = vadd.f32 0.0, %v3024
        %3026 = vmatmul.bf16.gmra.mxu0 %v2941
        %v3027 = vpop.f32.mrf.mxu0
        %v3028 = vadd.f32 0.0, %v3027
        %v3029 = vpop.f32.mrf.mxu0
        %v3030 = vadd.f32 0.0, %v3029
        %3031 = vdwg.mxu0
        %v3032 = vunpack.c.l.b16 %v2386
        %v3033 = vunpack.c.l.b16 %v2396
        %v3034 = vpack.c.b16 %v3033, %v3032
        %v3043 = vunpack.c.l.b16 %v2806
        %v3044 = vunpack.c.l.b16 %v2807
        %v3045 = vunpack.c.l.b16 %v2808
        %v3046 = vunpack.c.l.b16 %v2809
        %v3047 = vunpack.c.l.b16 %v2810
        %v3048 = vunpack.c.l.b16 %v2811
        %v3049 = vunpack.c.l.b16 %v2812
        %v3050 = vunpack.c.l.b16 %v2813
        %v3051 = vpack.c.b16 %v3044, %v3043
        %v3052 = vpack.c.b16 %v3046, %v3045
        %v3053 = vpack.c.b16 %v3048, %v3047
        %v3054 = vpack.c.b16 %v3050, %v3049
        %v3060 = vsel %vm1325, %v3034, 0
        %3062 = vmatpush.bf16.msra.mxu0 0
        %3063 = vmatpush.bf16.msra.mxu0 0
        %3064 = vmatpush.bf16.msra.mxu0 0
        %3065 = vmatpush.bf16.msra.mxu0 0
        %3066 = vmatpush.bf16.msra.mxu0 %v3054
        %3067 = vmatpush.bf16.msra.mxu0 %v3053
        %3068 = vmatpush.bf16.msra.mxu0 %v3052
        %3069 = vmatpush.bf16.msra.mxu0 %v3051
        %3070 = vmatmul.bf16.gmra.mxu0 %v3060
        %v3071 = vpop.f32.mrf.mxu0
        %v3072 = vadd.f32 %v2953, %v3071
        %v3073 = vpop.f32.mrf.mxu0
        %v3074 = vadd.f32 %v2955, %v3073
        %3075 = vmatmul.bf16.gmra.mxu0 %v2896
        %v3076 = vpop.f32.mrf.mxu0
        %v3077 = vadd.f32 %v2958, %v3076
        %v3078 = vpop.f32.mrf.mxu0
        %v3079 = vadd.f32 %v2960, %v3078
        %3080 = vmatmul.bf16.gmra.mxu0 %v2899
        %v3081 = vpop.f32.mrf.mxu0
        %v3082 = vadd.f32 %v2963, %v3081
        %v3083 = vpop.f32.mrf.mxu0
        %v3084 = vadd.f32 %v2965, %v3083
        %3085 = vmatmul.bf16.gmra.mxu0 %v2902
        %v3086 = vpop.f32.mrf.mxu0
        %v3087 = vadd.f32 %v2968, %v3086
        %v3088 = vpop.f32.mrf.mxu0
        %v3089 = vadd.f32 %v2970, %v3088
        %3090 = vmatmul.bf16.gmra.mxu0 %v2905
        %v3091 = vpop.f32.mrf.mxu0
        %v3092 = vadd.f32 %v2973, %v3091
        %v3093 = vpop.f32.mrf.mxu0
        %v3094 = vadd.f32 %v2975, %v3093
        %3095 = vmatmul.bf16.gmra.mxu0 %v2908
        %v3096 = vpop.f32.mrf.mxu0
        %v3097 = vadd.f32 %v2978, %v3096
        %v3098 = vpop.f32.mrf.mxu0
        %v3099 = vadd.f32 %v2980, %v3098
        %3100 = vmatmul.bf16.gmra.mxu0 %v2911
        %v3101 = vpop.f32.mrf.mxu0
        %v3102 = vadd.f32 %v2983, %v3101
        %v3103 = vpop.f32.mrf.mxu0
        %v3104 = vadd.f32 %v2985, %v3103
        %3105 = vmatmul.bf16.gmra.mxu0 %v2914
        %v3106 = vpop.f32.mrf.mxu0
        %v3107 = vadd.f32 %v2988, %v3106
        %v3108 = vpop.f32.mrf.mxu0
        %v3109 = vadd.f32 %v2990, %v3108
        %3110 = vmatmul.bf16.gmra.mxu0 %v2917
        %v3111 = vpop.f32.mrf.mxu0
        %v3112 = vadd.f32 %v2993, %v3111
        %v3113 = vpop.f32.mrf.mxu0
        %v3114 = vadd.f32 %v2995, %v3113
        %3115 = vmatmul.bf16.gmra.mxu0 %v2920
        %v3116 = vpop.f32.mrf.mxu0
        %v3117 = vadd.f32 %v2998, %v3116
        %v3118 = vpop.f32.mrf.mxu0
        %v3119 = vadd.f32 %v3000, %v3118
        %3120 = vmatmul.bf16.gmra.mxu0 %v2923
        %v3121 = vpop.f32.mrf.mxu0
        %v3122 = vadd.f32 %v3003, %v3121
        %v3123 = vpop.f32.mrf.mxu0
        %v3124 = vadd.f32 %v3005, %v3123
        %3125 = vmatmul.bf16.gmra.mxu0 %v2926
        %v3126 = vpop.f32.mrf.mxu0
        %v3127 = vadd.f32 %v3008, %v3126
        %v3128 = vpop.f32.mrf.mxu0
        %v3129 = vadd.f32 %v3010, %v3128
        %3130 = vmatmul.bf16.gmra.mxu0 %v2929
        %v3131 = vpop.f32.mrf.mxu0
        %v3132 = vadd.f32 %v3013, %v3131
        %v3133 = vpop.f32.mrf.mxu0
        %v3134 = vadd.f32 %v3015, %v3133
        %3135 = vmatmul.bf16.gmra.mxu0 %v2932
        %v3136 = vpop.f32.mrf.mxu0
        %v3137 = vadd.f32 %v3018, %v3136
        %v3138 = vpop.f32.mrf.mxu0
        %v3139 = vadd.f32 %v3020, %v3138
        %3140 = vmatmul.bf16.gmra.mxu0 %v2935
        %v3141 = vpop.f32.mrf.mxu0
        %v3142 = vadd.f32 %v3023, %v3141
        %v3143 = vpop.f32.mrf.mxu0
        %v3144 = vadd.f32 %v3025, %v3143
        %3145 = vmatmul.bf16.gmra.mxu0 %v2938
        %v3146 = vpop.f32.mrf.mxu0
        %v3147 = vadd.f32 %v3028, %v3146
        %v3148 = vpop.f32.mrf.mxu0
        %v3149 = vadd.f32 %v3030, %v3148
        %3150 = vdwg.mxu0
        %s3151 = scalar_lea.vmem [#allocation5], 256
        %v3152 = vld [vmem:[%s3151] sm:$0xf]
        %v3153 = vld [vmem:[%s3151 + $0x4] sm:$0xf]
        %v3154 = vld [vmem:[%s3151 + $0x8] sm:$0xf]
        %v3155 = vld [vmem:[%s3151 + $0xc] sm:$0xf]
        %v3156 = vld [vmem:[%s3151 + $0x10] sm:$0xf]
        %v3157 = vld [vmem:[%s3151 + $0x14] sm:$0xf]
        %v3158 = vld [vmem:[%s3151 + $0x18] sm:$0xf]
        %v3159 = vld [vmem:[%s3151 + $0x1c] sm:$0xf]
        %v3160 = vunpack.c.l.b16 %v2794
        %v3161 = vunpack.c.l.b16 %v2804
        %v3162 = vpack.c.b16 %v3161, %v3160
        %v3171 = vunpack.c.l.b16 %v3152
        %v3172 = vunpack.c.l.b16 %v3153
        %v3173 = vunpack.c.l.b16 %v3154
        %v3174 = vunpack.c.l.b16 %v3155
        %v3175 = vunpack.c.l.b16 %v3156
        %v3176 = vunpack.c.l.b16 %v3157
        %v3177 = vunpack.c.l.b16 %v3158
        %v3178 = vunpack.c.l.b16 %v3159
        %v3179 = vpack.c.b16 %v3172, %v3171
        %v3180 = vpack.c.b16 %v3174, %v3173
        %v3181 = vpack.c.b16 %v3176, %v3175
        %v3182 = vpack.c.b16 %v3178, %v3177
        %v3188 = vsel %vm1325, %v3162, 0
        %3190 = vmatpush.bf16.msra.mxu0 0
        %3191 = vmatpush.bf16.msra.mxu0 0
        %3192 = vmatpush.bf16.msra.mxu0 0
        %3193 = vmatpush.bf16.msra.mxu0 0
        %3194 = vmatpush.bf16.msra.mxu0 %v3182
        %3195 = vmatpush.bf16.msra.mxu0 %v3181
        %3196 = vmatpush.bf16.msra.mxu0 %v3180
        %3197 = vmatpush.bf16.msra.mxu0 %v3179
        %3198 = vmatmul.bf16.gmra.mxu0 %v2899
        %v3199 = vpop.f32.mrf.mxu0
        %v3200 = vadd.f32 0.0, %v3199
        %v3201 = vpop.f32.mrf.mxu0
        %v3202 = vadd.f32 0.0, %v3201
        %3203 = vmatmul.bf16.gmra.mxu0 %v2902
        %v3204 = vpop.f32.mrf.mxu0
        %v3205 = vadd.f32 0.0, %v3204
        %v3206 = vpop.f32.mrf.mxu0
        %v3207 = vadd.f32 0.0, %v3206
        %3208 = vmatmul.bf16.gmra.mxu0 %v2905
        %v3209 = vpop.f32.mrf.mxu0
        %v3210 = vadd.f32 0.0, %v3209
        %v3211 = vpop.f32.mrf.mxu0
        %v3212 = vadd.f32 0.0, %v3211
        %3213 = vmatmul.bf16.gmra.mxu0 %v2908
        %v3214 = vpop.f32.mrf.mxu0
        %v3215 = vadd.f32 0.0, %v3214
        %v3216 = vpop.f32.mrf.mxu0
        %v3217 = vadd.f32 0.0, %v3216
        %3218 = vmatmul.bf16.gmra.mxu0 %v2911
        %v3219 = vpop.f32.mrf.mxu0
        %v3220 = vadd.f32 0.0, %v3219
        %v3221 = vpop.f32.mrf.mxu0
        %v3222 = vadd.f32 0.0, %v3221
        %3223 = vmatmul.bf16.gmra.mxu0 %v2914
        %v3224 = vpop.f32.mrf.mxu0
        %v3225 = vadd.f32 0.0, %v3224
        %v3226 = vpop.f32.mrf.mxu0
        %v3227 = vadd.f32 0.0, %v3226
        %3228 = vmatmul.bf16.gmra.mxu0 %v2917
        %v3229 = vpop.f32.mrf.mxu0
        %v3230 = vadd.f32 0.0, %v3229
        %v3231 = vpop.f32.mrf.mxu0
        %v3232 = vadd.f32 0.0, %v3231
        %3233 = vmatmul.bf16.gmra.mxu0 %v2920
        %v3234 = vpop.f32.mrf.mxu0
        %v3235 = vadd.f32 0.0, %v3234
        %v3236 = vpop.f32.mrf.mxu0
        %v3237 = vadd.f32 0.0, %v3236
        %3238 = vmatmul.bf16.gmra.mxu0 %v2923
        %v3239 = vpop.f32.mrf.mxu0
        %v3240 = vadd.f32 0.0, %v3239
        %v3241 = vpop.f32.mrf.mxu0
        %v3242 = vadd.f32 0.0, %v3241
        %3243 = vmatmul.bf16.gmra.mxu0 %v2926
        %v3244 = vpop.f32.mrf.mxu0
        %v3245 = vadd.f32 0.0, %v3244
        %v3246 = vpop.f32.mrf.mxu0
        %v3247 = vadd.f32 0.0, %v3246
        %3248 = vmatmul.bf16.gmra.mxu0 %v2929
        %v3249 = vpop.f32.mrf.mxu0
        %v3250 = vadd.f32 0.0, %v3249
        %v3251 = vpop.f32.mrf.mxu0
        %v3252 = vadd.f32 0.0, %v3251
        %3253 = vmatmul.bf16.gmra.mxu0 %v2932
        %v3254 = vpop.f32.mrf.mxu0
        %v3255 = vadd.f32 0.0, %v3254
        %v3256 = vpop.f32.mrf.mxu0
        %v3257 = vadd.f32 0.0, %v3256
        %3258 = vmatmul.bf16.gmra.mxu0 %v2935
        %v3259 = vpop.f32.mrf.mxu0
        %v3260 = vadd.f32 0.0, %v3259
        %v3261 = vpop.f32.mrf.mxu0
        %v3262 = vadd.f32 0.0, %v3261
        %3263 = vmatmul.bf16.gmra.mxu0 %v2938
        %v3264 = vpop.f32.mrf.mxu0
        %v3265 = vadd.f32 0.0, %v3264
        %v3266 = vpop.f32.mrf.mxu0
        %v3267 = vadd.f32 0.0, %v3266
        %3268 = vmatmul.bf16.gmra.mxu0 %v2941
        %v3269 = vpop.f32.mrf.mxu0
        %v3270 = vadd.f32 0.0, %v3269
        %v3271 = vpop.f32.mrf.mxu0
        %v3272 = vadd.f32 0.0, %v3271
        %3273 = vmatmul.bf16.gmra.mxu0 %v3188
        %v3274 = vpop.f32.mrf.mxu0
        %v3275 = vadd.f32 0.0, %v3274
        %v3276 = vpop.f32.mrf.mxu0
        %v3277 = vadd.f32 0.0, %v3276
        %3278 = vdwg.mxu0
        %v3279 = vadd.f32 %v3072, %v3200
        %v3280 = vadd.f32 %v3074, %v3202
        %v3281 = vadd.f32 %v3077, %v3205
        %v3282 = vadd.f32 %v3079, %v3207
        %v3283 = vadd.f32 %v3082, %v3210
        %v3284 = vadd.f32 %v3084, %v3212
        %v3285 = vadd.f32 %v3087, %v3215
        %v3286 = vadd.f32 %v3089, %v3217
        %v3287 = vadd.f32 %v3092, %v3220
        %v3288 = vadd.f32 %v3094, %v3222
        %v3289 = vadd.f32 %v3097, %v3225
        %v3290 = vadd.f32 %v3099, %v3227
        %v3291 = vadd.f32 %v3102, %v3230
        %v3292 = vadd.f32 %v3104, %v3232
        %v3293 = vadd.f32 %v3107, %v3235
        %v3294 = vadd.f32 %v3109, %v3237
        %v3295 = vadd.f32 %v3112, %v3240
        %v3296 = vadd.f32 %v3114, %v3242
        %v3297 = vadd.f32 %v3117, %v3245
        %v3298 = vadd.f32 %v3119, %v3247
        %v3299 = vadd.f32 %v3122, %v3250
        %v3300 = vadd.f32 %v3124, %v3252
        %v3301 = vadd.f32 %v3127, %v3255
        %v3302 = vadd.f32 %v3129, %v3257
        %v3303 = vadd.f32 %v3132, %v3260
        %v3304 = vadd.f32 %v3134, %v3262
        %v3305 = vadd.f32 %v3137, %v3265
        %v3306 = vadd.f32 %v3139, %v3267
        %v3307 = vadd.f32 %v3142, %v3270
        %v3308 = vadd.f32 %v3144, %v3272
        %v3309 = vadd.f32 %v3147, %v3275
        %v3310 = vadd.f32 %v3149, %v3277
        %v3311 = vadd.f32 %v2284, %v3279
        %v3312 = vadd.f32 %v2285, %v3280
        %v3313 = vadd.f32 %v2286, %v3281
        %v3314 = vadd.f32 %v2287, %v3282
        %v3315 = vadd.f32 %v2288, %v3283
        %v3316 = vadd.f32 %v2289, %v3284
        %v3317 = vadd.f32 %v2290, %v3285
        %v3318 = vadd.f32 %v2291, %v3286
        %v3319 = vadd.f32 %v2292, %v3287
        %v3320 = vadd.f32 %v2293, %v3288
        %v3321 = vadd.f32 %v2294, %v3289
        %v3322 = vadd.f32 %v2295, %v3290
        %v3323 = vadd.f32 %v2296, %v3291
        %v3324 = vadd.f32 %v2297, %v3292
        %v3325 = vadd.f32 %v2298, %v3293
        %v3326 = vadd.f32 %v2299, %v3294
        %v3327 = vadd.f32 %v2300, %v3295
        %v3328 = vadd.f32 %v2301, %v3296
        %v3329 = vadd.f32 %v2302, %v3297
        %v3330 = vadd.f32 %v2303, %v3298
        %v3331 = vadd.f32 %v2304, %v3299
        %v3332 = vadd.f32 %v2305, %v3300
        %v3333 = vadd.f32 %v2306, %v3301
        %v3334 = vadd.f32 %v2307, %v3302
        %v3335 = vadd.f32 %v2308, %v3303
        %v3336 = vadd.f32 %v2309, %v3304
        %v3337 = vadd.f32 %v2310, %v3305
        %v3338 = vadd.f32 %v2311, %v3306
        %v3339 = vadd.f32 %v2312, %v3307
        %v3340 = vadd.f32 %v2313, %v3308
        %v3341 = vadd.f32 %v2314, %v3309
        %v3342 = vadd.f32 %v2315, %v3310
        %v3343 = vld [vmem:[#allocation7] sm:$0x1]
        %v3345 = vperm.slane %v3343, 0
        %v3347 = vadd.f32 %v3311, %v3345
        %v3348 = vadd.f32 %v3312, %v3345
        %v3349 = vadd.f32 %v3313, %v3345
        %v3350 = vadd.f32 %v3314, %v3345
        %v3351 = vadd.f32 %v3315, %v3345
        %v3352 = vadd.f32 %v3316, %v3345
        %v3353 = vadd.f32 %v3317, %v3345
        %v3354 = vadd.f32 %v3318, %v3345
        %v3355 = vadd.f32 %v3319, %v3345
        %v3356 = vadd.f32 %v3320, %v3345
        %v3357 = vadd.f32 %v3321, %v3345
        %v3358 = vadd.f32 %v3322, %v3345
        %v3359 = vadd.f32 %v3323, %v3345
        %v3360 = vadd.f32 %v3324, %v3345
        %v3361 = vadd.f32 %v3325, %v3345
        %v3362 = vadd.f32 %v3326, %v3345
        %v3363 = vadd.f32 %v3327, %v3345
        %v3364 = vadd.f32 %v3328, %v3345
        %v3365 = vadd.f32 %v3329, %v3345
        %v3366 = vadd.f32 %v3330, %v3345
        %v3367 = vadd.f32 %v3331, %v3345
        %v3368 = vadd.f32 %v3332, %v3345
        %v3369 = vadd.f32 %v3333, %v3345
        %v3370 = vadd.f32 %v3334, %v3345
        %v3371 = vadd.f32 %v3335, %v3345
        %v3372 = vadd.f32 %v3336, %v3345
        %v3373 = vadd.f32 %v3337, %v3345
        %v3374 = vadd.f32 %v3338, %v3345
        %v3375 = vadd.f32 %v3339, %v3345
        %v3376 = vadd.f32 %v3340, %v3345
        %v3377 = vadd.f32 %v3341, %v3345
        %v3378 = vadd.f32 %v3342, %v3345
        %v3379 = vpack.c.bf16 %v3348, %v3347
        %v3380 = vpack.c.bf16 %v3350, %v3349
        %v3381 = vpack.c.bf16 %v3352, %v3351
        %v3382 = vpack.c.bf16 %v3354, %v3353
        %v3383 = vpack.c.bf16 %v3356, %v3355
        %v3384 = vpack.c.bf16 %v3358, %v3357
        %v3385 = vpack.c.bf16 %v3360, %v3359
        %v3386 = vpack.c.bf16 %v3362, %v3361
        %v3387 = vpack.c.bf16 %v3364, %v3363
        %v3388 = vpack.c.bf16 %v3366, %v3365
        %v3389 = vpack.c.bf16 %v3368, %v3367
        %v3390 = vpack.c.bf16 %v3370, %v3369
        %v3391 = vpack.c.bf16 %v3372, %v3371
        %v3392 = vpack.c.bf16 %v3374, %v3373
        %v3393 = vpack.c.bf16 %v3376, %v3375
        %v3394 = vpack.c.bf16 %v3378, %v3377
        %v3395 = vld [vmem:[%s5] sm:$0xf]
        %v3396 = vld [vmem:[%s5 + $0x4] sm:$0xf]
        %v3397 = vld [vmem:[%s5 + $0x8] sm:$0xf]
        %v3398 = vld [vmem:[%s5 + $0xc] sm:$0xf]
        %v3399 = vld [vmem:[%s5 + $0x10] sm:$0xf]
        %v3400 = vld [vmem:[%s5 + $0x14] sm:$0xf]
        %v3401 = vld [vmem:[%s5 + $0x18] sm:$0xf]
        %v3402 = vld [vmem:[%s5 + $0x1c] sm:$0xf]
        %v3403 = vld [vmem:[#allocation8] sm:$0x1]
        %v3405 = vperm.slane %v3403, 0
        %v3415 = vunpack.c.l.b16 %v3395
        %v3416 = vunpack.c.l.b16 %v3396
        %v3417 = vunpack.c.l.b16 %v3397
        %v3418 = vunpack.c.l.b16 %v3398
        %v3419 = vunpack.c.l.b16 %v3399
        %v3420 = vunpack.c.l.b16 %v3400
        %v3421 = vunpack.c.l.b16 %v3401
        %v3422 = vunpack.c.l.b16 %v3402
        %v3423 = vpack.c.b16 %v3416, %v3415
        %v3424 = vpack.c.b16 %v3418, %v3417
        %v3425 = vpack.c.b16 %v3420, %v3419
        %v3426 = vpack.c.b16 %v3422, %v3421
        %v3432 = vsel %vm1325, %v3379, 0
        %v3435 = vsel %vm1325, %v3380, 0
        %v3438 = vsel %vm1325, %v3381, 0
        %v3441 = vsel %vm1325, %v3382, 0
        %v3444 = vsel %vm1325, %v3383, 0
        %v3447 = vsel %vm1325, %v3384, 0
        %v3450 = vsel %vm1325, %v3385, 0
        %v3453 = vsel %vm1325, %v3386, 0
        %v3456 = vsel %vm1325, %v3387, 0
        %v3459 = vsel %vm1325, %v3388, 0
        %v3462 = vsel %vm1325, %v3389, 0
        %v3465 = vsel %vm1325, %v3390, 0
        %v3468 = vsel %vm1325, %v3391, 0
        %v3471 = vsel %vm1325, %v3392, 0
        %v3474 = vsel %vm1325, %v3393, 0
        %v3477 = vsel %vm1325, %v3394, 0
        %3479 = vmatpush.bf16.msra.mxu0 0
        %3480 = vmatpush.bf16.msra.mxu0 0
        %3481 = vmatpush.bf16.msra.mxu0 0
        %3482 = vmatpush.bf16.msra.mxu0 0
        %3483 = vmatpush.bf16.msra.mxu0 %v3426
        %3484 = vmatpush.bf16.msra.mxu0 %v3425
        %3485 = vmatpush.bf16.msra.mxu0 %v3424
        %3486 = vmatpush.bf16.msra.mxu0 %v3423
        %3487 = vmatmul.bf16.gmra.mxu0 %v3432
        %v3488 = vpop.f32.mrf.mxu0
        %v3489 = vadd.f32 %v3405, %v3488
        %v3490 = vpop.f32.mrf.mxu0
        %v3491 = vadd.f32 %v3405, %v3490
        %3492 = vmatmul.bf16.gmra.mxu0 %v3435
        %v3493 = vpop.f32.mrf.mxu0
        %v3494 = vadd.f32 %v3405, %v3493
        %v3495 = vpop.f32.mrf.mxu0
        %v3496 = vadd.f32 %v3405, %v3495
        %3497 = vmatmul.bf16.gmra.mxu0 %v3438
        %v3498 = vpop.f32.mrf.mxu0
        %v3499 = vadd.f32 %v3405, %v3498
        %v3500 = vpop.f32.mrf.mxu0
        %v3501 = vadd.f32 %v3405, %v3500
        %3502 = vmatmul.bf16.gmra.mxu0 %v3441
        %v3503 = vpop.f32.mrf.mxu0
        %v3504 = vadd.f32 %v3405, %v3503
        %v3505 = vpop.f32.mrf.mxu0
        %v3506 = vadd.f32 %v3405, %v3505
        %3507 = vmatmul.bf16.gmra.mxu0 %v3444
        %v3508 = vpop.f32.mrf.mxu0
        %v3509 = vadd.f32 %v3405, %v3508
        %v3510 = vpop.f32.mrf.mxu0
        %v3511 = vadd.f32 %v3405, %v3510
        %3512 = vmatmul.bf16.gmra.mxu0 %v3447
        %v3513 = vpop.f32.mrf.mxu0
        %v3514 = vadd.f32 %v3405, %v3513
        %v3515 = vpop.f32.mrf.mxu0
        %v3516 = vadd.f32 %v3405, %v3515
        %3517 = vmatmul.bf16.gmra.mxu0 %v3450
        %v3518 = vpop.f32.mrf.mxu0
        %v3519 = vadd.f32 %v3405, %v3518
        %v3520 = vpop.f32.mrf.mxu0
        %v3521 = vadd.f32 %v3405, %v3520
        %3522 = vmatmul.bf16.gmra.mxu0 %v3453
        %v3523 = vpop.f32.mrf.mxu0
        %v3524 = vadd.f32 %v3405, %v3523
        %v3525 = vpop.f32.mrf.mxu0
        %v3526 = vadd.f32 %v3405, %v3525
        %3527 = vmatmul.bf16.gmra.mxu0 %v3456
        %v3528 = vpop.f32.mrf.mxu0
        %v3529 = vadd.f32 %v3405, %v3528
        %v3530 = vpop.f32.mrf.mxu0
        %v3531 = vadd.f32 %v3405, %v3530
        %3532 = vmatmul.bf16.gmra.mxu0 %v3459
        %v3533 = vpop.f32.mrf.mxu0
        %v3534 = vadd.f32 %v3405, %v3533
        %v3535 = vpop.f32.mrf.mxu0
        %v3536 = vadd.f32 %v3405, %v3535
        %3537 = vmatmul.bf16.gmra.mxu0 %v3462
        %v3538 = vpop.f32.mrf.mxu0
        %v3539 = vadd.f32 %v3405, %v3538
        %v3540 = vpop.f32.mrf.mxu0
        %v3541 = vadd.f32 %v3405, %v3540
        %3542 = vmatmul.bf16.gmra.mxu0 %v3465
        %v3543 = vpop.f32.mrf.mxu0
        %v3544 = vadd.f32 %v3405, %v3543
        %v3545 = vpop.f32.mrf.mxu0
        %v3546 = vadd.f32 %v3405, %v3545
        %3547 = vmatmul.bf16.gmra.mxu0 %v3468
        %v3548 = vpop.f32.mrf.mxu0
        %v3549 = vadd.f32 %v3405, %v3548
        %v3550 = vpop.f32.mrf.mxu0
        %v3551 = vadd.f32 %v3405, %v3550
        %3552 = vmatmul.bf16.gmra.mxu0 %v3471
        %v3553 = vpop.f32.mrf.mxu0
        %v3554 = vadd.f32 %v3405, %v3553
        %v3555 = vpop.f32.mrf.mxu0
        %v3556 = vadd.f32 %v3405, %v3555
        %3557 = vmatmul.bf16.gmra.mxu0 %v3474
        %v3558 = vpop.f32.mrf.mxu0
        %v3559 = vadd.f32 %v3405, %v3558
        %v3560 = vpop.f32.mrf.mxu0
        %v3561 = vadd.f32 %v3405, %v3560
        %3562 = vmatmul.bf16.gmra.mxu0 %v3477
        %v3563 = vpop.f32.mrf.mxu0
        %v3564 = vadd.f32 %v3405, %v3563
        %v3565 = vpop.f32.mrf.mxu0
        %v3566 = vadd.f32 %v3405, %v3565
        %3567 = vdwg.mxu0
        %v3568 = vld [vmem:[%s499] sm:$0xff]
        %v3569 = vld [vmem:[%s499 + $0x8] sm:$0xff]
        %v3570 = vld [vmem:[%s499 + $0x10] sm:$0xff]
        %v3571 = vld [vmem:[%s499 + $0x18] sm:$0xff]
        %v3572 = vld [vmem:[%s499 + $0x20] sm:$0xff]
        %v3573 = vld [vmem:[%s499 + $0x28] sm:$0xff]
        %v3574 = vld [vmem:[%s499 + $0x30] sm:$0xff]
        %v3575 = vld [vmem:[%s499 + $0x38] sm:$0xff]
        %v3576 = vld [vmem:[%s499 + $0x40] sm:$0xff]
        %v3577 = vld [vmem:[%s499 + $0x48] sm:$0xff]
        %v3578 = vld [vmem:[%s499 + $0x50] sm:$0xff]
        %v3579 = vld [vmem:[%s499 + $0x58] sm:$0xff]
        %v3580 = vld [vmem:[%s499 + $0x60] sm:$0xff]
        %v3581 = vld [vmem:[%s499 + $0x68] sm:$0xff]
        %v3582 = vld [vmem:[%s499 + $0x70] sm:$0xff]
        %v3583 = vld [vmem:[%s499 + $0x78] sm:$0xff]
        %v3584 = vld [vmem:[%s499 + $0x80] sm:$0xff]
        %v3585 = vld [vmem:[%s499 + $0x88] sm:$0xff]
        %v3586 = vld [vmem:[%s499 + $0x90] sm:$0xff]
        %v3587 = vld [vmem:[%s499 + $0x98] sm:$0xff]
        %v3588 = vld [vmem:[%s499 + $0xa0] sm:$0xff]
        %v3589 = vld [vmem:[%s499 + $0xa8] sm:$0xff]
        %v3590 = vld [vmem:[%s499 + $0xb0] sm:$0xff]
        %v3591 = vld [vmem:[%s499 + $0xb8] sm:$0xff]
        %v3592 = vld [vmem:[%s499 + $0xc0] sm:$0xff]
        %v3593 = vld [vmem:[%s499 + $0xc8] sm:$0xff]
        %v3594 = vld [vmem:[%s499 + $0xd0] sm:$0xff]
        %v3595 = vld [vmem:[%s499 + $0xd8] sm:$0xff]
        %v3596 = vld [vmem:[%s499 + $0xe0] sm:$0xff]
        %v3597 = vld [vmem:[%s499 + $0xe8] sm:$0xff]
        %v3598 = vld [vmem:[%s499 + $0xf0] sm:$0xff]
        %v3599 = vld [vmem:[%s499 + $0xf8] sm:$0xff]
        %v3600 = vadd.f32 %v3568, %v3489
        %v3601 = vadd.f32 %v3569, %v3491
        %v3602 = vadd.f32 %v3570, %v3494
        %v3603 = vadd.f32 %v3571, %v3496
        %v3604 = vadd.f32 %v3572, %v3499
        %v3605 = vadd.f32 %v3573, %v3501
        %v3606 = vadd.f32 %v3574, %v3504
        %v3607 = vadd.f32 %v3575, %v3506
        %v3608 = vadd.f32 %v3576, %v3509
        %v3609 = vadd.f32 %v3577, %v3511
        %v3610 = vadd.f32 %v3578, %v3514
        %v3611 = vadd.f32 %v3579, %v3516
        %v3612 = vadd.f32 %v3580, %v3519
        %v3613 = vadd.f32 %v3581, %v3521
        %v3614 = vadd.f32 %v3582, %v3524
        %v3615 = vadd.f32 %v3583, %v3526
        %v3616 = vadd.f32 %v3584, %v3529
        %v3617 = vadd.f32 %v3585, %v3531
        %v3618 = vadd.f32 %v3586, %v3534
        %v3619 = vadd.f32 %v3587, %v3536
        %v3620 = vadd.f32 %v3588, %v3539
        %v3621 = vadd.f32 %v3589, %v3541
        %v3622 = vadd.f32 %v3590, %v3544
        %v3623 = vadd.f32 %v3591, %v3546
        %v3624 = vadd.f32 %v3592, %v3549
        %v3625 = vadd.f32 %v3593, %v3551
        %v3626 = vadd.f32 %v3594, %v3554
        %v3627 = vadd.f32 %v3595, %v3556
        %v3628 = vadd.f32 %v3596, %v3559
        %v3629 = vadd.f32 %v3597, %v3561
        %v3630 = vadd.f32 %v3598, %v3564
        %v3631 = vadd.f32 %v3599, %v3566
        %v3632 = vld [vmem:[#allocation10] sm:$0x7]
        %3634 = vset.pattern.permute.xlu0 0
        %3635 = vperm.xlu0 %3634, %v3600
        %v3636 = vpop.permute.xlu0 %3635
        %3639 = vset.pattern.permute.xlu0 0
        %3640 = vperm.xlu0 %3639, %v3601
        %v3641 = vpop.permute.xlu0 %3640
        %3644 = vset.pattern.permute.xlu0 0
        %3645 = vperm.xlu0 %3644, %v3602
        %v3646 = vpop.permute.xlu0 %3645
        %3649 = vset.pattern.permute.xlu0 0
        %3650 = vperm.xlu0 %3649, %v3603
        %v3651 = vpop.permute.xlu0 %3650
        %3654 = vset.pattern.permute.xlu0 0
        %3655 = vperm.xlu0 %3654, %v3604
        %v3656 = vpop.permute.xlu0 %3655
        %3659 = vset.pattern.permute.xlu0 0
        %3660 = vperm.xlu0 %3659, %v3605
        %v3661 = vpop.permute.xlu0 %3660
        %3664 = vset.pattern.permute.xlu0 0
        %3665 = vperm.xlu0 %3664, %v3606
        %v3666 = vpop.permute.xlu0 %3665
        %3669 = vset.pattern.permute.xlu0 0
        %3670 = vperm.xlu0 %3669, %v3607
        %v3671 = vpop.permute.xlu0 %3670
        %3674 = vset.pattern.permute.xlu0 0
        %3675 = vperm.xlu0 %3674, %v3608
        %v3676 = vpop.permute.xlu0 %3675
        %3679 = vset.pattern.permute.xlu0 0
        %3680 = vperm.xlu0 %3679, %v3609
        %v3681 = vpop.permute.xlu0 %3680
        %3684 = vset.pattern.permute.xlu0 0
        %3685 = vperm.xlu0 %3684, %v3610
        %v3686 = vpop.permute.xlu0 %3685
        %3689 = vset.pattern.permute.xlu0 0
        %3690 = vperm.xlu0 %3689, %v3611
        %v3691 = vpop.permute.xlu0 %3690
        %3694 = vset.pattern.permute.xlu0 0
        %3695 = vperm.xlu0 %3694, %v3612
        %v3696 = vpop.permute.xlu0 %3695
        %3699 = vset.pattern.permute.xlu0 0
        %3700 = vperm.xlu0 %3699, %v3613
        %v3701 = vpop.permute.xlu0 %3700
        %3704 = vset.pattern.permute.xlu0 0
        %3705 = vperm.xlu0 %3704, %v3614
        %v3706 = vpop.permute.xlu0 %3705
        %3709 = vset.pattern.permute.xlu0 0
        %3710 = vperm.xlu0 %3709, %v3615
        %v3711 = vpop.permute.xlu0 %3710
        %3714 = vset.pattern.permute.xlu0 0
        %3715 = vperm.xlu0 %3714, %v3616
        %v3716 = vpop.permute.xlu0 %3715
        %3719 = vset.pattern.permute.xlu0 0
        %3720 = vperm.xlu0 %3719, %v3617
        %v3721 = vpop.permute.xlu0 %3720
        %3724 = vset.pattern.permute.xlu0 0
        %3725 = vperm.xlu0 %3724, %v3618
        %v3726 = vpop.permute.xlu0 %3725
        %3729 = vset.pattern.permute.xlu0 0
        %3730 = vperm.xlu0 %3729, %v3619
        %v3731 = vpop.permute.xlu0 %3730
        %3734 = vset.pattern.permute.xlu0 0
        %3735 = vperm.xlu0 %3734, %v3620
        %v3736 = vpop.permute.xlu0 %3735
        %3739 = vset.pattern.permute.xlu0 0
        %3740 = vperm.xlu0 %3739, %v3621
        %v3741 = vpop.permute.xlu0 %3740
        %3744 = vset.pattern.permute.xlu0 0
        %3745 = vperm.xlu0 %3744, %v3622
        %v3746 = vpop.permute.xlu0 %3745
        %3749 = vset.pattern.permute.xlu0 0
        %3750 = vperm.xlu0 %3749, %v3623
        %v3751 = vpop.permute.xlu0 %3750
        %3754 = vset.pattern.permute.xlu0 0
        %3755 = vperm.xlu0 %3754, %v3624
        %v3756 = vpop.permute.xlu0 %3755
        %3759 = vset.pattern.permute.xlu0 0
        %3760 = vperm.xlu0 %3759, %v3625
        %v3761 = vpop.permute.xlu0 %3760
        %3764 = vset.pattern.permute.xlu0 0
        %3765 = vperm.xlu0 %3764, %v3626
        %v3766 = vpop.permute.xlu0 %3765
        %3769 = vset.pattern.permute.xlu0 0
        %3770 = vperm.xlu0 %3769, %v3627
        %v3771 = vpop.permute.xlu0 %3770
        %3774 = vset.pattern.permute.xlu0 0
        %3775 = vperm.xlu0 %3774, %v3628
        %v3776 = vpop.permute.xlu0 %3775
        %3779 = vset.pattern.permute.xlu0 0
        %3780 = vperm.xlu0 %3779, %v3629
        %v3781 = vpop.permute.xlu0 %3780
        %3784 = vset.pattern.permute.xlu0 0
        %3785 = vperm.xlu0 %3784, %v3630
        %v3786 = vpop.permute.xlu0 %3785
        %3789 = vset.pattern.permute.xlu0 0
        %3790 = vperm.xlu0 %3789, %v3631
        %v3791 = vpop.permute.xlu0 %3790
        %v3793 = vperm.slane %v3632, 0
        %v3794 = vmul.f32 %v3636, %v3793
        %v3795 = vmul.f32 %v3641, %v3793
        %v3796 = vmul.f32 %v3646, %v3793
        %v3797 = vmul.f32 %v3651, %v3793
        %v3798 = vmul.f32 %v3656, %v3793
        %v3799 = vmul.f32 %v3661, %v3793
        %v3800 = vmul.f32 %v3666, %v3793
        %v3801 = vmul.f32 %v3671, %v3793
        %v3802 = vmul.f32 %v3676, %v3793
        %v3803 = vmul.f32 %v3681, %v3793
        %v3804 = vmul.f32 %v3686, %v3793
        %v3805 = vmul.f32 %v3691, %v3793
        %v3806 = vmul.f32 %v3696, %v3793
        %v3807 = vmul.f32 %v3701, %v3793
        %v3808 = vmul.f32 %v3706, %v3793
        %v3809 = vmul.f32 %v3711, %v3793
        %v3810 = vmul.f32 %v3716, %v3793
        %v3811 = vmul.f32 %v3721, %v3793
        %v3812 = vmul.f32 %v3726, %v3793
        %v3813 = vmul.f32 %v3731, %v3793
        %v3814 = vmul.f32 %v3736, %v3793
        %v3815 = vmul.f32 %v3741, %v3793
        %v3816 = vmul.f32 %v3746, %v3793
        %v3817 = vmul.f32 %v3751, %v3793
        %v3818 = vmul.f32 %v3756, %v3793
        %v3819 = vmul.f32 %v3761, %v3793
        %v3820 = vmul.f32 %v3766, %v3793
        %v3821 = vmul.f32 %v3771, %v3793
        %v3822 = vmul.f32 %v3776, %v3793
        %v3823 = vmul.f32 %v3781, %v3793
        %v3824 = vmul.f32 %v3786, %v3793
        %v3825 = vmul.f32 %v3791, %v3793
        %3826 = vset.pattern.permute.xlu0 1
        %3827 = vperm.xlu0 %3826, %v3600
        %v3828 = vpop.permute.xlu0 %3827
        %3830 = vset.pattern.permute.xlu0 1
        %3831 = vperm.xlu0 %3830, %v3601
        %v3832 = vpop.permute.xlu0 %3831
        %3834 = vset.pattern.permute.xlu0 1
        %3835 = vperm.xlu0 %3834, %v3602
        %v3836 = vpop.permute.xlu0 %3835
        %3838 = vset.pattern.permute.xlu0 1
        %3839 = vperm.xlu0 %3838, %v3603
        %v3840 = vpop.permute.xlu0 %3839
        %3842 = vset.pattern.permute.xlu0 1
        %3843 = vperm.xlu0 %3842, %v3604
        %v3844 = vpop.permute.xlu0 %3843
        %3846 = vset.pattern.permute.xlu0 1
        %3847 = vperm.xlu0 %3846, %v3605
        %v3848 = vpop.permute.xlu0 %3847
        %3850 = vset.pattern.permute.xlu0 1
        %3851 = vperm.xlu0 %3850, %v3606
        %v3852 = vpop.permute.xlu0 %3851
        %3854 = vset.pattern.permute.xlu0 1
        %3855 = vperm.xlu0 %3854, %v3607
        %v3856 = vpop.permute.xlu0 %3855
        %3858 = vset.pattern.permute.xlu0 1
        %3859 = vperm.xlu0 %3858, %v3608
        %v3860 = vpop.permute.xlu0 %3859
        %3862 = vset.pattern.permute.xlu0 1
        %3863 = vperm.xlu0 %3862, %v3609
        %v3864 = vpop.permute.xlu0 %3863
        %3866 = vset.pattern.permute.xlu0 1
        %3867 = vperm.xlu0 %3866, %v3610
        %v3868 = vpop.permute.xlu0 %3867
        %3870 = vset.pattern.permute.xlu0 1
        %3871 = vperm.xlu0 %3870, %v3611
        %v3872 = vpop.permute.xlu0 %3871
        %3874 = vset.pattern.permute.xlu0 1
        %3875 = vperm.xlu0 %3874, %v3612
        %v3876 = vpop.permute.xlu0 %3875
        %3878 = vset.pattern.permute.xlu0 1
        %3879 = vperm.xlu0 %3878, %v3613
        %v3880 = vpop.permute.xlu0 %3879
        %3882 = vset.pattern.permute.xlu0 1
        %3883 = vperm.xlu0 %3882, %v3614
        %v3884 = vpop.permute.xlu0 %3883
        %3886 = vset.pattern.permute.xlu0 1
        %3887 = vperm.xlu0 %3886, %v3615
        %v3888 = vpop.permute.xlu0 %3887
        %3890 = vset.pattern.permute.xlu0 1
        %3891 = vperm.xlu0 %3890, %v3616
        %v3892 = vpop.permute.xlu0 %3891
        %3894 = vset.pattern.permute.xlu0 1
        %3895 = vperm.xlu0 %3894, %v3617
        %v3896 = vpop.permute.xlu0 %3895
        %3898 = vset.pattern.permute.xlu0 1
        %3899 = vperm.xlu0 %3898, %v3618
        %v3900 = vpop.permute.xlu0 %3899
        %3902 = vset.pattern.permute.xlu0 1
        %3903 = vperm.xlu0 %3902, %v3619
        %v3904 = vpop.permute.xlu0 %3903
        %3906 = vset.pattern.permute.xlu0 1
        %3907 = vperm.xlu0 %3906, %v3620
        %v3908 = vpop.permute.xlu0 %3907
        %3910 = vset.pattern.permute.xlu0 1
        %3911 = vperm.xlu0 %3910, %v3621
        %v3912 = vpop.permute.xlu0 %3911
        %3914 = vset.pattern.permute.xlu0 1
        %3915 = vperm.xlu0 %3914, %v3622
        %v3916 = vpop.permute.xlu0 %3915
        %3918 = vset.pattern.permute.xlu0 1
        %3919 = vperm.xlu0 %3918, %v3623
        %v3920 = vpop.permute.xlu0 %3919
        %3922 = vset.pattern.permute.xlu0 1
        %3923 = vperm.xlu0 %3922, %v3624
        %v3924 = vpop.permute.xlu0 %3923
        %3926 = vset.pattern.permute.xlu0 1
        %3927 = vperm.xlu0 %3926, %v3625
        %v3928 = vpop.permute.xlu0 %3927
        %3930 = vset.pattern.permute.xlu0 1
        %3931 = vperm.xlu0 %3930, %v3626
        %v3932 = vpop.permute.xlu0 %3931
        %3934 = vset.pattern.permute.xlu0 1
        %3935 = vperm.xlu0 %3934, %v3627
        %v3936 = vpop.permute.xlu0 %3935
        %3938 = vset.pattern.permute.xlu0 1
        %3939 = vperm.xlu0 %3938, %v3628
        %v3940 = vpop.permute.xlu0 %3939
        %3942 = vset.pattern.permute.xlu0 1
        %3943 = vperm.xlu0 %3942, %v3629
        %v3944 = vpop.permute.xlu0 %3943
        %3946 = vset.pattern.permute.xlu0 1
        %3947 = vperm.xlu0 %3946, %v3630
        %v3948 = vpop.permute.xlu0 %3947
        %3950 = vset.pattern.permute.xlu0 1
        %3951 = vperm.xlu0 %3950, %v3631
        %v3952 = vpop.permute.xlu0 %3951
        %v3954 = vperm.slane %v3632, 1
        %v3955 = vmul.f32 %v3828, %v3954
        %v3956 = vmul.f32 %v3832, %v3954
        %v3957 = vmul.f32 %v3836, %v3954
        %v3958 = vmul.f32 %v3840, %v3954
        %v3959 = vmul.f32 %v3844, %v3954
        %v3960 = vmul.f32 %v3848, %v3954
        %v3961 = vmul.f32 %v3852, %v3954
        %v3962 = vmul.f32 %v3856, %v3954
        %v3963 = vmul.f32 %v3860, %v3954
        %v3964 = vmul.f32 %v3864, %v3954
        %v3965 = vmul.f32 %v3868, %v3954
        %v3966 = vmul.f32 %v3872, %v3954
        %v3967 = vmul.f32 %v3876, %v3954
        %v3968 = vmul.f32 %v3880, %v3954
        %v3969 = vmul.f32 %v3884, %v3954
        %v3970 = vmul.f32 %v3888, %v3954
        %v3971 = vmul.f32 %v3892, %v3954
        %v3972 = vmul.f32 %v3896, %v3954
        %v3973 = vmul.f32 %v3900, %v3954
        %v3974 = vmul.f32 %v3904, %v3954
        %v3975 = vmul.f32 %v3908, %v3954
        %v3976 = vmul.f32 %v3912, %v3954
        %v3977 = vmul.f32 %v3916, %v3954
        %v3978 = vmul.f32 %v3920, %v3954
        %v3979 = vmul.f32 %v3924, %v3954
        %v3980 = vmul.f32 %v3928, %v3954
        %v3981 = vmul.f32 %v3932, %v3954
        %v3982 = vmul.f32 %v3936, %v3954
        %v3983 = vmul.f32 %v3940, %v3954
        %v3984 = vmul.f32 %v3944, %v3954
        %v3985 = vmul.f32 %v3948, %v3954
        %v3986 = vmul.f32 %v3952, %v3954
        %v3987 = vadd.f32 %v3794, %v3955
        %v3988 = vadd.f32 %v3795, %v3956
        %v3989 = vadd.f32 %v3796, %v3957
        %v3990 = vadd.f32 %v3797, %v3958
        %v3991 = vadd.f32 %v3798, %v3959
        %v3992 = vadd.f32 %v3799, %v3960
        %v3993 = vadd.f32 %v3800, %v3961
        %v3994 = vadd.f32 %v3801, %v3962
        %v3995 = vadd.f32 %v3802, %v3963
        %v3996 = vadd.f32 %v3803, %v3964
        %v3997 = vadd.f32 %v3804, %v3965
        %v3998 = vadd.f32 %v3805, %v3966
        %v3999 = vadd.f32 %v3806, %v3967
        %v4000 = vadd.f32 %v3807, %v3968
        %v4001 = vadd.f32 %v3808, %v3969
        %v4002 = vadd.f32 %v3809, %v3970
        %v4003 = vadd.f32 %v3810, %v3971
        %v4004 = vadd.f32 %v3811, %v3972
        %v4005 = vadd.f32 %v3812, %v3973
        %v4006 = vadd.f32 %v3813, %v3974
        %v4007 = vadd.f32 %v3814, %v3975
        %v4008 = vadd.f32 %v3815, %v3976
        %v4009 = vadd.f32 %v3816, %v3977
        %v4010 = vadd.f32 %v3817, %v3978
        %v4011 = vadd.f32 %v3818, %v3979
        %v4012 = vadd.f32 %v3819, %v3980
        %v4013 = vadd.f32 %v3820, %v3981
        %v4014 = vadd.f32 %v3821, %v3982
        %v4015 = vadd.f32 %v3822, %v3983
        %v4016 = vadd.f32 %v3823, %v3984
        %v4017 = vadd.f32 %v3824, %v3985
        %v4018 = vadd.f32 %v3825, %v3986
        %4019 = vset.pattern.permute.xlu0 2
        %4020 = vperm.xlu0 %4019, %v3600
        %v4021 = vpop.permute.xlu0 %4020
        %4023 = vset.pattern.permute.xlu0 2
        %4024 = vperm.xlu0 %4023, %v3601
        %v4025 = vpop.permute.xlu0 %4024
        %4027 = vset.pattern.permute.xlu0 2
        %4028 = vperm.xlu0 %4027, %v3602
        %v4029 = vpop.permute.xlu0 %4028
        %4031 = vset.pattern.permute.xlu0 2
        %4032 = vperm.xlu0 %4031, %v3603
        %v4033 = vpop.permute.xlu0 %4032
        %4035 = vset.pattern.permute.xlu0 2
        %4036 = vperm.xlu0 %4035, %v3604
        %v4037 = vpop.permute.xlu0 %4036
        %4039 = vset.pattern.permute.xlu0 2
        %4040 = vperm.xlu0 %4039, %v3605
        %v4041 = vpop.permute.xlu0 %4040
        %4043 = vset.pattern.permute.xlu0 2
        %4044 = vperm.xlu0 %4043, %v3606
        %v4045 = vpop.permute.xlu0 %4044
        %4047 = vset.pattern.permute.xlu0 2
        %4048 = vperm.xlu0 %4047, %v3607
        %v4049 = vpop.permute.xlu0 %4048
        %4051 = vset.pattern.permute.xlu0 2
        %4052 = vperm.xlu0 %4051, %v3608
        %v4053 = vpop.permute.xlu0 %4052
        %4055 = vset.pattern.permute.xlu0 2
        %4056 = vperm.xlu0 %4055, %v3609
        %v4057 = vpop.permute.xlu0 %4056
        %4059 = vset.pattern.permute.xlu0 2
        %4060 = vperm.xlu0 %4059, %v3610
        %v4061 = vpop.permute.xlu0 %4060
        %4063 = vset.pattern.permute.xlu0 2
        %4064 = vperm.xlu0 %4063, %v3611
        %v4065 = vpop.permute.xlu0 %4064
        %4067 = vset.pattern.permute.xlu0 2
        %4068 = vperm.xlu0 %4067, %v3612
        %v4069 = vpop.permute.xlu0 %4068
        %4071 = vset.pattern.permute.xlu0 2
        %4072 = vperm.xlu0 %4071, %v3613
        %v4073 = vpop.permute.xlu0 %4072
        %4075 = vset.pattern.permute.xlu0 2
        %4076 = vperm.xlu0 %4075, %v3614
        %v4077 = vpop.permute.xlu0 %4076
        %4079 = vset.pattern.permute.xlu0 2
        %4080 = vperm.xlu0 %4079, %v3615
        %v4081 = vpop.permute.xlu0 %4080
        %4083 = vset.pattern.permute.xlu0 2
        %4084 = vperm.xlu0 %4083, %v3616
        %v4085 = vpop.permute.xlu0 %4084
        %4087 = vset.pattern.permute.xlu0 2
        %4088 = vperm.xlu0 %4087, %v3617
        %v4089 = vpop.permute.xlu0 %4088
        %4091 = vset.pattern.permute.xlu0 2
        %4092 = vperm.xlu0 %4091, %v3618
        %v4093 = vpop.permute.xlu0 %4092
        %4095 = vset.pattern.permute.xlu0 2
        %4096 = vperm.xlu0 %4095, %v3619
        %v4097 = vpop.permute.xlu0 %4096
        %4099 = vset.pattern.permute.xlu0 2
        %4100 = vperm.xlu0 %4099, %v3620
        %v4101 = vpop.permute.xlu0 %4100
        %4103 = vset.pattern.permute.xlu0 2
        %4104 = vperm.xlu0 %4103, %v3621
        %v4105 = vpop.permute.xlu0 %4104
        %4107 = vset.pattern.permute.xlu0 2
        %4108 = vperm.xlu0 %4107, %v3622
        %v4109 = vpop.permute.xlu0 %4108
        %4111 = vset.pattern.permute.xlu0 2
        %4112 = vperm.xlu0 %4111, %v3623
        %v4113 = vpop.permute.xlu0 %4112
        %4115 = vset.pattern.permute.xlu0 2
        %4116 = vperm.xlu0 %4115, %v3624
        %v4117 = vpop.permute.xlu0 %4116
        %4119 = vset.pattern.permute.xlu0 2
        %4120 = vperm.xlu0 %4119, %v3625
        %v4121 = vpop.permute.xlu0 %4120
        %4123 = vset.pattern.permute.xlu0 2
        %4124 = vperm.xlu0 %4123, %v3626
        %v4125 = vpop.permute.xlu0 %4124
        %4127 = vset.pattern.permute.xlu0 2
        %4128 = vperm.xlu0 %4127, %v3627
        %v4129 = vpop.permute.xlu0 %4128
        %4131 = vset.pattern.permute.xlu0 2
        %4132 = vperm.xlu0 %4131, %v3628
        %v4133 = vpop.permute.xlu0 %4132
        %4135 = vset.pattern.permute.xlu0 2
        %4136 = vperm.xlu0 %4135, %v3629
        %v4137 = vpop.permute.xlu0 %4136
        %4139 = vset.pattern.permute.xlu0 2
        %4140 = vperm.xlu0 %4139, %v3630
        %v4141 = vpop.permute.xlu0 %4140
        %4143 = vset.pattern.permute.xlu0 2
        %4144 = vperm.xlu0 %4143, %v3631
        %v4145 = vpop.permute.xlu0 %4144
        %v4147 = vperm.slane %v3632, 2
        %v4148 = vmul.f32 %v4021, %v4147
        %v4149 = vmul.f32 %v4025, %v4147
        %v4150 = vmul.f32 %v4029, %v4147
        %v4151 = vmul.f32 %v4033, %v4147
        %v4152 = vmul.f32 %v4037, %v4147
        %v4153 = vmul.f32 %v4041, %v4147
        %v4154 = vmul.f32 %v4045, %v4147
        %v4155 = vmul.f32 %v4049, %v4147
        %v4156 = vmul.f32 %v4053, %v4147
        %v4157 = vmul.f32 %v4057, %v4147
        %v4158 = vmul.f32 %v4061, %v4147
        %v4159 = vmul.f32 %v4065, %v4147
        %v4160 = vmul.f32 %v4069, %v4147
        %v4161 = vmul.f32 %v4073, %v4147
        %v4162 = vmul.f32 %v4077, %v4147
        %v4163 = vmul.f32 %v4081, %v4147
        %v4164 = vmul.f32 %v4085, %v4147
        %v4165 = vmul.f32 %v4089, %v4147
        %v4166 = vmul.f32 %v4093, %v4147
        %v4167 = vmul.f32 %v4097, %v4147
        %v4168 = vmul.f32 %v4101, %v4147
        %v4169 = vmul.f32 %v4105, %v4147
        %v4170 = vmul.f32 %v4109, %v4147
        %v4171 = vmul.f32 %v4113, %v4147
        %v4172 = vmul.f32 %v4117, %v4147
        %v4173 = vmul.f32 %v4121, %v4147
        %v4174 = vmul.f32 %v4125, %v4147
        %v4175 = vmul.f32 %v4129, %v4147
        %v4176 = vmul.f32 %v4133, %v4147
        %v4177 = vmul.f32 %v4137, %v4147
        %v4178 = vmul.f32 %v4141, %v4147
        %v4179 = vmul.f32 %v4145, %v4147
        %v4180 = vadd.f32 %v3987, %v4148
        %v4181 = vadd.f32 %v3988, %v4149
        %v4182 = vadd.f32 %v3989, %v4150
        %v4183 = vadd.f32 %v3990, %v4151
        %v4184 = vadd.f32 %v3991, %v4152
        %v4185 = vadd.f32 %v3992, %v4153
        %v4186 = vadd.f32 %v3993, %v4154
        %v4187 = vadd.f32 %v3994, %v4155
        %v4188 = vadd.f32 %v3995, %v4156
        %v4189 = vadd.f32 %v3996, %v4157
        %v4190 = vadd.f32 %v3997, %v4158
        %v4191 = vadd.f32 %v3998, %v4159
        %v4192 = vadd.f32 %v3999, %v4160
        %v4193 = vadd.f32 %v4000, %v4161
        %v4194 = vadd.f32 %v4001, %v4162
        %v4195 = vadd.f32 %v4002, %v4163
        %v4196 = vadd.f32 %v4003, %v4164
        %v4197 = vadd.f32 %v4004, %v4165
        %v4198 = vadd.f32 %v4005, %v4166
        %v4199 = vadd.f32 %v4006, %v4167
        %v4200 = vadd.f32 %v4007, %v4168
        %v4201 = vadd.f32 %v4008, %v4169
        %v4202 = vadd.f32 %v4009, %v4170
        %v4203 = vadd.f32 %v4010, %v4171
        %v4204 = vadd.f32 %v4011, %v4172
        %v4205 = vadd.f32 %v4012, %v4173
        %v4206 = vadd.f32 %v4013, %v4174
        %v4207 = vadd.f32 %v4014, %v4175
        %v4208 = vadd.f32 %v4015, %v4176
        %v4209 = vadd.f32 %v4016, %v4177
        %v4210 = vadd.f32 %v4017, %v4178
        %v4211 = vadd.f32 %v4018, %v4179
        %v4212 = vld [vmem:[#allocation11] sm:$0x1]
        %v4214 = vperm.slane %v4212, 0
        %v4216 = vadd.f32 %v4180, %v4214
        %v4217 = vadd.f32 %v4181, %v4214
        %v4218 = vadd.f32 %v4182, %v4214
        %v4219 = vadd.f32 %v4183, %v4214
        %v4220 = vadd.f32 %v4184, %v4214
        %v4221 = vadd.f32 %v4185, %v4214
        %v4222 = vadd.f32 %v4186, %v4214
        %v4223 = vadd.f32 %v4187, %v4214
        %v4224 = vadd.f32 %v4188, %v4214
        %v4225 = vadd.f32 %v4189, %v4214
        %v4226 = vadd.f32 %v4190, %v4214
        %v4227 = vadd.f32 %v4191, %v4214
        %v4228 = vadd.f32 %v4192, %v4214
        %v4229 = vadd.f32 %v4193, %v4214
        %v4230 = vadd.f32 %v4194, %v4214
        %v4231 = vadd.f32 %v4195, %v4214
        %v4232 = vadd.f32 %v4196, %v4214
        %v4233 = vadd.f32 %v4197, %v4214
        %v4234 = vadd.f32 %v4198, %v4214
        %v4235 = vadd.f32 %v4199, %v4214
        %v4236 = vadd.f32 %v4200, %v4214
        %v4237 = vadd.f32 %v4201, %v4214
        %v4238 = vadd.f32 %v4202, %v4214
        %v4239 = vadd.f32 %v4203, %v4214
        %v4240 = vadd.f32 %v4204, %v4214
        %v4241 = vadd.f32 %v4205, %v4214
        %v4242 = vadd.f32 %v4206, %v4214
        %v4243 = vadd.f32 %v4207, %v4214
        %v4244 = vadd.f32 %v4208, %v4214
        %v4245 = vadd.f32 %v4209, %v4214
        %v4246 = vadd.f32 %v4210, %v4214
        %v4247 = vadd.f32 %v4211, %v4214
        %v4248 = vtanh.pop %v4216
        %v4249 = vtanh.pop %v4217
        %v4250 = vtanh.pop %v4218
        %v4251 = vtanh.pop %v4219
        %v4252 = vtanh.pop %v4220
        %v4253 = vtanh.pop %v4221
        %v4254 = vtanh.pop %v4222
        %v4255 = vtanh.pop %v4223
        %v4256 = vtanh.pop %v4224
        %v4257 = vtanh.pop %v4225
        %v4258 = vtanh.pop %v4226
        %v4259 = vtanh.pop %v4227
        %v4260 = vtanh.pop %v4228
        %v4261 = vtanh.pop %v4229
        %v4262 = vtanh.pop %v4230
        %v4263 = vtanh.pop %v4231
        %v4264 = vtanh.pop %v4232
        %v4265 = vtanh.pop %v4233
        %v4266 = vtanh.pop %v4234
        %v4267 = vtanh.pop %v4235
        %v4268 = vtanh.pop %v4236
        %v4269 = vtanh.pop %v4237
        %v4270 = vtanh.pop %v4238
        %v4271 = vtanh.pop %v4239
        %v4272 = vtanh.pop %v4240
        %v4273 = vtanh.pop %v4241
        %v4274 = vtanh.pop %v4242
        %v4275 = vtanh.pop %v4243
        %v4276 = vtanh.pop %v4244
        %v4277 = vtanh.pop %v4245
        %v4278 = vtanh.pop %v4246
        %v4279 = vtanh.pop %v4247
        %vm4280 = vcmask 23552
        %4281 = vst.msk [vmem:[%s509] sm:$0xff] %vm4280, %v3489
        %4282 = vst.msk [vmem:[%s509 + $0x8] sm:$0xff] %vm4280, %v3491
        %4283 = vst.msk [vmem:[%s509 + $0x10] sm:$0xff] %vm4280, %v3494
        %4284 = vst.msk [vmem:[%s509 + $0x18] sm:$0xff] %vm4280, %v3496
        %4285 = vst.msk [vmem:[%s509 + $0x20] sm:$0xff] %vm4280, %v3499
        %4286 = vst.msk [vmem:[%s509 + $0x28] sm:$0xff] %vm4280, %v3501
        %4287 = vst.msk [vmem:[%s509 + $0x30] sm:$0xff] %vm4280, %v3504
        %4288 = vst.msk [vmem:[%s509 + $0x38] sm:$0xff] %vm4280, %v3506
        %4289 = vst.msk [vmem:[%s509 + $0x40] sm:$0xff] %vm4280, %v3509
        %4290 = vst.msk [vmem:[%s509 + $0x48] sm:$0xff] %vm4280, %v3511
        %4291 = vst.msk [vmem:[%s509 + $0x50] sm:$0xff] %vm4280, %v3514
        %4292 = vst.msk [vmem:[%s509 + $0x58] sm:$0xff] %vm4280, %v3516
        %4293 = vst.msk [vmem:[%s509 + $0x60] sm:$0xff] %vm4280, %v3519
        %4294 = vst.msk [vmem:[%s509 + $0x68] sm:$0xff] %vm4280, %v3521
        %4295 = vst.msk [vmem:[%s509 + $0x70] sm:$0xff] %vm4280, %v3524
        %4296 = vst.msk [vmem:[%s509 + $0x78] sm:$0xff] %vm4280, %v3526
        %4297 = vst.msk [vmem:[%s509 + $0x80] sm:$0xff] %vm4280, %v3529
        %4298 = vst.msk [vmem:[%s509 + $0x88] sm:$0xff] %vm4280, %v3531
        %4299 = vst.msk [vmem:[%s509 + $0x90] sm:$0xff] %vm4280, %v3534
        %4300 = vst.msk [vmem:[%s509 + $0x98] sm:$0xff] %vm4280, %v3536
        %4301 = vst.msk [vmem:[%s509 + $0xa0] sm:$0xff] %vm4280, %v3539
        %4302 = vst.msk [vmem:[%s509 + $0xa8] sm:$0xff] %vm4280, %v3541
        %4303 = vst.msk [vmem:[%s509 + $0xb0] sm:$0xff] %vm4280, %v3544
        %4304 = vst.msk [vmem:[%s509 + $0xb8] sm:$0xff] %vm4280, %v3546
        %4305 = vst.msk [vmem:[%s509 + $0xc0] sm:$0xff] %vm4280, %v3549
        %4306 = vst.msk [vmem:[%s509 + $0xc8] sm:$0xff] %vm4280, %v3551
        %4307 = vst.msk [vmem:[%s509 + $0xd0] sm:$0xff] %vm4280, %v3554
        %4308 = vst.msk [vmem:[%s509 + $0xd8] sm:$0xff] %vm4280, %v3556
        %4309 = vst.msk [vmem:[%s509 + $0xe0] sm:$0xff] %vm4280, %v3559
        %4310 = vst.msk [vmem:[%s509 + $0xe8] sm:$0xff] %vm4280, %v3561
        %4311 = vst.msk [vmem:[%s509 + $0xf0] sm:$0xff] %vm4280, %v3564
        %4312 = vst.msk [vmem:[%s509 + $0xf8] sm:$0xff] %vm4280, %v3566
        %4313 = vst.msk [vmem:[%s504] sm:$0xff] %vm4280, %v4248
        %4314 = vst.msk [vmem:[%s504 + $0x8] sm:$0xff] %vm4280, %v4249
        %4315 = vst.msk [vmem:[%s504 + $0x10] sm:$0xff] %vm4280, %v4250
        %4316 = vst.msk [vmem:[%s504 + $0x18] sm:$0xff] %vm4280, %v4251
        %4317 = vst.msk [vmem:[%s504 + $0x20] sm:$0xff] %vm4280, %v4252
        %4318 = vst.msk [vmem:[%s504 + $0x28] sm:$0xff] %vm4280, %v4253
        %4319 = vst.msk [vmem:[%s504 + $0x30] sm:$0xff] %vm4280, %v4254
        %4320 = vst.msk [vmem:[%s504 + $0x38] sm:$0xff] %vm4280, %v4255
        %4321 = vst.msk [vmem:[%s504 + $0x40] sm:$0xff] %vm4280, %v4256
        %4322 = vst.msk [vmem:[%s504 + $0x48] sm:$0xff] %vm4280, %v4257
        %4323 = vst.msk [vmem:[%s504 + $0x50] sm:$0xff] %vm4280, %v4258
        %4324 = vst.msk [vmem:[%s504 + $0x58] sm:$0xff] %vm4280, %v4259
        %4325 = vst.msk [vmem:[%s504 + $0x60] sm:$0xff] %vm4280, %v4260
        %4326 = vst.msk [vmem:[%s504 + $0x68] sm:$0xff] %vm4280, %v4261
        %4327 = vst.msk [vmem:[%s504 + $0x70] sm:$0xff] %vm4280, %v4262
        %4328 = vst.msk [vmem:[%s504 + $0x78] sm:$0xff] %vm4280, %v4263
        %4329 = vst.msk [vmem:[%s504 + $0x80] sm:$0xff] %vm4280, %v4264
        %4330 = vst.msk [vmem:[%s504 + $0x88] sm:$0xff] %vm4280, %v4265
        %4331 = vst.msk [vmem:[%s504 + $0x90] sm:$0xff] %vm4280, %v4266
        %4332 = vst.msk [vmem:[%s504 + $0x98] sm:$0xff] %vm4280, %v4267
        %4333 = vst.msk [vmem:[%s504 + $0xa0] sm:$0xff] %vm4280, %v4268
        %4334 = vst.msk [vmem:[%s504 + $0xa8] sm:$0xff] %vm4280, %v4269
        %4335 = vst.msk [vmem:[%s504 + $0xb0] sm:$0xff] %vm4280, %v4270
        %4336 = vst.msk [vmem:[%s504 + $0xb8] sm:$0xff] %vm4280, %v4271
        %4337 = vst.msk [vmem:[%s504 + $0xc0] sm:$0xff] %vm4280, %v4272
        %4338 = vst.msk [vmem:[%s504 + $0xc8] sm:$0xff] %vm4280, %v4273
        %4339 = vst.msk [vmem:[%s504 + $0xd0] sm:$0xff] %vm4280, %v4274
        %4340 = vst.msk [vmem:[%s504 + $0xd8] sm:$0xff] %vm4280, %v4275
        %4341 = vst.msk [vmem:[%s504 + $0xe0] sm:$0xff] %vm4280, %v4276
        %4342 = vst.msk [vmem:[%s504 + $0xe8] sm:$0xff] %vm4280, %v4277
        %4343 = vst.msk [vmem:[%s504 + $0xf0] sm:$0xff] %vm4280, %v4278
        %4344 = vst.msk [vmem:[%s504 + $0xf8] sm:$0xff] %vm4280, %v4279
        %p4345 = scmp.lt.s32.totalorder %s28, 1
        %s4346 = scalar_select %p4345, %s28, 1
        %s4347 = smul.addr %s4346, 32
        %s4348 = smul.addr %s4347, 8
        %s4349 = scalar_lea.vmem %s9, %s4348
        %p4350 = scmp.lt.s32.totalorder %s28, 1
        %s4351 = scalar_select %p4350, %s28, 1
        %s4352 = smul.addr %s4351, 32
        %s4353 = smul.addr %s4352, 8
        %s4354 = scalar_lea.vmem %s10, %s4353
        // Predicated region
        $region81: #{feature_decoder_forward.11} parent=55 // pred_check
          %p4355 = pneg %p250
        $region82: #{feature_decoder_forward.11} parent=55 // pred_check_branch
          %4357 = sbr.rel (%p4355) target = $region84
        $region83: #{feature_decoder_forward.11} parent=55 // pred_region
          _
        $region84: #{feature_decoder_forward.11} parent=55 // pred_fallthru
          _
        // Predicated region
        $region85: #{feature_decoder_forward.11} parent=55 // pred_check
          %p4358 = pneg %p276
        $region86: #{feature_decoder_forward.11} parent=55 // pred_check_branch
          %4360 = sbr.rel (%p4358) target = $region88
        $region87: #{feature_decoder_forward.11} parent=55 // pred_region
          _
        $region88: #{feature_decoder_forward.11} parent=55 // pred_fallthru
          _
      $region56: #{feature_decoder_forward.11} parent=5 // pred_fallthru
        _
      %p4361 = scmp.le.s32.totalorder 2, %s23
      // Predicated region
      $region89: #{feature_decoder_forward.11} parent=5 // pred_check
        %p4362 = pneg %p4361
      $region90: #{feature_decoder_forward.11} parent=5 // pred_check_branch
        %4364 = sbr.rel (%p4362) target = $region92
      $region91: #{feature_decoder_forward.11} parent=5 // pred_region
        %s4365 = ssub.s32 %s23, 2
        // Predicated region
        $region93: #{feature_decoder_forward.11} parent=91 // pred_check
          %p4366 = pneg %p256
        $region94: #{feature_decoder_forward.11} parent=91 // pred_check_branch
          %4368 = sbr.rel (%p4366) target = $region96
        $region95: #{feature_decoder_forward.11} parent=91 // pred_region
          %p4369 = scmp.lt.s32.totalorder %s29, 1
          %s4370 = scalar_select %p4369, %s29, 1
          %s4371 = smul.addr %s4370, 32
          %s4372 = smul.addr %s4371, 8
          %s4373 = scalar_lea.vmem %s9, %s4372
        $region96: #{feature_decoder_forward.11} parent=91 // pred_fallthru
          _
        // Predicated region
        $region97: #{feature_decoder_forward.11} parent=91 // pred_check
          %p4374 = pneg %p282
        $region98: #{feature_decoder_forward.11} parent=91 // pred_check_branch
          %4376 = sbr.rel (%p4374) target = $region100
        $region99: #{feature_decoder_forward.11} parent=91 // pred_region
          %p4377 = scmp.lt.s32.totalorder %s29, 1
          %s4378 = scalar_select %p4377, %s29, 1
          %s4379 = smul.addr %s4378, 32
          %s4380 = smul.addr %s4379, 8
          %s4381 = scalar_lea.vmem %s10, %s4380
        $region100: #{feature_decoder_forward.11} parent=91 // pred_fallthru
          _
      $region92: #{feature_decoder_forward.11} parent=5 // pred_fallthru
        _
    $region6: #{feature_decoder_forward.11} parent=1 // loop_footer
      %s27 = sadd.s32 1, %s23
    $region7: #{feature_decoder_forward.11} parent=1 // loop_footer_branch
      %22 = sbr.rel target = $region3
    $region8: #{feature_decoder_forward.11} parent=1 // loop_exit
      _
    %4382 = vsyncpa [#allocation4], 1
    %s4383 = scalar_lea.sflag [#allocation4], 1
    %4384 = vsyncpa %s4383, 1
    %4385 = vsyncpa [#allocation6], 1
    %4386 = vsyncpa [#allocation9], 1
    %4387 = vsyncpa [#allocation12], 1

</llo_original>
